<compile_context>
chip_gen: v6e
topology: v6e:2x2x1
jax: 0.10.0
libtpu: 0.0.40
codegen_flags: <defaults>
</compile_context>

<pallas_src>
import jax
import jax.numpy as jnp
from jax import lax
from jax.experimental import pallas as pl
from jax.experimental.pallas import tpu as pltpu
import numpy as np

L_IN = 256        # input length (fixed by fc1 = 32 * 64 after two /2 pools)
ROWS = 32         # im2col row-groups per sample (8 input positions per group)
NEG = -1e30       # mask value for the 118 padded fc2 logit columns


def compressed_net_kernel(x_ref, w1_ref, b1_ref, w2_ref, b2_ref,
                          wf1_ref, bf1_ref, wf2_ref, bf2_ref, out_ref):
    f32, bf16 = jnp.float32, jnp.bfloat16
    tb = x_ref.shape[1]              # samples in this batch tile (multiple of 8)
    n = ROWS * tb                    # matmul rows; row r = m*tb + b (m-major)

    # x_ref is (ROWS, tb, 8): group m holds input positions 8m..8m+7 of every
    # sample.  Merging the leading dims keeps the minor dim -> free reshape.
    x2d = x_ref[...].reshape(n, 8)

    # Neighbours x[8m-1] / x[8m+8] live one row-group away (same sample b).
    # The zero rows inserted at m==0 / m==ROWS-1 ARE the conv1 zero padding,
    # and the shift-by-tb concats are tile aligned (tb % 8 == 0) -> cheap.
    z1 = jnp.zeros((tb, 1), f32)
    xm1 = jnp.concatenate([z1, x2d[:-tb, 7:8]], axis=0)      # x[8m-1]
    xp8 = jnp.concatenate([x2d[tb:, 0:1], z1], axis=0)       # x[8m+8]

    # conv1 + ReLU: one im2col matmul, K=10, N=128 (lane dense).
    #   im1 column t              <-> input position 8m + t - 1
    #   h1 column eo*64 + j*16+ch <-> conv1 position 8m + 2j + eo, channel ch
    im1 = jnp.concatenate([xm1, x2d, xp8], axis=-1)          # (n, 10)
    h1 = jnp.dot(im1.astype(bf16), w1_ref[...], preferred_element_type=f32)
    h1 = jnp.maximum(h1 + b1_ref[...], 0.0)                  # (n, 128)

    # max_pool1d(2): even/odd conv1 positions sit in opposite lane halves.
    #   p1 column j*16 + ch <-> pool1 position 4m + j
    p1 = jnp.maximum(h1[:, 0:64], h1[:, 64:128])             # (n, 64)

    # Neighbours pool1[4m-1] / pool1[4m+4] from the adjacent row-groups.
    z16 = jnp.zeros((tb, 16), f32)
    u_m1 = jnp.concatenate([z16, p1[:-tb, 48:64]], axis=0)   # pool1[4m-1]
    u_p4 = jnp.concatenate([p1[tb:, 0:16], z16], axis=0)     # pool1[4m+4]

    # conv2 + ReLU: one im2col matmul, K=96, N=128 (lane dense).
    #   im2 column c                    <-> pool1 pos 4m + c//16 - 1, ch c%16
    #   h2 column parity*64 + u*32 + co <-> conv2 pos 4m + 2u + parity, ch co
    im2 = jnp.concatenate([u_m1, p1, u_p4], axis=-1)         # (n, 96)
    h2 = jnp.dot(im2.astype(bf16), w2_ref[...], preferred_element_type=f32)
    h2 = jnp.maximum(h2 + b2_ref[...], 0.0)                  # (n, 128)

    # max_pool1d(2) again: pooled column u*32 + co <-> pool2 position 2m + u
    pooled = jnp.maximum(h2[:, 0:64], h2[:, 64:128])         # (n, 64)

    # fc1 + ReLU without the (tb, 2048) flatten relayout: rows are m-major,
    # so each group m is a contiguous, tile-aligned sublane slice and
    #   fc1(flat) = sum_m pooled[m*tb:(m+1)*tb, :] @ Wf1[m]
    # (the wrapper permutes fc1's 2048 input rows into this [m, u*32+co]
    # order).  32 small MXU matmuls accumulated in f32.
    f1 = jnp.zeros((tb, 128), f32)
    for m in range(ROWS):
        blk = pooled[m * tb:(m + 1) * tb, :].astype(bf16)    # (tb, 64)
        f1 = f1 + jnp.dot(blk, wf1_ref[m], preferred_element_type=f32)
    f1 = jnp.maximum(f1 + bf1_ref[...], 0.0)                 # (tb, 128)

    # fc2 (padded to a lane-dense 128-wide output; the 118 unused logits are
    # pushed to -1e30 through the f32 bias) + numerically stable log_softmax.
    logits = jnp.dot(f1.astype(bf16), wf2_ref[...],
                     preferred_element_type=f32) + bf2_ref[...]
    mx = jnp.max(logits, axis=1, keepdims=True)
    zl = logits - mx
    lse = jnp.log(jnp.sum(jnp.exp(zl), axis=1, keepdims=True))
    out_ref[...] = zl - lse                                  # (tb, 128)


def _pick_tiling(batch):
    """Generation-aware batch tile (multiple of 8) and rounded batch size."""
    try:
        kind = jax.devices()[0].device_kind.lower()
    except Exception:
        kind = ""
    is_v7 = ("v7" in kind) or ("7x" in kind)
    if is_v7:
        target = 128                       # 64 MiB VMEM / TC, 2 TCs per chip
    elif any(tag in kind for tag in ("v4", "v5", "v6")):
        target = 256                       # 128 MiB VMEM, single TC
    else:
        target = 128                       # conservative default
    bp = ((batch + 7) // 8) * 8            # <=7 dead rows; no full-tile padding
    tb = min(target, bp)
    while bp % tb:                         # tile must divide the (rounded) batch
        tb -= 8
    if is_v7 and bp // tb < 2 and bp >= 16:
        half = max(8, (tb // 2) - ((tb // 2) % 8))
        while bp % half:
            half -= 8
        tb = half                          # keep both v7x TensorCores busy
    return tb, bp


def compressed_net_forward(x, w1_pt, b1_pt, w2_pt, b2_pt,
                           wf1_pt, bf1_pt, wf2_pt, bf2_pt, *, tb=None):
    """PyTorch-shaped params -> fused bf16 weight layout -> pallas_call."""
    assert x.ndim == 2 and x.shape[1] == L_IN
    f32, bf16 = jnp.float32, jnp.bfloat16
    B = x.shape[0]
    if tb is None:
        tb, Bp = _pick_tiling(B)
    else:
        assert tb % 8 == 0
        Bp = pl.cdiv(B, tb) * tb
    vmem_limit = (64 if tb > 128 else 32) * 1024 * 1024

    # ---- input: (B, 256) -> (ROWS, Bp, 8); row-group m holds x[:, 8m:8m+8].
    # One-off XLA reshape/transpose (~1 KiB/sample) that lets the kernel run
    # m-major and skip the in-kernel flatten relayout entirely.
    xg = x.astype(f32)
    if Bp != B:
        xg = jnp.pad(xg, ((0, Bp - B), (0, 0)))
    xg = xg.reshape(Bp, ROWS, 8).transpose(1, 0, 2)

    # ---- conv1 fused weight: W1[po+k, eo*64 + j*16 + ch] = w1[ch, 0, k],
    # with output position offset po = 2j + eo (even/odd-major for the pool).
    w1np = np.asarray(w1_pt, np.float32)                      # (16, 1, 3)
    w1big = np.zeros((10, 128), np.float32)
    for po in range(8):
        eo, j = po % 2, po // 2
        c0 = eo * 64 + j * 16
        for k in range(3):
            w1big[po + k, c0:c0 + 16] = w1np[:, 0, k]
    b1big = np.tile(np.asarray(b1_pt, np.float32), 8).reshape(1, 128)

    # ---- conv2 fused weight:
    # W2[16*(e+k) + ci, parity*64 + u*32 + co] = w2[co, ci, k], e = 2u+parity.
    w2np = np.asarray(w2_pt, np.float32)                      # (32, 16, 3)
    w2big = np.zeros((96, 128), np.float32)
    for e in range(4):
        u, parity = e // 2, e % 2
        c0 = parity * 64 + u * 32
        for k in range(3):
            w2big[16 * (e + k):16 * (e + k + 1), c0:c0 + 32] = w2np[:, :, k].T
    b2big = np.tile(np.asarray(b2_pt, np.float32), 4).reshape(1, 128)

    # ---- fc1, split per row-group m: kernel feature order is [m, u*32 + co]
    # with pool2 position p = 2m + u; PyTorch's flatten order is co*64 + p.
    wf1k = (np.asarray(wf1_pt, np.float32).T                  # [co*64 + p, nn]
            .reshape(32, 64, 128).transpose(1, 0, 2)          # [p, co, nn]
            .reshape(2048, 128)                               # [p*32 + co, nn]
            .reshape(ROWS, 64, 128))                          # [m, u*32+co, nn]
    bf1r = np.asarray(bf1_pt, np.float32).reshape(1, 128)

    # ---- fc2 padded to 128 lanes; unused logits pushed to NEG via f32 bias.
    wf2p = np.zeros((128, 128), np.float32)
    wf2p[:, :10] = np.asarray(wf2_pt, np.float32).T
    bf2p = np.full((1, 128), NEG, np.float32)
    bf2p[0, :10] = np.asarray(bf2_pt, np.float32)

    args = (xg,
            jnp.asarray(w1big, bf16), jnp.asarray(b1big, f32),
            jnp.asarray(w2big, bf16), jnp.asarray(b2big, f32),
            jnp.asarray(wf1k, bf16), jnp.asarray(bf1r, f32),
            jnp.asarray(wf2p, bf16), jnp.asarray(bf2p, f32))

    pin2 = lambda i: (0, 0)      # weights/biases: constant block -> VMEM resident
    pin3 = lambda i: (0, 0, 0)
    out = pl.pallas_call(
        compressed_net_kernel,
        out_shape=jax.ShapeDtypeStruct((Bp, 128), jnp.float32),
        grid_spec=pltpu.PrefetchScalarGridSpec(
            num_scalar_prefetch=0,
            grid=(Bp // tb,),
            in_specs=[
                pl.BlockSpec((ROWS, tb, 8), lambda i: (0, i, 0)),  # x (m-major)
                pl.BlockSpec((10, 128), pin2),        # conv1 fused weight (bf16)
                pl.BlockSpec((1, 128), pin2),         # conv1 bias (f32)
                pl.BlockSpec((96, 128), pin2),        # conv2 fused weight (bf16)
                pl.BlockSpec((1, 128), pin2),         # conv2 bias (f32)
                pl.BlockSpec((ROWS, 64, 128), pin3),  # fc1 weight blocks (bf16)
                pl.BlockSpec((1, 128), pin2),         # fc1 bias (f32)
                pl.BlockSpec((128, 128), pin2),       # fc2 weight, padded (bf16)
                pl.BlockSpec((1, 128), pin2),         # fc2 bias, padded (f32)
            ],
            out_specs=pl.BlockSpec((tb, 128), lambda i: (i, 0)),
        ),
        compiler_params=pltpu.CompilerParams(
            dimension_semantics=("parallel",),
            vmem_limit_bytes=vmem_limit,
        ),
    )(*args)
    return out[:B, :10]


def reference_forward(x, w1_pt, b1_pt, w2_pt, b2_pt,
                      wf1_pt, bf1_pt, wf2_pt, bf2_pt):
    """Pure-JAX reference mirroring the PyTorch forward (NCW)."""
    B = x.shape[0]
    h = x[:, None, :]                                     # (B, 1, 256)
    h = lax.conv_general_dilated(h, w1_pt, window_strides=(1,),
                                 padding=[(1, 1)],
                                 dimension_numbers=("NCH", "OIH", "NCH"))
    h = jax.nn.relu(h + b1_pt[None, :, None])
    h = h.reshape(B, 16, 128, 2).max(axis=-1)
    h = lax.conv_general_dilated(h, w2_pt, window_strides=(1,),
                                 padding=[(1, 1)],
                                 dimension_numbers=("NCH", "OIH", "NCH"))
    h = jax.nn.relu(h + b2_pt[None, :, None])
    h = h.reshape(B, 32, 64, 2).max(axis=-1)
    flat = h.reshape(B, 32 * 64)
    f1 = jax.nn.relu(flat @ wf1_pt.T + bf1_pt)
    logits = f1 @ wf2_pt.T + bf2_pt
    return jax.nn.log_softmax(logits, axis=1)


if __name__ == "__main__":
    B = 32
    key = jax.random.PRNGKey(0)
    ks = jax.random.split(key, 9)

    # Deterministic synthetic parameters (PyTorch-shaped).
    w1_pt = jax.random.normal(ks[0], (16, 1, 3), jnp.float32) * 0.2
    b1_pt = jax.random.normal(ks[1], (16,), jnp.float32) * 0.1
    w2_pt = jax.random.normal(ks[2], (32, 16, 3), jnp.float32) * 0.1
    b2_pt = jax.random.normal(ks[3], (32,), jnp.float32) * 0.1
    wf1_pt = jax.random.normal(ks[4], (128, 2048), jnp.float32) * 0.02
    bf1_pt = jax.random.normal(ks[5], (128,), jnp.float32) * 0.1
    wf2_pt = jax.random.normal(ks[6], (10, 128), jnp.float32) * 0.05
    bf2_pt = jax.random.normal(ks[7], (10,), jnp.float32) * 0.1
    x = jax.random.normal(ks[8], (B, L_IN), jnp.float32)

    out = compressed_net_forward(x, w1_pt, b1_pt, w2_pt, b2_pt,
                                 wf1_pt, bf1_pt, wf2_pt, bf2_pt)
    out = jax.block_until_ready(out)

    ref = reference_forward(x, w1_pt, b1_pt, w2_pt, b2_pt,
                            wf1_pt, bf1_pt, wf2_pt, bf2_pt)
    np.testing.assert_allclose(np.asarray(out), np.asarray(ref),
                               rtol=2e-2, atol=2e-2)
    print("KERNEL_OK")
</pallas_src>

<mosaic_0001>
module attributes {stable_mosaic.version = 11 : i64} {
  func.func @compressed_net_kernel(%arg0: i32, %arg1: memref<32x32x8xf32, #tpu.memory_space<vmem>>, %arg2: memref<10x128xbf16, #tpu.memory_space<vmem>>, %arg3: memref<1x128xf32, #tpu.memory_space<vmem>>, %arg4: memref<96x128xbf16, #tpu.memory_space<vmem>>, %arg5: memref<1x128xf32, #tpu.memory_space<vmem>>, %arg6: memref<32x64x128xbf16, #tpu.memory_space<vmem>>, %arg7: memref<1x128xf32, #tpu.memory_space<vmem>>, %arg8: memref<128x128xbf16, #tpu.memory_space<vmem>>, %arg9: memref<1x128xf32, #tpu.memory_space<vmem>>, %arg10: memref<32x128xf32, #tpu.memory_space<vmem>>) attributes {dimension_semantics = [#tpu.dimension_semantics<parallel>], iteration_bounds = array<i64: 1>, scalar_prefetch = 0 : i64, scratch_operands = 0 : i64, tpu.core_type = #tpu.core_type<tc>, window_params = [{transform_indices = @transform_0, window_bounds = array<i64: 32, 32, 8>}, {pipeline_mode = #tpu.pipeline_mode<synchronous>, transform_indices = @transform_1, window_bounds = array<i64: 10, 128>}, {pipeline_mode = #tpu.pipeline_mode<synchronous>, transform_indices = @transform_2, window_bounds = array<i64: 1, 128>}, {pipeline_mode = #tpu.pipeline_mode<synchronous>, transform_indices = @transform_3, window_bounds = array<i64: 96, 128>}, {pipeline_mode = #tpu.pipeline_mode<synchronous>, transform_indices = @transform_4, window_bounds = array<i64: 1, 128>}, {pipeline_mode = #tpu.pipeline_mode<synchronous>, transform_indices = @transform_5, window_bounds = array<i64: 32, 64, 128>}, {pipeline_mode = #tpu.pipeline_mode<synchronous>, transform_indices = @transform_6, window_bounds = array<i64: 1, 128>}, {pipeline_mode = #tpu.pipeline_mode<synchronous>, transform_indices = @transform_7, window_bounds = array<i64: 128, 128>}, {pipeline_mode = #tpu.pipeline_mode<synchronous>, transform_indices = @transform_8, window_bounds = array<i64: 1, 128>}, {transform_indices = @transform_9, window_bounds = array<i64: 32, 128>}]} {
    %c0 = arith.constant 0 : index
    %c0_0 = arith.constant 0 : index
    %c0_1 = arith.constant 0 : index
    %0 = vector.load %arg1[%c0, %c0_0, %c0_1] : memref<32x32x8xf32, #tpu.memory_space<vmem>>, vector<32x32x8xf32>
    %1 = vector.shape_cast %0 : vector<32x32x8xf32> to vector<1024x8xf32>
    %cst = arith.constant 0.000000e+00 : f32
    %2 = vector.broadcast %cst : f32 to vector<32x1xf32>
    %3 = vector.extract_strided_slice %1 {offsets = [0, 7], sizes = [992, 1], strides = [1, 1]} : vector<1024x8xf32> to vector<992x1xf32>
    %4 = tpu.concatenate %2, %3 in 0 : vector<32x1xf32>, vector<992x1xf32> -> vector<1024x1xf32>
    %5 = vector.extract_strided_slice %1 {offsets = [32, 0], sizes = [992, 1], strides = [1, 1]} : vector<1024x8xf32> to vector<992x1xf32>
    %6 = tpu.concatenate %5, %2 in 0 : vector<992x1xf32>, vector<32x1xf32> -> vector<1024x1xf32>
    %7 = tpu.concatenate %4, %1, %6 in 1 : vector<1024x1xf32>, vector<1024x8xf32>, vector<1024x1xf32> -> vector<1024x10xf32>
    %8 = arith.truncf %7 : vector<1024x10xf32> to vector<1024x10xbf16>
    %c0_2 = arith.constant 0 : index
    %c0_3 = arith.constant 0 : index
    %9 = vector.load %arg2[%c0_2, %c0_3] : memref<10x128xbf16, #tpu.memory_space<vmem>>, vector<10x128xbf16>
    %cst_4 = arith.constant dense<0.000000e+00> : vector<1024x128xf32>
    %10 = tpu.matmul %8, %9, %cst_4 {dimension_numbers = #tpu.dot_dimension_numbers<[1], [0], [0], [1], [0, 0, 1, 1], [], []>} : vector<1024x10xbf16>, vector<10x128xbf16>, vector<1024x128xf32> -> vector<1024x128xf32>
    %c0_5 = arith.constant 0 : index
    %c0_6 = arith.constant 0 : index
    %11 = vector.load %arg3[%c0_5, %c0_6] : memref<1x128xf32, #tpu.memory_space<vmem>>, vector<1x128xf32>
    %12 = vector.broadcast %11 : vector<1x128xf32> to vector<1024x128xf32>
    %13 = arith.addf %10, %12 : vector<1024x128xf32>
    %cst_7 = arith.constant 0.000000e+00 : f32
    %14 = vector.broadcast %cst_7 : f32 to vector<1024x128xf32>
    %15 = arith.maximumf %13, %14 : vector<1024x128xf32>
    %16 = vector.extract_strided_slice %15 {offsets = [0, 0], sizes = [1024, 64], strides = [1, 1]} : vector<1024x128xf32> to vector<1024x64xf32>
    %17 = vector.extract_strided_slice %15 {offsets = [0, 64], sizes = [1024, 64], strides = [1, 1]} : vector<1024x128xf32> to vector<1024x64xf32>
    %18 = arith.maximumf %16, %17 : vector<1024x64xf32>
    %cst_8 = arith.constant 0.000000e+00 : f32
    %19 = vector.broadcast %cst_8 : f32 to vector<32x16xf32>
    %20 = vector.extract_strided_slice %18 {offsets = [0, 48], sizes = [992, 16], strides = [1, 1]} : vector<1024x64xf32> to vector<992x16xf32>
    %21 = tpu.concatenate %19, %20 in 0 : vector<32x16xf32>, vector<992x16xf32> -> vector<1024x16xf32>
    %22 = vector.extract_strided_slice %18 {offsets = [32, 0], sizes = [992, 16], strides = [1, 1]} : vector<1024x64xf32> to vector<992x16xf32>
    %23 = tpu.concatenate %22, %19 in 0 : vector<992x16xf32>, vector<32x16xf32> -> vector<1024x16xf32>
    %24 = tpu.concatenate %21, %18, %23 in 1 : vector<1024x16xf32>, vector<1024x64xf32>, vector<1024x16xf32> -> vector<1024x96xf32>
    %25 = arith.truncf %24 : vector<1024x96xf32> to vector<1024x96xbf16>
    %c0_9 = arith.constant 0 : index
    %c0_10 = arith.constant 0 : index
    %26 = vector.load %arg4[%c0_9, %c0_10] : memref<96x128xbf16, #tpu.memory_space<vmem>>, vector<96x128xbf16>
    %cst_11 = arith.constant dense<0.000000e+00> : vector<1024x128xf32>
    %27 = tpu.matmul %25, %26, %cst_11 {dimension_numbers = #tpu.dot_dimension_numbers<[1], [0], [0], [1], [0, 0, 1, 1], [], []>} : vector<1024x96xbf16>, vector<96x128xbf16>, vector<1024x128xf32> -> vector<1024x128xf32>
    %c0_12 = arith.constant 0 : index
    %c0_13 = arith.constant 0 : index
    %28 = vector.load %arg5[%c0_12, %c0_13] : memref<1x128xf32, #tpu.memory_space<vmem>>, vector<1x128xf32>
    %29 = vector.broadcast %28 : vector<1x128xf32> to vector<1024x128xf32>
    %30 = arith.addf %27, %29 : vector<1024x128xf32>
    %cst_14 = arith.constant 0.000000e+00 : f32
    %31 = vector.broadcast %cst_14 : f32 to vector<1024x128xf32>
    %32 = arith.maximumf %30, %31 : vector<1024x128xf32>
    %33 = vector.extract_strided_slice %32 {offsets = [0, 0], sizes = [1024, 64], strides = [1, 1]} : vector<1024x128xf32> to vector<1024x64xf32>
    %34 = vector.extract_strided_slice %32 {offsets = [0, 64], sizes = [1024, 64], strides = [1, 1]} : vector<1024x128xf32> to vector<1024x64xf32>
    %35 = arith.maximumf %33, %34 : vector<1024x64xf32>
    %cst_15 = arith.constant 0.000000e+00 : f32
    %36 = vector.broadcast %cst_15 : f32 to vector<32x128xf32>
    %37 = vector.extract_strided_slice %35 {offsets = [0, 0], sizes = [32, 64], strides = [1, 1]} : vector<1024x64xf32> to vector<32x64xf32>
    %38 = arith.truncf %37 : vector<32x64xf32> to vector<32x64xbf16>
    %c0_16 = arith.constant 0 : index
    %c0_17 = arith.constant 0 : index
    %c0_18 = arith.constant 0 : index
    %39 = vector.load %arg6[%c0_16, %c0_17, %c0_18] : memref<32x64x128xbf16, #tpu.memory_space<vmem>>, vector<1x64x128xbf16>
    %40 = vector.shape_cast %39 : vector<1x64x128xbf16> to vector<64x128xbf16>
    %cst_19 = arith.constant dense<0.000000e+00> : vector<32x128xf32>
    %41 = tpu.matmul %38, %40, %cst_19 {dimension_numbers = #tpu.dot_dimension_numbers<[1], [0], [0], [1], [0, 0, 1, 1], [], []>} : vector<32x64xbf16>, vector<64x128xbf16>, vector<32x128xf32> -> vector<32x128xf32>
    %42 = arith.addf %36, %41 : vector<32x128xf32>
    %43 = vector.extract_strided_slice %35 {offsets = [32, 0], sizes = [32, 64], strides = [1, 1]} : vector<1024x64xf32> to vector<32x64xf32>
    %44 = arith.truncf %43 : vector<32x64xf32> to vector<32x64xbf16>
    %c1 = arith.constant 1 : index
    %c0_20 = arith.constant 0 : index
    %c0_21 = arith.constant 0 : index
    %45 = vector.load %arg6[%c1, %c0_20, %c0_21] : memref<32x64x128xbf16, #tpu.memory_space<vmem>>, vector<1x64x128xbf16>
    %46 = vector.shape_cast %45 : vector<1x64x128xbf16> to vector<64x128xbf16>
    %cst_22 = arith.constant dense<0.000000e+00> : vector<32x128xf32>
    %47 = tpu.matmul %44, %46, %cst_22 {dimension_numbers = #tpu.dot_dimension_numbers<[1], [0], [0], [1], [0, 0, 1, 1], [], []>} : vector<32x64xbf16>, vector<64x128xbf16>, vector<32x128xf32> -> vector<32x128xf32>
    %48 = arith.addf %42, %47 : vector<32x128xf32>
    %49 = vector.extract_strided_slice %35 {offsets = [64, 0], sizes = [32, 64], strides = [1, 1]} : vector<1024x64xf32> to vector<32x64xf32>
    %50 = arith.truncf %49 : vector<32x64xf32> to vector<32x64xbf16>
    %c2 = arith.constant 2 : index
    %c0_23 = arith.constant 0 : index
    %c0_24 = arith.constant 0 : index
    %51 = vector.load %arg6[%c2, %c0_23, %c0_24] : memref<32x64x128xbf16, #tpu.memory_space<vmem>>, vector<1x64x128xbf16>
    %52 = vector.shape_cast %51 : vector<1x64x128xbf16> to vector<64x128xbf16>
    %cst_25 = arith.constant dense<0.000000e+00> : vector<32x128xf32>
    %53 = tpu.matmul %50, %52, %cst_25 {dimension_numbers = #tpu.dot_dimension_numbers<[1], [0], [0], [1], [0, 0, 1, 1], [], []>} : vector<32x64xbf16>, vector<64x128xbf16>, vector<32x128xf32> -> vector<32x128xf32>
    %54 = arith.addf %48, %53 : vector<32x128xf32>
    %55 = vector.extract_strided_slice %35 {offsets = [96, 0], sizes = [32, 64], strides = [1, 1]} : vector<1024x64xf32> to vector<32x64xf32>
    %56 = arith.truncf %55 : vector<32x64xf32> to vector<32x64xbf16>
    %c3 = arith.constant 3 : index
    %c0_26 = arith.constant 0 : index
    %c0_27 = arith.constant 0 : index
    %57 = vector.load %arg6[%c3, %c0_26, %c0_27] : memref<32x64x128xbf16, #tpu.memory_space<vmem>>, vector<1x64x128xbf16>
    %58 = vector.shape_cast %57 : vector<1x64x128xbf16> to vector<64x128xbf16>
    %cst_28 = arith.constant dense<0.000000e+00> : vector<32x128xf32>
    %59 = tpu.matmul %56, %58, %cst_28 {dimension_numbers = #tpu.dot_dimension_numbers<[1], [0], [0], [1], [0, 0, 1, 1], [], []>} : vector<32x64xbf16>, vector<64x128xbf16>, vector<32x128xf32> -> vector<32x128xf32>
    %60 = arith.addf %54, %59 : vector<32x128xf32>
    %61 = vector.extract_strided_slice %35 {offsets = [128, 0], sizes = [32, 64], strides = [1, 1]} : vector<1024x64xf32> to vector<32x64xf32>
    %62 = arith.truncf %61 : vector<32x64xf32> to vector<32x64xbf16>
    %c4 = arith.constant 4 : index
    %c0_29 = arith.constant 0 : index
    %c0_30 = arith.constant 0 : index
    %63 = vector.load %arg6[%c4, %c0_29, %c0_30] : memref<32x64x128xbf16, #tpu.memory_space<vmem>>, vector<1x64x128xbf16>
    %64 = vector.shape_cast %63 : vector<1x64x128xbf16> to vector<64x128xbf16>
    %cst_31 = arith.constant dense<0.000000e+00> : vector<32x128xf32>
    %65 = tpu.matmul %62, %64, %cst_31 {dimension_numbers = #tpu.dot_dimension_numbers<[1], [0], [0], [1], [0, 0, 1, 1], [], []>} : vector<32x64xbf16>, vector<64x128xbf16>, vector<32x128xf32> -> vector<32x128xf32>
    %66 = arith.addf %60, %65 : vector<32x128xf32>
    %67 = vector.extract_strided_slice %35 {offsets = [160, 0], sizes = [32, 64], strides = [1, 1]} : vector<1024x64xf32> to vector<32x64xf32>
    %68 = arith.truncf %67 : vector<32x64xf32> to vector<32x64xbf16>
    %c5 = arith.constant 5 : index
    %c0_32 = arith.constant 0 : index
    %c0_33 = arith.constant 0 : index
    %69 = vector.load %arg6[%c5, %c0_32, %c0_33] : memref<32x64x128xbf16, #tpu.memory_space<vmem>>, vector<1x64x128xbf16>
    %70 = vector.shape_cast %69 : vector<1x64x128xbf16> to vector<64x128xbf16>
    %cst_34 = arith.constant dense<0.000000e+00> : vector<32x128xf32>
    %71 = tpu.matmul %68, %70, %cst_34 {dimension_numbers = #tpu.dot_dimension_numbers<[1], [0], [0], [1], [0, 0, 1, 1], [], []>} : vector<32x64xbf16>, vector<64x128xbf16>, vector<32x128xf32> -> vector<32x128xf32>
    %72 = arith.addf %66, %71 : vector<32x128xf32>
    %73 = vector.extract_strided_slice %35 {offsets = [192, 0], sizes = [32, 64], strides = [1, 1]} : vector<1024x64xf32> to vector<32x64xf32>
    %74 = arith.truncf %73 : vector<32x64xf32> to vector<32x64xbf16>
    %c6 = arith.constant 6 : index
    %c0_35 = arith.constant 0 : index
    %c0_36 = arith.constant 0 : index
    %75 = vector.load %arg6[%c6, %c0_35, %c0_36] : memref<32x64x128xbf16, #tpu.memory_space<vmem>>, vector<1x64x128xbf16>
    %76 = vector.shape_cast %75 : vector<1x64x128xbf16> to vector<64x128xbf16>
    %cst_37 = arith.constant dense<0.000000e+00> : vector<32x128xf32>
    %77 = tpu.matmul %74, %76, %cst_37 {dimension_numbers = #tpu.dot_dimension_numbers<[1], [0], [0], [1], [0, 0, 1, 1], [], []>} : vector<32x64xbf16>, vector<64x128xbf16>, vector<32x128xf32> -> vector<32x128xf32>
    %78 = arith.addf %72, %77 : vector<32x128xf32>
    %79 = vector.extract_strided_slice %35 {offsets = [224, 0], sizes = [32, 64], strides = [1, 1]} : vector<1024x64xf32> to vector<32x64xf32>
    %80 = arith.truncf %79 : vector<32x64xf32> to vector<32x64xbf16>
    %c7 = arith.constant 7 : index
    %c0_38 = arith.constant 0 : index
    %c0_39 = arith.constant 0 : index
    %81 = vector.load %arg6[%c7, %c0_38, %c0_39] : memref<32x64x128xbf16, #tpu.memory_space<vmem>>, vector<1x64x128xbf16>
    %82 = vector.shape_cast %81 : vector<1x64x128xbf16> to vector<64x128xbf16>
    %cst_40 = arith.constant dense<0.000000e+00> : vector<32x128xf32>
    %83 = tpu.matmul %80, %82, %cst_40 {dimension_numbers = #tpu.dot_dimension_numbers<[1], [0], [0], [1], [0, 0, 1, 1], [], []>} : vector<32x64xbf16>, vector<64x128xbf16>, vector<32x128xf32> -> vector<32x128xf32>
    %84 = arith.addf %78, %83 : vector<32x128xf32>
    %85 = vector.extract_strided_slice %35 {offsets = [256, 0], sizes = [32, 64], strides = [1, 1]} : vector<1024x64xf32> to vector<32x64xf32>
    %86 = arith.truncf %85 : vector<32x64xf32> to vector<32x64xbf16>
    %c8 = arith.constant 8 : index
    %c0_41 = arith.constant 0 : index
    %c0_42 = arith.constant 0 : index
    %87 = vector.load %arg6[%c8, %c0_41, %c0_42] : memref<32x64x128xbf16, #tpu.memory_space<vmem>>, vector<1x64x128xbf16>
    %88 = vector.shape_cast %87 : vector<1x64x128xbf16> to vector<64x128xbf16>
    %cst_43 = arith.constant dense<0.000000e+00> : vector<32x128xf32>
    %89 = tpu.matmul %86, %88, %cst_43 {dimension_numbers = #tpu.dot_dimension_numbers<[1], [0], [0], [1], [0, 0, 1, 1], [], []>} : vector<32x64xbf16>, vector<64x128xbf16>, vector<32x128xf32> -> vector<32x128xf32>
    %90 = arith.addf %84, %89 : vector<32x128xf32>
    %91 = vector.extract_strided_slice %35 {offsets = [288, 0], sizes = [32, 64], strides = [1, 1]} : vector<1024x64xf32> to vector<32x64xf32>
    %92 = arith.truncf %91 : vector<32x64xf32> to vector<32x64xbf16>
    %c9 = arith.constant 9 : index
    %c0_44 = arith.constant 0 : index
    %c0_45 = arith.constant 0 : index
    %93 = vector.load %arg6[%c9, %c0_44, %c0_45] : memref<32x64x128xbf16, #tpu.memory_space<vmem>>, vector<1x64x128xbf16>
    %94 = vector.shape_cast %93 : vector<1x64x128xbf16> to vector<64x128xbf16>
    %cst_46 = arith.constant dense<0.000000e+00> : vector<32x128xf32>
    %95 = tpu.matmul %92, %94, %cst_46 {dimension_numbers = #tpu.dot_dimension_numbers<[1], [0], [0], [1], [0, 0, 1, 1], [], []>} : vector<32x64xbf16>, vector<64x128xbf16>, vector<32x128xf32> -> vector<32x128xf32>
    %96 = arith.addf %90, %95 : vector<32x128xf32>
    %97 = vector.extract_strided_slice %35 {offsets = [320, 0], sizes = [32, 64], strides = [1, 1]} : vector<1024x64xf32> to vector<32x64xf32>
    %98 = arith.truncf %97 : vector<32x64xf32> to vector<32x64xbf16>
    %c10 = arith.constant 10 : index
    %c0_47 = arith.constant 0 : index
    %c0_48 = arith.constant 0 : index
    %99 = vector.load %arg6[%c10, %c0_47, %c0_48] : memref<32x64x128xbf16, #tpu.memory_space<vmem>>, vector<1x64x128xbf16>
    %100 = vector.shape_cast %99 : vector<1x64x128xbf16> to vector<64x128xbf16>
    %cst_49 = arith.constant dense<0.000000e+00> : vector<32x128xf32>
    %101 = tpu.matmul %98, %100, %cst_49 {dimension_numbers = #tpu.dot_dimension_numbers<[1], [0], [0], [1], [0, 0, 1, 1], [], []>} : vector<32x64xbf16>, vector<64x128xbf16>, vector<32x128xf32> -> vector<32x128xf32>
    %102 = arith.addf %96, %101 : vector<32x128xf32>
    %103 = vector.extract_strided_slice %35 {offsets = [352, 0], sizes = [32, 64], strides = [1, 1]} : vector<1024x64xf32> to vector<32x64xf32>
    %104 = arith.truncf %103 : vector<32x64xf32> to vector<32x64xbf16>
    %c11 = arith.constant 11 : index
    %c0_50 = arith.constant 0 : index
    %c0_51 = arith.constant 0 : index
    %105 = vector.load %arg6[%c11, %c0_50, %c0_51] : memref<32x64x128xbf16, #tpu.memory_space<vmem>>, vector<1x64x128xbf16>
    %106 = vector.shape_cast %105 : vector<1x64x128xbf16> to vector<64x128xbf16>
    %cst_52 = arith.constant dense<0.000000e+00> : vector<32x128xf32>
    %107 = tpu.matmul %104, %106, %cst_52 {dimension_numbers = #tpu.dot_dimension_numbers<[1], [0], [0], [1], [0, 0, 1, 1], [], []>} : vector<32x64xbf16>, vector<64x128xbf16>, vector<32x128xf32> -> vector<32x128xf32>
    %108 = arith.addf %102, %107 : vector<32x128xf32>
    %109 = vector.extract_strided_slice %35 {offsets = [384, 0], sizes = [32, 64], strides = [1, 1]} : vector<1024x64xf32> to vector<32x64xf32>
    %110 = arith.truncf %109 : vector<32x64xf32> to vector<32x64xbf16>
    %c12 = arith.constant 12 : index
    %c0_53 = arith.constant 0 : index
    %c0_54 = arith.constant 0 : index
    %111 = vector.load %arg6[%c12, %c0_53, %c0_54] : memref<32x64x128xbf16, #tpu.memory_space<vmem>>, vector<1x64x128xbf16>
    %112 = vector.shape_cast %111 : vector<1x64x128xbf16> to vector<64x128xbf16>
    %cst_55 = arith.constant dense<0.000000e+00> : vector<32x128xf32>
    %113 = tpu.matmul %110, %112, %cst_55 {dimension_numbers = #tpu.dot_dimension_numbers<[1], [0], [0], [1], [0, 0, 1, 1], [], []>} : vector<32x64xbf16>, vector<64x128xbf16>, vector<32x128xf32> -> vector<32x128xf32>
    %114 = arith.addf %108, %113 : vector<32x128xf32>
    %115 = vector.extract_strided_slice %35 {offsets = [416, 0], sizes = [32, 64], strides = [1, 1]} : vector<1024x64xf32> to vector<32x64xf32>
    %116 = arith.truncf %115 : vector<32x64xf32> to vector<32x64xbf16>
    %c13 = arith.constant 13 : index
    %c0_56 = arith.constant 0 : index
    %c0_57 = arith.constant 0 : index
    %117 = vector.load %arg6[%c13, %c0_56, %c0_57] : memref<32x64x128xbf16, #tpu.memory_space<vmem>>, vector<1x64x128xbf16>
    %118 = vector.shape_cast %117 : vector<1x64x128xbf16> to vector<64x128xbf16>
    %cst_58 = arith.constant dense<0.000000e+00> : vector<32x128xf32>
    %119 = tpu.matmul %116, %118, %cst_58 {dimension_numbers = #tpu.dot_dimension_numbers<[1], [0], [0], [1], [0, 0, 1, 1], [], []>} : vector<32x64xbf16>, vector<64x128xbf16>, vector<32x128xf32> -> vector<32x128xf32>
    %120 = arith.addf %114, %119 : vector<32x128xf32>
    %121 = vector.extract_strided_slice %35 {offsets = [448, 0], sizes = [32, 64], strides = [1, 1]} : vector<1024x64xf32> to vector<32x64xf32>
    %122 = arith.truncf %121 : vector<32x64xf32> to vector<32x64xbf16>
    %c14 = arith.constant 14 : index
    %c0_59 = arith.constant 0 : index
    %c0_60 = arith.constant 0 : index
    %123 = vector.load %arg6[%c14, %c0_59, %c0_60] : memref<32x64x128xbf16, #tpu.memory_space<vmem>>, vector<1x64x128xbf16>
    %124 = vector.shape_cast %123 : vector<1x64x128xbf16> to vector<64x128xbf16>
    %cst_61 = arith.constant dense<0.000000e+00> : vector<32x128xf32>
    %125 = tpu.matmul %122, %124, %cst_61 {dimension_numbers = #tpu.dot_dimension_numbers<[1], [0], [0], [1], [0, 0, 1, 1], [], []>} : vector<32x64xbf16>, vector<64x128xbf16>, vector<32x128xf32> -> vector<32x128xf32>
    %126 = arith.addf %120, %125 : vector<32x128xf32>
    %127 = vector.extract_strided_slice %35 {offsets = [480, 0], sizes = [32, 64], strides = [1, 1]} : vector<1024x64xf32> to vector<32x64xf32>
    %128 = arith.truncf %127 : vector<32x64xf32> to vector<32x64xbf16>
    %c15 = arith.constant 15 : index
    %c0_62 = arith.constant 0 : index
    %c0_63 = arith.constant 0 : index
    %129 = vector.load %arg6[%c15, %c0_62, %c0_63] : memref<32x64x128xbf16, #tpu.memory_space<vmem>>, vector<1x64x128xbf16>
    %130 = vector.shape_cast %129 : vector<1x64x128xbf16> to vector<64x128xbf16>
    %cst_64 = arith.constant dense<0.000000e+00> : vector<32x128xf32>
    %131 = tpu.matmul %128, %130, %cst_64 {dimension_numbers = #tpu.dot_dimension_numbers<[1], [0], [0], [1], [0, 0, 1, 1], [], []>} : vector<32x64xbf16>, vector<64x128xbf16>, vector<32x128xf32> -> vector<32x128xf32>
    %132 = arith.addf %126, %131 : vector<32x128xf32>
    %133 = vector.extract_strided_slice %35 {offsets = [512, 0], sizes = [32, 64], strides = [1, 1]} : vector<1024x64xf32> to vector<32x64xf32>
    %134 = arith.truncf %133 : vector<32x64xf32> to vector<32x64xbf16>
    %c16 = arith.constant 16 : index
    %c0_65 = arith.constant 0 : index
    %c0_66 = arith.constant 0 : index
    %135 = vector.load %arg6[%c16, %c0_65, %c0_66] : memref<32x64x128xbf16, #tpu.memory_space<vmem>>, vector<1x64x128xbf16>
    %136 = vector.shape_cast %135 : vector<1x64x128xbf16> to vector<64x128xbf16>
    %cst_67 = arith.constant dense<0.000000e+00> : vector<32x128xf32>
    %137 = tpu.matmul %134, %136, %cst_67 {dimension_numbers = #tpu.dot_dimension_numbers<[1], [0], [0], [1], [0, 0, 1, 1], [], []>} : vector<32x64xbf16>, vector<64x128xbf16>, vector<32x128xf32> -> vector<32x128xf32>
    %138 = arith.addf %132, %137 : vector<32x128xf32>
    %139 = vector.extract_strided_slice %35 {offsets = [544, 0], sizes = [32, 64], strides = [1, 1]} : vector<1024x64xf32> to vector<32x64xf32>
    %140 = arith.truncf %139 : vector<32x64xf32> to vector<32x64xbf16>
    %c17 = arith.constant 17 : index
    %c0_68 = arith.constant 0 : index
    %c0_69 = arith.constant 0 : index
    %141 = vector.load %arg6[%c17, %c0_68, %c0_69] : memref<32x64x128xbf16, #tpu.memory_space<vmem>>, vector<1x64x128xbf16>
    %142 = vector.shape_cast %141 : vector<1x64x128xbf16> to vector<64x128xbf16>
    %cst_70 = arith.constant dense<0.000000e+00> : vector<32x128xf32>
    %143 = tpu.matmul %140, %142, %cst_70 {dimension_numbers = #tpu.dot_dimension_numbers<[1], [0], [0], [1], [0, 0, 1, 1], [], []>} : vector<32x64xbf16>, vector<64x128xbf16>, vector<32x128xf32> -> vector<32x128xf32>
    %144 = arith.addf %138, %143 : vector<32x128xf32>
    %145 = vector.extract_strided_slice %35 {offsets = [576, 0], sizes = [32, 64], strides = [1, 1]} : vector<1024x64xf32> to vector<32x64xf32>
    %146 = arith.truncf %145 : vector<32x64xf32> to vector<32x64xbf16>
    %c18 = arith.constant 18 : index
    %c0_71 = arith.constant 0 : index
    %c0_72 = arith.constant 0 : index
    %147 = vector.load %arg6[%c18, %c0_71, %c0_72] : memref<32x64x128xbf16, #tpu.memory_space<vmem>>, vector<1x64x128xbf16>
    %148 = vector.shape_cast %147 : vector<1x64x128xbf16> to vector<64x128xbf16>
    %cst_73 = arith.constant dense<0.000000e+00> : vector<32x128xf32>
    %149 = tpu.matmul %146, %148, %cst_73 {dimension_numbers = #tpu.dot_dimension_numbers<[1], [0], [0], [1], [0, 0, 1, 1], [], []>} : vector<32x64xbf16>, vector<64x128xbf16>, vector<32x128xf32> -> vector<32x128xf32>
    %150 = arith.addf %144, %149 : vector<32x128xf32>
    %151 = vector.extract_strided_slice %35 {offsets = [608, 0], sizes = [32, 64], strides = [1, 1]} : vector<1024x64xf32> to vector<32x64xf32>
    %152 = arith.truncf %151 : vector<32x64xf32> to vector<32x64xbf16>
    %c19 = arith.constant 19 : index
    %c0_74 = arith.constant 0 : index
    %c0_75 = arith.constant 0 : index
    %153 = vector.load %arg6[%c19, %c0_74, %c0_75] : memref<32x64x128xbf16, #tpu.memory_space<vmem>>, vector<1x64x128xbf16>
    %154 = vector.shape_cast %153 : vector<1x64x128xbf16> to vector<64x128xbf16>
    %cst_76 = arith.constant dense<0.000000e+00> : vector<32x128xf32>
    %155 = tpu.matmul %152, %154, %cst_76 {dimension_numbers = #tpu.dot_dimension_numbers<[1], [0], [0], [1], [0, 0, 1, 1], [], []>} : vector<32x64xbf16>, vector<64x128xbf16>, vector<32x128xf32> -> vector<32x128xf32>
    %156 = arith.addf %150, %155 : vector<32x128xf32>
    %157 = vector.extract_strided_slice %35 {offsets = [640, 0], sizes = [32, 64], strides = [1, 1]} : vector<1024x64xf32> to vector<32x64xf32>
    %158 = arith.truncf %157 : vector<32x64xf32> to vector<32x64xbf16>
    %c20 = arith.constant 20 : index
    %c0_77 = arith.constant 0 : index
    %c0_78 = arith.constant 0 : index
    %159 = vector.load %arg6[%c20, %c0_77, %c0_78] : memref<32x64x128xbf16, #tpu.memory_space<vmem>>, vector<1x64x128xbf16>
    %160 = vector.shape_cast %159 : vector<1x64x128xbf16> to vector<64x128xbf16>
    %cst_79 = arith.constant dense<0.000000e+00> : vector<32x128xf32>
    %161 = tpu.matmul %158, %160, %cst_79 {dimension_numbers = #tpu.dot_dimension_numbers<[1], [0], [0], [1], [0, 0, 1, 1], [], []>} : vector<32x64xbf16>, vector<64x128xbf16>, vector<32x128xf32> -> vector<32x128xf32>
    %162 = arith.addf %156, %161 : vector<32x128xf32>
    %163 = vector.extract_strided_slice %35 {offsets = [672, 0], sizes = [32, 64], strides = [1, 1]} : vector<1024x64xf32> to vector<32x64xf32>
    %164 = arith.truncf %163 : vector<32x64xf32> to vector<32x64xbf16>
    %c21 = arith.constant 21 : index
    %c0_80 = arith.constant 0 : index
    %c0_81 = arith.constant 0 : index
    %165 = vector.load %arg6[%c21, %c0_80, %c0_81] : memref<32x64x128xbf16, #tpu.memory_space<vmem>>, vector<1x64x128xbf16>
    %166 = vector.shape_cast %165 : vector<1x64x128xbf16> to vector<64x128xbf16>
    %cst_82 = arith.constant dense<0.000000e+00> : vector<32x128xf32>
    %167 = tpu.matmul %164, %166, %cst_82 {dimension_numbers = #tpu.dot_dimension_numbers<[1], [0], [0], [1], [0, 0, 1, 1], [], []>} : vector<32x64xbf16>, vector<64x128xbf16>, vector<32x128xf32> -> vector<32x128xf32>
    %168 = arith.addf %162, %167 : vector<32x128xf32>
    %169 = vector.extract_strided_slice %35 {offsets = [704, 0], sizes = [32, 64], strides = [1, 1]} : vector<1024x64xf32> to vector<32x64xf32>
    %170 = arith.truncf %169 : vector<32x64xf32> to vector<32x64xbf16>
    %c22 = arith.constant 22 : index
    %c0_83 = arith.constant 0 : index
    %c0_84 = arith.constant 0 : index
    %171 = vector.load %arg6[%c22, %c0_83, %c0_84] : memref<32x64x128xbf16, #tpu.memory_space<vmem>>, vector<1x64x128xbf16>
    %172 = vector.shape_cast %171 : vector<1x64x128xbf16> to vector<64x128xbf16>
    %cst_85 = arith.constant dense<0.000000e+00> : vector<32x128xf32>
    %173 = tpu.matmul %170, %172, %cst_85 {dimension_numbers = #tpu.dot_dimension_numbers<[1], [0], [0], [1], [0, 0, 1, 1], [], []>} : vector<32x64xbf16>, vector<64x128xbf16>, vector<32x128xf32> -> vector<32x128xf32>
    %174 = arith.addf %168, %173 : vector<32x128xf32>
    %175 = vector.extract_strided_slice %35 {offsets = [736, 0], sizes = [32, 64], strides = [1, 1]} : vector<1024x64xf32> to vector<32x64xf32>
    %176 = arith.truncf %175 : vector<32x64xf32> to vector<32x64xbf16>
    %c23 = arith.constant 23 : index
    %c0_86 = arith.constant 0 : index
    %c0_87 = arith.constant 0 : index
    %177 = vector.load %arg6[%c23, %c0_86, %c0_87] : memref<32x64x128xbf16, #tpu.memory_space<vmem>>, vector<1x64x128xbf16>
    %178 = vector.shape_cast %177 : vector<1x64x128xbf16> to vector<64x128xbf16>
    %cst_88 = arith.constant dense<0.000000e+00> : vector<32x128xf32>
    %179 = tpu.matmul %176, %178, %cst_88 {dimension_numbers = #tpu.dot_dimension_numbers<[1], [0], [0], [1], [0, 0, 1, 1], [], []>} : vector<32x64xbf16>, vector<64x128xbf16>, vector<32x128xf32> -> vector<32x128xf32>
    %180 = arith.addf %174, %179 : vector<32x128xf32>
    %181 = vector.extract_strided_slice %35 {offsets = [768, 0], sizes = [32, 64], strides = [1, 1]} : vector<1024x64xf32> to vector<32x64xf32>
    %182 = arith.truncf %181 : vector<32x64xf32> to vector<32x64xbf16>
    %c24 = arith.constant 24 : index
    %c0_89 = arith.constant 0 : index
    %c0_90 = arith.constant 0 : index
    %183 = vector.load %arg6[%c24, %c0_89, %c0_90] : memref<32x64x128xbf16, #tpu.memory_space<vmem>>, vector<1x64x128xbf16>
    %184 = vector.shape_cast %183 : vector<1x64x128xbf16> to vector<64x128xbf16>
    %cst_91 = arith.constant dense<0.000000e+00> : vector<32x128xf32>
    %185 = tpu.matmul %182, %184, %cst_91 {dimension_numbers = #tpu.dot_dimension_numbers<[1], [0], [0], [1], [0, 0, 1, 1], [], []>} : vector<32x64xbf16>, vector<64x128xbf16>, vector<32x128xf32> -> vector<32x128xf32>
    %186 = arith.addf %180, %185 : vector<32x128xf32>
    %187 = vector.extract_strided_slice %35 {offsets = [800, 0], sizes = [32, 64], strides = [1, 1]} : vector<1024x64xf32> to vector<32x64xf32>
    %188 = arith.truncf %187 : vector<32x64xf32> to vector<32x64xbf16>
    %c25 = arith.constant 25 : index
    %c0_92 = arith.constant 0 : index
    %c0_93 = arith.constant 0 : index
    %189 = vector.load %arg6[%c25, %c0_92, %c0_93] : memref<32x64x128xbf16, #tpu.memory_space<vmem>>, vector<1x64x128xbf16>
    %190 = vector.shape_cast %189 : vector<1x64x128xbf16> to vector<64x128xbf16>
    %cst_94 = arith.constant dense<0.000000e+00> : vector<32x128xf32>
    %191 = tpu.matmul %188, %190, %cst_94 {dimension_numbers = #tpu.dot_dimension_numbers<[1], [0], [0], [1], [0, 0, 1, 1], [], []>} : vector<32x64xbf16>, vector<64x128xbf16>, vector<32x128xf32> -> vector<32x128xf32>
    %192 = arith.addf %186, %191 : vector<32x128xf32>
    %193 = vector.extract_strided_slice %35 {offsets = [832, 0], sizes = [32, 64], strides = [1, 1]} : vector<1024x64xf32> to vector<32x64xf32>
    %194 = arith.truncf %193 : vector<32x64xf32> to vector<32x64xbf16>
    %c26 = arith.constant 26 : index
    %c0_95 = arith.constant 0 : index
    %c0_96 = arith.constant 0 : index
    %195 = vector.load %arg6[%c26, %c0_95, %c0_96] : memref<32x64x128xbf16, #tpu.memory_space<vmem>>, vector<1x64x128xbf16>
    %196 = vector.shape_cast %195 : vector<1x64x128xbf16> to vector<64x128xbf16>
    %cst_97 = arith.constant dense<0.000000e+00> : vector<32x128xf32>
    %197 = tpu.matmul %194, %196, %cst_97 {dimension_numbers = #tpu.dot_dimension_numbers<[1], [0], [0], [1], [0, 0, 1, 1], [], []>} : vector<32x64xbf16>, vector<64x128xbf16>, vector<32x128xf32> -> vector<32x128xf32>
    %198 = arith.addf %192, %197 : vector<32x128xf32>
    %199 = vector.extract_strided_slice %35 {offsets = [864, 0], sizes = [32, 64], strides = [1, 1]} : vector<1024x64xf32> to vector<32x64xf32>
    %200 = arith.truncf %199 : vector<32x64xf32> to vector<32x64xbf16>
    %c27 = arith.constant 27 : index
    %c0_98 = arith.constant 0 : index
    %c0_99 = arith.constant 0 : index
    %201 = vector.load %arg6[%c27, %c0_98, %c0_99] : memref<32x64x128xbf16, #tpu.memory_space<vmem>>, vector<1x64x128xbf16>
    %202 = vector.shape_cast %201 : vector<1x64x128xbf16> to vector<64x128xbf16>
    %cst_100 = arith.constant dense<0.000000e+00> : vector<32x128xf32>
    %203 = tpu.matmul %200, %202, %cst_100 {dimension_numbers = #tpu.dot_dimension_numbers<[1], [0], [0], [1], [0, 0, 1, 1], [], []>} : vector<32x64xbf16>, vector<64x128xbf16>, vector<32x128xf32> -> vector<32x128xf32>
    %204 = arith.addf %198, %203 : vector<32x128xf32>
    %205 = vector.extract_strided_slice %35 {offsets = [896, 0], sizes = [32, 64], strides = [1, 1]} : vector<1024x64xf32> to vector<32x64xf32>
    %206 = arith.truncf %205 : vector<32x64xf32> to vector<32x64xbf16>
    %c28 = arith.constant 28 : index
    %c0_101 = arith.constant 0 : index
    %c0_102 = arith.constant 0 : index
    %207 = vector.load %arg6[%c28, %c0_101, %c0_102] : memref<32x64x128xbf16, #tpu.memory_space<vmem>>, vector<1x64x128xbf16>
    %208 = vector.shape_cast %207 : vector<1x64x128xbf16> to vector<64x128xbf16>
    %cst_103 = arith.constant dense<0.000000e+00> : vector<32x128xf32>
    %209 = tpu.matmul %206, %208, %cst_103 {dimension_numbers = #tpu.dot_dimension_numbers<[1], [0], [0], [1], [0, 0, 1, 1], [], []>} : vector<32x64xbf16>, vector<64x128xbf16>, vector<32x128xf32> -> vector<32x128xf32>
    %210 = arith.addf %204, %209 : vector<32x128xf32>
    %211 = vector.extract_strided_slice %35 {offsets = [928, 0], sizes = [32, 64], strides = [1, 1]} : vector<1024x64xf32> to vector<32x64xf32>
    %212 = arith.truncf %211 : vector<32x64xf32> to vector<32x64xbf16>
    %c29 = arith.constant 29 : index
    %c0_104 = arith.constant 0 : index
    %c0_105 = arith.constant 0 : index
    %213 = vector.load %arg6[%c29, %c0_104, %c0_105] : memref<32x64x128xbf16, #tpu.memory_space<vmem>>, vector<1x64x128xbf16>
    %214 = vector.shape_cast %213 : vector<1x64x128xbf16> to vector<64x128xbf16>
    %cst_106 = arith.constant dense<0.000000e+00> : vector<32x128xf32>
    %215 = tpu.matmul %212, %214, %cst_106 {dimension_numbers = #tpu.dot_dimension_numbers<[1], [0], [0], [1], [0, 0, 1, 1], [], []>} : vector<32x64xbf16>, vector<64x128xbf16>, vector<32x128xf32> -> vector<32x128xf32>
    %216 = arith.addf %210, %215 : vector<32x128xf32>
    %217 = vector.extract_strided_slice %35 {offsets = [960, 0], sizes = [32, 64], strides = [1, 1]} : vector<1024x64xf32> to vector<32x64xf32>
    %218 = arith.truncf %217 : vector<32x64xf32> to vector<32x64xbf16>
    %c30 = arith.constant 30 : index
    %c0_107 = arith.constant 0 : index
    %c0_108 = arith.constant 0 : index
    %219 = vector.load %arg6[%c30, %c0_107, %c0_108] : memref<32x64x128xbf16, #tpu.memory_space<vmem>>, vector<1x64x128xbf16>
    %220 = vector.shape_cast %219 : vector<1x64x128xbf16> to vector<64x128xbf16>
    %cst_109 = arith.constant dense<0.000000e+00> : vector<32x128xf32>
    %221 = tpu.matmul %218, %220, %cst_109 {dimension_numbers = #tpu.dot_dimension_numbers<[1], [0], [0], [1], [0, 0, 1, 1], [], []>} : vector<32x64xbf16>, vector<64x128xbf16>, vector<32x128xf32> -> vector<32x128xf32>
    %222 = arith.addf %216, %221 : vector<32x128xf32>
    %223 = vector.extract_strided_slice %35 {offsets = [992, 0], sizes = [32, 64], strides = [1, 1]} : vector<1024x64xf32> to vector<32x64xf32>
    %224 = arith.truncf %223 : vector<32x64xf32> to vector<32x64xbf16>
    %c31 = arith.constant 31 : index
    %c0_110 = arith.constant 0 : index
    %c0_111 = arith.constant 0 : index
    %225 = vector.load %arg6[%c31, %c0_110, %c0_111] : memref<32x64x128xbf16, #tpu.memory_space<vmem>>, vector<1x64x128xbf16>
    %226 = vector.shape_cast %225 : vector<1x64x128xbf16> to vector<64x128xbf16>
    %cst_112 = arith.constant dense<0.000000e+00> : vector<32x128xf32>
    %227 = tpu.matmul %224, %226, %cst_112 {dimension_numbers = #tpu.dot_dimension_numbers<[1], [0], [0], [1], [0, 0, 1, 1], [], []>} : vector<32x64xbf16>, vector<64x128xbf16>, vector<32x128xf32> -> vector<32x128xf32>
    %228 = arith.addf %222, %227 : vector<32x128xf32>
    %c0_113 = arith.constant 0 : index
    %c0_114 = arith.constant 0 : index
    %229 = vector.load %arg7[%c0_113, %c0_114] : memref<1x128xf32, #tpu.memory_space<vmem>>, vector<1x128xf32>
    %230 = vector.broadcast %229 : vector<1x128xf32> to vector<32x128xf32>
    %231 = arith.addf %228, %230 : vector<32x128xf32>
    %cst_115 = arith.constant 0.000000e+00 : f32
    %232 = vector.broadcast %cst_115 : f32 to vector<32x128xf32>
    %233 = arith.maximumf %231, %232 : vector<32x128xf32>
    %234 = arith.truncf %233 : vector<32x128xf32> to vector<32x128xbf16>
    %c0_116 = arith.constant 0 : index
    %c0_117 = arith.constant 0 : index
    %235 = vector.load %arg8[%c0_116, %c0_117] : memref<128x128xbf16, #tpu.memory_space<vmem>>, vector<128x128xbf16>
    %cst_118 = arith.constant dense<0.000000e+00> : vector<32x128xf32>
    %236 = tpu.matmul %234, %235, %cst_118 {dimension_numbers = #tpu.dot_dimension_numbers<[1], [0], [0], [1], [0, 0, 1, 1], [], []>} : vector<32x128xbf16>, vector<128x128xbf16>, vector<32x128xf32> -> vector<32x128xf32>
    %c0_119 = arith.constant 0 : index
    %c0_120 = arith.constant 0 : index
    %237 = vector.load %arg9[%c0_119, %c0_120] : memref<1x128xf32, #tpu.memory_space<vmem>>, vector<1x128xf32>
    %238 = vector.broadcast %237 : vector<1x128xf32> to vector<32x128xf32>
    %239 = arith.addf %236, %238 : vector<32x128xf32>
    %cst_121 = arith.constant dense<0xFF800000> : vector<32xf32>
    %240 = vector.multi_reduction <maximumf>, %239, %cst_121 [1] : vector<32x128xf32> to vector<32xf32>
    %241 = vector.shape_cast %240 : vector<32xf32> to vector<32x1xf32>
    %242 = vector.broadcast %241 : vector<32x1xf32> to vector<32x128xf32>
    %243 = arith.subf %239, %242 : vector<32x128xf32>
    %244 = math.exp %243 : vector<32x128xf32>
    %cst_122 = arith.constant dense<0.000000e+00> : vector<32xf32>
    %245 = vector.multi_reduction <add>, %244, %cst_122 [1] : vector<32x128xf32> to vector<32xf32>
    %246 = vector.shape_cast %245 : vector<32xf32> to vector<32x1xf32>
    %247 = math.log %246 : vector<32x1xf32>
    %248 = vector.broadcast %247 : vector<32x1xf32> to vector<32x128xf32>
    %249 = arith.subf %243, %248 : vector<32x128xf32>
    %c0_123 = arith.constant 0 : index
    %c0_124 = arith.constant 0 : index
    %250 = vector.load %arg10[%c0_123, %c0_124] : memref<32x128xf32, #tpu.memory_space<vmem>>, vector<32x128xf32>
    tpu.vector_store %arg10[%c0_123, %c0_124], %249 {strides = array<i32>} : memref<32x128xf32, #tpu.memory_space<vmem>>, vector<32x128xf32>,
    return
  }
  func.func @transform_0(%arg0: i32) -> (i32, i32, i32) {
    %c0_i32 = arith.constant 0 : i32
    %c0_i32_0 = arith.constant 0 : i32
    %c0_i32_1 = arith.constant 0 : i32
    return %c0_i32, %arg0, %c0_i32_0 : i32, i32, i32
  }
  func.func @transform_1(%arg0: i32) -> (i32, i32) {
    %c0_i32 = arith.constant 0 : i32
    %c0_i32_0 = arith.constant 0 : i32
    %c0_i32_1 = arith.constant 0 : i32
    return %c0_i32, %c0_i32_0 : i32, i32
  }
  func.func @transform_2(%arg0: i32) -> (i32, i32) {
    %c0_i32 = arith.constant 0 : i32
    %c0_i32_0 = arith.constant 0 : i32
    %c0_i32_1 = arith.constant 0 : i32
    return %c0_i32, %c0_i32_0 : i32, i32
  }
  func.func @transform_3(%arg0: i32) -> (i32, i32) {
    %c0_i32 = arith.constant 0 : i32
    %c0_i32_0 = arith.constant 0 : i32
    %c0_i32_1 = arith.constant 0 : i32
    return %c0_i32, %c0_i32_0 : i32, i32
  }
  func.func @transform_4(%arg0: i32) -> (i32, i32) {
    %c0_i32 = arith.constant 0 : i32
    %c0_i32_0 = arith.constant 0 : i32
    %c0_i32_1 = arith.constant 0 : i32
    return %c0_i32, %c0_i32_0 : i32, i32
  }
  func.func @transform_5(%arg0: i32) -> (i32, i32, i32) {
    %c0_i32 = arith.constant 0 : i32
    %c0_i32_0 = arith.constant 0 : i32
    %c0_i32_1 = arith.constant 0 : i32
    %c0_i32_2 = arith.constant 0 : i32
    return %c0_i32, %c0_i32_0, %c0_i32_1 : i32, i32, i32
  }
  func.func @transform_6(%arg0: i32) -> (i32, i32) {
    %c0_i32 = arith.constant 0 : i32
    %c0_i32_0 = arith.constant 0 : i32
    %c0_i32_1 = arith.constant 0 : i32
    return %c0_i32, %c0_i32_0 : i32, i32
  }
  func.func @transform_7(%arg0: i32) -> (i32, i32) {
    %c0_i32 = arith.constant 0 : i32
    %c0_i32_0 = arith.constant 0 : i32
    %c0_i32_1 = arith.constant 0 : i32
    return %c0_i32, %c0_i32_0 : i32, i32
  }
  func.func @transform_8(%arg0: i32) -> (i32, i32) {
    %c0_i32 = arith.constant 0 : i32
    %c0_i32_0 = arith.constant 0 : i32
    %c0_i32_1 = arith.constant 0 : i32
    return %c0_i32, %c0_i32_0 : i32, i32
  }
  func.func @transform_9(%arg0: i32) -> (i32, i32) {
    %c0_i32 = arith.constant 0 : i32
    %c0_i32_0 = arith.constant 0 : i32
    return %arg0, %c0_i32 : i32, i32
  }
}

</mosaic_0001>

<llo_original>
// kernel: tpu_custom_call.1
$region0: #{tpu_custom_call.1}
  #allocation0 [shape = 'u32[]', space=smem, size = 0x4, offset = 0x4, fixed_abs, tag = 'smem constant byte address 0x4 - core index']
  #allocation1 [shape = 'u32[144,128]{1,0:T(1,128)}', space=vmem, size = 0x12000, scoped, tag = 'internal scratch']
  %s0 = inlined_call_operand.vmem [shape: f32[32,32,8], index: 0, kind: input, shape index: {}]
  %s1 = inlined_call_operand.vmem [shape: bf16[10,128], index: 1, kind: input, shape index: {}]
  %s2 = inlined_call_operand.vmem [shape: f32[1,128], index: 2, kind: input, shape index: {}]
  %s3 = inlined_call_operand.vmem [shape: bf16[96,128], index: 3, kind: input, shape index: {}]
  %s4 = inlined_call_operand.vmem [shape: f32[1,128], index: 4, kind: input, shape index: {}]
  %s5 = inlined_call_operand.vmem [shape: bf16[32,64,128], index: 5, kind: input, shape index: {}]
  %s6 = inlined_call_operand.vmem [shape: f32[1,128], index: 6, kind: input, shape index: {}]
  %s7 = inlined_call_operand.vmem [shape: bf16[128,128], index: 7, kind: input, shape index: {}]
  %s8 = inlined_call_operand.vmem [shape: f32[1,128], index: 8, kind: input, shape index: {}]
  %s9 = inlined_call_operand.hbm [shape: f32[32,128], index: 9, kind: output, shape index: {}]
  %s10 = sld [smem:[#allocation0]]
  $region46: #{tpu_custom_call.1} parent=0
    _
  %s12 = ssub.s32 1, %s10
  %s13 = scalar_select 0, %s12, %s10
  $region1: #{tpu_custom_call.1} parent=0
    #allocation2 [shape = 'u8[16384]{0}', space=vmem, size = 0x4000, scoped, tag = 'output window, operand 0, single buffered']
    #allocation3 [shape = 's32[1]{0}', space=sflag, size = 0x4, scoped, tag = 'scoped memory for tpu_custom_call.1']
    %14 = vsyncpa [#allocation3], 0
    // Predicated region
    $region2: #{tpu_custom_call.1} parent=1 // pred_check
      _
    $region3: #{tpu_custom_call.1} parent=1 // pred_check_branch
      %16 = sbr.rel (0) target = $region5
    $region4: #{tpu_custom_call.1} parent=1 // pred_region
      _
    $region5: #{tpu_custom_call.1} parent=1 // pred_fallthru
      _
    // Predicated region
    $region6: #{tpu_custom_call.1} parent=1 // pred_check
      _
    $region7: #{tpu_custom_call.1} parent=1 // pred_check_branch
      %18 = sbr.rel (0) target = $region9
    $region8: #{tpu_custom_call.1} parent=1 // pred_region
      _
    $region9: #{tpu_custom_call.1} parent=1 // pred_fallthru
      _
    // Predicated region
    $region10: #{tpu_custom_call.1} parent=1 // pred_check
      _
    $region11: #{tpu_custom_call.1} parent=1 // pred_check_branch
      %20 = sbr.rel (0) target = $region13
    $region12: #{tpu_custom_call.1} parent=1 // pred_region
      _
    $region13: #{tpu_custom_call.1} parent=1 // pred_fallthru
      _
    // Predicated region
    $region14: #{tpu_custom_call.1} parent=1 // pred_check
      _
    $region15: #{tpu_custom_call.1} parent=1 // pred_check_branch
      %22 = sbr.rel (0) target = $region17
    $region16: #{tpu_custom_call.1} parent=1 // pred_region
      _
    $region17: #{tpu_custom_call.1} parent=1 // pred_fallthru
      _
    // Predicated region
    $region18: #{tpu_custom_call.1} parent=1 // pred_check
      _
    $region19: #{tpu_custom_call.1} parent=1 // pred_check_branch
      %24 = sbr.rel (0) target = $region21
    $region20: #{tpu_custom_call.1} parent=1 // pred_region
      _
    $region21: #{tpu_custom_call.1} parent=1 // pred_fallthru
      _
    // Predicated region
    $region22: #{tpu_custom_call.1} parent=1 // pred_check
      _
    $region23: #{tpu_custom_call.1} parent=1 // pred_check_branch
      %26 = sbr.rel (0) target = $region25
    $region24: #{tpu_custom_call.1} parent=1 // pred_region
      _
    $region25: #{tpu_custom_call.1} parent=1 // pred_fallthru
      _
    // Predicated region
    $region26: #{tpu_custom_call.1} parent=1 // pred_check
      _
    $region27: #{tpu_custom_call.1} parent=1 // pred_check_branch
      %28 = sbr.rel (0) target = $region29
    $region28: #{tpu_custom_call.1} parent=1 // pred_region
      _
    $region29: #{tpu_custom_call.1} parent=1 // pred_fallthru
      _
    // Predicated region
    $region30: #{tpu_custom_call.1} parent=1 // pred_check
      _
    $region31: #{tpu_custom_call.1} parent=1 // pred_check_branch
      %30 = sbr.rel (0) target = $region33
    $region32: #{tpu_custom_call.1} parent=1 // pred_region
      _
    $region33: #{tpu_custom_call.1} parent=1 // pred_fallthru
      _
    // Predicated region
    $region34: #{tpu_custom_call.1} parent=1 // pred_check
      _
    $region35: #{tpu_custom_call.1} parent=1 // pred_check_branch
      %32 = sbr.rel (0) target = $region37
    $region36: #{tpu_custom_call.1} parent=1 // pred_region
      _
    $region37: #{tpu_custom_call.1} parent=1 // pred_fallthru
      _
    %v34 = vld [vmem:[%s0] sm:$0xff]
    %v35 = vld [vmem:[%s0 + $0x8] sm:$0xff]
    %v36 = vld [vmem:[%s0 + $0x10] sm:$0xff]
    %v37 = vld [vmem:[%s0 + $0x18] sm:$0xff]
    %v38 = vld [vmem:[%s0 + $0x20] sm:$0xff]
    %v39 = vld [vmem:[%s0 + $0x28] sm:$0xff]
    %v40 = vld [vmem:[%s0 + $0x30] sm:$0xff]
    %v41 = vld [vmem:[%s0 + $0x38] sm:$0xff]
    %v42 = vld [vmem:[%s0 + $0x40] sm:$0xff]
    %v43 = vld [vmem:[%s0 + $0x48] sm:$0xff]
    %v44 = vld [vmem:[%s0 + $0x50] sm:$0xff]
    %v45 = vld [vmem:[%s0 + $0x58] sm:$0xff]
    %v46 = vld [vmem:[%s0 + $0x60] sm:$0xff]
    %v47 = vld [vmem:[%s0 + $0x68] sm:$0xff]
    %v48 = vld [vmem:[%s0 + $0x70] sm:$0xff]
    %v49 = vld [vmem:[%s0 + $0x78] sm:$0xff]
    %v50 = vld [vmem:[%s0 + $0x80] sm:$0xff]
    %v51 = vld [vmem:[%s0 + $0x88] sm:$0xff]
    %v52 = vld [vmem:[%s0 + $0x90] sm:$0xff]
    %v53 = vld [vmem:[%s0 + $0x98] sm:$0xff]
    %v54 = vld [vmem:[%s0 + $0xa0] sm:$0xff]
    %v55 = vld [vmem:[%s0 + $0xa8] sm:$0xff]
    %v56 = vld [vmem:[%s0 + $0xb0] sm:$0xff]
    %v57 = vld [vmem:[%s0 + $0xb8] sm:$0xff]
    %v58 = vld [vmem:[%s0 + $0xc0] sm:$0xff]
    %v59 = vld [vmem:[%s0 + $0xc8] sm:$0xff]
    %v60 = vld [vmem:[%s0 + $0xd0] sm:$0xff]
    %v61 = vld [vmem:[%s0 + $0xd8] sm:$0xff]
    %v62 = vld [vmem:[%s0 + $0xe0] sm:$0xff]
    %v63 = vld [vmem:[%s0 + $0xe8] sm:$0xff]
    %v64 = vld [vmem:[%s0 + $0xf0] sm:$0xff]
    %v65 = vld [vmem:[%s0 + $0xf8] sm:$0xff]
    %v66 = vld [vmem:[%s0 + $0x100] sm:$0xff]
    %v67 = vld [vmem:[%s0 + $0x108] sm:$0xff]
    %v68 = vld [vmem:[%s0 + $0x110] sm:$0xff]
    %v69 = vld [vmem:[%s0 + $0x118] sm:$0xff]
    %v70 = vld [vmem:[%s0 + $0x120] sm:$0xff]
    %v71 = vld [vmem:[%s0 + $0x128] sm:$0xff]
    %v72 = vld [vmem:[%s0 + $0x130] sm:$0xff]
    %v73 = vld [vmem:[%s0 + $0x138] sm:$0xff]
    %v74 = vld [vmem:[%s0 + $0x140] sm:$0xff]
    %v75 = vld [vmem:[%s0 + $0x148] sm:$0xff]
    %v76 = vld [vmem:[%s0 + $0x150] sm:$0xff]
    %v77 = vld [vmem:[%s0 + $0x158] sm:$0xff]
    %v78 = vld [vmem:[%s0 + $0x160] sm:$0xff]
    %v79 = vld [vmem:[%s0 + $0x168] sm:$0xff]
    %v80 = vld [vmem:[%s0 + $0x170] sm:$0xff]
    %v81 = vld [vmem:[%s0 + $0x178] sm:$0xff]
    %v82 = vld [vmem:[%s0 + $0x180] sm:$0xff]
    %v83 = vld [vmem:[%s0 + $0x188] sm:$0xff]
    %v84 = vld [vmem:[%s0 + $0x190] sm:$0xff]
    %v85 = vld [vmem:[%s0 + $0x198] sm:$0xff]
    %v86 = vld [vmem:[%s0 + $0x1a0] sm:$0xff]
    %v87 = vld [vmem:[%s0 + $0x1a8] sm:$0xff]
    %v88 = vld [vmem:[%s0 + $0x1b0] sm:$0xff]
    %v89 = vld [vmem:[%s0 + $0x1b8] sm:$0xff]
    %v90 = vld [vmem:[%s0 + $0x1c0] sm:$0xff]
    %v91 = vld [vmem:[%s0 + $0x1c8] sm:$0xff]
    %v92 = vld [vmem:[%s0 + $0x1d0] sm:$0xff]
    %v93 = vld [vmem:[%s0 + $0x1d8] sm:$0xff]
    %v94 = vld [vmem:[%s0 + $0x1e0] sm:$0xff]
    %v95 = vld [vmem:[%s0 + $0x1e8] sm:$0xff]
    %v96 = vld [vmem:[%s0 + $0x1f0] sm:$0xff]
    %v97 = vld [vmem:[%s0 + $0x1f8] sm:$0xff]
    %v98 = vld [vmem:[%s0 + $0x200] sm:$0xff]
    %v99 = vld [vmem:[%s0 + $0x208] sm:$0xff]
    %v100 = vld [vmem:[%s0 + $0x210] sm:$0xff]
    %v101 = vld [vmem:[%s0 + $0x218] sm:$0xff]
    %v102 = vld [vmem:[%s0 + $0x220] sm:$0xff]
    %v103 = vld [vmem:[%s0 + $0x228] sm:$0xff]
    %v104 = vld [vmem:[%s0 + $0x230] sm:$0xff]
    %v105 = vld [vmem:[%s0 + $0x238] sm:$0xff]
    %v106 = vld [vmem:[%s0 + $0x240] sm:$0xff]
    %v107 = vld [vmem:[%s0 + $0x248] sm:$0xff]
    %v108 = vld [vmem:[%s0 + $0x250] sm:$0xff]
    %v109 = vld [vmem:[%s0 + $0x258] sm:$0xff]
    %v110 = vld [vmem:[%s0 + $0x260] sm:$0xff]
    %v111 = vld [vmem:[%s0 + $0x268] sm:$0xff]
    %v112 = vld [vmem:[%s0 + $0x270] sm:$0xff]
    %v113 = vld [vmem:[%s0 + $0x278] sm:$0xff]
    %v114 = vld [vmem:[%s0 + $0x280] sm:$0xff]
    %v115 = vld [vmem:[%s0 + $0x288] sm:$0xff]
    %v116 = vld [vmem:[%s0 + $0x290] sm:$0xff]
    %v117 = vld [vmem:[%s0 + $0x298] sm:$0xff]
    %v118 = vld [vmem:[%s0 + $0x2a0] sm:$0xff]
    %v119 = vld [vmem:[%s0 + $0x2a8] sm:$0xff]
    %v120 = vld [vmem:[%s0 + $0x2b0] sm:$0xff]
    %v121 = vld [vmem:[%s0 + $0x2b8] sm:$0xff]
    %v122 = vld [vmem:[%s0 + $0x2c0] sm:$0xff]
    %v123 = vld [vmem:[%s0 + $0x2c8] sm:$0xff]
    %v124 = vld [vmem:[%s0 + $0x2d0] sm:$0xff]
    %v125 = vld [vmem:[%s0 + $0x2d8] sm:$0xff]
    %v126 = vld [vmem:[%s0 + $0x2e0] sm:$0xff]
    %v127 = vld [vmem:[%s0 + $0x2e8] sm:$0xff]
    %v128 = vld [vmem:[%s0 + $0x2f0] sm:$0xff]
    %v129 = vld [vmem:[%s0 + $0x2f8] sm:$0xff]
    %v130 = vld [vmem:[%s0 + $0x300] sm:$0xff]
    %v131 = vld [vmem:[%s0 + $0x308] sm:$0xff]
    %v132 = vld [vmem:[%s0 + $0x310] sm:$0xff]
    %v133 = vld [vmem:[%s0 + $0x318] sm:$0xff]
    %v134 = vld [vmem:[%s0 + $0x320] sm:$0xff]
    %v135 = vld [vmem:[%s0 + $0x328] sm:$0xff]
    %v136 = vld [vmem:[%s0 + $0x330] sm:$0xff]
    %v137 = vld [vmem:[%s0 + $0x338] sm:$0xff]
    %v138 = vld [vmem:[%s0 + $0x340] sm:$0xff]
    %v139 = vld [vmem:[%s0 + $0x348] sm:$0xff]
    %v140 = vld [vmem:[%s0 + $0x350] sm:$0xff]
    %v141 = vld [vmem:[%s0 + $0x358] sm:$0xff]
    %v142 = vld [vmem:[%s0 + $0x360] sm:$0xff]
    %v143 = vld [vmem:[%s0 + $0x368] sm:$0xff]
    %v144 = vld [vmem:[%s0 + $0x370] sm:$0xff]
    %v145 = vld [vmem:[%s0 + $0x378] sm:$0xff]
    %v146 = vld [vmem:[%s0 + $0x380] sm:$0xff]
    %v147 = vld [vmem:[%s0 + $0x388] sm:$0xff]
    %v148 = vld [vmem:[%s0 + $0x390] sm:$0xff]
    %v149 = vld [vmem:[%s0 + $0x398] sm:$0xff]
    %v150 = vld [vmem:[%s0 + $0x3a0] sm:$0xff]
    %v151 = vld [vmem:[%s0 + $0x3a8] sm:$0xff]
    %v152 = vld [vmem:[%s0 + $0x3b0] sm:$0xff]
    %v153 = vld [vmem:[%s0 + $0x3b8] sm:$0xff]
    %v154 = vld [vmem:[%s0 + $0x3c0] sm:$0xff]
    %v155 = vld [vmem:[%s0 + $0x3c8] sm:$0xff]
    %v156 = vld [vmem:[%s0 + $0x3d0] sm:$0xff]
    %v157 = vld [vmem:[%s0 + $0x3d8] sm:$0xff]
    %v158 = vld [vmem:[%s0 + $0x3e0] sm:$0xff]
    %v159 = vld [vmem:[%s0 + $0x3e8] sm:$0xff]
    %v160 = vld [vmem:[%s0 + $0x3f0] sm:$0xff]
    %v161 = vld [vmem:[%s0 + $0x3f8] sm:$0xff]
    %286 = vrot.lane.b32.xlu0 %v34, 121
    %v287 = vpop.permute.xlu0 %286
    %288 = vrot.lane.b32.xlu0 %v35, 121
    %v289 = vpop.permute.xlu0 %288
    %290 = vrot.lane.b32.xlu0 %v36, 121
    %v291 = vpop.permute.xlu0 %290
    %292 = vrot.lane.b32.xlu0 %v37, 121
    %v293 = vpop.permute.xlu0 %292
    %294 = vrot.lane.b32.xlu0 %v38, 121
    %v295 = vpop.permute.xlu0 %294
    %296 = vrot.lane.b32.xlu0 %v39, 121
    %v297 = vpop.permute.xlu0 %296
    %298 = vrot.lane.b32.xlu0 %v40, 121
    %v299 = vpop.permute.xlu0 %298
    %300 = vrot.lane.b32.xlu0 %v41, 121
    %v301 = vpop.permute.xlu0 %300
    %302 = vrot.lane.b32.xlu0 %v42, 121
    %v303 = vpop.permute.xlu0 %302
    %304 = vrot.lane.b32.xlu0 %v43, 121
    %v305 = vpop.permute.xlu0 %304
    %306 = vrot.lane.b32.xlu0 %v44, 121
    %v307 = vpop.permute.xlu0 %306
    %308 = vrot.lane.b32.xlu0 %v45, 121
    %v309 = vpop.permute.xlu0 %308
    %310 = vrot.lane.b32.xlu0 %v46, 121
    %v311 = vpop.permute.xlu0 %310
    %312 = vrot.lane.b32.xlu0 %v47, 121
    %v313 = vpop.permute.xlu0 %312
    %314 = vrot.lane.b32.xlu0 %v48, 121
    %v315 = vpop.permute.xlu0 %314
    %316 = vrot.lane.b32.xlu0 %v49, 121
    %v317 = vpop.permute.xlu0 %316
    %318 = vrot.lane.b32.xlu0 %v50, 121
    %v319 = vpop.permute.xlu0 %318
    %320 = vrot.lane.b32.xlu0 %v51, 121
    %v321 = vpop.permute.xlu0 %320
    %322 = vrot.lane.b32.xlu0 %v52, 121
    %v323 = vpop.permute.xlu0 %322
    %324 = vrot.lane.b32.xlu0 %v53, 121
    %v325 = vpop.permute.xlu0 %324
    %326 = vrot.lane.b32.xlu0 %v54, 121
    %v327 = vpop.permute.xlu0 %326
    %328 = vrot.lane.b32.xlu0 %v55, 121
    %v329 = vpop.permute.xlu0 %328
    %330 = vrot.lane.b32.xlu0 %v56, 121
    %v331 = vpop.permute.xlu0 %330
    %332 = vrot.lane.b32.xlu0 %v57, 121
    %v333 = vpop.permute.xlu0 %332
    %334 = vrot.lane.b32.xlu0 %v58, 121
    %v335 = vpop.permute.xlu0 %334
    %336 = vrot.lane.b32.xlu0 %v59, 121
    %v337 = vpop.permute.xlu0 %336
    %338 = vrot.lane.b32.xlu0 %v60, 121
    %v339 = vpop.permute.xlu0 %338
    %340 = vrot.lane.b32.xlu0 %v61, 121
    %v341 = vpop.permute.xlu0 %340
    %342 = vrot.lane.b32.xlu0 %v62, 121
    %v343 = vpop.permute.xlu0 %342
    %344 = vrot.lane.b32.xlu0 %v63, 121
    %v345 = vpop.permute.xlu0 %344
    %346 = vrot.lane.b32.xlu0 %v64, 121
    %v347 = vpop.permute.xlu0 %346
    %348 = vrot.lane.b32.xlu0 %v65, 121
    %v349 = vpop.permute.xlu0 %348
    %350 = vrot.lane.b32.xlu0 %v66, 121
    %v351 = vpop.permute.xlu0 %350
    %352 = vrot.lane.b32.xlu0 %v67, 121
    %v353 = vpop.permute.xlu0 %352
    %354 = vrot.lane.b32.xlu0 %v68, 121
    %v355 = vpop.permute.xlu0 %354
    %356 = vrot.lane.b32.xlu0 %v69, 121
    %v357 = vpop.permute.xlu0 %356
    %358 = vrot.lane.b32.xlu0 %v70, 121
    %v359 = vpop.permute.xlu0 %358
    %360 = vrot.lane.b32.xlu0 %v71, 121
    %v361 = vpop.permute.xlu0 %360
    %362 = vrot.lane.b32.xlu0 %v72, 121
    %v363 = vpop.permute.xlu0 %362
    %364 = vrot.lane.b32.xlu0 %v73, 121
    %v365 = vpop.permute.xlu0 %364
    %366 = vrot.lane.b32.xlu0 %v74, 121
    %v367 = vpop.permute.xlu0 %366
    %368 = vrot.lane.b32.xlu0 %v75, 121
    %v369 = vpop.permute.xlu0 %368
    %370 = vrot.lane.b32.xlu0 %v76, 121
    %v371 = vpop.permute.xlu0 %370
    %372 = vrot.lane.b32.xlu0 %v77, 121
    %v373 = vpop.permute.xlu0 %372
    %374 = vrot.lane.b32.xlu0 %v78, 121
    %v375 = vpop.permute.xlu0 %374
    %376 = vrot.lane.b32.xlu0 %v79, 121
    %v377 = vpop.permute.xlu0 %376
    %378 = vrot.lane.b32.xlu0 %v80, 121
    %v379 = vpop.permute.xlu0 %378
    %380 = vrot.lane.b32.xlu0 %v81, 121
    %v381 = vpop.permute.xlu0 %380
    %382 = vrot.lane.b32.xlu0 %v82, 121
    %v383 = vpop.permute.xlu0 %382
    %384 = vrot.lane.b32.xlu0 %v83, 121
    %v385 = vpop.permute.xlu0 %384
    %386 = vrot.lane.b32.xlu0 %v84, 121
    %v387 = vpop.permute.xlu0 %386
    %388 = vrot.lane.b32.xlu0 %v85, 121
    %v389 = vpop.permute.xlu0 %388
    %390 = vrot.lane.b32.xlu0 %v86, 121
    %v391 = vpop.permute.xlu0 %390
    %392 = vrot.lane.b32.xlu0 %v87, 121
    %v393 = vpop.permute.xlu0 %392
    %394 = vrot.lane.b32.xlu0 %v88, 121
    %v395 = vpop.permute.xlu0 %394
    %396 = vrot.lane.b32.xlu0 %v89, 121
    %v397 = vpop.permute.xlu0 %396
    %398 = vrot.lane.b32.xlu0 %v90, 121
    %v399 = vpop.permute.xlu0 %398
    %400 = vrot.lane.b32.xlu0 %v91, 121
    %v401 = vpop.permute.xlu0 %400
    %402 = vrot.lane.b32.xlu0 %v92, 121
    %v403 = vpop.permute.xlu0 %402
    %404 = vrot.lane.b32.xlu0 %v93, 121
    %v405 = vpop.permute.xlu0 %404
    %406 = vrot.lane.b32.xlu0 %v94, 121
    %v407 = vpop.permute.xlu0 %406
    %408 = vrot.lane.b32.xlu0 %v95, 121
    %v409 = vpop.permute.xlu0 %408
    %410 = vrot.lane.b32.xlu0 %v96, 121
    %v411 = vpop.permute.xlu0 %410
    %412 = vrot.lane.b32.xlu0 %v97, 121
    %v413 = vpop.permute.xlu0 %412
    %414 = vrot.lane.b32.xlu0 %v98, 121
    %v415 = vpop.permute.xlu0 %414
    %416 = vrot.lane.b32.xlu0 %v99, 121
    %v417 = vpop.permute.xlu0 %416
    %418 = vrot.lane.b32.xlu0 %v100, 121
    %v419 = vpop.permute.xlu0 %418
    %420 = vrot.lane.b32.xlu0 %v101, 121
    %v421 = vpop.permute.xlu0 %420
    %422 = vrot.lane.b32.xlu0 %v102, 121
    %v423 = vpop.permute.xlu0 %422
    %424 = vrot.lane.b32.xlu0 %v103, 121
    %v425 = vpop.permute.xlu0 %424
    %426 = vrot.lane.b32.xlu0 %v104, 121
    %v427 = vpop.permute.xlu0 %426
    %428 = vrot.lane.b32.xlu0 %v105, 121
    %v429 = vpop.permute.xlu0 %428
    %430 = vrot.lane.b32.xlu0 %v106, 121
    %v431 = vpop.permute.xlu0 %430
    %432 = vrot.lane.b32.xlu0 %v107, 121
    %v433 = vpop.permute.xlu0 %432
    %434 = vrot.lane.b32.xlu0 %v108, 121
    %v435 = vpop.permute.xlu0 %434
    %436 = vrot.lane.b32.xlu0 %v109, 121
    %v437 = vpop.permute.xlu0 %436
    %438 = vrot.lane.b32.xlu0 %v110, 121
    %v439 = vpop.permute.xlu0 %438
    %440 = vrot.lane.b32.xlu0 %v111, 121
    %v441 = vpop.permute.xlu0 %440
    %442 = vrot.lane.b32.xlu0 %v112, 121
    %v443 = vpop.permute.xlu0 %442
    %444 = vrot.lane.b32.xlu0 %v113, 121
    %v445 = vpop.permute.xlu0 %444
    %446 = vrot.lane.b32.xlu0 %v114, 121
    %v447 = vpop.permute.xlu0 %446
    %448 = vrot.lane.b32.xlu0 %v115, 121
    %v449 = vpop.permute.xlu0 %448
    %450 = vrot.lane.b32.xlu0 %v116, 121
    %v451 = vpop.permute.xlu0 %450
    %452 = vrot.lane.b32.xlu0 %v117, 121
    %v453 = vpop.permute.xlu0 %452
    %454 = vrot.lane.b32.xlu0 %v118, 121
    %v455 = vpop.permute.xlu0 %454
    %456 = vrot.lane.b32.xlu0 %v119, 121
    %v457 = vpop.permute.xlu0 %456
    %458 = vrot.lane.b32.xlu0 %v120, 121
    %v459 = vpop.permute.xlu0 %458
    %460 = vrot.lane.b32.xlu0 %v121, 121
    %v461 = vpop.permute.xlu0 %460
    %462 = vrot.lane.b32.xlu0 %v122, 121
    %v463 = vpop.permute.xlu0 %462
    %464 = vrot.lane.b32.xlu0 %v123, 121
    %v465 = vpop.permute.xlu0 %464
    %466 = vrot.lane.b32.xlu0 %v124, 121
    %v467 = vpop.permute.xlu0 %466
    %468 = vrot.lane.b32.xlu0 %v125, 121
    %v469 = vpop.permute.xlu0 %468
    %470 = vrot.lane.b32.xlu0 %v126, 121
    %v471 = vpop.permute.xlu0 %470
    %472 = vrot.lane.b32.xlu0 %v127, 121
    %v473 = vpop.permute.xlu0 %472
    %474 = vrot.lane.b32.xlu0 %v128, 121
    %v475 = vpop.permute.xlu0 %474
    %476 = vrot.lane.b32.xlu0 %v129, 121
    %v477 = vpop.permute.xlu0 %476
    %478 = vrot.lane.b32.xlu0 %v130, 121
    %v479 = vpop.permute.xlu0 %478
    %480 = vrot.lane.b32.xlu0 %v131, 121
    %v481 = vpop.permute.xlu0 %480
    %482 = vrot.lane.b32.xlu0 %v132, 121
    %v483 = vpop.permute.xlu0 %482
    %484 = vrot.lane.b32.xlu0 %v133, 121
    %v485 = vpop.permute.xlu0 %484
    %486 = vrot.lane.b32.xlu0 %v134, 121
    %v487 = vpop.permute.xlu0 %486
    %488 = vrot.lane.b32.xlu0 %v135, 121
    %v489 = vpop.permute.xlu0 %488
    %490 = vrot.lane.b32.xlu0 %v136, 121
    %v491 = vpop.permute.xlu0 %490
    %492 = vrot.lane.b32.xlu0 %v137, 121
    %v493 = vpop.permute.xlu0 %492
    %494 = vrot.lane.b32.xlu0 %v138, 121
    %v495 = vpop.permute.xlu0 %494
    %496 = vrot.lane.b32.xlu0 %v139, 121
    %v497 = vpop.permute.xlu0 %496
    %498 = vrot.lane.b32.xlu0 %v140, 121
    %v499 = vpop.permute.xlu0 %498
    %500 = vrot.lane.b32.xlu0 %v141, 121
    %v501 = vpop.permute.xlu0 %500
    %502 = vrot.lane.b32.xlu0 %v142, 121
    %v503 = vpop.permute.xlu0 %502
    %504 = vrot.lane.b32.xlu0 %v143, 121
    %v505 = vpop.permute.xlu0 %504
    %506 = vrot.lane.b32.xlu0 %v144, 121
    %v507 = vpop.permute.xlu0 %506
    %508 = vrot.lane.b32.xlu0 %v145, 121
    %v509 = vpop.permute.xlu0 %508
    %510 = vrot.lane.b32.xlu0 %v146, 121
    %v511 = vpop.permute.xlu0 %510
    %512 = vrot.lane.b32.xlu0 %v147, 121
    %v513 = vpop.permute.xlu0 %512
    %514 = vrot.lane.b32.xlu0 %v148, 121
    %v515 = vpop.permute.xlu0 %514
    %516 = vrot.lane.b32.xlu0 %v149, 121
    %v517 = vpop.permute.xlu0 %516
    %518 = vrot.lane.b32.xlu0 %v150, 121
    %v519 = vpop.permute.xlu0 %518
    %520 = vrot.lane.b32.xlu0 %v151, 121
    %v521 = vpop.permute.xlu0 %520
    %522 = vrot.lane.b32.xlu0 %v152, 121
    %v523 = vpop.permute.xlu0 %522
    %524 = vrot.lane.b32.xlu0 %v153, 121
    %v525 = vpop.permute.xlu0 %524
    %526 = vrot.lane.b32.xlu0 %v154, 121
    %v527 = vpop.permute.xlu0 %526
    %528 = vrot.lane.b32.xlu0 %v155, 121
    %v529 = vpop.permute.xlu0 %528
    %530 = vrot.lane.b32.xlu0 %v156, 121
    %v531 = vpop.permute.xlu0 %530
    %532 = vrot.lane.b32.xlu0 %v157, 121
    %v533 = vpop.permute.xlu0 %532
    %662 = vrot.lane.b32.xlu0 %v34, 1
    %v663 = vpop.permute.xlu0 %662
    %664 = vrot.lane.b32.xlu0 %v35, 1
    %v665 = vpop.permute.xlu0 %664
    %666 = vrot.lane.b32.xlu0 %v36, 1
    %v667 = vpop.permute.xlu0 %666
    %668 = vrot.lane.b32.xlu0 %v37, 1
    %v669 = vpop.permute.xlu0 %668
    %670 = vrot.lane.b32.xlu0 %v38, 1
    %v671 = vpop.permute.xlu0 %670
    %672 = vrot.lane.b32.xlu0 %v39, 1
    %v673 = vpop.permute.xlu0 %672
    %674 = vrot.lane.b32.xlu0 %v40, 1
    %v675 = vpop.permute.xlu0 %674
    %676 = vrot.lane.b32.xlu0 %v41, 1
    %v677 = vpop.permute.xlu0 %676
    %678 = vrot.lane.b32.xlu0 %v42, 1
    %v679 = vpop.permute.xlu0 %678
    %680 = vrot.lane.b32.xlu0 %v43, 1
    %v681 = vpop.permute.xlu0 %680
    %682 = vrot.lane.b32.xlu0 %v44, 1
    %v683 = vpop.permute.xlu0 %682
    %684 = vrot.lane.b32.xlu0 %v45, 1
    %v685 = vpop.permute.xlu0 %684
    %686 = vrot.lane.b32.xlu0 %v46, 1
    %v687 = vpop.permute.xlu0 %686
    %688 = vrot.lane.b32.xlu0 %v47, 1
    %v689 = vpop.permute.xlu0 %688
    %690 = vrot.lane.b32.xlu0 %v48, 1
    %v691 = vpop.permute.xlu0 %690
    %692 = vrot.lane.b32.xlu0 %v49, 1
    %v693 = vpop.permute.xlu0 %692
    %694 = vrot.lane.b32.xlu0 %v50, 1
    %v695 = vpop.permute.xlu0 %694
    %696 = vrot.lane.b32.xlu0 %v51, 1
    %v697 = vpop.permute.xlu0 %696
    %698 = vrot.lane.b32.xlu0 %v52, 1
    %v699 = vpop.permute.xlu0 %698
    %700 = vrot.lane.b32.xlu0 %v53, 1
    %v701 = vpop.permute.xlu0 %700
    %702 = vrot.lane.b32.xlu0 %v54, 1
    %v703 = vpop.permute.xlu0 %702
    %704 = vrot.lane.b32.xlu0 %v55, 1
    %v705 = vpop.permute.xlu0 %704
    %706 = vrot.lane.b32.xlu0 %v56, 1
    %v707 = vpop.permute.xlu0 %706
    %708 = vrot.lane.b32.xlu0 %v57, 1
    %v709 = vpop.permute.xlu0 %708
    %710 = vrot.lane.b32.xlu0 %v58, 1
    %v711 = vpop.permute.xlu0 %710
    %712 = vrot.lane.b32.xlu0 %v59, 1
    %v713 = vpop.permute.xlu0 %712
    %714 = vrot.lane.b32.xlu0 %v60, 1
    %v715 = vpop.permute.xlu0 %714
    %716 = vrot.lane.b32.xlu0 %v61, 1
    %v717 = vpop.permute.xlu0 %716
    %718 = vrot.lane.b32.xlu0 %v62, 1
    %v719 = vpop.permute.xlu0 %718
    %720 = vrot.lane.b32.xlu0 %v63, 1
    %v721 = vpop.permute.xlu0 %720
    %722 = vrot.lane.b32.xlu0 %v64, 1
    %v723 = vpop.permute.xlu0 %722
    %724 = vrot.lane.b32.xlu0 %v65, 1
    %v725 = vpop.permute.xlu0 %724
    %726 = vrot.lane.b32.xlu0 %v66, 1
    %v727 = vpop.permute.xlu0 %726
    %728 = vrot.lane.b32.xlu0 %v67, 1
    %v729 = vpop.permute.xlu0 %728
    %730 = vrot.lane.b32.xlu0 %v68, 1
    %v731 = vpop.permute.xlu0 %730
    %732 = vrot.lane.b32.xlu0 %v69, 1
    %v733 = vpop.permute.xlu0 %732
    %734 = vrot.lane.b32.xlu0 %v70, 1
    %v735 = vpop.permute.xlu0 %734
    %736 = vrot.lane.b32.xlu0 %v71, 1
    %v737 = vpop.permute.xlu0 %736
    %738 = vrot.lane.b32.xlu0 %v72, 1
    %v739 = vpop.permute.xlu0 %738
    %740 = vrot.lane.b32.xlu0 %v73, 1
    %v741 = vpop.permute.xlu0 %740
    %742 = vrot.lane.b32.xlu0 %v74, 1
    %v743 = vpop.permute.xlu0 %742
    %744 = vrot.lane.b32.xlu0 %v75, 1
    %v745 = vpop.permute.xlu0 %744
    %746 = vrot.lane.b32.xlu0 %v76, 1
    %v747 = vpop.permute.xlu0 %746
    %748 = vrot.lane.b32.xlu0 %v77, 1
    %v749 = vpop.permute.xlu0 %748
    %750 = vrot.lane.b32.xlu0 %v78, 1
    %v751 = vpop.permute.xlu0 %750
    %752 = vrot.lane.b32.xlu0 %v79, 1
    %v753 = vpop.permute.xlu0 %752
    %754 = vrot.lane.b32.xlu0 %v80, 1
    %v755 = vpop.permute.xlu0 %754
    %756 = vrot.lane.b32.xlu0 %v81, 1
    %v757 = vpop.permute.xlu0 %756
    %758 = vrot.lane.b32.xlu0 %v82, 1
    %v759 = vpop.permute.xlu0 %758
    %760 = vrot.lane.b32.xlu0 %v83, 1
    %v761 = vpop.permute.xlu0 %760
    %762 = vrot.lane.b32.xlu0 %v84, 1
    %v763 = vpop.permute.xlu0 %762
    %764 = vrot.lane.b32.xlu0 %v85, 1
    %v765 = vpop.permute.xlu0 %764
    %766 = vrot.lane.b32.xlu0 %v86, 1
    %v767 = vpop.permute.xlu0 %766
    %768 = vrot.lane.b32.xlu0 %v87, 1
    %v769 = vpop.permute.xlu0 %768
    %770 = vrot.lane.b32.xlu0 %v88, 1
    %v771 = vpop.permute.xlu0 %770
    %772 = vrot.lane.b32.xlu0 %v89, 1
    %v773 = vpop.permute.xlu0 %772
    %774 = vrot.lane.b32.xlu0 %v90, 1
    %v775 = vpop.permute.xlu0 %774
    %776 = vrot.lane.b32.xlu0 %v91, 1
    %v777 = vpop.permute.xlu0 %776
    %778 = vrot.lane.b32.xlu0 %v92, 1
    %v779 = vpop.permute.xlu0 %778
    %780 = vrot.lane.b32.xlu0 %v93, 1
    %v781 = vpop.permute.xlu0 %780
    %782 = vrot.lane.b32.xlu0 %v94, 1
    %v783 = vpop.permute.xlu0 %782
    %784 = vrot.lane.b32.xlu0 %v95, 1
    %v785 = vpop.permute.xlu0 %784
    %786 = vrot.lane.b32.xlu0 %v96, 1
    %v787 = vpop.permute.xlu0 %786
    %788 = vrot.lane.b32.xlu0 %v97, 1
    %v789 = vpop.permute.xlu0 %788
    %790 = vrot.lane.b32.xlu0 %v98, 1
    %v791 = vpop.permute.xlu0 %790
    %792 = vrot.lane.b32.xlu0 %v99, 1
    %v793 = vpop.permute.xlu0 %792
    %794 = vrot.lane.b32.xlu0 %v100, 1
    %v795 = vpop.permute.xlu0 %794
    %796 = vrot.lane.b32.xlu0 %v101, 1
    %v797 = vpop.permute.xlu0 %796
    %798 = vrot.lane.b32.xlu0 %v102, 1
    %v799 = vpop.permute.xlu0 %798
    %800 = vrot.lane.b32.xlu0 %v103, 1
    %v801 = vpop.permute.xlu0 %800
    %802 = vrot.lane.b32.xlu0 %v104, 1
    %v803 = vpop.permute.xlu0 %802
    %804 = vrot.lane.b32.xlu0 %v105, 1
    %v805 = vpop.permute.xlu0 %804
    %806 = vrot.lane.b32.xlu0 %v106, 1
    %v807 = vpop.permute.xlu0 %806
    %808 = vrot.lane.b32.xlu0 %v107, 1
    %v809 = vpop.permute.xlu0 %808
    %810 = vrot.lane.b32.xlu0 %v108, 1
    %v811 = vpop.permute.xlu0 %810
    %812 = vrot.lane.b32.xlu0 %v109, 1
    %v813 = vpop.permute.xlu0 %812
    %814 = vrot.lane.b32.xlu0 %v110, 1
    %v815 = vpop.permute.xlu0 %814
    %816 = vrot.lane.b32.xlu0 %v111, 1
    %v817 = vpop.permute.xlu0 %816
    %818 = vrot.lane.b32.xlu0 %v112, 1
    %v819 = vpop.permute.xlu0 %818
    %820 = vrot.lane.b32.xlu0 %v113, 1
    %v821 = vpop.permute.xlu0 %820
    %822 = vrot.lane.b32.xlu0 %v114, 1
    %v823 = vpop.permute.xlu0 %822
    %824 = vrot.lane.b32.xlu0 %v115, 1
    %v825 = vpop.permute.xlu0 %824
    %826 = vrot.lane.b32.xlu0 %v116, 1
    %v827 = vpop.permute.xlu0 %826
    %828 = vrot.lane.b32.xlu0 %v117, 1
    %v829 = vpop.permute.xlu0 %828
    %830 = vrot.lane.b32.xlu0 %v118, 1
    %v831 = vpop.permute.xlu0 %830
    %832 = vrot.lane.b32.xlu0 %v119, 1
    %v833 = vpop.permute.xlu0 %832
    %834 = vrot.lane.b32.xlu0 %v120, 1
    %v835 = vpop.permute.xlu0 %834
    %836 = vrot.lane.b32.xlu0 %v121, 1
    %v837 = vpop.permute.xlu0 %836
    %838 = vrot.lane.b32.xlu0 %v122, 1
    %v839 = vpop.permute.xlu0 %838
    %840 = vrot.lane.b32.xlu0 %v123, 1
    %v841 = vpop.permute.xlu0 %840
    %842 = vrot.lane.b32.xlu0 %v124, 1
    %v843 = vpop.permute.xlu0 %842
    %844 = vrot.lane.b32.xlu0 %v125, 1
    %v845 = vpop.permute.xlu0 %844
    %846 = vrot.lane.b32.xlu0 %v126, 1
    %v847 = vpop.permute.xlu0 %846
    %848 = vrot.lane.b32.xlu0 %v127, 1
    %v849 = vpop.permute.xlu0 %848
    %850 = vrot.lane.b32.xlu0 %v128, 1
    %v851 = vpop.permute.xlu0 %850
    %852 = vrot.lane.b32.xlu0 %v129, 1
    %v853 = vpop.permute.xlu0 %852
    %854 = vrot.lane.b32.xlu0 %v130, 1
    %v855 = vpop.permute.xlu0 %854
    %856 = vrot.lane.b32.xlu0 %v131, 1
    %v857 = vpop.permute.xlu0 %856
    %858 = vrot.lane.b32.xlu0 %v132, 1
    %v859 = vpop.permute.xlu0 %858
    %860 = vrot.lane.b32.xlu0 %v133, 1
    %v861 = vpop.permute.xlu0 %860
    %862 = vrot.lane.b32.xlu0 %v134, 1
    %v863 = vpop.permute.xlu0 %862
    %864 = vrot.lane.b32.xlu0 %v135, 1
    %v865 = vpop.permute.xlu0 %864
    %866 = vrot.lane.b32.xlu0 %v136, 1
    %v867 = vpop.permute.xlu0 %866
    %868 = vrot.lane.b32.xlu0 %v137, 1
    %v869 = vpop.permute.xlu0 %868
    %870 = vrot.lane.b32.xlu0 %v138, 1
    %v871 = vpop.permute.xlu0 %870
    %872 = vrot.lane.b32.xlu0 %v139, 1
    %v873 = vpop.permute.xlu0 %872
    %874 = vrot.lane.b32.xlu0 %v140, 1
    %v875 = vpop.permute.xlu0 %874
    %876 = vrot.lane.b32.xlu0 %v141, 1
    %v877 = vpop.permute.xlu0 %876
    %878 = vrot.lane.b32.xlu0 %v142, 1
    %v879 = vpop.permute.xlu0 %878
    %880 = vrot.lane.b32.xlu0 %v143, 1
    %v881 = vpop.permute.xlu0 %880
    %882 = vrot.lane.b32.xlu0 %v144, 1
    %v883 = vpop.permute.xlu0 %882
    %884 = vrot.lane.b32.xlu0 %v145, 1
    %v885 = vpop.permute.xlu0 %884
    %886 = vrot.lane.b32.xlu0 %v146, 1
    %v887 = vpop.permute.xlu0 %886
    %888 = vrot.lane.b32.xlu0 %v147, 1
    %v889 = vpop.permute.xlu0 %888
    %890 = vrot.lane.b32.xlu0 %v148, 1
    %v891 = vpop.permute.xlu0 %890
    %892 = vrot.lane.b32.xlu0 %v149, 1
    %v893 = vpop.permute.xlu0 %892
    %894 = vrot.lane.b32.xlu0 %v150, 1
    %v895 = vpop.permute.xlu0 %894
    %896 = vrot.lane.b32.xlu0 %v151, 1
    %v897 = vpop.permute.xlu0 %896
    %898 = vrot.lane.b32.xlu0 %v152, 1
    %v899 = vpop.permute.xlu0 %898
    %900 = vrot.lane.b32.xlu0 %v153, 1
    %v901 = vpop.permute.xlu0 %900
    %902 = vrot.lane.b32.xlu0 %v154, 1
    %v903 = vpop.permute.xlu0 %902
    %904 = vrot.lane.b32.xlu0 %v155, 1
    %v905 = vpop.permute.xlu0 %904
    %906 = vrot.lane.b32.xlu0 %v156, 1
    %v907 = vpop.permute.xlu0 %906
    %908 = vrot.lane.b32.xlu0 %v157, 1
    %v909 = vpop.permute.xlu0 %908
    %910 = vrot.lane.b32.xlu0 %v158, 1
    %v911 = vpop.permute.xlu0 %910
    %912 = vrot.lane.b32.xlu0 %v159, 1
    %v913 = vpop.permute.xlu0 %912
    %914 = vrot.lane.b32.xlu0 %v160, 1
    %v915 = vpop.permute.xlu0 %914
    %916 = vrot.lane.b32.xlu0 %v161, 1
    %v917 = vpop.permute.xlu0 %916
    %1047 = vrot.lane.b32.xlu0 %v38, 9
    %v1048 = vpop.permute.xlu0 %1047
    %1049 = vrot.lane.b32.xlu0 %v39, 9
    %v1050 = vpop.permute.xlu0 %1049
    %1051 = vrot.lane.b32.xlu0 %v40, 9
    %v1052 = vpop.permute.xlu0 %1051
    %1053 = vrot.lane.b32.xlu0 %v41, 9
    %v1054 = vpop.permute.xlu0 %1053
    %1055 = vrot.lane.b32.xlu0 %v42, 9
    %v1056 = vpop.permute.xlu0 %1055
    %1057 = vrot.lane.b32.xlu0 %v43, 9
    %v1058 = vpop.permute.xlu0 %1057
    %1059 = vrot.lane.b32.xlu0 %v44, 9
    %v1060 = vpop.permute.xlu0 %1059
    %1061 = vrot.lane.b32.xlu0 %v45, 9
    %v1062 = vpop.permute.xlu0 %1061
    %1063 = vrot.lane.b32.xlu0 %v46, 9
    %v1064 = vpop.permute.xlu0 %1063
    %1065 = vrot.lane.b32.xlu0 %v47, 9
    %v1066 = vpop.permute.xlu0 %1065
    %1067 = vrot.lane.b32.xlu0 %v48, 9
    %v1068 = vpop.permute.xlu0 %1067
    %1069 = vrot.lane.b32.xlu0 %v49, 9
    %v1070 = vpop.permute.xlu0 %1069
    %1071 = vrot.lane.b32.xlu0 %v50, 9
    %v1072 = vpop.permute.xlu0 %1071
    %1073 = vrot.lane.b32.xlu0 %v51, 9
    %v1074 = vpop.permute.xlu0 %1073
    %1075 = vrot.lane.b32.xlu0 %v52, 9
    %v1076 = vpop.permute.xlu0 %1075
    %1077 = vrot.lane.b32.xlu0 %v53, 9
    %v1078 = vpop.permute.xlu0 %1077
    %1079 = vrot.lane.b32.xlu0 %v54, 9
    %v1080 = vpop.permute.xlu0 %1079
    %1081 = vrot.lane.b32.xlu0 %v55, 9
    %v1082 = vpop.permute.xlu0 %1081
    %1083 = vrot.lane.b32.xlu0 %v56, 9
    %v1084 = vpop.permute.xlu0 %1083
    %1085 = vrot.lane.b32.xlu0 %v57, 9
    %v1086 = vpop.permute.xlu0 %1085
    %1087 = vrot.lane.b32.xlu0 %v58, 9
    %v1088 = vpop.permute.xlu0 %1087
    %1089 = vrot.lane.b32.xlu0 %v59, 9
    %v1090 = vpop.permute.xlu0 %1089
    %1091 = vrot.lane.b32.xlu0 %v60, 9
    %v1092 = vpop.permute.xlu0 %1091
    %1093 = vrot.lane.b32.xlu0 %v61, 9
    %v1094 = vpop.permute.xlu0 %1093
    %1095 = vrot.lane.b32.xlu0 %v62, 9
    %v1096 = vpop.permute.xlu0 %1095
    %1097 = vrot.lane.b32.xlu0 %v63, 9
    %v1098 = vpop.permute.xlu0 %1097
    %1099 = vrot.lane.b32.xlu0 %v64, 9
    %v1100 = vpop.permute.xlu0 %1099
    %1101 = vrot.lane.b32.xlu0 %v65, 9
    %v1102 = vpop.permute.xlu0 %1101
    %1103 = vrot.lane.b32.xlu0 %v66, 9
    %v1104 = vpop.permute.xlu0 %1103
    %1105 = vrot.lane.b32.xlu0 %v67, 9
    %v1106 = vpop.permute.xlu0 %1105
    %1107 = vrot.lane.b32.xlu0 %v68, 9
    %v1108 = vpop.permute.xlu0 %1107
    %1109 = vrot.lane.b32.xlu0 %v69, 9
    %v1110 = vpop.permute.xlu0 %1109
    %1111 = vrot.lane.b32.xlu0 %v70, 9
    %v1112 = vpop.permute.xlu0 %1111
    %1113 = vrot.lane.b32.xlu0 %v71, 9
    %v1114 = vpop.permute.xlu0 %1113
    %1115 = vrot.lane.b32.xlu0 %v72, 9
    %v1116 = vpop.permute.xlu0 %1115
    %1117 = vrot.lane.b32.xlu0 %v73, 9
    %v1118 = vpop.permute.xlu0 %1117
    %1119 = vrot.lane.b32.xlu0 %v74, 9
    %v1120 = vpop.permute.xlu0 %1119
    %1121 = vrot.lane.b32.xlu0 %v75, 9
    %v1122 = vpop.permute.xlu0 %1121
    %1123 = vrot.lane.b32.xlu0 %v76, 9
    %v1124 = vpop.permute.xlu0 %1123
    %1125 = vrot.lane.b32.xlu0 %v77, 9
    %v1126 = vpop.permute.xlu0 %1125
    %1127 = vrot.lane.b32.xlu0 %v78, 9
    %v1128 = vpop.permute.xlu0 %1127
    %1129 = vrot.lane.b32.xlu0 %v79, 9
    %v1130 = vpop.permute.xlu0 %1129
    %1131 = vrot.lane.b32.xlu0 %v80, 9
    %v1132 = vpop.permute.xlu0 %1131
    %1133 = vrot.lane.b32.xlu0 %v81, 9
    %v1134 = vpop.permute.xlu0 %1133
    %1135 = vrot.lane.b32.xlu0 %v82, 9
    %v1136 = vpop.permute.xlu0 %1135
    %1137 = vrot.lane.b32.xlu0 %v83, 9
    %v1138 = vpop.permute.xlu0 %1137
    %1139 = vrot.lane.b32.xlu0 %v84, 9
    %v1140 = vpop.permute.xlu0 %1139
    %1141 = vrot.lane.b32.xlu0 %v85, 9
    %v1142 = vpop.permute.xlu0 %1141
    %1143 = vrot.lane.b32.xlu0 %v86, 9
    %v1144 = vpop.permute.xlu0 %1143
    %1145 = vrot.lane.b32.xlu0 %v87, 9
    %v1146 = vpop.permute.xlu0 %1145
    %1147 = vrot.lane.b32.xlu0 %v88, 9
    %v1148 = vpop.permute.xlu0 %1147
    %1149 = vrot.lane.b32.xlu0 %v89, 9
    %v1150 = vpop.permute.xlu0 %1149
    %1151 = vrot.lane.b32.xlu0 %v90, 9
    %v1152 = vpop.permute.xlu0 %1151
    %1153 = vrot.lane.b32.xlu0 %v91, 9
    %v1154 = vpop.permute.xlu0 %1153
    %1155 = vrot.lane.b32.xlu0 %v92, 9
    %v1156 = vpop.permute.xlu0 %1155
    %1157 = vrot.lane.b32.xlu0 %v93, 9
    %v1158 = vpop.permute.xlu0 %1157
    %1159 = vrot.lane.b32.xlu0 %v94, 9
    %v1160 = vpop.permute.xlu0 %1159
    %1161 = vrot.lane.b32.xlu0 %v95, 9
    %v1162 = vpop.permute.xlu0 %1161
    %1163 = vrot.lane.b32.xlu0 %v96, 9
    %v1164 = vpop.permute.xlu0 %1163
    %1165 = vrot.lane.b32.xlu0 %v97, 9
    %v1166 = vpop.permute.xlu0 %1165
    %1167 = vrot.lane.b32.xlu0 %v98, 9
    %v1168 = vpop.permute.xlu0 %1167
    %1169 = vrot.lane.b32.xlu0 %v99, 9
    %v1170 = vpop.permute.xlu0 %1169
    %1171 = vrot.lane.b32.xlu0 %v100, 9
    %v1172 = vpop.permute.xlu0 %1171
    %1173 = vrot.lane.b32.xlu0 %v101, 9
    %v1174 = vpop.permute.xlu0 %1173
    %1175 = vrot.lane.b32.xlu0 %v102, 9
    %v1176 = vpop.permute.xlu0 %1175
    %1177 = vrot.lane.b32.xlu0 %v103, 9
    %v1178 = vpop.permute.xlu0 %1177
    %1179 = vrot.lane.b32.xlu0 %v104, 9
    %v1180 = vpop.permute.xlu0 %1179
    %1181 = vrot.lane.b32.xlu0 %v105, 9
    %v1182 = vpop.permute.xlu0 %1181
    %1183 = vrot.lane.b32.xlu0 %v106, 9
    %v1184 = vpop.permute.xlu0 %1183
    %1185 = vrot.lane.b32.xlu0 %v107, 9
    %v1186 = vpop.permute.xlu0 %1185
    %1187 = vrot.lane.b32.xlu0 %v108, 9
    %v1188 = vpop.permute.xlu0 %1187
    %1189 = vrot.lane.b32.xlu0 %v109, 9
    %v1190 = vpop.permute.xlu0 %1189
    %1191 = vrot.lane.b32.xlu0 %v110, 9
    %v1192 = vpop.permute.xlu0 %1191
    %1193 = vrot.lane.b32.xlu0 %v111, 9
    %v1194 = vpop.permute.xlu0 %1193
    %1195 = vrot.lane.b32.xlu0 %v112, 9
    %v1196 = vpop.permute.xlu0 %1195
    %1197 = vrot.lane.b32.xlu0 %v113, 9
    %v1198 = vpop.permute.xlu0 %1197
    %1199 = vrot.lane.b32.xlu0 %v114, 9
    %v1200 = vpop.permute.xlu0 %1199
    %1201 = vrot.lane.b32.xlu0 %v115, 9
    %v1202 = vpop.permute.xlu0 %1201
    %1203 = vrot.lane.b32.xlu0 %v116, 9
    %v1204 = vpop.permute.xlu0 %1203
    %1205 = vrot.lane.b32.xlu0 %v117, 9
    %v1206 = vpop.permute.xlu0 %1205
    %1207 = vrot.lane.b32.xlu0 %v118, 9
    %v1208 = vpop.permute.xlu0 %1207
    %1209 = vrot.lane.b32.xlu0 %v119, 9
    %v1210 = vpop.permute.xlu0 %1209
    %1211 = vrot.lane.b32.xlu0 %v120, 9
    %v1212 = vpop.permute.xlu0 %1211
    %1213 = vrot.lane.b32.xlu0 %v121, 9
    %v1214 = vpop.permute.xlu0 %1213
    %1215 = vrot.lane.b32.xlu0 %v122, 9
    %v1216 = vpop.permute.xlu0 %1215
    %1217 = vrot.lane.b32.xlu0 %v123, 9
    %v1218 = vpop.permute.xlu0 %1217
    %1219 = vrot.lane.b32.xlu0 %v124, 9
    %v1220 = vpop.permute.xlu0 %1219
    %1221 = vrot.lane.b32.xlu0 %v125, 9
    %v1222 = vpop.permute.xlu0 %1221
    %1223 = vrot.lane.b32.xlu0 %v126, 9
    %v1224 = vpop.permute.xlu0 %1223
    %1225 = vrot.lane.b32.xlu0 %v127, 9
    %v1226 = vpop.permute.xlu0 %1225
    %1227 = vrot.lane.b32.xlu0 %v128, 9
    %v1228 = vpop.permute.xlu0 %1227
    %1229 = vrot.lane.b32.xlu0 %v129, 9
    %v1230 = vpop.permute.xlu0 %1229
    %1231 = vrot.lane.b32.xlu0 %v130, 9
    %v1232 = vpop.permute.xlu0 %1231
    %1233 = vrot.lane.b32.xlu0 %v131, 9
    %v1234 = vpop.permute.xlu0 %1233
    %1235 = vrot.lane.b32.xlu0 %v132, 9
    %v1236 = vpop.permute.xlu0 %1235
    %1237 = vrot.lane.b32.xlu0 %v133, 9
    %v1238 = vpop.permute.xlu0 %1237
    %1239 = vrot.lane.b32.xlu0 %v134, 9
    %v1240 = vpop.permute.xlu0 %1239
    %1241 = vrot.lane.b32.xlu0 %v135, 9
    %v1242 = vpop.permute.xlu0 %1241
    %1243 = vrot.lane.b32.xlu0 %v136, 9
    %v1244 = vpop.permute.xlu0 %1243
    %1245 = vrot.lane.b32.xlu0 %v137, 9
    %v1246 = vpop.permute.xlu0 %1245
    %1247 = vrot.lane.b32.xlu0 %v138, 9
    %v1248 = vpop.permute.xlu0 %1247
    %1249 = vrot.lane.b32.xlu0 %v139, 9
    %v1250 = vpop.permute.xlu0 %1249
    %1251 = vrot.lane.b32.xlu0 %v140, 9
    %v1252 = vpop.permute.xlu0 %1251
    %1253 = vrot.lane.b32.xlu0 %v141, 9
    %v1254 = vpop.permute.xlu0 %1253
    %1255 = vrot.lane.b32.xlu0 %v142, 9
    %v1256 = vpop.permute.xlu0 %1255
    %1257 = vrot.lane.b32.xlu0 %v143, 9
    %v1258 = vpop.permute.xlu0 %1257
    %1259 = vrot.lane.b32.xlu0 %v144, 9
    %v1260 = vpop.permute.xlu0 %1259
    %1261 = vrot.lane.b32.xlu0 %v145, 9
    %v1262 = vpop.permute.xlu0 %1261
    %1263 = vrot.lane.b32.xlu0 %v146, 9
    %v1264 = vpop.permute.xlu0 %1263
    %1265 = vrot.lane.b32.xlu0 %v147, 9
    %v1266 = vpop.permute.xlu0 %1265
    %1267 = vrot.lane.b32.xlu0 %v148, 9
    %v1268 = vpop.permute.xlu0 %1267
    %1269 = vrot.lane.b32.xlu0 %v149, 9
    %v1270 = vpop.permute.xlu0 %1269
    %1271 = vrot.lane.b32.xlu0 %v150, 9
    %v1272 = vpop.permute.xlu0 %1271
    %1273 = vrot.lane.b32.xlu0 %v151, 9
    %v1274 = vpop.permute.xlu0 %1273
    %1275 = vrot.lane.b32.xlu0 %v152, 9
    %v1276 = vpop.permute.xlu0 %1275
    %1277 = vrot.lane.b32.xlu0 %v153, 9
    %v1278 = vpop.permute.xlu0 %1277
    %1279 = vrot.lane.b32.xlu0 %v154, 9
    %v1280 = vpop.permute.xlu0 %1279
    %1281 = vrot.lane.b32.xlu0 %v155, 9
    %v1282 = vpop.permute.xlu0 %1281
    %1283 = vrot.lane.b32.xlu0 %v156, 9
    %v1284 = vpop.permute.xlu0 %1283
    %1285 = vrot.lane.b32.xlu0 %v157, 9
    %v1286 = vpop.permute.xlu0 %1285
    %1287 = vrot.lane.b32.xlu0 %v158, 9
    %v1288 = vpop.permute.xlu0 %1287
    %1289 = vrot.lane.b32.xlu0 %v159, 9
    %v1290 = vpop.permute.xlu0 %1289
    %1291 = vrot.lane.b32.xlu0 %v160, 9
    %v1292 = vpop.permute.xlu0 %1291
    %1293 = vrot.lane.b32.xlu0 %v161, 9
    %v1294 = vpop.permute.xlu0 %1293
    %1295 = vrot.lane.b32.xlu0 0.0, 9
    %v1296 = vpop.permute.xlu0 %1295
    %vm1422 = vcmask 7168
    %v1423 = vsel %vm1422, 0.0, %v663
    %v1424 = vsel %vm1422, 0.0, %v665
    %v1425 = vsel %vm1422, 0.0, %v667
    %v1426 = vsel %vm1422, 0.0, %v669
    %v1427 = vsel %vm1422, %v287, %v671
    %v1428 = vsel %vm1422, %v289, %v673
    %v1429 = vsel %vm1422, %v291, %v675
    %v1430 = vsel %vm1422, %v293, %v677
    %v1431 = vsel %vm1422, %v295, %v679
    %v1432 = vsel %vm1422, %v297, %v681
    %v1433 = vsel %vm1422, %v299, %v683
    %v1434 = vsel %vm1422, %v301, %v685
    %v1435 = vsel %vm1422, %v303, %v687
    %v1436 = vsel %vm1422, %v305, %v689
    %v1437 = vsel %vm1422, %v307, %v691
    %v1438 = vsel %vm1422, %v309, %v693
    %v1439 = vsel %vm1422, %v311, %v695
    %v1440 = vsel %vm1422, %v313, %v697
    %v1441 = vsel %vm1422, %v315, %v699
    %v1442 = vsel %vm1422, %v317, %v701
    %v1443 = vsel %vm1422, %v319, %v703
    %v1444 = vsel %vm1422, %v321, %v705
    %v1445 = vsel %vm1422, %v323, %v707
    %v1446 = vsel %vm1422, %v325, %v709
    %v1447 = vsel %vm1422, %v327, %v711
    %v1448 = vsel %vm1422, %v329, %v713
    %v1449 = vsel %vm1422, %v331, %v715
    %v1450 = vsel %vm1422, %v333, %v717
    %v1451 = vsel %vm1422, %v335, %v719
    %v1452 = vsel %vm1422, %v337, %v721
    %v1453 = vsel %vm1422, %v339, %v723
    %v1454 = vsel %vm1422, %v341, %v725
    %v1455 = vsel %vm1422, %v343, %v727
    %v1456 = vsel %vm1422, %v345, %v729
    %v1457 = vsel %vm1422, %v347, %v731
    %v1458 = vsel %vm1422, %v349, %v733
    %v1459 = vsel %vm1422, %v351, %v735
    %v1460 = vsel %vm1422, %v353, %v737
    %v1461 = vsel %vm1422, %v355, %v739
    %v1462 = vsel %vm1422, %v357, %v741
    %v1463 = vsel %vm1422, %v359, %v743
    %v1464 = vsel %vm1422, %v361, %v745
    %v1465 = vsel %vm1422, %v363, %v747
    %v1466 = vsel %vm1422, %v365, %v749
    %v1467 = vsel %vm1422, %v367, %v751
    %v1468 = vsel %vm1422, %v369, %v753
    %v1469 = vsel %vm1422, %v371, %v755
    %v1470 = vsel %vm1422, %v373, %v757
    %v1471 = vsel %vm1422, %v375, %v759
    %v1472 = vsel %vm1422, %v377, %v761
    %v1473 = vsel %vm1422, %v379, %v763
    %v1474 = vsel %vm1422, %v381, %v765
    %v1475 = vsel %vm1422, %v383, %v767
    %v1476 = vsel %vm1422, %v385, %v769
    %v1477 = vsel %vm1422, %v387, %v771
    %v1478 = vsel %vm1422, %v389, %v773
    %v1479 = vsel %vm1422, %v391, %v775
    %v1480 = vsel %vm1422, %v393, %v777
    %v1481 = vsel %vm1422, %v395, %v779
    %v1482 = vsel %vm1422, %v397, %v781
    %v1483 = vsel %vm1422, %v399, %v783
    %v1484 = vsel %vm1422, %v401, %v785
    %v1485 = vsel %vm1422, %v403, %v787
    %v1486 = vsel %vm1422, %v405, %v789
    %v1487 = vsel %vm1422, %v407, %v791
    %v1488 = vsel %vm1422, %v409, %v793
    %v1489 = vsel %vm1422, %v411, %v795
    %v1490 = vsel %vm1422, %v413, %v797
    %v1491 = vsel %vm1422, %v415, %v799
    %v1492 = vsel %vm1422, %v417, %v801
    %v1493 = vsel %vm1422, %v419, %v803
    %v1494 = vsel %vm1422, %v421, %v805
    %v1495 = vsel %vm1422, %v423, %v807
    %v1496 = vsel %vm1422, %v425, %v809
    %v1497 = vsel %vm1422, %v427, %v811
    %v1498 = vsel %vm1422, %v429, %v813
    %v1499 = vsel %vm1422, %v431, %v815
    %v1500 = vsel %vm1422, %v433, %v817
    %v1501 = vsel %vm1422, %v435, %v819
    %v1502 = vsel %vm1422, %v437, %v821
    %v1503 = vsel %vm1422, %v439, %v823
    %v1504 = vsel %vm1422, %v441, %v825
    %v1505 = vsel %vm1422, %v443, %v827
    %v1506 = vsel %vm1422, %v445, %v829
    %v1507 = vsel %vm1422, %v447, %v831
    %v1508 = vsel %vm1422, %v449, %v833
    %v1509 = vsel %vm1422, %v451, %v835
    %v1510 = vsel %vm1422, %v453, %v837
    %v1511 = vsel %vm1422, %v455, %v839
    %v1512 = vsel %vm1422, %v457, %v841
    %v1513 = vsel %vm1422, %v459, %v843
    %v1514 = vsel %vm1422, %v461, %v845
    %v1515 = vsel %vm1422, %v463, %v847
    %v1516 = vsel %vm1422, %v465, %v849
    %v1517 = vsel %vm1422, %v467, %v851
    %v1518 = vsel %vm1422, %v469, %v853
    %v1519 = vsel %vm1422, %v471, %v855
    %v1520 = vsel %vm1422, %v473, %v857
    %v1521 = vsel %vm1422, %v475, %v859
    %v1522 = vsel %vm1422, %v477, %v861
    %v1523 = vsel %vm1422, %v479, %v863
    %v1524 = vsel %vm1422, %v481, %v865
    %v1525 = vsel %vm1422, %v483, %v867
    %v1526 = vsel %vm1422, %v485, %v869
    %v1527 = vsel %vm1422, %v487, %v871
    %v1528 = vsel %vm1422, %v489, %v873
    %v1529 = vsel %vm1422, %v491, %v875
    %v1530 = vsel %vm1422, %v493, %v877
    %v1531 = vsel %vm1422, %v495, %v879
    %v1532 = vsel %vm1422, %v497, %v881
    %v1533 = vsel %vm1422, %v499, %v883
    %v1534 = vsel %vm1422, %v501, %v885
    %v1535 = vsel %vm1422, %v503, %v887
    %v1536 = vsel %vm1422, %v505, %v889
    %v1537 = vsel %vm1422, %v507, %v891
    %v1538 = vsel %vm1422, %v509, %v893
    %v1539 = vsel %vm1422, %v511, %v895
    %v1540 = vsel %vm1422, %v513, %v897
    %v1541 = vsel %vm1422, %v515, %v899
    %v1542 = vsel %vm1422, %v517, %v901
    %v1543 = vsel %vm1422, %v519, %v903
    %v1544 = vsel %vm1422, %v521, %v905
    %v1545 = vsel %vm1422, %v523, %v907
    %v1546 = vsel %vm1422, %v525, %v909
    %v1547 = vsel %vm1422, %v527, %v911
    %v1548 = vsel %vm1422, %v529, %v913
    %v1549 = vsel %vm1422, %v531, %v915
    %v1550 = vsel %vm1422, %v533, %v917
    %vm1551 = vcmask 72704
    %v1552 = vsel %vm1551, %v1423, %v1048
    %v1553 = vsel %vm1551, %v1424, %v1050
    %v1554 = vsel %vm1551, %v1425, %v1052
    %v1555 = vsel %vm1551, %v1426, %v1054
    %v1556 = vsel %vm1551, %v1427, %v1056
    %v1557 = vsel %vm1551, %v1428, %v1058
    %v1558 = vsel %vm1551, %v1429, %v1060
    %v1559 = vsel %vm1551, %v1430, %v1062
    %v1560 = vsel %vm1551, %v1431, %v1064
    %v1561 = vsel %vm1551, %v1432, %v1066
    %v1562 = vsel %vm1551, %v1433, %v1068
    %v1563 = vsel %vm1551, %v1434, %v1070
    %v1564 = vsel %vm1551, %v1435, %v1072
    %v1565 = vsel %vm1551, %v1436, %v1074
    %v1566 = vsel %vm1551, %v1437, %v1076
    %v1567 = vsel %vm1551, %v1438, %v1078
    %v1568 = vsel %vm1551, %v1439, %v1080
    %v1569 = vsel %vm1551, %v1440, %v1082
    %v1570 = vsel %vm1551, %v1441, %v1084
    %v1571 = vsel %vm1551, %v1442, %v1086
    %v1572 = vsel %vm1551, %v1443, %v1088
    %v1573 = vsel %vm1551, %v1444, %v1090
    %v1574 = vsel %vm1551, %v1445, %v1092
    %v1575 = vsel %vm1551, %v1446, %v1094
    %v1576 = vsel %vm1551, %v1447, %v1096
    %v1577 = vsel %vm1551, %v1448, %v1098
    %v1578 = vsel %vm1551, %v1449, %v1100
    %v1579 = vsel %vm1551, %v1450, %v1102
    %v1580 = vsel %vm1551, %v1451, %v1104
    %v1581 = vsel %vm1551, %v1452, %v1106
    %v1582 = vsel %vm1551, %v1453, %v1108
    %v1583 = vsel %vm1551, %v1454, %v1110
    %v1584 = vsel %vm1551, %v1455, %v1112
    %v1585 = vsel %vm1551, %v1456, %v1114
    %v1586 = vsel %vm1551, %v1457, %v1116
    %v1587 = vsel %vm1551, %v1458, %v1118
    %v1588 = vsel %vm1551, %v1459, %v1120
    %v1589 = vsel %vm1551, %v1460, %v1122
    %v1590 = vsel %vm1551, %v1461, %v1124
    %v1591 = vsel %vm1551, %v1462, %v1126
    %v1592 = vsel %vm1551, %v1463, %v1128
    %v1593 = vsel %vm1551, %v1464, %v1130
    %v1594 = vsel %vm1551, %v1465, %v1132
    %v1595 = vsel %vm1551, %v1466, %v1134
    %v1596 = vsel %vm1551, %v1467, %v1136
    %v1597 = vsel %vm1551, %v1468, %v1138
    %v1598 = vsel %vm1551, %v1469, %v1140
    %v1599 = vsel %vm1551, %v1470, %v1142
    %v1600 = vsel %vm1551, %v1471, %v1144
    %v1601 = vsel %vm1551, %v1472, %v1146
    %v1602 = vsel %vm1551, %v1473, %v1148
    %v1603 = vsel %vm1551, %v1474, %v1150
    %v1604 = vsel %vm1551, %v1475, %v1152
    %v1605 = vsel %vm1551, %v1476, %v1154
    %v1606 = vsel %vm1551, %v1477, %v1156
    %v1607 = vsel %vm1551, %v1478, %v1158
    %v1608 = vsel %vm1551, %v1479, %v1160
    %v1609 = vsel %vm1551, %v1480, %v1162
    %v1610 = vsel %vm1551, %v1481, %v1164
    %v1611 = vsel %vm1551, %v1482, %v1166
    %v1612 = vsel %vm1551, %v1483, %v1168
    %v1613 = vsel %vm1551, %v1484, %v1170
    %v1614 = vsel %vm1551, %v1485, %v1172
    %v1615 = vsel %vm1551, %v1486, %v1174
    %v1616 = vsel %vm1551, %v1487, %v1176
    %v1617 = vsel %vm1551, %v1488, %v1178
    %v1618 = vsel %vm1551, %v1489, %v1180
    %v1619 = vsel %vm1551, %v1490, %v1182
    %v1620 = vsel %vm1551, %v1491, %v1184
    %v1621 = vsel %vm1551, %v1492, %v1186
    %v1622 = vsel %vm1551, %v1493, %v1188
    %v1623 = vsel %vm1551, %v1494, %v1190
    %v1624 = vsel %vm1551, %v1495, %v1192
    %v1625 = vsel %vm1551, %v1496, %v1194
    %v1626 = vsel %vm1551, %v1497, %v1196
    %v1627 = vsel %vm1551, %v1498, %v1198
    %v1628 = vsel %vm1551, %v1499, %v1200
    %v1629 = vsel %vm1551, %v1500, %v1202
    %v1630 = vsel %vm1551, %v1501, %v1204
    %v1631 = vsel %vm1551, %v1502, %v1206
    %v1632 = vsel %vm1551, %v1503, %v1208
    %v1633 = vsel %vm1551, %v1504, %v1210
    %v1634 = vsel %vm1551, %v1505, %v1212
    %v1635 = vsel %vm1551, %v1506, %v1214
    %v1636 = vsel %vm1551, %v1507, %v1216
    %v1637 = vsel %vm1551, %v1508, %v1218
    %v1638 = vsel %vm1551, %v1509, %v1220
    %v1639 = vsel %vm1551, %v1510, %v1222
    %v1640 = vsel %vm1551, %v1511, %v1224
    %v1641 = vsel %vm1551, %v1512, %v1226
    %v1642 = vsel %vm1551, %v1513, %v1228
    %v1643 = vsel %vm1551, %v1514, %v1230
    %v1644 = vsel %vm1551, %v1515, %v1232
    %v1645 = vsel %vm1551, %v1516, %v1234
    %v1646 = vsel %vm1551, %v1517, %v1236
    %v1647 = vsel %vm1551, %v1518, %v1238
    %v1648 = vsel %vm1551, %v1519, %v1240
    %v1649 = vsel %vm1551, %v1520, %v1242
    %v1650 = vsel %vm1551, %v1521, %v1244
    %v1651 = vsel %vm1551, %v1522, %v1246
    %v1652 = vsel %vm1551, %v1523, %v1248
    %v1653 = vsel %vm1551, %v1524, %v1250
    %v1654 = vsel %vm1551, %v1525, %v1252
    %v1655 = vsel %vm1551, %v1526, %v1254
    %v1656 = vsel %vm1551, %v1527, %v1256
    %v1657 = vsel %vm1551, %v1528, %v1258
    %v1658 = vsel %vm1551, %v1529, %v1260
    %v1659 = vsel %vm1551, %v1530, %v1262
    %v1660 = vsel %vm1551, %v1531, %v1264
    %v1661 = vsel %vm1551, %v1532, %v1266
    %v1662 = vsel %vm1551, %v1533, %v1268
    %v1663 = vsel %vm1551, %v1534, %v1270
    %v1664 = vsel %vm1551, %v1535, %v1272
    %v1665 = vsel %vm1551, %v1536, %v1274
    %v1666 = vsel %vm1551, %v1537, %v1276
    %v1667 = vsel %vm1551, %v1538, %v1278
    %v1668 = vsel %vm1551, %v1539, %v1280
    %v1669 = vsel %vm1551, %v1540, %v1282
    %v1670 = vsel %vm1551, %v1541, %v1284
    %v1671 = vsel %vm1551, %v1542, %v1286
    %v1672 = vsel %vm1551, %v1543, %v1288
    %v1673 = vsel %vm1551, %v1544, %v1290
    %v1674 = vsel %vm1551, %v1545, %v1292
    %v1675 = vsel %vm1551, %v1546, %v1294
    %v1676 = vsel %vm1551, %v1547, %v1296
    %v1677 = vsel %vm1551, %v1548, %v1296
    %v1678 = vsel %vm1551, %v1549, %v1296
    %v1679 = vsel %vm1551, %v1550, %v1296
    %v1680 = vpack.c.bf16 %v1553, %v1552
    %v1681 = vpack.c.bf16 %v1555, %v1554
    %v1682 = vpack.c.bf16 %v1557, %v1556
    %v1683 = vpack.c.bf16 %v1559, %v1558
    %v1684 = vpack.c.bf16 %v1561, %v1560
    %v1685 = vpack.c.bf16 %v1563, %v1562
    %v1686 = vpack.c.bf16 %v1565, %v1564
    %v1687 = vpack.c.bf16 %v1567, %v1566
    %v1688 = vpack.c.bf16 %v1569, %v1568
    %v1689 = vpack.c.bf16 %v1571, %v1570
    %v1690 = vpack.c.bf16 %v1573, %v1572
    %v1691 = vpack.c.bf16 %v1575, %v1574
    %v1692 = vpack.c.bf16 %v1577, %v1576
    %v1693 = vpack.c.bf16 %v1579, %v1578
    %v1694 = vpack.c.bf16 %v1581, %v1580
    %v1695 = vpack.c.bf16 %v1583, %v1582
    %v1696 = vpack.c.bf16 %v1585, %v1584
    %v1697 = vpack.c.bf16 %v1587, %v1586
    %v1698 = vpack.c.bf16 %v1589, %v1588
    %v1699 = vpack.c.bf16 %v1591, %v1590
    %v1700 = vpack.c.bf16 %v1593, %v1592
    %v1701 = vpack.c.bf16 %v1595, %v1594
    %v1702 = vpack.c.bf16 %v1597, %v1596
    %v1703 = vpack.c.bf16 %v1599, %v1598
    %v1704 = vpack.c.bf16 %v1601, %v1600
    %v1705 = vpack.c.bf16 %v1603, %v1602
    %v1706 = vpack.c.bf16 %v1605, %v1604
    %v1707 = vpack.c.bf16 %v1607, %v1606
    %v1708 = vpack.c.bf16 %v1609, %v1608
    %v1709 = vpack.c.bf16 %v1611, %v1610
    %v1710 = vpack.c.bf16 %v1613, %v1612
    %v1711 = vpack.c.bf16 %v1615, %v1614
    %v1712 = vpack.c.bf16 %v1617, %v1616
    %v1713 = vpack.c.bf16 %v1619, %v1618
    %v1714 = vpack.c.bf16 %v1621, %v1620
    %v1715 = vpack.c.bf16 %v1623, %v1622
    %v1716 = vpack.c.bf16 %v1625, %v1624
    %v1717 = vpack.c.bf16 %v1627, %v1626
    %v1718 = vpack.c.bf16 %v1629, %v1628
    %v1719 = vpack.c.bf16 %v1631, %v1630
    %v1720 = vpack.c.bf16 %v1633, %v1632
    %v1721 = vpack.c.bf16 %v1635, %v1634
    %v1722 = vpack.c.bf16 %v1637, %v1636
    %v1723 = vpack.c.bf16 %v1639, %v1638
    %v1724 = vpack.c.bf16 %v1641, %v1640
    %v1725 = vpack.c.bf16 %v1643, %v1642
    %v1726 = vpack.c.bf16 %v1645, %v1644
    %v1727 = vpack.c.bf16 %v1647, %v1646
    %v1728 = vpack.c.bf16 %v1649, %v1648
    %v1729 = vpack.c.bf16 %v1651, %v1650
    %v1730 = vpack.c.bf16 %v1653, %v1652
    %v1731 = vpack.c.bf16 %v1655, %v1654
    %v1732 = vpack.c.bf16 %v1657, %v1656
    %v1733 = vpack.c.bf16 %v1659, %v1658
    %v1734 = vpack.c.bf16 %v1661, %v1660
    %v1735 = vpack.c.bf16 %v1663, %v1662
    %v1736 = vpack.c.bf16 %v1665, %v1664
    %v1737 = vpack.c.bf16 %v1667, %v1666
    %v1738 = vpack.c.bf16 %v1669, %v1668
    %v1739 = vpack.c.bf16 %v1671, %v1670
    %v1740 = vpack.c.bf16 %v1673, %v1672
    %v1741 = vpack.c.bf16 %v1675, %v1674
    %v1742 = vpack.c.bf16 %v1677, %v1676
    %v1743 = vpack.c.bf16 %v1679, %v1678
    %v1744 = vld [vmem:[%s1] sm:$0xf]
    %v1745 = vld [vmem:[%s1 + $0x4] sm:$0x1]
    %v1746 = vld [vmem:[%s2] sm:$0x1]
    %v1748 = vlaneseq
    %v1749 = vshrl.u32 %v1748, 7
    %v1750 = vsub.s32 0, %v1749
    %v1751 = vrot.slane %v1746, %v1750
    %v1755 = vunpack.c.l.b16 %v1744
    %v1756 = vunpack.c.l.b16 %v1745
    %v1757 = vpack.c.b16 %v1756, %v1755
    %vm1758 = vcmask 80896
    %v1760 = vsel %vm1758, %v1680, 0
    %v1763 = vsel %vm1758, %v1681, 0
    %v1766 = vsel %vm1758, %v1682, 0
    %v1769 = vsel %vm1758, %v1683, 0
    %v1772 = vsel %vm1758, %v1684, 0
    %v1775 = vsel %vm1758, %v1685, 0
    %v1778 = vsel %vm1758, %v1686, 0
    %v1781 = vsel %vm1758, %v1687, 0
    %v1784 = vsel %vm1758, %v1688, 0
    %v1787 = vsel %vm1758, %v1689, 0
    %v1790 = vsel %vm1758, %v1690, 0
    %v1793 = vsel %vm1758, %v1691, 0
    %v1796 = vsel %vm1758, %v1692, 0
    %v1799 = vsel %vm1758, %v1693, 0
    %v1802 = vsel %vm1758, %v1694, 0
    %v1805 = vsel %vm1758, %v1695, 0
    %v1808 = vsel %vm1758, %v1696, 0
    %v1811 = vsel %vm1758, %v1697, 0
    %v1814 = vsel %vm1758, %v1698, 0
    %v1817 = vsel %vm1758, %v1699, 0
    %v1820 = vsel %vm1758, %v1700, 0
    %v1823 = vsel %vm1758, %v1701, 0
    %v1826 = vsel %vm1758, %v1702, 0
    %v1829 = vsel %vm1758, %v1703, 0
    %v1832 = vsel %vm1758, %v1704, 0
    %v1835 = vsel %vm1758, %v1705, 0
    %v1838 = vsel %vm1758, %v1706, 0
    %v1841 = vsel %vm1758, %v1707, 0
    %v1844 = vsel %vm1758, %v1708, 0
    %v1847 = vsel %vm1758, %v1709, 0
    %v1850 = vsel %vm1758, %v1710, 0
    %v1853 = vsel %vm1758, %v1711, 0
    %v1856 = vsel %vm1758, %v1712, 0
    %v1859 = vsel %vm1758, %v1713, 0
    %v1862 = vsel %vm1758, %v1714, 0
    %v1865 = vsel %vm1758, %v1715, 0
    %v1868 = vsel %vm1758, %v1716, 0
    %v1871 = vsel %vm1758, %v1717, 0
    %v1874 = vsel %vm1758, %v1718, 0
    %v1877 = vsel %vm1758, %v1719, 0
    %v1880 = vsel %vm1758, %v1720, 0
    %v1883 = vsel %vm1758, %v1721, 0
    %v1886 = vsel %vm1758, %v1722, 0
    %v1889 = vsel %vm1758, %v1723, 0
    %v1892 = vsel %vm1758, %v1724, 0
    %v1895 = vsel %vm1758, %v1725, 0
    %v1898 = vsel %vm1758, %v1726, 0
    %v1901 = vsel %vm1758, %v1727, 0
    %v1904 = vsel %vm1758, %v1728, 0
    %v1907 = vsel %vm1758, %v1729, 0
    %v1910 = vsel %vm1758, %v1730, 0
    %v1913 = vsel %vm1758, %v1731, 0
    %v1916 = vsel %vm1758, %v1732, 0
    %v1919 = vsel %vm1758, %v1733, 0
    %v1922 = vsel %vm1758, %v1734, 0
    %v1925 = vsel %vm1758, %v1735, 0
    %v1928 = vsel %vm1758, %v1736, 0
    %v1931 = vsel %vm1758, %v1737, 0
    %v1934 = vsel %vm1758, %v1738, 0
    %v1937 = vsel %vm1758, %v1739, 0
    %v1940 = vsel %vm1758, %v1740, 0
    %v1943 = vsel %vm1758, %v1741, 0
    %v1946 = vsel %vm1758, %v1742, 0
    %v1949 = vsel %vm1758, %v1743, 0
    %vm1951 = vcmask 1044480
    %v1953 = vsel %vm1951, %v1757, 0
    %1955 = vmatprep.subr.bf16.mxu0 0
    %1956 = vmatpush1.bf16.msra.mxu0 0
    %1957 = vmatprep.subr.bf16.mxu0 0
    %1958 = vmatpush1.bf16.msra.mxu0 0
    %1959 = vmatprep.subr.bf16.mxu0 0
    %1960 = vmatpush1.bf16.msra.mxu0 0
    %1961 = vmatprep.subr.bf16.mxu0 0
    %1962 = vmatpush1.bf16.msra.mxu0 0
    %1963 = vmatprep.subr.bf16.mxu0 0
    %1964 = vmatpush1.bf16.msra.mxu0 0
    %1965 = vmatprep.subr.bf16.mxu0 0
    %1966 = vmatpush1.bf16.msra.mxu0 0
    %1967 = vmatprep.subr.bf16.mxu0 0
    %1968 = vmatpush1.bf16.msra.mxu0 0
    %1969 = vmatprep.subr.bf16.mxu0 0
    %1970 = vmatpush1.bf16.msra.mxu0 %v1953
    %1971 = vmatprep.subr.bf16.mxu0 0
    %1972 = vmatpush2.bf16.msra.mxu0 0
    %1973 = vmatprep.subr.bf16.mxu0 0
    %1974 = vmatpush2.bf16.msra.mxu0 0
    %1975 = vmatprep.subr.bf16.mxu0 0
    %1976 = vmatpush2.bf16.msra.mxu0 0
    %1977 = vmatprep.subr.bf16.mxu0 0
    %1978 = vmatpush2.bf16.msra.mxu0 0
    %1979 = vmatprep.subr.bf16.mxu0 0
    %1980 = vmatpush2.bf16.msra.mxu0 0
    %1981 = vmatprep.subr.bf16.mxu0 0
    %1982 = vmatpush2.bf16.msra.mxu0 0
    %1983 = vmatprep.subr.bf16.mxu0 0
    %1984 = vmatpush2.bf16.msra.mxu0 0
    %1985 = vmatprep.subr.bf16.mxu0 0
    %1986 = vmatpush2.bf16.msra.mxu0 0
    %1987 = vmatprep.mubr.bf16.mxu0 0
    %1988 = vmatmul.mubr.bf16.gmra.mxu0 %v1760
    %v1989 = vpop.f32.mrf.mxu0
    %v1990 = vadd.f32 %v1751, %v1989
    %v1991 = vpop.f32.mrf.mxu0
    %v1992 = vpop.f32.mrf.mxu0
    %v1993 = vadd.f32 %v1751, %v1992
    %v1994 = vpop.f32.mrf.mxu0
    %1995 = vmatprep.mubr.bf16.mxu0 0
    %1996 = vmatmul.mubr.bf16.gmra.mxu0 %v1763
    %v1997 = vpop.f32.mrf.mxu0
    %v1998 = vadd.f32 %v1751, %v1997
    %v1999 = vpop.f32.mrf.mxu0
    %v2000 = vpop.f32.mrf.mxu0
    %v2001 = vadd.f32 %v1751, %v2000
    %v2002 = vpop.f32.mrf.mxu0
    %2003 = vmatprep.mubr.bf16.mxu0 0
    %2004 = vmatmul.mubr.bf16.gmra.mxu0 %v1766
    %v2005 = vpop.f32.mrf.mxu0
    %v2006 = vadd.f32 %v1751, %v2005
    %v2007 = vpop.f32.mrf.mxu0
    %v2008 = vpop.f32.mrf.mxu0
    %v2009 = vadd.f32 %v1751, %v2008
    %v2010 = vpop.f32.mrf.mxu0
    %2011 = vmatprep.mubr.bf16.mxu0 0
    %2012 = vmatmul.mubr.bf16.gmra.mxu0 %v1769
    %v2013 = vpop.f32.mrf.mxu0
    %v2014 = vadd.f32 %v1751, %v2013
    %v2015 = vpop.f32.mrf.mxu0
    %v2016 = vpop.f32.mrf.mxu0
    %v2017 = vadd.f32 %v1751, %v2016
    %v2018 = vpop.f32.mrf.mxu0
    %2019 = vmatprep.mubr.bf16.mxu0 0
    %2020 = vmatmul.mubr.bf16.gmra.mxu0 %v1772
    %v2021 = vpop.f32.mrf.mxu0
    %v2022 = vadd.f32 %v1751, %v2021
    %v2023 = vpop.f32.mrf.mxu0
    %v2024 = vpop.f32.mrf.mxu0
    %v2025 = vadd.f32 %v1751, %v2024
    %v2026 = vpop.f32.mrf.mxu0
    %2027 = vmatprep.mubr.bf16.mxu0 0
    %2028 = vmatmul.mubr.bf16.gmra.mxu0 %v1775
    %v2029 = vpop.f32.mrf.mxu0
    %v2030 = vadd.f32 %v1751, %v2029
    %v2031 = vpop.f32.mrf.mxu0
    %v2032 = vpop.f32.mrf.mxu0
    %v2033 = vadd.f32 %v1751, %v2032
    %v2034 = vpop.f32.mrf.mxu0
    %2035 = vmatprep.mubr.bf16.mxu0 0
    %2036 = vmatmul.mubr.bf16.gmra.mxu0 %v1778
    %v2037 = vpop.f32.mrf.mxu0
    %v2038 = vadd.f32 %v1751, %v2037
    %v2039 = vpop.f32.mrf.mxu0
    %v2040 = vpop.f32.mrf.mxu0
    %v2041 = vadd.f32 %v1751, %v2040
    %v2042 = vpop.f32.mrf.mxu0
    %2043 = vmatprep.mubr.bf16.mxu0 0
    %2044 = vmatmul.mubr.bf16.gmra.mxu0 %v1781
    %v2045 = vpop.f32.mrf.mxu0
    %v2046 = vadd.f32 %v1751, %v2045
    %v2047 = vpop.f32.mrf.mxu0
    %v2048 = vpop.f32.mrf.mxu0
    %v2049 = vadd.f32 %v1751, %v2048
    %v2050 = vpop.f32.mrf.mxu0
    %2051 = vmatprep.mubr.bf16.mxu0 0
    %2052 = vmatmul.mubr.bf16.gmra.mxu0 %v1784
    %v2053 = vpop.f32.mrf.mxu0
    %v2054 = vadd.f32 %v1751, %v2053
    %v2055 = vpop.f32.mrf.mxu0
    %v2056 = vpop.f32.mrf.mxu0
    %v2057 = vadd.f32 %v1751, %v2056
    %v2058 = vpop.f32.mrf.mxu0
    %2059 = vmatprep.mubr.bf16.mxu0 0
    %2060 = vmatmul.mubr.bf16.gmra.mxu0 %v1787
    %v2061 = vpop.f32.mrf.mxu0
    %v2062 = vadd.f32 %v1751, %v2061
    %v2063 = vpop.f32.mrf.mxu0
    %v2064 = vpop.f32.mrf.mxu0
    %v2065 = vadd.f32 %v1751, %v2064
    %v2066 = vpop.f32.mrf.mxu0
    %2067 = vmatprep.mubr.bf16.mxu0 0
    %2068 = vmatmul.mubr.bf16.gmra.mxu0 %v1790
    %v2069 = vpop.f32.mrf.mxu0
    %v2070 = vadd.f32 %v1751, %v2069
    %v2071 = vpop.f32.mrf.mxu0
    %v2072 = vpop.f32.mrf.mxu0
    %v2073 = vadd.f32 %v1751, %v2072
    %v2074 = vpop.f32.mrf.mxu0
    %2075 = vmatprep.mubr.bf16.mxu0 0
    %2076 = vmatmul.mubr.bf16.gmra.mxu0 %v1793
    %v2077 = vpop.f32.mrf.mxu0
    %v2078 = vadd.f32 %v1751, %v2077
    %v2079 = vpop.f32.mrf.mxu0
    %v2080 = vpop.f32.mrf.mxu0
    %v2081 = vadd.f32 %v1751, %v2080
    %v2082 = vpop.f32.mrf.mxu0
    %2083 = vmatprep.mubr.bf16.mxu0 0
    %2084 = vmatmul.mubr.bf16.gmra.mxu0 %v1796
    %v2085 = vpop.f32.mrf.mxu0
    %v2086 = vadd.f32 %v1751, %v2085
    %v2087 = vpop.f32.mrf.mxu0
    %v2088 = vpop.f32.mrf.mxu0
    %v2089 = vadd.f32 %v1751, %v2088
    %v2090 = vpop.f32.mrf.mxu0
    %2091 = vmatprep.mubr.bf16.mxu0 0
    %2092 = vmatmul.mubr.bf16.gmra.mxu0 %v1799
    %v2093 = vpop.f32.mrf.mxu0
    %v2094 = vadd.f32 %v1751, %v2093
    %v2095 = vpop.f32.mrf.mxu0
    %v2096 = vpop.f32.mrf.mxu0
    %v2097 = vadd.f32 %v1751, %v2096
    %v2098 = vpop.f32.mrf.mxu0
    %2099 = vmatprep.mubr.bf16.mxu0 0
    %2100 = vmatmul.mubr.bf16.gmra.mxu0 %v1802
    %v2101 = vpop.f32.mrf.mxu0
    %v2102 = vadd.f32 %v1751, %v2101
    %v2103 = vpop.f32.mrf.mxu0
    %v2104 = vpop.f32.mrf.mxu0
    %v2105 = vadd.f32 %v1751, %v2104
    %v2106 = vpop.f32.mrf.mxu0
    %2107 = vmatprep.mubr.bf16.mxu0 0
    %2108 = vmatmul.mubr.bf16.gmra.mxu0 %v1805
    %v2109 = vpop.f32.mrf.mxu0
    %v2110 = vadd.f32 %v1751, %v2109
    %v2111 = vpop.f32.mrf.mxu0
    %v2112 = vpop.f32.mrf.mxu0
    %v2113 = vadd.f32 %v1751, %v2112
    %v2114 = vpop.f32.mrf.mxu0
    %2115 = vmatprep.mubr.bf16.mxu0 0
    %2116 = vmatmul.mubr.bf16.gmra.mxu0 %v1808
    %v2117 = vpop.f32.mrf.mxu0
    %v2118 = vadd.f32 %v1751, %v2117
    %v2119 = vpop.f32.mrf.mxu0
    %v2120 = vpop.f32.mrf.mxu0
    %v2121 = vadd.f32 %v1751, %v2120
    %v2122 = vpop.f32.mrf.mxu0
    %2123 = vmatprep.mubr.bf16.mxu0 0
    %2124 = vmatmul.mubr.bf16.gmra.mxu0 %v1811
    %v2125 = vpop.f32.mrf.mxu0
    %v2126 = vadd.f32 %v1751, %v2125
    %v2127 = vpop.f32.mrf.mxu0
    %v2128 = vpop.f32.mrf.mxu0
    %v2129 = vadd.f32 %v1751, %v2128
    %v2130 = vpop.f32.mrf.mxu0
    %2131 = vmatprep.mubr.bf16.mxu0 0
    %2132 = vmatmul.mubr.bf16.gmra.mxu0 %v1814
    %v2133 = vpop.f32.mrf.mxu0
    %v2134 = vadd.f32 %v1751, %v2133
    %v2135 = vpop.f32.mrf.mxu0
    %v2136 = vpop.f32.mrf.mxu0
    %v2137 = vadd.f32 %v1751, %v2136
    %v2138 = vpop.f32.mrf.mxu0
    %2139 = vmatprep.mubr.bf16.mxu0 0
    %2140 = vmatmul.mubr.bf16.gmra.mxu0 %v1817
    %v2141 = vpop.f32.mrf.mxu0
    %v2142 = vadd.f32 %v1751, %v2141
    %v2143 = vpop.f32.mrf.mxu0
    %v2144 = vpop.f32.mrf.mxu0
    %v2145 = vadd.f32 %v1751, %v2144
    %v2146 = vpop.f32.mrf.mxu0
    %2147 = vmatprep.mubr.bf16.mxu0 0
    %2148 = vmatmul.mubr.bf16.gmra.mxu0 %v1820
    %v2149 = vpop.f32.mrf.mxu0
    %v2150 = vadd.f32 %v1751, %v2149
    %v2151 = vpop.f32.mrf.mxu0
    %v2152 = vpop.f32.mrf.mxu0
    %v2153 = vadd.f32 %v1751, %v2152
    %v2154 = vpop.f32.mrf.mxu0
    %2155 = vmatprep.mubr.bf16.mxu0 0
    %2156 = vmatmul.mubr.bf16.gmra.mxu0 %v1823
    %v2157 = vpop.f32.mrf.mxu0
    %v2158 = vadd.f32 %v1751, %v2157
    %v2159 = vpop.f32.mrf.mxu0
    %v2160 = vpop.f32.mrf.mxu0
    %v2161 = vadd.f32 %v1751, %v2160
    %v2162 = vpop.f32.mrf.mxu0
    %2163 = vmatprep.mubr.bf16.mxu0 0
    %2164 = vmatmul.mubr.bf16.gmra.mxu0 %v1826
    %v2165 = vpop.f32.mrf.mxu0
    %v2166 = vadd.f32 %v1751, %v2165
    %v2167 = vpop.f32.mrf.mxu0
    %v2168 = vpop.f32.mrf.mxu0
    %v2169 = vadd.f32 %v1751, %v2168
    %v2170 = vpop.f32.mrf.mxu0
    %2171 = vmatprep.mubr.bf16.mxu0 0
    %2172 = vmatmul.mubr.bf16.gmra.mxu0 %v1829
    %v2173 = vpop.f32.mrf.mxu0
    %v2174 = vadd.f32 %v1751, %v2173
    %v2175 = vpop.f32.mrf.mxu0
    %v2176 = vpop.f32.mrf.mxu0
    %v2177 = vadd.f32 %v1751, %v2176
    %v2178 = vpop.f32.mrf.mxu0
    %2179 = vmatprep.mubr.bf16.mxu0 0
    %2180 = vmatmul.mubr.bf16.gmra.mxu0 %v1832
    %v2181 = vpop.f32.mrf.mxu0
    %v2182 = vadd.f32 %v1751, %v2181
    %v2183 = vpop.f32.mrf.mxu0
    %v2184 = vpop.f32.mrf.mxu0
    %v2185 = vadd.f32 %v1751, %v2184
    %v2186 = vpop.f32.mrf.mxu0
    %2187 = vmatprep.mubr.bf16.mxu0 0
    %2188 = vmatmul.mubr.bf16.gmra.mxu0 %v1835
    %v2189 = vpop.f32.mrf.mxu0
    %v2190 = vadd.f32 %v1751, %v2189
    %v2191 = vpop.f32.mrf.mxu0
    %v2192 = vpop.f32.mrf.mxu0
    %v2193 = vadd.f32 %v1751, %v2192
    %v2194 = vpop.f32.mrf.mxu0
    %2195 = vmatprep.mubr.bf16.mxu0 0
    %2196 = vmatmul.mubr.bf16.gmra.mxu0 %v1838
    %v2197 = vpop.f32.mrf.mxu0
    %v2198 = vadd.f32 %v1751, %v2197
    %v2199 = vpop.f32.mrf.mxu0
    %v2200 = vpop.f32.mrf.mxu0
    %v2201 = vadd.f32 %v1751, %v2200
    %v2202 = vpop.f32.mrf.mxu0
    %2203 = vmatprep.mubr.bf16.mxu0 0
    %2204 = vmatmul.mubr.bf16.gmra.mxu0 %v1841
    %v2205 = vpop.f32.mrf.mxu0
    %v2206 = vadd.f32 %v1751, %v2205
    %v2207 = vpop.f32.mrf.mxu0
    %v2208 = vpop.f32.mrf.mxu0
    %v2209 = vadd.f32 %v1751, %v2208
    %v2210 = vpop.f32.mrf.mxu0
    %2211 = vmatprep.mubr.bf16.mxu0 0
    %2212 = vmatmul.mubr.bf16.gmra.mxu0 %v1844
    %v2213 = vpop.f32.mrf.mxu0
    %v2214 = vadd.f32 %v1751, %v2213
    %v2215 = vpop.f32.mrf.mxu0
    %v2216 = vpop.f32.mrf.mxu0
    %v2217 = vadd.f32 %v1751, %v2216
    %v2218 = vpop.f32.mrf.mxu0
    %2219 = vmatprep.mubr.bf16.mxu0 0
    %2220 = vmatmul.mubr.bf16.gmra.mxu0 %v1847
    %v2221 = vpop.f32.mrf.mxu0
    %v2222 = vadd.f32 %v1751, %v2221
    %v2223 = vpop.f32.mrf.mxu0
    %v2224 = vpop.f32.mrf.mxu0
    %v2225 = vadd.f32 %v1751, %v2224
    %v2226 = vpop.f32.mrf.mxu0
    %2227 = vmatprep.mubr.bf16.mxu0 0
    %2228 = vmatmul.mubr.bf16.gmra.mxu0 %v1850
    %v2229 = vpop.f32.mrf.mxu0
    %v2230 = vadd.f32 %v1751, %v2229
    %v2231 = vpop.f32.mrf.mxu0
    %v2232 = vpop.f32.mrf.mxu0
    %v2233 = vadd.f32 %v1751, %v2232
    %v2234 = vpop.f32.mrf.mxu0
    %2235 = vmatprep.mubr.bf16.mxu0 0
    %2236 = vmatmul.mubr.bf16.gmra.mxu0 %v1853
    %v2237 = vpop.f32.mrf.mxu0
    %v2238 = vadd.f32 %v1751, %v2237
    %v2239 = vpop.f32.mrf.mxu0
    %v2240 = vpop.f32.mrf.mxu0
    %v2241 = vadd.f32 %v1751, %v2240
    %v2242 = vpop.f32.mrf.mxu0
    %2243 = vmatprep.mubr.bf16.mxu0 0
    %2244 = vmatmul.mubr.bf16.gmra.mxu0 %v1856
    %v2245 = vpop.f32.mrf.mxu0
    %v2246 = vadd.f32 %v1751, %v2245
    %v2247 = vpop.f32.mrf.mxu0
    %v2248 = vpop.f32.mrf.mxu0
    %v2249 = vadd.f32 %v1751, %v2248
    %v2250 = vpop.f32.mrf.mxu0
    %2251 = vmatprep.mubr.bf16.mxu0 0
    %2252 = vmatmul.mubr.bf16.gmra.mxu0 %v1859
    %v2253 = vpop.f32.mrf.mxu0
    %v2254 = vadd.f32 %v1751, %v2253
    %v2255 = vpop.f32.mrf.mxu0
    %v2256 = vpop.f32.mrf.mxu0
    %v2257 = vadd.f32 %v1751, %v2256
    %v2258 = vpop.f32.mrf.mxu0
    %2259 = vmatprep.mubr.bf16.mxu0 0
    %2260 = vmatmul.mubr.bf16.gmra.mxu0 %v1862
    %v2261 = vpop.f32.mrf.mxu0
    %v2262 = vadd.f32 %v1751, %v2261
    %v2263 = vpop.f32.mrf.mxu0
    %v2264 = vpop.f32.mrf.mxu0
    %v2265 = vadd.f32 %v1751, %v2264
    %v2266 = vpop.f32.mrf.mxu0
    %2267 = vmatprep.mubr.bf16.mxu0 0
    %2268 = vmatmul.mubr.bf16.gmra.mxu0 %v1865
    %v2269 = vpop.f32.mrf.mxu0
    %v2270 = vadd.f32 %v1751, %v2269
    %v2271 = vpop.f32.mrf.mxu0
    %v2272 = vpop.f32.mrf.mxu0
    %v2273 = vadd.f32 %v1751, %v2272
    %v2274 = vpop.f32.mrf.mxu0
    %2275 = vmatprep.mubr.bf16.mxu0 0
    %2276 = vmatmul.mubr.bf16.gmra.mxu0 %v1868
    %v2277 = vpop.f32.mrf.mxu0
    %v2278 = vadd.f32 %v1751, %v2277
    %v2279 = vpop.f32.mrf.mxu0
    %v2280 = vpop.f32.mrf.mxu0
    %v2281 = vadd.f32 %v1751, %v2280
    %v2282 = vpop.f32.mrf.mxu0
    %2283 = vmatprep.mubr.bf16.mxu0 0
    %2284 = vmatmul.mubr.bf16.gmra.mxu0 %v1871
    %v2285 = vpop.f32.mrf.mxu0
    %v2286 = vadd.f32 %v1751, %v2285
    %v2287 = vpop.f32.mrf.mxu0
    %v2288 = vpop.f32.mrf.mxu0
    %v2289 = vadd.f32 %v1751, %v2288
    %v2290 = vpop.f32.mrf.mxu0
    %2291 = vmatprep.mubr.bf16.mxu0 0
    %2292 = vmatmul.mubr.bf16.gmra.mxu0 %v1874
    %v2293 = vpop.f32.mrf.mxu0
    %v2294 = vadd.f32 %v1751, %v2293
    %v2295 = vpop.f32.mrf.mxu0
    %v2296 = vpop.f32.mrf.mxu0
    %v2297 = vadd.f32 %v1751, %v2296
    %v2298 = vpop.f32.mrf.mxu0
    %2299 = vmatprep.mubr.bf16.mxu0 0
    %2300 = vmatmul.mubr.bf16.gmra.mxu0 %v1877
    %v2301 = vpop.f32.mrf.mxu0
    %v2302 = vadd.f32 %v1751, %v2301
    %v2303 = vpop.f32.mrf.mxu0
    %v2304 = vpop.f32.mrf.mxu0
    %v2305 = vadd.f32 %v1751, %v2304
    %v2306 = vpop.f32.mrf.mxu0
    %2307 = vmatprep.mubr.bf16.mxu0 0
    %2308 = vmatmul.mubr.bf16.gmra.mxu0 %v1880
    %v2309 = vpop.f32.mrf.mxu0
    %v2310 = vadd.f32 %v1751, %v2309
    %v2311 = vpop.f32.mrf.mxu0
    %v2312 = vpop.f32.mrf.mxu0
    %v2313 = vadd.f32 %v1751, %v2312
    %v2314 = vpop.f32.mrf.mxu0
    %2315 = vmatprep.mubr.bf16.mxu0 0
    %2316 = vmatmul.mubr.bf16.gmra.mxu0 %v1883
    %v2317 = vpop.f32.mrf.mxu0
    %v2318 = vadd.f32 %v1751, %v2317
    %v2319 = vpop.f32.mrf.mxu0
    %v2320 = vpop.f32.mrf.mxu0
    %v2321 = vadd.f32 %v1751, %v2320
    %v2322 = vpop.f32.mrf.mxu0
    %2323 = vmatprep.mubr.bf16.mxu0 0
    %2324 = vmatmul.mubr.bf16.gmra.mxu0 %v1886
    %v2325 = vpop.f32.mrf.mxu0
    %v2326 = vadd.f32 %v1751, %v2325
    %v2327 = vpop.f32.mrf.mxu0
    %v2328 = vpop.f32.mrf.mxu0
    %v2329 = vadd.f32 %v1751, %v2328
    %v2330 = vpop.f32.mrf.mxu0
    %2331 = vmatprep.mubr.bf16.mxu0 0
    %2332 = vmatmul.mubr.bf16.gmra.mxu0 %v1889
    %v2333 = vpop.f32.mrf.mxu0
    %v2334 = vadd.f32 %v1751, %v2333
    %v2335 = vpop.f32.mrf.mxu0
    %v2336 = vpop.f32.mrf.mxu0
    %v2337 = vadd.f32 %v1751, %v2336
    %v2338 = vpop.f32.mrf.mxu0
    %2339 = vmatprep.mubr.bf16.mxu0 0
    %2340 = vmatmul.mubr.bf16.gmra.mxu0 %v1892
    %v2341 = vpop.f32.mrf.mxu0
    %v2342 = vadd.f32 %v1751, %v2341
    %v2343 = vpop.f32.mrf.mxu0
    %v2344 = vpop.f32.mrf.mxu0
    %v2345 = vadd.f32 %v1751, %v2344
    %v2346 = vpop.f32.mrf.mxu0
    %2347 = vmatprep.mubr.bf16.mxu0 0
    %2348 = vmatmul.mubr.bf16.gmra.mxu0 %v1895
    %v2349 = vpop.f32.mrf.mxu0
    %v2350 = vadd.f32 %v1751, %v2349
    %v2351 = vpop.f32.mrf.mxu0
    %v2352 = vpop.f32.mrf.mxu0
    %v2353 = vadd.f32 %v1751, %v2352
    %v2354 = vpop.f32.mrf.mxu0
    %2355 = vmatprep.mubr.bf16.mxu0 0
    %2356 = vmatmul.mubr.bf16.gmra.mxu0 %v1898
    %v2357 = vpop.f32.mrf.mxu0
    %v2358 = vadd.f32 %v1751, %v2357
    %v2359 = vpop.f32.mrf.mxu0
    %v2360 = vpop.f32.mrf.mxu0
    %v2361 = vadd.f32 %v1751, %v2360
    %v2362 = vpop.f32.mrf.mxu0
    %2363 = vmatprep.mubr.bf16.mxu0 0
    %2364 = vmatmul.mubr.bf16.gmra.mxu0 %v1901
    %v2365 = vpop.f32.mrf.mxu0
    %v2366 = vadd.f32 %v1751, %v2365
    %v2367 = vpop.f32.mrf.mxu0
    %v2368 = vpop.f32.mrf.mxu0
    %v2369 = vadd.f32 %v1751, %v2368
    %v2370 = vpop.f32.mrf.mxu0
    %2371 = vmatprep.mubr.bf16.mxu0 0
    %2372 = vmatmul.mubr.bf16.gmra.mxu0 %v1904
    %v2373 = vpop.f32.mrf.mxu0
    %v2374 = vadd.f32 %v1751, %v2373
    %v2375 = vpop.f32.mrf.mxu0
    %v2376 = vpop.f32.mrf.mxu0
    %v2377 = vadd.f32 %v1751, %v2376
    %v2378 = vpop.f32.mrf.mxu0
    %2379 = vmatprep.mubr.bf16.mxu0 0
    %2380 = vmatmul.mubr.bf16.gmra.mxu0 %v1907
    %v2381 = vpop.f32.mrf.mxu0
    %v2382 = vadd.f32 %v1751, %v2381
    %v2383 = vpop.f32.mrf.mxu0
    %v2384 = vpop.f32.mrf.mxu0
    %v2385 = vadd.f32 %v1751, %v2384
    %v2386 = vpop.f32.mrf.mxu0
    %2387 = vmatprep.mubr.bf16.mxu0 0
    %2388 = vmatmul.mubr.bf16.gmra.mxu0 %v1910
    %v2389 = vpop.f32.mrf.mxu0
    %v2390 = vadd.f32 %v1751, %v2389
    %v2391 = vpop.f32.mrf.mxu0
    %v2392 = vpop.f32.mrf.mxu0
    %v2393 = vadd.f32 %v1751, %v2392
    %v2394 = vpop.f32.mrf.mxu0
    %2395 = vmatprep.mubr.bf16.mxu0 0
    %2396 = vmatmul.mubr.bf16.gmra.mxu0 %v1913
    %v2397 = vpop.f32.mrf.mxu0
    %v2398 = vadd.f32 %v1751, %v2397
    %v2399 = vpop.f32.mrf.mxu0
    %v2400 = vpop.f32.mrf.mxu0
    %v2401 = vadd.f32 %v1751, %v2400
    %v2402 = vpop.f32.mrf.mxu0
    %2403 = vmatprep.mubr.bf16.mxu0 0
    %2404 = vmatmul.mubr.bf16.gmra.mxu0 %v1916
    %v2405 = vpop.f32.mrf.mxu0
    %v2406 = vadd.f32 %v1751, %v2405
    %v2407 = vpop.f32.mrf.mxu0
    %v2408 = vpop.f32.mrf.mxu0
    %v2409 = vadd.f32 %v1751, %v2408
    %v2410 = vpop.f32.mrf.mxu0
    %2411 = vmatprep.mubr.bf16.mxu0 0
    %2412 = vmatmul.mubr.bf16.gmra.mxu0 %v1919
    %v2413 = vpop.f32.mrf.mxu0
    %v2414 = vadd.f32 %v1751, %v2413
    %v2415 = vpop.f32.mrf.mxu0
    %v2416 = vpop.f32.mrf.mxu0
    %v2417 = vadd.f32 %v1751, %v2416
    %v2418 = vpop.f32.mrf.mxu0
    %2419 = vmatprep.mubr.bf16.mxu0 0
    %2420 = vmatmul.mubr.bf16.gmra.mxu0 %v1922
    %v2421 = vpop.f32.mrf.mxu0
    %v2422 = vadd.f32 %v1751, %v2421
    %v2423 = vpop.f32.mrf.mxu0
    %v2424 = vpop.f32.mrf.mxu0
    %v2425 = vadd.f32 %v1751, %v2424
    %v2426 = vpop.f32.mrf.mxu0
    %2427 = vmatprep.mubr.bf16.mxu0 0
    %2428 = vmatmul.mubr.bf16.gmra.mxu0 %v1925
    %v2429 = vpop.f32.mrf.mxu0
    %v2430 = vadd.f32 %v1751, %v2429
    %v2431 = vpop.f32.mrf.mxu0
    %v2432 = vpop.f32.mrf.mxu0
    %v2433 = vadd.f32 %v1751, %v2432
    %v2434 = vpop.f32.mrf.mxu0
    %2435 = vmatprep.mubr.bf16.mxu0 0
    %2436 = vmatmul.mubr.bf16.gmra.mxu0 %v1928
    %v2437 = vpop.f32.mrf.mxu0
    %v2438 = vadd.f32 %v1751, %v2437
    %v2439 = vpop.f32.mrf.mxu0
    %v2440 = vpop.f32.mrf.mxu0
    %v2441 = vadd.f32 %v1751, %v2440
    %v2442 = vpop.f32.mrf.mxu0
    %2443 = vmatprep.mubr.bf16.mxu0 0
    %2444 = vmatmul.mubr.bf16.gmra.mxu0 %v1931
    %v2445 = vpop.f32.mrf.mxu0
    %v2446 = vadd.f32 %v1751, %v2445
    %v2447 = vpop.f32.mrf.mxu0
    %v2448 = vpop.f32.mrf.mxu0
    %v2449 = vadd.f32 %v1751, %v2448
    %v2450 = vpop.f32.mrf.mxu0
    %2451 = vmatprep.mubr.bf16.mxu0 0
    %2452 = vmatmul.mubr.bf16.gmra.mxu0 %v1934
    %v2453 = vpop.f32.mrf.mxu0
    %v2454 = vadd.f32 %v1751, %v2453
    %v2455 = vpop.f32.mrf.mxu0
    %v2456 = vpop.f32.mrf.mxu0
    %v2457 = vadd.f32 %v1751, %v2456
    %v2458 = vpop.f32.mrf.mxu0
    %2459 = vmatprep.mubr.bf16.mxu0 0
    %2460 = vmatmul.mubr.bf16.gmra.mxu0 %v1937
    %v2461 = vpop.f32.mrf.mxu0
    %v2462 = vadd.f32 %v1751, %v2461
    %v2463 = vpop.f32.mrf.mxu0
    %v2464 = vpop.f32.mrf.mxu0
    %v2465 = vadd.f32 %v1751, %v2464
    %v2466 = vpop.f32.mrf.mxu0
    %2467 = vmatprep.mubr.bf16.mxu0 0
    %2468 = vmatmul.mubr.bf16.gmra.mxu0 %v1940
    %v2469 = vpop.f32.mrf.mxu0
    %v2470 = vadd.f32 %v1751, %v2469
    %v2471 = vpop.f32.mrf.mxu0
    %v2472 = vpop.f32.mrf.mxu0
    %v2473 = vadd.f32 %v1751, %v2472
    %v2474 = vpop.f32.mrf.mxu0
    %2475 = vmatprep.mubr.bf16.mxu0 0
    %2476 = vmatmul.mubr.bf16.gmra.mxu0 %v1943
    %v2477 = vpop.f32.mrf.mxu0
    %v2478 = vadd.f32 %v1751, %v2477
    %v2479 = vpop.f32.mrf.mxu0
    %v2480 = vpop.f32.mrf.mxu0
    %v2481 = vadd.f32 %v1751, %v2480
    %v2482 = vpop.f32.mrf.mxu0
    %2483 = vmatprep.mubr.bf16.mxu0 0
    %2484 = vmatmul.mubr.bf16.gmra.mxu0 %v1946
    %v2485 = vpop.f32.mrf.mxu0
    %v2486 = vadd.f32 %v1751, %v2485
    %v2487 = vpop.f32.mrf.mxu0
    %v2488 = vpop.f32.mrf.mxu0
    %v2489 = vadd.f32 %v1751, %v2488
    %v2490 = vpop.f32.mrf.mxu0
    %2491 = vmatprep.mubr.bf16.mxu0 0
    %2492 = vmatmul.mubr.bf16.gmra.mxu0 %v1949
    %v2493 = vpop.f32.mrf.mxu0
    %v2494 = vadd.f32 %v1751, %v2493
    %v2495 = vpop.f32.mrf.mxu0
    %v2496 = vpop.f32.mrf.mxu0
    %v2497 = vadd.f32 %v1751, %v2496
    %v2498 = vpop.f32.mrf.mxu0
    %2499 = vdwg.mxu0
    %v2500 = vmax.f32 %v1990, 0.0
    %v2501 = vmax.f32 %v1993, 0.0
    %v2502 = vmax.f32 %v1998, 0.0
    %v2503 = vmax.f32 %v2001, 0.0
    %v2504 = vmax.f32 %v2006, 0.0
    %v2505 = vmax.f32 %v2009, 0.0
    %v2506 = vmax.f32 %v2014, 0.0
    %v2507 = vmax.f32 %v2017, 0.0
    %v2508 = vmax.f32 %v2022, 0.0
    %v2509 = vmax.f32 %v2025, 0.0
    %v2510 = vmax.f32 %v2030, 0.0
    %v2511 = vmax.f32 %v2033, 0.0
    %v2512 = vmax.f32 %v2038, 0.0
    %v2513 = vmax.f32 %v2041, 0.0
    %v2514 = vmax.f32 %v2046, 0.0
    %v2515 = vmax.f32 %v2049, 0.0
    %v2516 = vmax.f32 %v2054, 0.0
    %v2517 = vmax.f32 %v2057, 0.0
    %v2518 = vmax.f32 %v2062, 0.0
    %v2519 = vmax.f32 %v2065, 0.0
    %v2520 = vmax.f32 %v2070, 0.0
    %v2521 = vmax.f32 %v2073, 0.0
    %v2522 = vmax.f32 %v2078, 0.0
    %v2523 = vmax.f32 %v2081, 0.0
    %v2524 = vmax.f32 %v2086, 0.0
    %v2525 = vmax.f32 %v2089, 0.0
    %v2526 = vmax.f32 %v2094, 0.0
    %v2527 = vmax.f32 %v2097, 0.0
    %v2528 = vmax.f32 %v2102, 0.0
    %v2529 = vmax.f32 %v2105, 0.0
    %v2530 = vmax.f32 %v2110, 0.0
    %v2531 = vmax.f32 %v2113, 0.0
    %v2532 = vmax.f32 %v2118, 0.0
    %v2533 = vmax.f32 %v2121, 0.0
    %v2534 = vmax.f32 %v2126, 0.0
    %v2535 = vmax.f32 %v2129, 0.0
    %v2536 = vmax.f32 %v2134, 0.0
    %v2537 = vmax.f32 %v2137, 0.0
    %v2538 = vmax.f32 %v2142, 0.0
    %v2539 = vmax.f32 %v2145, 0.0
    %v2540 = vmax.f32 %v2150, 0.0
    %v2541 = vmax.f32 %v2153, 0.0
    %v2542 = vmax.f32 %v2158, 0.0
    %v2543 = vmax.f32 %v2161, 0.0
    %v2544 = vmax.f32 %v2166, 0.0
    %v2545 = vmax.f32 %v2169, 0.0
    %v2546 = vmax.f32 %v2174, 0.0
    %v2547 = vmax.f32 %v2177, 0.0
    %v2548 = vmax.f32 %v2182, 0.0
    %v2549 = vmax.f32 %v2185, 0.0
    %v2550 = vmax.f32 %v2190, 0.0
    %v2551 = vmax.f32 %v2193, 0.0
    %v2552 = vmax.f32 %v2198, 0.0
    %v2553 = vmax.f32 %v2201, 0.0
    %v2554 = vmax.f32 %v2206, 0.0
    %v2555 = vmax.f32 %v2209, 0.0
    %v2556 = vmax.f32 %v2214, 0.0
    %v2557 = vmax.f32 %v2217, 0.0
    %v2558 = vmax.f32 %v2222, 0.0
    %v2559 = vmax.f32 %v2225, 0.0
    %v2560 = vmax.f32 %v2230, 0.0
    %v2561 = vmax.f32 %v2233, 0.0
    %v2562 = vmax.f32 %v2238, 0.0
    %v2563 = vmax.f32 %v2241, 0.0
    %v2564 = vmax.f32 %v2246, 0.0
    %v2565 = vmax.f32 %v2249, 0.0
    %v2566 = vmax.f32 %v2254, 0.0
    %v2567 = vmax.f32 %v2257, 0.0
    %v2568 = vmax.f32 %v2262, 0.0
    %v2569 = vmax.f32 %v2265, 0.0
    %v2570 = vmax.f32 %v2270, 0.0
    %v2571 = vmax.f32 %v2273, 0.0
    %v2572 = vmax.f32 %v2278, 0.0
    %v2573 = vmax.f32 %v2281, 0.0
    %v2574 = vmax.f32 %v2286, 0.0
    %v2575 = vmax.f32 %v2289, 0.0
    %v2576 = vmax.f32 %v2294, 0.0
    %v2577 = vmax.f32 %v2297, 0.0
    %v2578 = vmax.f32 %v2302, 0.0
    %v2579 = vmax.f32 %v2305, 0.0
    %v2580 = vmax.f32 %v2310, 0.0
    %v2581 = vmax.f32 %v2313, 0.0
    %v2582 = vmax.f32 %v2318, 0.0
    %v2583 = vmax.f32 %v2321, 0.0
    %v2584 = vmax.f32 %v2326, 0.0
    %v2585 = vmax.f32 %v2329, 0.0
    %v2586 = vmax.f32 %v2334, 0.0
    %v2587 = vmax.f32 %v2337, 0.0
    %v2588 = vmax.f32 %v2342, 0.0
    %v2589 = vmax.f32 %v2345, 0.0
    %v2590 = vmax.f32 %v2350, 0.0
    %v2591 = vmax.f32 %v2353, 0.0
    %v2592 = vmax.f32 %v2358, 0.0
    %v2593 = vmax.f32 %v2361, 0.0
    %v2594 = vmax.f32 %v2366, 0.0
    %v2595 = vmax.f32 %v2369, 0.0
    %v2596 = vmax.f32 %v2374, 0.0
    %v2597 = vmax.f32 %v2377, 0.0
    %v2598 = vmax.f32 %v2382, 0.0
    %v2599 = vmax.f32 %v2385, 0.0
    %v2600 = vmax.f32 %v2390, 0.0
    %v2601 = vmax.f32 %v2393, 0.0
    %v2602 = vmax.f32 %v2398, 0.0
    %v2603 = vmax.f32 %v2401, 0.0
    %v2604 = vmax.f32 %v2406, 0.0
    %v2605 = vmax.f32 %v2409, 0.0
    %v2606 = vmax.f32 %v2414, 0.0
    %v2607 = vmax.f32 %v2417, 0.0
    %v2608 = vmax.f32 %v2422, 0.0
    %v2609 = vmax.f32 %v2425, 0.0
    %v2610 = vmax.f32 %v2430, 0.0
    %v2611 = vmax.f32 %v2433, 0.0
    %v2612 = vmax.f32 %v2438, 0.0
    %v2613 = vmax.f32 %v2441, 0.0
    %v2614 = vmax.f32 %v2446, 0.0
    %v2615 = vmax.f32 %v2449, 0.0
    %v2616 = vmax.f32 %v2454, 0.0
    %v2617 = vmax.f32 %v2457, 0.0
    %v2618 = vmax.f32 %v2462, 0.0
    %v2619 = vmax.f32 %v2465, 0.0
    %v2620 = vmax.f32 %v2470, 0.0
    %v2621 = vmax.f32 %v2473, 0.0
    %v2622 = vmax.f32 %v2478, 0.0
    %v2623 = vmax.f32 %v2481, 0.0
    %v2624 = vmax.f32 %v2486, 0.0
    %v2625 = vmax.f32 %v2489, 0.0
    %v2626 = vmax.f32 %v2494, 0.0
    %v2627 = vmax.f32 %v2497, 0.0
    %2756 = vrot.lane.b32.xlu0 %v2500, 64
    %v2757 = vpop.permute.xlu0 %2756
    %2758 = vrot.lane.b32.xlu0 %v2501, 64
    %v2759 = vpop.permute.xlu0 %2758
    %2760 = vrot.lane.b32.xlu0 %v2502, 64
    %v2761 = vpop.permute.xlu0 %2760
    %2762 = vrot.lane.b32.xlu0 %v2503, 64
    %v2763 = vpop.permute.xlu0 %2762
    %2764 = vrot.lane.b32.xlu0 %v2504, 64
    %v2765 = vpop.permute.xlu0 %2764
    %2766 = vrot.lane.b32.xlu0 %v2505, 64
    %v2767 = vpop.permute.xlu0 %2766
    %2768 = vrot.lane.b32.xlu0 %v2506, 64
    %v2769 = vpop.permute.xlu0 %2768
    %2770 = vrot.lane.b32.xlu0 %v2507, 64
    %v2771 = vpop.permute.xlu0 %2770
    %2772 = vrot.lane.b32.xlu0 %v2508, 64
    %v2773 = vpop.permute.xlu0 %2772
    %2774 = vrot.lane.b32.xlu0 %v2509, 64
    %v2775 = vpop.permute.xlu0 %2774
    %2776 = vrot.lane.b32.xlu0 %v2510, 64
    %v2777 = vpop.permute.xlu0 %2776
    %2778 = vrot.lane.b32.xlu0 %v2511, 64
    %v2779 = vpop.permute.xlu0 %2778
    %2780 = vrot.lane.b32.xlu0 %v2512, 64
    %v2781 = vpop.permute.xlu0 %2780
    %2782 = vrot.lane.b32.xlu0 %v2513, 64
    %v2783 = vpop.permute.xlu0 %2782
    %2784 = vrot.lane.b32.xlu0 %v2514, 64
    %v2785 = vpop.permute.xlu0 %2784
    %2786 = vrot.lane.b32.xlu0 %v2515, 64
    %v2787 = vpop.permute.xlu0 %2786
    %2788 = vrot.lane.b32.xlu0 %v2516, 64
    %v2789 = vpop.permute.xlu0 %2788
    %2790 = vrot.lane.b32.xlu0 %v2517, 64
    %v2791 = vpop.permute.xlu0 %2790
    %2792 = vrot.lane.b32.xlu0 %v2518, 64
    %v2793 = vpop.permute.xlu0 %2792
    %2794 = vrot.lane.b32.xlu0 %v2519, 64
    %v2795 = vpop.permute.xlu0 %2794
    %2796 = vrot.lane.b32.xlu0 %v2520, 64
    %v2797 = vpop.permute.xlu0 %2796
    %2798 = vrot.lane.b32.xlu0 %v2521, 64
    %v2799 = vpop.permute.xlu0 %2798
    %2800 = vrot.lane.b32.xlu0 %v2522, 64
    %v2801 = vpop.permute.xlu0 %2800
    %2802 = vrot.lane.b32.xlu0 %v2523, 64
    %v2803 = vpop.permute.xlu0 %2802
    %2804 = vrot.lane.b32.xlu0 %v2524, 64
    %v2805 = vpop.permute.xlu0 %2804
    %2806 = vrot.lane.b32.xlu0 %v2525, 64
    %v2807 = vpop.permute.xlu0 %2806
    %2808 = vrot.lane.b32.xlu0 %v2526, 64
    %v2809 = vpop.permute.xlu0 %2808
    %2810 = vrot.lane.b32.xlu0 %v2527, 64
    %v2811 = vpop.permute.xlu0 %2810
    %2812 = vrot.lane.b32.xlu0 %v2528, 64
    %v2813 = vpop.permute.xlu0 %2812
    %2814 = vrot.lane.b32.xlu0 %v2529, 64
    %v2815 = vpop.permute.xlu0 %2814
    %2816 = vrot.lane.b32.xlu0 %v2530, 64
    %v2817 = vpop.permute.xlu0 %2816
    %2818 = vrot.lane.b32.xlu0 %v2531, 64
    %v2819 = vpop.permute.xlu0 %2818
    %2820 = vrot.lane.b32.xlu0 %v2532, 64
    %v2821 = vpop.permute.xlu0 %2820
    %2822 = vrot.lane.b32.xlu0 %v2533, 64
    %v2823 = vpop.permute.xlu0 %2822
    %2824 = vrot.lane.b32.xlu0 %v2534, 64
    %v2825 = vpop.permute.xlu0 %2824
    %2826 = vrot.lane.b32.xlu0 %v2535, 64
    %v2827 = vpop.permute.xlu0 %2826
    %2828 = vrot.lane.b32.xlu0 %v2536, 64
    %v2829 = vpop.permute.xlu0 %2828
    %2830 = vrot.lane.b32.xlu0 %v2537, 64
    %v2831 = vpop.permute.xlu0 %2830
    %2832 = vrot.lane.b32.xlu0 %v2538, 64
    %v2833 = vpop.permute.xlu0 %2832
    %2834 = vrot.lane.b32.xlu0 %v2539, 64
    %v2835 = vpop.permute.xlu0 %2834
    %2836 = vrot.lane.b32.xlu0 %v2540, 64
    %v2837 = vpop.permute.xlu0 %2836
    %2838 = vrot.lane.b32.xlu0 %v2541, 64
    %v2839 = vpop.permute.xlu0 %2838
    %2840 = vrot.lane.b32.xlu0 %v2542, 64
    %v2841 = vpop.permute.xlu0 %2840
    %2842 = vrot.lane.b32.xlu0 %v2543, 64
    %v2843 = vpop.permute.xlu0 %2842
    %2844 = vrot.lane.b32.xlu0 %v2544, 64
    %v2845 = vpop.permute.xlu0 %2844
    %2846 = vrot.lane.b32.xlu0 %v2545, 64
    %v2847 = vpop.permute.xlu0 %2846
    %2848 = vrot.lane.b32.xlu0 %v2546, 64
    %v2849 = vpop.permute.xlu0 %2848
    %2850 = vrot.lane.b32.xlu0 %v2547, 64
    %v2851 = vpop.permute.xlu0 %2850
    %2852 = vrot.lane.b32.xlu0 %v2548, 64
    %v2853 = vpop.permute.xlu0 %2852
    %2854 = vrot.lane.b32.xlu0 %v2549, 64
    %v2855 = vpop.permute.xlu0 %2854
    %2856 = vrot.lane.b32.xlu0 %v2550, 64
    %v2857 = vpop.permute.xlu0 %2856
    %2858 = vrot.lane.b32.xlu0 %v2551, 64
    %v2859 = vpop.permute.xlu0 %2858
    %2860 = vrot.lane.b32.xlu0 %v2552, 64
    %v2861 = vpop.permute.xlu0 %2860
    %2862 = vrot.lane.b32.xlu0 %v2553, 64
    %v2863 = vpop.permute.xlu0 %2862
    %2864 = vrot.lane.b32.xlu0 %v2554, 64
    %v2865 = vpop.permute.xlu0 %2864
    %2866 = vrot.lane.b32.xlu0 %v2555, 64
    %v2867 = vpop.permute.xlu0 %2866
    %2868 = vrot.lane.b32.xlu0 %v2556, 64
    %v2869 = vpop.permute.xlu0 %2868
    %2870 = vrot.lane.b32.xlu0 %v2557, 64
    %v2871 = vpop.permute.xlu0 %2870
    %2872 = vrot.lane.b32.xlu0 %v2558, 64
    %v2873 = vpop.permute.xlu0 %2872
    %2874 = vrot.lane.b32.xlu0 %v2559, 64
    %v2875 = vpop.permute.xlu0 %2874
    %2876 = vrot.lane.b32.xlu0 %v2560, 64
    %v2877 = vpop.permute.xlu0 %2876
    %2878 = vrot.lane.b32.xlu0 %v2561, 64
    %v2879 = vpop.permute.xlu0 %2878
    %2880 = vrot.lane.b32.xlu0 %v2562, 64
    %v2881 = vpop.permute.xlu0 %2880
    %2882 = vrot.lane.b32.xlu0 %v2563, 64
    %v2883 = vpop.permute.xlu0 %2882
    %2884 = vrot.lane.b32.xlu0 %v2564, 64
    %v2885 = vpop.permute.xlu0 %2884
    %2886 = vrot.lane.b32.xlu0 %v2565, 64
    %v2887 = vpop.permute.xlu0 %2886
    %2888 = vrot.lane.b32.xlu0 %v2566, 64
    %v2889 = vpop.permute.xlu0 %2888
    %2890 = vrot.lane.b32.xlu0 %v2567, 64
    %v2891 = vpop.permute.xlu0 %2890
    %2892 = vrot.lane.b32.xlu0 %v2568, 64
    %v2893 = vpop.permute.xlu0 %2892
    %2894 = vrot.lane.b32.xlu0 %v2569, 64
    %v2895 = vpop.permute.xlu0 %2894
    %2896 = vrot.lane.b32.xlu0 %v2570, 64
    %v2897 = vpop.permute.xlu0 %2896
    %2898 = vrot.lane.b32.xlu0 %v2571, 64
    %v2899 = vpop.permute.xlu0 %2898
    %2900 = vrot.lane.b32.xlu0 %v2572, 64
    %v2901 = vpop.permute.xlu0 %2900
    %2902 = vrot.lane.b32.xlu0 %v2573, 64
    %v2903 = vpop.permute.xlu0 %2902
    %2904 = vrot.lane.b32.xlu0 %v2574, 64
    %v2905 = vpop.permute.xlu0 %2904
    %2906 = vrot.lane.b32.xlu0 %v2575, 64
    %v2907 = vpop.permute.xlu0 %2906
    %2908 = vrot.lane.b32.xlu0 %v2576, 64
    %v2909 = vpop.permute.xlu0 %2908
    %2910 = vrot.lane.b32.xlu0 %v2577, 64
    %v2911 = vpop.permute.xlu0 %2910
    %2912 = vrot.lane.b32.xlu0 %v2578, 64
    %v2913 = vpop.permute.xlu0 %2912
    %2914 = vrot.lane.b32.xlu0 %v2579, 64
    %v2915 = vpop.permute.xlu0 %2914
    %2916 = vrot.lane.b32.xlu0 %v2580, 64
    %v2917 = vpop.permute.xlu0 %2916
    %2918 = vrot.lane.b32.xlu0 %v2581, 64
    %v2919 = vpop.permute.xlu0 %2918
    %2920 = vrot.lane.b32.xlu0 %v2582, 64
    %v2921 = vpop.permute.xlu0 %2920
    %2922 = vrot.lane.b32.xlu0 %v2583, 64
    %v2923 = vpop.permute.xlu0 %2922
    %2924 = vrot.lane.b32.xlu0 %v2584, 64
    %v2925 = vpop.permute.xlu0 %2924
    %2926 = vrot.lane.b32.xlu0 %v2585, 64
    %v2927 = vpop.permute.xlu0 %2926
    %2928 = vrot.lane.b32.xlu0 %v2586, 64
    %v2929 = vpop.permute.xlu0 %2928
    %2930 = vrot.lane.b32.xlu0 %v2587, 64
    %v2931 = vpop.permute.xlu0 %2930
    %2932 = vrot.lane.b32.xlu0 %v2588, 64
    %v2933 = vpop.permute.xlu0 %2932
    %2934 = vrot.lane.b32.xlu0 %v2589, 64
    %v2935 = vpop.permute.xlu0 %2934
    %2936 = vrot.lane.b32.xlu0 %v2590, 64
    %v2937 = vpop.permute.xlu0 %2936
    %2938 = vrot.lane.b32.xlu0 %v2591, 64
    %v2939 = vpop.permute.xlu0 %2938
    %2940 = vrot.lane.b32.xlu0 %v2592, 64
    %v2941 = vpop.permute.xlu0 %2940
    %2942 = vrot.lane.b32.xlu0 %v2593, 64
    %v2943 = vpop.permute.xlu0 %2942
    %2944 = vrot.lane.b32.xlu0 %v2594, 64
    %v2945 = vpop.permute.xlu0 %2944
    %2946 = vrot.lane.b32.xlu0 %v2595, 64
    %v2947 = vpop.permute.xlu0 %2946
    %2948 = vrot.lane.b32.xlu0 %v2596, 64
    %v2949 = vpop.permute.xlu0 %2948
    %2950 = vrot.lane.b32.xlu0 %v2597, 64
    %v2951 = vpop.permute.xlu0 %2950
    %2952 = vrot.lane.b32.xlu0 %v2598, 64
    %v2953 = vpop.permute.xlu0 %2952
    %2954 = vrot.lane.b32.xlu0 %v2599, 64
    %v2955 = vpop.permute.xlu0 %2954
    %2956 = vrot.lane.b32.xlu0 %v2600, 64
    %v2957 = vpop.permute.xlu0 %2956
    %2958 = vrot.lane.b32.xlu0 %v2601, 64
    %v2959 = vpop.permute.xlu0 %2958
    %2960 = vrot.lane.b32.xlu0 %v2602, 64
    %v2961 = vpop.permute.xlu0 %2960
    %2962 = vrot.lane.b32.xlu0 %v2603, 64
    %v2963 = vpop.permute.xlu0 %2962
    %2964 = vrot.lane.b32.xlu0 %v2604, 64
    %v2965 = vpop.permute.xlu0 %2964
    %2966 = vrot.lane.b32.xlu0 %v2605, 64
    %v2967 = vpop.permute.xlu0 %2966
    %2968 = vrot.lane.b32.xlu0 %v2606, 64
    %v2969 = vpop.permute.xlu0 %2968
    %2970 = vrot.lane.b32.xlu0 %v2607, 64
    %v2971 = vpop.permute.xlu0 %2970
    %2972 = vrot.lane.b32.xlu0 %v2608, 64
    %v2973 = vpop.permute.xlu0 %2972
    %2974 = vrot.lane.b32.xlu0 %v2609, 64
    %v2975 = vpop.permute.xlu0 %2974
    %2976 = vrot.lane.b32.xlu0 %v2610, 64
    %v2977 = vpop.permute.xlu0 %2976
    %2978 = vrot.lane.b32.xlu0 %v2611, 64
    %v2979 = vpop.permute.xlu0 %2978
    %2980 = vrot.lane.b32.xlu0 %v2612, 64
    %v2981 = vpop.permute.xlu0 %2980
    %2982 = vrot.lane.b32.xlu0 %v2613, 64
    %v2983 = vpop.permute.xlu0 %2982
    %2984 = vrot.lane.b32.xlu0 %v2614, 64
    %v2985 = vpop.permute.xlu0 %2984
    %2986 = vrot.lane.b32.xlu0 %v2615, 64
    %v2987 = vpop.permute.xlu0 %2986
    %2988 = vrot.lane.b32.xlu0 %v2616, 64
    %v2989 = vpop.permute.xlu0 %2988
    %2990 = vrot.lane.b32.xlu0 %v2617, 64
    %v2991 = vpop.permute.xlu0 %2990
    %2992 = vrot.lane.b32.xlu0 %v2618, 64
    %v2993 = vpop.permute.xlu0 %2992
    %2994 = vrot.lane.b32.xlu0 %v2619, 64
    %v2995 = vpop.permute.xlu0 %2994
    %2996 = vrot.lane.b32.xlu0 %v2620, 64
    %v2997 = vpop.permute.xlu0 %2996
    %2998 = vrot.lane.b32.xlu0 %v2621, 64
    %v2999 = vpop.permute.xlu0 %2998
    %3000 = vrot.lane.b32.xlu0 %v2622, 64
    %v3001 = vpop.permute.xlu0 %3000
    %3002 = vrot.lane.b32.xlu0 %v2623, 64
    %v3003 = vpop.permute.xlu0 %3002
    %3004 = vrot.lane.b32.xlu0 %v2624, 64
    %v3005 = vpop.permute.xlu0 %3004
    %3006 = vrot.lane.b32.xlu0 %v2625, 64
    %v3007 = vpop.permute.xlu0 %3006
    %3008 = vrot.lane.b32.xlu0 %v2626, 64
    %v3009 = vpop.permute.xlu0 %3008
    %3010 = vrot.lane.b32.xlu0 %v2627, 64
    %v3011 = vpop.permute.xlu0 %3010
    %v3140 = vmax.f32 %v2500, %v2757
    %v3141 = vmax.f32 %v2501, %v2759
    %v3142 = vmax.f32 %v2502, %v2761
    %v3143 = vmax.f32 %v2503, %v2763
    %v3144 = vmax.f32 %v2504, %v2765
    %v3145 = vmax.f32 %v2505, %v2767
    %v3146 = vmax.f32 %v2506, %v2769
    %v3147 = vmax.f32 %v2507, %v2771
    %v3148 = vmax.f32 %v2508, %v2773
    %v3149 = vmax.f32 %v2509, %v2775
    %v3150 = vmax.f32 %v2510, %v2777
    %v3151 = vmax.f32 %v2511, %v2779
    %v3152 = vmax.f32 %v2512, %v2781
    %v3153 = vmax.f32 %v2513, %v2783
    %v3154 = vmax.f32 %v2514, %v2785
    %v3155 = vmax.f32 %v2515, %v2787
    %v3156 = vmax.f32 %v2516, %v2789
    %v3157 = vmax.f32 %v2517, %v2791
    %v3158 = vmax.f32 %v2518, %v2793
    %v3159 = vmax.f32 %v2519, %v2795
    %v3160 = vmax.f32 %v2520, %v2797
    %v3161 = vmax.f32 %v2521, %v2799
    %v3162 = vmax.f32 %v2522, %v2801
    %v3163 = vmax.f32 %v2523, %v2803
    %v3164 = vmax.f32 %v2524, %v2805
    %v3165 = vmax.f32 %v2525, %v2807
    %v3166 = vmax.f32 %v2526, %v2809
    %v3167 = vmax.f32 %v2527, %v2811
    %v3168 = vmax.f32 %v2528, %v2813
    %v3169 = vmax.f32 %v2529, %v2815
    %v3170 = vmax.f32 %v2530, %v2817
    %v3171 = vmax.f32 %v2531, %v2819
    %v3172 = vmax.f32 %v2532, %v2821
    %v3173 = vmax.f32 %v2533, %v2823
    %v3174 = vmax.f32 %v2534, %v2825
    %v3175 = vmax.f32 %v2535, %v2827
    %v3176 = vmax.f32 %v2536, %v2829
    %v3177 = vmax.f32 %v2537, %v2831
    %v3178 = vmax.f32 %v2538, %v2833
    %v3179 = vmax.f32 %v2539, %v2835
    %v3180 = vmax.f32 %v2540, %v2837
    %v3181 = vmax.f32 %v2541, %v2839
    %v3182 = vmax.f32 %v2542, %v2841
    %v3183 = vmax.f32 %v2543, %v2843
    %v3184 = vmax.f32 %v2544, %v2845
    %v3185 = vmax.f32 %v2545, %v2847
    %v3186 = vmax.f32 %v2546, %v2849
    %v3187 = vmax.f32 %v2547, %v2851
    %v3188 = vmax.f32 %v2548, %v2853
    %v3189 = vmax.f32 %v2549, %v2855
    %v3190 = vmax.f32 %v2550, %v2857
    %v3191 = vmax.f32 %v2551, %v2859
    %v3192 = vmax.f32 %v2552, %v2861
    %v3193 = vmax.f32 %v2553, %v2863
    %v3194 = vmax.f32 %v2554, %v2865
    %v3195 = vmax.f32 %v2555, %v2867
    %v3196 = vmax.f32 %v2556, %v2869
    %v3197 = vmax.f32 %v2557, %v2871
    %v3198 = vmax.f32 %v2558, %v2873
    %v3199 = vmax.f32 %v2559, %v2875
    %v3200 = vmax.f32 %v2560, %v2877
    %v3201 = vmax.f32 %v2561, %v2879
    %v3202 = vmax.f32 %v2562, %v2881
    %v3203 = vmax.f32 %v2563, %v2883
    %v3204 = vmax.f32 %v2564, %v2885
    %v3205 = vmax.f32 %v2565, %v2887
    %v3206 = vmax.f32 %v2566, %v2889
    %v3207 = vmax.f32 %v2567, %v2891
    %v3208 = vmax.f32 %v2568, %v2893
    %v3209 = vmax.f32 %v2569, %v2895
    %v3210 = vmax.f32 %v2570, %v2897
    %v3211 = vmax.f32 %v2571, %v2899
    %v3212 = vmax.f32 %v2572, %v2901
    %v3213 = vmax.f32 %v2573, %v2903
    %v3214 = vmax.f32 %v2574, %v2905
    %v3215 = vmax.f32 %v2575, %v2907
    %v3216 = vmax.f32 %v2576, %v2909
    %v3217 = vmax.f32 %v2577, %v2911
    %v3218 = vmax.f32 %v2578, %v2913
    %v3219 = vmax.f32 %v2579, %v2915
    %v3220 = vmax.f32 %v2580, %v2917
    %v3221 = vmax.f32 %v2581, %v2919
    %v3222 = vmax.f32 %v2582, %v2921
    %v3223 = vmax.f32 %v2583, %v2923
    %v3224 = vmax.f32 %v2584, %v2925
    %v3225 = vmax.f32 %v2585, %v2927
    %v3226 = vmax.f32 %v2586, %v2929
    %v3227 = vmax.f32 %v2587, %v2931
    %v3228 = vmax.f32 %v2588, %v2933
    %v3229 = vmax.f32 %v2589, %v2935
    %v3230 = vmax.f32 %v2590, %v2937
    %v3231 = vmax.f32 %v2591, %v2939
    %v3232 = vmax.f32 %v2592, %v2941
    %v3233 = vmax.f32 %v2593, %v2943
    %v3234 = vmax.f32 %v2594, %v2945
    %v3235 = vmax.f32 %v2595, %v2947
    %v3236 = vmax.f32 %v2596, %v2949
    %v3237 = vmax.f32 %v2597, %v2951
    %v3238 = vmax.f32 %v2598, %v2953
    %v3239 = vmax.f32 %v2599, %v2955
    %v3240 = vmax.f32 %v2600, %v2957
    %v3241 = vmax.f32 %v2601, %v2959
    %v3242 = vmax.f32 %v2602, %v2961
    %v3243 = vmax.f32 %v2603, %v2963
    %v3244 = vmax.f32 %v2604, %v2965
    %v3245 = vmax.f32 %v2605, %v2967
    %v3246 = vmax.f32 %v2606, %v2969
    %v3247 = vmax.f32 %v2607, %v2971
    %v3248 = vmax.f32 %v2608, %v2973
    %v3249 = vmax.f32 %v2609, %v2975
    %v3250 = vmax.f32 %v2610, %v2977
    %v3251 = vmax.f32 %v2611, %v2979
    %v3252 = vmax.f32 %v2612, %v2981
    %v3253 = vmax.f32 %v2613, %v2983
    %v3254 = vmax.f32 %v2614, %v2985
    %v3255 = vmax.f32 %v2615, %v2987
    %v3256 = vmax.f32 %v2616, %v2989
    %v3257 = vmax.f32 %v2617, %v2991
    %v3258 = vmax.f32 %v2618, %v2993
    %v3259 = vmax.f32 %v2619, %v2995
    %v3260 = vmax.f32 %v2620, %v2997
    %v3261 = vmax.f32 %v2621, %v2999
    %v3262 = vmax.f32 %v2622, %v3001
    %v3263 = vmax.f32 %v2623, %v3003
    %v3264 = vmax.f32 %v2624, %v3005
    %v3265 = vmax.f32 %v2625, %v3007
    %v3266 = vmax.f32 %v2626, %v3009
    %v3267 = vmax.f32 %v2627, %v3011
    %3392 = vrot.lane.b32.xlu0 %v3140, 80
    %v3393 = vpop.permute.xlu0 %3392
    %3394 = vrot.lane.b32.xlu0 %v3141, 80
    %v3395 = vpop.permute.xlu0 %3394
    %3396 = vrot.lane.b32.xlu0 %v3142, 80
    %v3397 = vpop.permute.xlu0 %3396
    %3398 = vrot.lane.b32.xlu0 %v3143, 80
    %v3399 = vpop.permute.xlu0 %3398
    %3400 = vrot.lane.b32.xlu0 %v3144, 80
    %v3401 = vpop.permute.xlu0 %3400
    %3402 = vrot.lane.b32.xlu0 %v3145, 80
    %v3403 = vpop.permute.xlu0 %3402
    %3404 = vrot.lane.b32.xlu0 %v3146, 80
    %v3405 = vpop.permute.xlu0 %3404
    %3406 = vrot.lane.b32.xlu0 %v3147, 80
    %v3407 = vpop.permute.xlu0 %3406
    %3408 = vrot.lane.b32.xlu0 %v3148, 80
    %v3409 = vpop.permute.xlu0 %3408
    %3410 = vrot.lane.b32.xlu0 %v3149, 80
    %v3411 = vpop.permute.xlu0 %3410
    %3412 = vrot.lane.b32.xlu0 %v3150, 80
    %v3413 = vpop.permute.xlu0 %3412
    %3414 = vrot.lane.b32.xlu0 %v3151, 80
    %v3415 = vpop.permute.xlu0 %3414
    %3416 = vrot.lane.b32.xlu0 %v3152, 80
    %v3417 = vpop.permute.xlu0 %3416
    %3418 = vrot.lane.b32.xlu0 %v3153, 80
    %v3419 = vpop.permute.xlu0 %3418
    %3420 = vrot.lane.b32.xlu0 %v3154, 80
    %v3421 = vpop.permute.xlu0 %3420
    %3422 = vrot.lane.b32.xlu0 %v3155, 80
    %v3423 = vpop.permute.xlu0 %3422
    %3424 = vrot.lane.b32.xlu0 %v3156, 80
    %v3425 = vpop.permute.xlu0 %3424
    %3426 = vrot.lane.b32.xlu0 %v3157, 80
    %v3427 = vpop.permute.xlu0 %3426
    %3428 = vrot.lane.b32.xlu0 %v3158, 80
    %v3429 = vpop.permute.xlu0 %3428
    %3430 = vrot.lane.b32.xlu0 %v3159, 80
    %v3431 = vpop.permute.xlu0 %3430
    %3432 = vrot.lane.b32.xlu0 %v3160, 80
    %v3433 = vpop.permute.xlu0 %3432
    %3434 = vrot.lane.b32.xlu0 %v3161, 80
    %v3435 = vpop.permute.xlu0 %3434
    %3436 = vrot.lane.b32.xlu0 %v3162, 80
    %v3437 = vpop.permute.xlu0 %3436
    %3438 = vrot.lane.b32.xlu0 %v3163, 80
    %v3439 = vpop.permute.xlu0 %3438
    %3440 = vrot.lane.b32.xlu0 %v3164, 80
    %v3441 = vpop.permute.xlu0 %3440
    %3442 = vrot.lane.b32.xlu0 %v3165, 80
    %v3443 = vpop.permute.xlu0 %3442
    %3444 = vrot.lane.b32.xlu0 %v3166, 80
    %v3445 = vpop.permute.xlu0 %3444
    %3446 = vrot.lane.b32.xlu0 %v3167, 80
    %v3447 = vpop.permute.xlu0 %3446
    %3448 = vrot.lane.b32.xlu0 %v3168, 80
    %v3449 = vpop.permute.xlu0 %3448
    %3450 = vrot.lane.b32.xlu0 %v3169, 80
    %v3451 = vpop.permute.xlu0 %3450
    %3452 = vrot.lane.b32.xlu0 %v3170, 80
    %v3453 = vpop.permute.xlu0 %3452
    %3454 = vrot.lane.b32.xlu0 %v3171, 80
    %v3455 = vpop.permute.xlu0 %3454
    %3456 = vrot.lane.b32.xlu0 %v3172, 80
    %v3457 = vpop.permute.xlu0 %3456
    %3458 = vrot.lane.b32.xlu0 %v3173, 80
    %v3459 = vpop.permute.xlu0 %3458
    %3460 = vrot.lane.b32.xlu0 %v3174, 80
    %v3461 = vpop.permute.xlu0 %3460
    %3462 = vrot.lane.b32.xlu0 %v3175, 80
    %v3463 = vpop.permute.xlu0 %3462
    %3464 = vrot.lane.b32.xlu0 %v3176, 80
    %v3465 = vpop.permute.xlu0 %3464
    %3466 = vrot.lane.b32.xlu0 %v3177, 80
    %v3467 = vpop.permute.xlu0 %3466
    %3468 = vrot.lane.b32.xlu0 %v3178, 80
    %v3469 = vpop.permute.xlu0 %3468
    %3470 = vrot.lane.b32.xlu0 %v3179, 80
    %v3471 = vpop.permute.xlu0 %3470
    %3472 = vrot.lane.b32.xlu0 %v3180, 80
    %v3473 = vpop.permute.xlu0 %3472
    %3474 = vrot.lane.b32.xlu0 %v3181, 80
    %v3475 = vpop.permute.xlu0 %3474
    %3476 = vrot.lane.b32.xlu0 %v3182, 80
    %v3477 = vpop.permute.xlu0 %3476
    %3478 = vrot.lane.b32.xlu0 %v3183, 80
    %v3479 = vpop.permute.xlu0 %3478
    %3480 = vrot.lane.b32.xlu0 %v3184, 80
    %v3481 = vpop.permute.xlu0 %3480
    %3482 = vrot.lane.b32.xlu0 %v3185, 80
    %v3483 = vpop.permute.xlu0 %3482
    %3484 = vrot.lane.b32.xlu0 %v3186, 80
    %v3485 = vpop.permute.xlu0 %3484
    %3486 = vrot.lane.b32.xlu0 %v3187, 80
    %v3487 = vpop.permute.xlu0 %3486
    %3488 = vrot.lane.b32.xlu0 %v3188, 80
    %v3489 = vpop.permute.xlu0 %3488
    %3490 = vrot.lane.b32.xlu0 %v3189, 80
    %v3491 = vpop.permute.xlu0 %3490
    %3492 = vrot.lane.b32.xlu0 %v3190, 80
    %v3493 = vpop.permute.xlu0 %3492
    %3494 = vrot.lane.b32.xlu0 %v3191, 80
    %v3495 = vpop.permute.xlu0 %3494
    %3496 = vrot.lane.b32.xlu0 %v3192, 80
    %v3497 = vpop.permute.xlu0 %3496
    %3498 = vrot.lane.b32.xlu0 %v3193, 80
    %v3499 = vpop.permute.xlu0 %3498
    %3500 = vrot.lane.b32.xlu0 %v3194, 80
    %v3501 = vpop.permute.xlu0 %3500
    %3502 = vrot.lane.b32.xlu0 %v3195, 80
    %v3503 = vpop.permute.xlu0 %3502
    %3504 = vrot.lane.b32.xlu0 %v3196, 80
    %v3505 = vpop.permute.xlu0 %3504
    %3506 = vrot.lane.b32.xlu0 %v3197, 80
    %v3507 = vpop.permute.xlu0 %3506
    %3508 = vrot.lane.b32.xlu0 %v3198, 80
    %v3509 = vpop.permute.xlu0 %3508
    %3510 = vrot.lane.b32.xlu0 %v3199, 80
    %v3511 = vpop.permute.xlu0 %3510
    %3512 = vrot.lane.b32.xlu0 %v3200, 80
    %v3513 = vpop.permute.xlu0 %3512
    %3514 = vrot.lane.b32.xlu0 %v3201, 80
    %v3515 = vpop.permute.xlu0 %3514
    %3516 = vrot.lane.b32.xlu0 %v3202, 80
    %v3517 = vpop.permute.xlu0 %3516
    %3518 = vrot.lane.b32.xlu0 %v3203, 80
    %v3519 = vpop.permute.xlu0 %3518
    %3520 = vrot.lane.b32.xlu0 %v3204, 80
    %v3521 = vpop.permute.xlu0 %3520
    %3522 = vrot.lane.b32.xlu0 %v3205, 80
    %v3523 = vpop.permute.xlu0 %3522
    %3524 = vrot.lane.b32.xlu0 %v3206, 80
    %v3525 = vpop.permute.xlu0 %3524
    %3526 = vrot.lane.b32.xlu0 %v3207, 80
    %v3527 = vpop.permute.xlu0 %3526
    %3528 = vrot.lane.b32.xlu0 %v3208, 80
    %v3529 = vpop.permute.xlu0 %3528
    %3530 = vrot.lane.b32.xlu0 %v3209, 80
    %v3531 = vpop.permute.xlu0 %3530
    %3532 = vrot.lane.b32.xlu0 %v3210, 80
    %v3533 = vpop.permute.xlu0 %3532
    %3534 = vrot.lane.b32.xlu0 %v3211, 80
    %v3535 = vpop.permute.xlu0 %3534
    %3536 = vrot.lane.b32.xlu0 %v3212, 80
    %v3537 = vpop.permute.xlu0 %3536
    %3538 = vrot.lane.b32.xlu0 %v3213, 80
    %v3539 = vpop.permute.xlu0 %3538
    %3540 = vrot.lane.b32.xlu0 %v3214, 80
    %v3541 = vpop.permute.xlu0 %3540
    %3542 = vrot.lane.b32.xlu0 %v3215, 80
    %v3543 = vpop.permute.xlu0 %3542
    %3544 = vrot.lane.b32.xlu0 %v3216, 80
    %v3545 = vpop.permute.xlu0 %3544
    %3546 = vrot.lane.b32.xlu0 %v3217, 80
    %v3547 = vpop.permute.xlu0 %3546
    %3548 = vrot.lane.b32.xlu0 %v3218, 80
    %v3549 = vpop.permute.xlu0 %3548
    %3550 = vrot.lane.b32.xlu0 %v3219, 80
    %v3551 = vpop.permute.xlu0 %3550
    %3552 = vrot.lane.b32.xlu0 %v3220, 80
    %v3553 = vpop.permute.xlu0 %3552
    %3554 = vrot.lane.b32.xlu0 %v3221, 80
    %v3555 = vpop.permute.xlu0 %3554
    %3556 = vrot.lane.b32.xlu0 %v3222, 80
    %v3557 = vpop.permute.xlu0 %3556
    %3558 = vrot.lane.b32.xlu0 %v3223, 80
    %v3559 = vpop.permute.xlu0 %3558
    %3560 = vrot.lane.b32.xlu0 %v3224, 80
    %v3561 = vpop.permute.xlu0 %3560
    %3562 = vrot.lane.b32.xlu0 %v3225, 80
    %v3563 = vpop.permute.xlu0 %3562
    %3564 = vrot.lane.b32.xlu0 %v3226, 80
    %v3565 = vpop.permute.xlu0 %3564
    %3566 = vrot.lane.b32.xlu0 %v3227, 80
    %v3567 = vpop.permute.xlu0 %3566
    %3568 = vrot.lane.b32.xlu0 %v3228, 80
    %v3569 = vpop.permute.xlu0 %3568
    %3570 = vrot.lane.b32.xlu0 %v3229, 80
    %v3571 = vpop.permute.xlu0 %3570
    %3572 = vrot.lane.b32.xlu0 %v3230, 80
    %v3573 = vpop.permute.xlu0 %3572
    %3574 = vrot.lane.b32.xlu0 %v3231, 80
    %v3575 = vpop.permute.xlu0 %3574
    %3576 = vrot.lane.b32.xlu0 %v3232, 80
    %v3577 = vpop.permute.xlu0 %3576
    %3578 = vrot.lane.b32.xlu0 %v3233, 80
    %v3579 = vpop.permute.xlu0 %3578
    %3580 = vrot.lane.b32.xlu0 %v3234, 80
    %v3581 = vpop.permute.xlu0 %3580
    %3582 = vrot.lane.b32.xlu0 %v3235, 80
    %v3583 = vpop.permute.xlu0 %3582
    %3584 = vrot.lane.b32.xlu0 %v3236, 80
    %v3585 = vpop.permute.xlu0 %3584
    %3586 = vrot.lane.b32.xlu0 %v3237, 80
    %v3587 = vpop.permute.xlu0 %3586
    %3588 = vrot.lane.b32.xlu0 %v3238, 80
    %v3589 = vpop.permute.xlu0 %3588
    %3590 = vrot.lane.b32.xlu0 %v3239, 80
    %v3591 = vpop.permute.xlu0 %3590
    %3592 = vrot.lane.b32.xlu0 %v3240, 80
    %v3593 = vpop.permute.xlu0 %3592
    %3594 = vrot.lane.b32.xlu0 %v3241, 80
    %v3595 = vpop.permute.xlu0 %3594
    %3596 = vrot.lane.b32.xlu0 %v3242, 80
    %v3597 = vpop.permute.xlu0 %3596
    %3598 = vrot.lane.b32.xlu0 %v3243, 80
    %v3599 = vpop.permute.xlu0 %3598
    %3600 = vrot.lane.b32.xlu0 %v3244, 80
    %v3601 = vpop.permute.xlu0 %3600
    %3602 = vrot.lane.b32.xlu0 %v3245, 80
    %v3603 = vpop.permute.xlu0 %3602
    %3604 = vrot.lane.b32.xlu0 %v3246, 80
    %v3605 = vpop.permute.xlu0 %3604
    %3606 = vrot.lane.b32.xlu0 %v3247, 80
    %v3607 = vpop.permute.xlu0 %3606
    %3608 = vrot.lane.b32.xlu0 %v3248, 80
    %v3609 = vpop.permute.xlu0 %3608
    %3610 = vrot.lane.b32.xlu0 %v3249, 80
    %v3611 = vpop.permute.xlu0 %3610
    %3612 = vrot.lane.b32.xlu0 %v3250, 80
    %v3613 = vpop.permute.xlu0 %3612
    %3614 = vrot.lane.b32.xlu0 %v3251, 80
    %v3615 = vpop.permute.xlu0 %3614
    %3616 = vrot.lane.b32.xlu0 %v3252, 80
    %v3617 = vpop.permute.xlu0 %3616
    %3618 = vrot.lane.b32.xlu0 %v3253, 80
    %v3619 = vpop.permute.xlu0 %3618
    %3620 = vrot.lane.b32.xlu0 %v3254, 80
    %v3621 = vpop.permute.xlu0 %3620
    %3622 = vrot.lane.b32.xlu0 %v3255, 80
    %v3623 = vpop.permute.xlu0 %3622
    %3624 = vrot.lane.b32.xlu0 %v3256, 80
    %v3625 = vpop.permute.xlu0 %3624
    %3626 = vrot.lane.b32.xlu0 %v3257, 80
    %v3627 = vpop.permute.xlu0 %3626
    %3628 = vrot.lane.b32.xlu0 %v3258, 80
    %v3629 = vpop.permute.xlu0 %3628
    %3630 = vrot.lane.b32.xlu0 %v3259, 80
    %v3631 = vpop.permute.xlu0 %3630
    %3632 = vrot.lane.b32.xlu0 %v3260, 80
    %v3633 = vpop.permute.xlu0 %3632
    %3634 = vrot.lane.b32.xlu0 %v3261, 80
    %v3635 = vpop.permute.xlu0 %3634
    %3636 = vrot.lane.b32.xlu0 %v3262, 80
    %v3637 = vpop.permute.xlu0 %3636
    %3638 = vrot.lane.b32.xlu0 %v3263, 80
    %v3639 = vpop.permute.xlu0 %3638
    %3768 = vrot.lane.b32.xlu0 %v3140, 16
    %v3769 = vpop.permute.xlu0 %3768
    %3770 = vrot.lane.b32.xlu0 %v3141, 16
    %v3771 = vpop.permute.xlu0 %3770
    %3772 = vrot.lane.b32.xlu0 %v3142, 16
    %v3773 = vpop.permute.xlu0 %3772
    %3774 = vrot.lane.b32.xlu0 %v3143, 16
    %v3775 = vpop.permute.xlu0 %3774
    %3776 = vrot.lane.b32.xlu0 %v3144, 16
    %v3777 = vpop.permute.xlu0 %3776
    %3778 = vrot.lane.b32.xlu0 %v3145, 16
    %v3779 = vpop.permute.xlu0 %3778
    %3780 = vrot.lane.b32.xlu0 %v3146, 16
    %v3781 = vpop.permute.xlu0 %3780
    %3782 = vrot.lane.b32.xlu0 %v3147, 16
    %v3783 = vpop.permute.xlu0 %3782
    %3784 = vrot.lane.b32.xlu0 %v3148, 16
    %v3785 = vpop.permute.xlu0 %3784
    %3786 = vrot.lane.b32.xlu0 %v3149, 16
    %v3787 = vpop.permute.xlu0 %3786
    %3788 = vrot.lane.b32.xlu0 %v3150, 16
    %v3789 = vpop.permute.xlu0 %3788
    %3790 = vrot.lane.b32.xlu0 %v3151, 16
    %v3791 = vpop.permute.xlu0 %3790
    %3792 = vrot.lane.b32.xlu0 %v3152, 16
    %v3793 = vpop.permute.xlu0 %3792
    %3794 = vrot.lane.b32.xlu0 %v3153, 16
    %v3795 = vpop.permute.xlu0 %3794
    %3796 = vrot.lane.b32.xlu0 %v3154, 16
    %v3797 = vpop.permute.xlu0 %3796
    %3798 = vrot.lane.b32.xlu0 %v3155, 16
    %v3799 = vpop.permute.xlu0 %3798
    %3800 = vrot.lane.b32.xlu0 %v3156, 16
    %v3801 = vpop.permute.xlu0 %3800
    %3802 = vrot.lane.b32.xlu0 %v3157, 16
    %v3803 = vpop.permute.xlu0 %3802
    %3804 = vrot.lane.b32.xlu0 %v3158, 16
    %v3805 = vpop.permute.xlu0 %3804
    %3806 = vrot.lane.b32.xlu0 %v3159, 16
    %v3807 = vpop.permute.xlu0 %3806
    %3808 = vrot.lane.b32.xlu0 %v3160, 16
    %v3809 = vpop.permute.xlu0 %3808
    %3810 = vrot.lane.b32.xlu0 %v3161, 16
    %v3811 = vpop.permute.xlu0 %3810
    %3812 = vrot.lane.b32.xlu0 %v3162, 16
    %v3813 = vpop.permute.xlu0 %3812
    %3814 = vrot.lane.b32.xlu0 %v3163, 16
    %v3815 = vpop.permute.xlu0 %3814
    %3816 = vrot.lane.b32.xlu0 %v3164, 16
    %v3817 = vpop.permute.xlu0 %3816
    %3818 = vrot.lane.b32.xlu0 %v3165, 16
    %v3819 = vpop.permute.xlu0 %3818
    %3820 = vrot.lane.b32.xlu0 %v3166, 16
    %v3821 = vpop.permute.xlu0 %3820
    %3822 = vrot.lane.b32.xlu0 %v3167, 16
    %v3823 = vpop.permute.xlu0 %3822
    %3824 = vrot.lane.b32.xlu0 %v3168, 16
    %v3825 = vpop.permute.xlu0 %3824
    %3826 = vrot.lane.b32.xlu0 %v3169, 16
    %v3827 = vpop.permute.xlu0 %3826
    %3828 = vrot.lane.b32.xlu0 %v3170, 16
    %v3829 = vpop.permute.xlu0 %3828
    %3830 = vrot.lane.b32.xlu0 %v3171, 16
    %v3831 = vpop.permute.xlu0 %3830
    %3832 = vrot.lane.b32.xlu0 %v3172, 16
    %v3833 = vpop.permute.xlu0 %3832
    %3834 = vrot.lane.b32.xlu0 %v3173, 16
    %v3835 = vpop.permute.xlu0 %3834
    %3836 = vrot.lane.b32.xlu0 %v3174, 16
    %v3837 = vpop.permute.xlu0 %3836
    %3838 = vrot.lane.b32.xlu0 %v3175, 16
    %v3839 = vpop.permute.xlu0 %3838
    %3840 = vrot.lane.b32.xlu0 %v3176, 16
    %v3841 = vpop.permute.xlu0 %3840
    %3842 = vrot.lane.b32.xlu0 %v3177, 16
    %v3843 = vpop.permute.xlu0 %3842
    %3844 = vrot.lane.b32.xlu0 %v3178, 16
    %v3845 = vpop.permute.xlu0 %3844
    %3846 = vrot.lane.b32.xlu0 %v3179, 16
    %v3847 = vpop.permute.xlu0 %3846
    %3848 = vrot.lane.b32.xlu0 %v3180, 16
    %v3849 = vpop.permute.xlu0 %3848
    %3850 = vrot.lane.b32.xlu0 %v3181, 16
    %v3851 = vpop.permute.xlu0 %3850
    %3852 = vrot.lane.b32.xlu0 %v3182, 16
    %v3853 = vpop.permute.xlu0 %3852
    %3854 = vrot.lane.b32.xlu0 %v3183, 16
    %v3855 = vpop.permute.xlu0 %3854
    %3856 = vrot.lane.b32.xlu0 %v3184, 16
    %v3857 = vpop.permute.xlu0 %3856
    %3858 = vrot.lane.b32.xlu0 %v3185, 16
    %v3859 = vpop.permute.xlu0 %3858
    %3860 = vrot.lane.b32.xlu0 %v3186, 16
    %v3861 = vpop.permute.xlu0 %3860
    %3862 = vrot.lane.b32.xlu0 %v3187, 16
    %v3863 = vpop.permute.xlu0 %3862
    %3864 = vrot.lane.b32.xlu0 %v3188, 16
    %v3865 = vpop.permute.xlu0 %3864
    %3866 = vrot.lane.b32.xlu0 %v3189, 16
    %v3867 = vpop.permute.xlu0 %3866
    %3868 = vrot.lane.b32.xlu0 %v3190, 16
    %v3869 = vpop.permute.xlu0 %3868
    %3870 = vrot.lane.b32.xlu0 %v3191, 16
    %v3871 = vpop.permute.xlu0 %3870
    %3872 = vrot.lane.b32.xlu0 %v3192, 16
    %v3873 = vpop.permute.xlu0 %3872
    %3874 = vrot.lane.b32.xlu0 %v3193, 16
    %v3875 = vpop.permute.xlu0 %3874
    %3876 = vrot.lane.b32.xlu0 %v3194, 16
    %v3877 = vpop.permute.xlu0 %3876
    %3878 = vrot.lane.b32.xlu0 %v3195, 16
    %v3879 = vpop.permute.xlu0 %3878
    %3880 = vrot.lane.b32.xlu0 %v3196, 16
    %v3881 = vpop.permute.xlu0 %3880
    %3882 = vrot.lane.b32.xlu0 %v3197, 16
    %v3883 = vpop.permute.xlu0 %3882
    %3884 = vrot.lane.b32.xlu0 %v3198, 16
    %v3885 = vpop.permute.xlu0 %3884
    %3886 = vrot.lane.b32.xlu0 %v3199, 16
    %v3887 = vpop.permute.xlu0 %3886
    %3888 = vrot.lane.b32.xlu0 %v3200, 16
    %v3889 = vpop.permute.xlu0 %3888
    %3890 = vrot.lane.b32.xlu0 %v3201, 16
    %v3891 = vpop.permute.xlu0 %3890
    %3892 = vrot.lane.b32.xlu0 %v3202, 16
    %v3893 = vpop.permute.xlu0 %3892
    %3894 = vrot.lane.b32.xlu0 %v3203, 16
    %v3895 = vpop.permute.xlu0 %3894
    %3896 = vrot.lane.b32.xlu0 %v3204, 16
    %v3897 = vpop.permute.xlu0 %3896
    %3898 = vrot.lane.b32.xlu0 %v3205, 16
    %v3899 = vpop.permute.xlu0 %3898
    %3900 = vrot.lane.b32.xlu0 %v3206, 16
    %v3901 = vpop.permute.xlu0 %3900
    %3902 = vrot.lane.b32.xlu0 %v3207, 16
    %v3903 = vpop.permute.xlu0 %3902
    %3904 = vrot.lane.b32.xlu0 %v3208, 16
    %v3905 = vpop.permute.xlu0 %3904
    %3906 = vrot.lane.b32.xlu0 %v3209, 16
    %v3907 = vpop.permute.xlu0 %3906
    %3908 = vrot.lane.b32.xlu0 %v3210, 16
    %v3909 = vpop.permute.xlu0 %3908
    %3910 = vrot.lane.b32.xlu0 %v3211, 16
    %v3911 = vpop.permute.xlu0 %3910
    %3912 = vrot.lane.b32.xlu0 %v3212, 16
    %v3913 = vpop.permute.xlu0 %3912
    %3914 = vrot.lane.b32.xlu0 %v3213, 16
    %v3915 = vpop.permute.xlu0 %3914
    %3916 = vrot.lane.b32.xlu0 %v3214, 16
    %v3917 = vpop.permute.xlu0 %3916
    %3918 = vrot.lane.b32.xlu0 %v3215, 16
    %v3919 = vpop.permute.xlu0 %3918
    %3920 = vrot.lane.b32.xlu0 %v3216, 16
    %v3921 = vpop.permute.xlu0 %3920
    %3922 = vrot.lane.b32.xlu0 %v3217, 16
    %v3923 = vpop.permute.xlu0 %3922
    %3924 = vrot.lane.b32.xlu0 %v3218, 16
    %v3925 = vpop.permute.xlu0 %3924
    %3926 = vrot.lane.b32.xlu0 %v3219, 16
    %v3927 = vpop.permute.xlu0 %3926
    %3928 = vrot.lane.b32.xlu0 %v3220, 16
    %v3929 = vpop.permute.xlu0 %3928
    %3930 = vrot.lane.b32.xlu0 %v3221, 16
    %v3931 = vpop.permute.xlu0 %3930
    %3932 = vrot.lane.b32.xlu0 %v3222, 16
    %v3933 = vpop.permute.xlu0 %3932
    %3934 = vrot.lane.b32.xlu0 %v3223, 16
    %v3935 = vpop.permute.xlu0 %3934
    %3936 = vrot.lane.b32.xlu0 %v3224, 16
    %v3937 = vpop.permute.xlu0 %3936
    %3938 = vrot.lane.b32.xlu0 %v3225, 16
    %v3939 = vpop.permute.xlu0 %3938
    %3940 = vrot.lane.b32.xlu0 %v3226, 16
    %v3941 = vpop.permute.xlu0 %3940
    %3942 = vrot.lane.b32.xlu0 %v3227, 16
    %v3943 = vpop.permute.xlu0 %3942
    %3944 = vrot.lane.b32.xlu0 %v3228, 16
    %v3945 = vpop.permute.xlu0 %3944
    %3946 = vrot.lane.b32.xlu0 %v3229, 16
    %v3947 = vpop.permute.xlu0 %3946
    %3948 = vrot.lane.b32.xlu0 %v3230, 16
    %v3949 = vpop.permute.xlu0 %3948
    %3950 = vrot.lane.b32.xlu0 %v3231, 16
    %v3951 = vpop.permute.xlu0 %3950
    %3952 = vrot.lane.b32.xlu0 %v3232, 16
    %v3953 = vpop.permute.xlu0 %3952
    %3954 = vrot.lane.b32.xlu0 %v3233, 16
    %v3955 = vpop.permute.xlu0 %3954
    %3956 = vrot.lane.b32.xlu0 %v3234, 16
    %v3957 = vpop.permute.xlu0 %3956
    %3958 = vrot.lane.b32.xlu0 %v3235, 16
    %v3959 = vpop.permute.xlu0 %3958
    %3960 = vrot.lane.b32.xlu0 %v3236, 16
    %v3961 = vpop.permute.xlu0 %3960
    %3962 = vrot.lane.b32.xlu0 %v3237, 16
    %v3963 = vpop.permute.xlu0 %3962
    %3964 = vrot.lane.b32.xlu0 %v3238, 16
    %v3965 = vpop.permute.xlu0 %3964
    %3966 = vrot.lane.b32.xlu0 %v3239, 16
    %v3967 = vpop.permute.xlu0 %3966
    %3968 = vrot.lane.b32.xlu0 %v3240, 16
    %v3969 = vpop.permute.xlu0 %3968
    %3970 = vrot.lane.b32.xlu0 %v3241, 16
    %v3971 = vpop.permute.xlu0 %3970
    %3972 = vrot.lane.b32.xlu0 %v3242, 16
    %v3973 = vpop.permute.xlu0 %3972
    %3974 = vrot.lane.b32.xlu0 %v3243, 16
    %v3975 = vpop.permute.xlu0 %3974
    %3976 = vrot.lane.b32.xlu0 %v3244, 16
    %v3977 = vpop.permute.xlu0 %3976
    %3978 = vrot.lane.b32.xlu0 %v3245, 16
    %v3979 = vpop.permute.xlu0 %3978
    %3980 = vrot.lane.b32.xlu0 %v3246, 16
    %v3981 = vpop.permute.xlu0 %3980
    %3982 = vrot.lane.b32.xlu0 %v3247, 16
    %v3983 = vpop.permute.xlu0 %3982
    %3984 = vrot.lane.b32.xlu0 %v3248, 16
    %v3985 = vpop.permute.xlu0 %3984
    %3986 = vrot.lane.b32.xlu0 %v3249, 16
    %v3987 = vpop.permute.xlu0 %3986
    %3988 = vrot.lane.b32.xlu0 %v3250, 16
    %v3989 = vpop.permute.xlu0 %3988
    %3990 = vrot.lane.b32.xlu0 %v3251, 16
    %v3991 = vpop.permute.xlu0 %3990
    %3992 = vrot.lane.b32.xlu0 %v3252, 16
    %v3993 = vpop.permute.xlu0 %3992
    %3994 = vrot.lane.b32.xlu0 %v3253, 16
    %v3995 = vpop.permute.xlu0 %3994
    %3996 = vrot.lane.b32.xlu0 %v3254, 16
    %v3997 = vpop.permute.xlu0 %3996
    %3998 = vrot.lane.b32.xlu0 %v3255, 16
    %v3999 = vpop.permute.xlu0 %3998
    %4000 = vrot.lane.b32.xlu0 %v3256, 16
    %v4001 = vpop.permute.xlu0 %4000
    %4002 = vrot.lane.b32.xlu0 %v3257, 16
    %v4003 = vpop.permute.xlu0 %4002
    %4004 = vrot.lane.b32.xlu0 %v3258, 16
    %v4005 = vpop.permute.xlu0 %4004
    %4006 = vrot.lane.b32.xlu0 %v3259, 16
    %v4007 = vpop.permute.xlu0 %4006
    %4008 = vrot.lane.b32.xlu0 %v3260, 16
    %v4009 = vpop.permute.xlu0 %4008
    %4010 = vrot.lane.b32.xlu0 %v3261, 16
    %v4011 = vpop.permute.xlu0 %4010
    %4012 = vrot.lane.b32.xlu0 %v3262, 16
    %v4013 = vpop.permute.xlu0 %4012
    %4014 = vrot.lane.b32.xlu0 %v3263, 16
    %v4015 = vpop.permute.xlu0 %4014
    %4016 = vrot.lane.b32.xlu0 %v3264, 16
    %v4017 = vpop.permute.xlu0 %4016
    %4018 = vrot.lane.b32.xlu0 %v3265, 16
    %v4019 = vpop.permute.xlu0 %4018
    %4020 = vrot.lane.b32.xlu0 %v3266, 16
    %v4021 = vpop.permute.xlu0 %4020
    %4022 = vrot.lane.b32.xlu0 %v3267, 16
    %v4023 = vpop.permute.xlu0 %4022
    %4152 = vrot.lane.b32.xlu0 %v3264, 80
    %v4153 = vpop.permute.xlu0 %4152
    %4154 = vrot.lane.b32.xlu0 %v3265, 80
    %v4155 = vpop.permute.xlu0 %4154
    %4156 = vrot.lane.b32.xlu0 %v3266, 80
    %v4157 = vpop.permute.xlu0 %4156
    %4158 = vrot.lane.b32.xlu0 %v3267, 80
    %v4159 = vpop.permute.xlu0 %4158
    %4160 = vrot.lane.b32.xlu0 0.0, 80
    %v4161 = vpop.permute.xlu0 %4160
    %vm4167 = vcmask 130048
    %v4168 = vsel %vm4167, 0.0, %v3769
    %v4169 = vsel %vm4167, 0.0, %v3771
    %v4170 = vsel %vm4167, 0.0, %v3773
    %v4171 = vsel %vm4167, 0.0, %v3775
    %v4172 = vsel %vm4167, %v3393, %v3777
    %v4173 = vsel %vm4167, %v3395, %v3779
    %v4174 = vsel %vm4167, %v3397, %v3781
    %v4175 = vsel %vm4167, %v3399, %v3783
    %v4176 = vsel %vm4167, %v3401, %v3785
    %v4177 = vsel %vm4167, %v3403, %v3787
    %v4178 = vsel %vm4167, %v3405, %v3789
    %v4179 = vsel %vm4167, %v3407, %v3791
    %v4180 = vsel %vm4167, %v3409, %v3793
    %v4181 = vsel %vm4167, %v3411, %v3795
    %v4182 = vsel %vm4167, %v3413, %v3797
    %v4183 = vsel %vm4167, %v3415, %v3799
    %v4184 = vsel %vm4167, %v3417, %v3801
    %v4185 = vsel %vm4167, %v3419, %v3803
    %v4186 = vsel %vm4167, %v3421, %v3805
    %v4187 = vsel %vm4167, %v3423, %v3807
    %v4188 = vsel %vm4167, %v3425, %v3809
    %v4189 = vsel %vm4167, %v3427, %v3811
    %v4190 = vsel %vm4167, %v3429, %v3813
    %v4191 = vsel %vm4167, %v3431, %v3815
    %v4192 = vsel %vm4167, %v3433, %v3817
    %v4193 = vsel %vm4167, %v3435, %v3819
    %v4194 = vsel %vm4167, %v3437, %v3821
    %v4195 = vsel %vm4167, %v3439, %v3823
    %v4196 = vsel %vm4167, %v3441, %v3825
    %v4197 = vsel %vm4167, %v3443, %v3827
    %v4198 = vsel %vm4167, %v3445, %v3829
    %v4199 = vsel %vm4167, %v3447, %v3831
    %v4200 = vsel %vm4167, %v3449, %v3833
    %v4201 = vsel %vm4167, %v3451, %v3835
    %v4202 = vsel %vm4167, %v3453, %v3837
    %v4203 = vsel %vm4167, %v3455, %v3839
    %v4204 = vsel %vm4167, %v3457, %v3841
    %v4205 = vsel %vm4167, %v3459, %v3843
    %v4206 = vsel %vm4167, %v3461, %v3845
    %v4207 = vsel %vm4167, %v3463, %v3847
    %v4208 = vsel %vm4167, %v3465, %v3849
    %v4209 = vsel %vm4167, %v3467, %v3851
    %v4210 = vsel %vm4167, %v3469, %v3853
    %v4211 = vsel %vm4167, %v3471, %v3855
    %v4212 = vsel %vm4167, %v3473, %v3857
    %v4213 = vsel %vm4167, %v3475, %v3859
    %v4214 = vsel %vm4167, %v3477, %v3861
    %v4215 = vsel %vm4167, %v3479, %v3863
    %v4216 = vsel %vm4167, %v3481, %v3865
    %v4217 = vsel %vm4167, %v3483, %v3867
    %v4218 = vsel %vm4167, %v3485, %v3869
    %v4219 = vsel %vm4167, %v3487, %v3871
    %v4220 = vsel %vm4167, %v3489, %v3873
    %v4221 = vsel %vm4167, %v3491, %v3875
    %v4222 = vsel %vm4167, %v3493, %v3877
    %v4223 = vsel %vm4167, %v3495, %v3879
    %v4224 = vsel %vm4167, %v3497, %v3881
    %v4225 = vsel %vm4167, %v3499, %v3883
    %v4226 = vsel %vm4167, %v3501, %v3885
    %v4227 = vsel %vm4167, %v3503, %v3887
    %v4228 = vsel %vm4167, %v3505, %v3889
    %v4229 = vsel %vm4167, %v3507, %v3891
    %v4230 = vsel %vm4167, %v3509, %v3893
    %v4231 = vsel %vm4167, %v3511, %v3895
    %v4232 = vsel %vm4167, %v3513, %v3897
    %v4233 = vsel %vm4167, %v3515, %v3899
    %v4234 = vsel %vm4167, %v3517, %v3901
    %v4235 = vsel %vm4167, %v3519, %v3903
    %v4236 = vsel %vm4167, %v3521, %v3905
    %v4237 = vsel %vm4167, %v3523, %v3907
    %v4238 = vsel %vm4167, %v3525, %v3909
    %v4239 = vsel %vm4167, %v3527, %v3911
    %v4240 = vsel %vm4167, %v3529, %v3913
    %v4241 = vsel %vm4167, %v3531, %v3915
    %v4242 = vsel %vm4167, %v3533, %v3917
    %v4243 = vsel %vm4167, %v3535, %v3919
    %v4244 = vsel %vm4167, %v3537, %v3921
    %v4245 = vsel %vm4167, %v3539, %v3923
    %v4246 = vsel %vm4167, %v3541, %v3925
    %v4247 = vsel %vm4167, %v3543, %v3927
    %v4248 = vsel %vm4167, %v3545, %v3929
    %v4249 = vsel %vm4167, %v3547, %v3931
    %v4250 = vsel %vm4167, %v3549, %v3933
    %v4251 = vsel %vm4167, %v3551, %v3935
    %v4252 = vsel %vm4167, %v3553, %v3937
    %v4253 = vsel %vm4167, %v3555, %v3939
    %v4254 = vsel %vm4167, %v3557, %v3941
    %v4255 = vsel %vm4167, %v3559, %v3943
    %v4256 = vsel %vm4167, %v3561, %v3945
    %v4257 = vsel %vm4167, %v3563, %v3947
    %v4258 = vsel %vm4167, %v3565, %v3949
    %v4259 = vsel %vm4167, %v3567, %v3951
    %v4260 = vsel %vm4167, %v3569, %v3953
    %v4261 = vsel %vm4167, %v3571, %v3955
    %v4262 = vsel %vm4167, %v3573, %v3957
    %v4263 = vsel %vm4167, %v3575, %v3959
    %v4264 = vsel %vm4167, %v3577, %v3961
    %v4265 = vsel %vm4167, %v3579, %v3963
    %v4266 = vsel %vm4167, %v3581, %v3965
    %v4267 = vsel %vm4167, %v3583, %v3967
    %v4268 = vsel %vm4167, %v3585, %v3969
    %v4269 = vsel %vm4167, %v3587, %v3971
    %v4270 = vsel %vm4167, %v3589, %v3973
    %v4271 = vsel %vm4167, %v3591, %v3975
    %v4272 = vsel %vm4167, %v3593, %v3977
    %v4273 = vsel %vm4167, %v3595, %v3979
    %v4274 = vsel %vm4167, %v3597, %v3981
    %v4275 = vsel %vm4167, %v3599, %v3983
    %v4276 = vsel %vm4167, %v3601, %v3985
    %v4277 = vsel %vm4167, %v3603, %v3987
    %v4278 = vsel %vm4167, %v3605, %v3989
    %v4279 = vsel %vm4167, %v3607, %v3991
    %v4280 = vsel %vm4167, %v3609, %v3993
    %v4281 = vsel %vm4167, %v3611, %v3995
    %v4282 = vsel %vm4167, %v3613, %v3997
    %v4283 = vsel %vm4167, %v3615, %v3999
    %v4284 = vsel %vm4167, %v3617, %v4001
    %v4285 = vsel %vm4167, %v3619, %v4003
    %v4286 = vsel %vm4167, %v3621, %v4005
    %v4287 = vsel %vm4167, %v3623, %v4007
    %v4288 = vsel %vm4167, %v3625, %v4009
    %v4289 = vsel %vm4167, %v3627, %v4011
    %v4290 = vsel %vm4167, %v3629, %v4013
    %v4291 = vsel %vm4167, %v3631, %v4015
    %v4292 = vsel %vm4167, %v3633, %v4017
    %v4293 = vsel %vm4167, %v3635, %v4019
    %v4294 = vsel %vm4167, %v3637, %v4021
    %v4295 = vsel %vm4167, %v3639, %v4023
    %vm4296 = vcmask 654336
    %v4297 = vsel %vm4296, %v4168, %v3401
    %v4298 = vsel %vm4296, %v4169, %v3403
    %v4299 = vsel %vm4296, %v4170, %v3405
    %v4300 = vsel %vm4296, %v4171, %v3407
    %v4301 = vsel %vm4296, %v4172, %v3409
    %v4302 = vsel %vm4296, %v4173, %v3411
    %v4303 = vsel %vm4296, %v4174, %v3413
    %v4304 = vsel %vm4296, %v4175, %v3415
    %v4305 = vsel %vm4296, %v4176, %v3417
    %v4306 = vsel %vm4296, %v4177, %v3419
    %v4307 = vsel %vm4296, %v4178, %v3421
    %v4308 = vsel %vm4296, %v4179, %v3423
    %v4309 = vsel %vm4296, %v4180, %v3425
    %v4310 = vsel %vm4296, %v4181, %v3427
    %v4311 = vsel %vm4296, %v4182, %v3429
    %v4312 = vsel %vm4296, %v4183, %v3431
    %v4313 = vsel %vm4296, %v4184, %v3433
    %v4314 = vsel %vm4296, %v4185, %v3435
    %v4315 = vsel %vm4296, %v4186, %v3437
    %v4316 = vsel %vm4296, %v4187, %v3439
    %v4317 = vsel %vm4296, %v4188, %v3441
    %v4318 = vsel %vm4296, %v4189, %v3443
    %v4319 = vsel %vm4296, %v4190, %v3445
    %v4320 = vsel %vm4296, %v4191, %v3447
    %v4321 = vsel %vm4296, %v4192, %v3449
    %v4322 = vsel %vm4296, %v4193, %v3451
    %v4323 = vsel %vm4296, %v4194, %v3453
    %v4324 = vsel %vm4296, %v4195, %v3455
    %v4325 = vsel %vm4296, %v4196, %v3457
    %v4326 = vsel %vm4296, %v4197, %v3459
    %v4327 = vsel %vm4296, %v4198, %v3461
    %v4328 = vsel %vm4296, %v4199, %v3463
    %v4329 = vsel %vm4296, %v4200, %v3465
    %v4330 = vsel %vm4296, %v4201, %v3467
    %v4331 = vsel %vm4296, %v4202, %v3469
    %v4332 = vsel %vm4296, %v4203, %v3471
    %v4333 = vsel %vm4296, %v4204, %v3473
    %v4334 = vsel %vm4296, %v4205, %v3475
    %v4335 = vsel %vm4296, %v4206, %v3477
    %v4336 = vsel %vm4296, %v4207, %v3479
    %v4337 = vsel %vm4296, %v4208, %v3481
    %v4338 = vsel %vm4296, %v4209, %v3483
    %v4339 = vsel %vm4296, %v4210, %v3485
    %v4340 = vsel %vm4296, %v4211, %v3487
    %v4341 = vsel %vm4296, %v4212, %v3489
    %v4342 = vsel %vm4296, %v4213, %v3491
    %v4343 = vsel %vm4296, %v4214, %v3493
    %v4344 = vsel %vm4296, %v4215, %v3495
    %v4345 = vsel %vm4296, %v4216, %v3497
    %v4346 = vsel %vm4296, %v4217, %v3499
    %v4347 = vsel %vm4296, %v4218, %v3501
    %v4348 = vsel %vm4296, %v4219, %v3503
    %v4349 = vsel %vm4296, %v4220, %v3505
    %v4350 = vsel %vm4296, %v4221, %v3507
    %v4351 = vsel %vm4296, %v4222, %v3509
    %v4352 = vsel %vm4296, %v4223, %v3511
    %v4353 = vsel %vm4296, %v4224, %v3513
    %v4354 = vsel %vm4296, %v4225, %v3515
    %v4355 = vsel %vm4296, %v4226, %v3517
    %v4356 = vsel %vm4296, %v4227, %v3519
    %v4357 = vsel %vm4296, %v4228, %v3521
    %v4358 = vsel %vm4296, %v4229, %v3523
    %v4359 = vsel %vm4296, %v4230, %v3525
    %v4360 = vsel %vm4296, %v4231, %v3527
    %v4361 = vsel %vm4296, %v4232, %v3529
    %v4362 = vsel %vm4296, %v4233, %v3531
    %v4363 = vsel %vm4296, %v4234, %v3533
    %v4364 = vsel %vm4296, %v4235, %v3535
    %v4365 = vsel %vm4296, %v4236, %v3537
    %v4366 = vsel %vm4296, %v4237, %v3539
    %v4367 = vsel %vm4296, %v4238, %v3541
    %v4368 = vsel %vm4296, %v4239, %v3543
    %v4369 = vsel %vm4296, %v4240, %v3545
    %v4370 = vsel %vm4296, %v4241, %v3547
    %v4371 = vsel %vm4296, %v4242, %v3549
    %v4372 = vsel %vm4296, %v4243, %v3551
    %v4373 = vsel %vm4296, %v4244, %v3553
    %v4374 = vsel %vm4296, %v4245, %v3555
    %v4375 = vsel %vm4296, %v4246, %v3557
    %v4376 = vsel %vm4296, %v4247, %v3559
    %v4377 = vsel %vm4296, %v4248, %v3561
    %v4378 = vsel %vm4296, %v4249, %v3563
    %v4379 = vsel %vm4296, %v4250, %v3565
    %v4380 = vsel %vm4296, %v4251, %v3567
    %v4381 = vsel %vm4296, %v4252, %v3569
    %v4382 = vsel %vm4296, %v4253, %v3571
    %v4383 = vsel %vm4296, %v4254, %v3573
    %v4384 = vsel %vm4296, %v4255, %v3575
    %v4385 = vsel %vm4296, %v4256, %v3577
    %v4386 = vsel %vm4296, %v4257, %v3579
    %v4387 = vsel %vm4296, %v4258, %v3581
    %v4388 = vsel %vm4296, %v4259, %v3583
    %v4389 = vsel %vm4296, %v4260, %v3585
    %v4390 = vsel %vm4296, %v4261, %v3587
    %v4391 = vsel %vm4296, %v4262, %v3589
    %v4392 = vsel %vm4296, %v4263, %v3591
    %v4393 = vsel %vm4296, %v4264, %v3593
    %v4394 = vsel %vm4296, %v4265, %v3595
    %v4395 = vsel %vm4296, %v4266, %v3597
    %v4396 = vsel %vm4296, %v4267, %v3599
    %v4397 = vsel %vm4296, %v4268, %v3601
    %v4398 = vsel %vm4296, %v4269, %v3603
    %v4399 = vsel %vm4296, %v4270, %v3605
    %v4400 = vsel %vm4296, %v4271, %v3607
    %v4401 = vsel %vm4296, %v4272, %v3609
    %v4402 = vsel %vm4296, %v4273, %v3611
    %v4403 = vsel %vm4296, %v4274, %v3613
    %v4404 = vsel %vm4296, %v4275, %v3615
    %v4405 = vsel %vm4296, %v4276, %v3617
    %v4406 = vsel %vm4296, %v4277, %v3619
    %v4407 = vsel %vm4296, %v4278, %v3621
    %v4408 = vsel %vm4296, %v4279, %v3623
    %v4409 = vsel %vm4296, %v4280, %v3625
    %v4410 = vsel %vm4296, %v4281, %v3627
    %v4411 = vsel %vm4296, %v4282, %v3629
    %v4412 = vsel %vm4296, %v4283, %v3631
    %v4413 = vsel %vm4296, %v4284, %v3633
    %v4414 = vsel %vm4296, %v4285, %v3635
    %v4415 = vsel %vm4296, %v4286, %v3637
    %v4416 = vsel %vm4296, %v4287, %v3639
    %v4417 = vsel %vm4296, %v4288, %v4153
    %v4418 = vsel %vm4296, %v4289, %v4155
    %v4419 = vsel %vm4296, %v4290, %v4157
    %v4420 = vsel %vm4296, %v4291, %v4159
    %v4421 = vsel %vm4296, %v4292, %v4161
    %v4422 = vsel %vm4296, %v4293, %v4161
    %v4423 = vsel %vm4296, %v4294, %v4161
    %v4424 = vsel %vm4296, %v4295, %v4161
    %v4425 = vpack.c.bf16 %v4298, %v4297
    %v4426 = vpack.c.bf16 %v4300, %v4299
    %v4427 = vpack.c.bf16 %v4302, %v4301
    %v4428 = vpack.c.bf16 %v4304, %v4303
    %v4429 = vpack.c.bf16 %v4306, %v4305
    %v4430 = vpack.c.bf16 %v4308, %v4307
    %v4431 = vpack.c.bf16 %v4310, %v4309
    %v4432 = vpack.c.bf16 %v4312, %v4311
    %v4433 = vpack.c.bf16 %v4314, %v4313
    %v4434 = vpack.c.bf16 %v4316, %v4315
    %v4435 = vpack.c.bf16 %v4318, %v4317
    %v4436 = vpack.c.bf16 %v4320, %v4319
    %v4437 = vpack.c.bf16 %v4322, %v4321
    %v4438 = vpack.c.bf16 %v4324, %v4323
    %v4439 = vpack.c.bf16 %v4326, %v4325
    %v4440 = vpack.c.bf16 %v4328, %v4327
    %v4441 = vpack.c.bf16 %v4330, %v4329
    %v4442 = vpack.c.bf16 %v4332, %v4331
    %v4443 = vpack.c.bf16 %v4334, %v4333
    %v4444 = vpack.c.bf16 %v4336, %v4335
    %v4445 = vpack.c.bf16 %v4338, %v4337
    %v4446 = vpack.c.bf16 %v4340, %v4339
    %v4447 = vpack.c.bf16 %v4342, %v4341
    %v4448 = vpack.c.bf16 %v4344, %v4343
    %v4449 = vpack.c.bf16 %v4346, %v4345
    %v4450 = vpack.c.bf16 %v4348, %v4347
    %v4451 = vpack.c.bf16 %v4350, %v4349
    %v4452 = vpack.c.bf16 %v4352, %v4351
    %v4453 = vpack.c.bf16 %v4354, %v4353
    %v4454 = vpack.c.bf16 %v4356, %v4355
    %v4455 = vpack.c.bf16 %v4358, %v4357
    %v4456 = vpack.c.bf16 %v4360, %v4359
    %v4457 = vpack.c.bf16 %v4362, %v4361
    %v4458 = vpack.c.bf16 %v4364, %v4363
    %v4459 = vpack.c.bf16 %v4366, %v4365
    %v4460 = vpack.c.bf16 %v4368, %v4367
    %v4461 = vpack.c.bf16 %v4370, %v4369
    %v4462 = vpack.c.bf16 %v4372, %v4371
    %v4463 = vpack.c.bf16 %v4374, %v4373
    %v4464 = vpack.c.bf16 %v4376, %v4375
    %v4465 = vpack.c.bf16 %v4378, %v4377
    %v4466 = vpack.c.bf16 %v4380, %v4379
    %v4467 = vpack.c.bf16 %v4382, %v4381
    %v4468 = vpack.c.bf16 %v4384, %v4383
    %v4469 = vpack.c.bf16 %v4386, %v4385
    %v4470 = vpack.c.bf16 %v4388, %v4387
    %v4471 = vpack.c.bf16 %v4390, %v4389
    %v4472 = vpack.c.bf16 %v4392, %v4391
    %v4473 = vpack.c.bf16 %v4394, %v4393
    %v4474 = vpack.c.bf16 %v4396, %v4395
    %v4475 = vpack.c.bf16 %v4398, %v4397
    %v4476 = vpack.c.bf16 %v4400, %v4399
    %v4477 = vpack.c.bf16 %v4402, %v4401
    %v4478 = vpack.c.bf16 %v4404, %v4403
    %v4479 = vpack.c.bf16 %v4406, %v4405
    %v4480 = vpack.c.bf16 %v4408, %v4407
    %v4481 = vpack.c.bf16 %v4410, %v4409
    %v4482 = vpack.c.bf16 %v4412, %v4411
    %v4483 = vpack.c.bf16 %v4414, %v4413
    %v4484 = vpack.c.bf16 %v4416, %v4415
    %v4485 = vpack.c.bf16 %v4418, %v4417
    %v4486 = vpack.c.bf16 %v4420, %v4419
    %v4487 = vpack.c.bf16 %v4422, %v4421
    %v4488 = vpack.c.bf16 %v4424, %v4423
    %v4489 = vld [vmem:[%s3] sm:$0xf]
    %v4490 = vld [vmem:[%s3 + $0x4] sm:$0xf]
    %v4491 = vld [vmem:[%s3 + $0x8] sm:$0xf]
    %v4492 = vld [vmem:[%s3 + $0xc] sm:$0xf]
    %v4493 = vld [vmem:[%s3 + $0x10] sm:$0xf]
    %v4494 = vld [vmem:[%s3 + $0x14] sm:$0xf]
    %v4495 = vld [vmem:[%s3 + $0x18] sm:$0xf]
    %v4496 = vld [vmem:[%s3 + $0x1c] sm:$0xf]
    %v4497 = vld [vmem:[%s3 + $0x20] sm:$0xf]
    %v4498 = vld [vmem:[%s3 + $0x24] sm:$0xf]
    %v4499 = vld [vmem:[%s3 + $0x28] sm:$0xf]
    %v4500 = vld [vmem:[%s3 + $0x2c] sm:$0xf]
    %v4501 = vld [vmem:[%s4] sm:$0x1]
    %v4503 = vlaneseq
    %v4504 = vshrl.u32 %v4503, 7
    %v4505 = vsub.s32 0, %v4504
    %v4506 = vrot.slane %v4501, %v4505
    %v4520 = vunpack.c.l.b16 %v4489
    %v4521 = vunpack.c.l.b16 %v4490
    %v4522 = vunpack.c.l.b16 %v4491
    %v4523 = vunpack.c.l.b16 %v4492
    %v4524 = vunpack.c.l.b16 %v4493
    %v4525 = vunpack.c.l.b16 %v4494
    %v4526 = vunpack.c.l.b16 %v4495
    %v4527 = vunpack.c.l.b16 %v4496
    %v4528 = vunpack.c.l.b16 %v4497
    %v4529 = vunpack.c.l.b16 %v4498
    %v4530 = vunpack.c.l.b16 %v4499
    %v4531 = vunpack.c.l.b16 %v4500
    %v4532 = vpack.c.b16 %v4521, %v4520
    %v4533 = vpack.c.b16 %v4523, %v4522
    %v4534 = vpack.c.b16 %v4525, %v4524
    %v4535 = vpack.c.b16 %v4527, %v4526
    %v4536 = vpack.c.b16 %v4529, %v4528
    %v4537 = vpack.c.b16 %v4531, %v4530
    %vm4544 = vcmask 785408
    %v4546 = vsel %vm4544, %v4425, 0
    %v4549 = vsel %vm4544, %v4426, 0
    %v4552 = vsel %vm4544, %v4427, 0
    %v4555 = vsel %vm4544, %v4428, 0
    %v4558 = vsel %vm4544, %v4429, 0
    %v4561 = vsel %vm4544, %v4430, 0
    %v4564 = vsel %vm4544, %v4431, 0
    %v4567 = vsel %vm4544, %v4432, 0
    %v4570 = vsel %vm4544, %v4433, 0
    %v4573 = vsel %vm4544, %v4434, 0
    %v4576 = vsel %vm4544, %v4435, 0
    %v4579 = vsel %vm4544, %v4436, 0
    %v4582 = vsel %vm4544, %v4437, 0
    %v4585 = vsel %vm4544, %v4438, 0
    %v4588 = vsel %vm4544, %v4439, 0
    %v4591 = vsel %vm4544, %v4440, 0
    %v4594 = vsel %vm4544, %v4441, 0
    %v4597 = vsel %vm4544, %v4442, 0
    %v4600 = vsel %vm4544, %v4443, 0
    %v4603 = vsel %vm4544, %v4444, 0
    %v4606 = vsel %vm4544, %v4445, 0
    %v4609 = vsel %vm4544, %v4446, 0
    %v4612 = vsel %vm4544, %v4447, 0
    %v4615 = vsel %vm4544, %v4448, 0
    %v4618 = vsel %vm4544, %v4449, 0
    %v4621 = vsel %vm4544, %v4450, 0
    %v4624 = vsel %vm4544, %v4451, 0
    %v4627 = vsel %vm4544, %v4452, 0
    %v4630 = vsel %vm4544, %v4453, 0
    %v4633 = vsel %vm4544, %v4454, 0
    %v4636 = vsel %vm4544, %v4455, 0
    %v4639 = vsel %vm4544, %v4456, 0
    %v4642 = vsel %vm4544, %v4457, 0
    %v4645 = vsel %vm4544, %v4458, 0
    %v4648 = vsel %vm4544, %v4459, 0
    %v4651 = vsel %vm4544, %v4460, 0
    %v4654 = vsel %vm4544, %v4461, 0
    %v4657 = vsel %vm4544, %v4462, 0
    %v4660 = vsel %vm4544, %v4463, 0
    %v4663 = vsel %vm4544, %v4464, 0
    %v4666 = vsel %vm4544, %v4465, 0
    %v4669 = vsel %vm4544, %v4466, 0
    %v4672 = vsel %vm4544, %v4467, 0
    %v4675 = vsel %vm4544, %v4468, 0
    %v4678 = vsel %vm4544, %v4469, 0
    %v4681 = vsel %vm4544, %v4470, 0
    %v4684 = vsel %vm4544, %v4471, 0
    %v4687 = vsel %vm4544, %v4472, 0
    %v4690 = vsel %vm4544, %v4473, 0
    %v4693 = vsel %vm4544, %v4474, 0
    %v4696 = vsel %vm4544, %v4475, 0
    %v4699 = vsel %vm4544, %v4476, 0
    %v4702 = vsel %vm4544, %v4477, 0
    %v4705 = vsel %vm4544, %v4478, 0
    %v4708 = vsel %vm4544, %v4479, 0
    %v4711 = vsel %vm4544, %v4480, 0
    %v4714 = vsel %vm4544, %v4481, 0
    %v4717 = vsel %vm4544, %v4482, 0
    %v4720 = vsel %vm4544, %v4483, 0
    %v4723 = vsel %vm4544, %v4484, 0
    %v4726 = vsel %vm4544, %v4485, 0
    %v4729 = vsel %vm4544, %v4486, 0
    %v4732 = vsel %vm4544, %v4487, 0
    %v4735 = vsel %vm4544, %v4488, 0
    %4737 = vmatprep.subr.bf16.mxu0 0
    %4738 = vmatpush1.bf16.msra.mxu0 0
    %4739 = vmatprep.subr.bf16.mxu0 0
    %4740 = vmatpush1.bf16.msra.mxu0 0
    %4741 = vmatprep.subr.bf16.mxu0 0
    %4742 = vmatpush1.bf16.msra.mxu0 %v4537
    %4743 = vmatprep.subr.bf16.mxu0 0
    %4744 = vmatpush1.bf16.msra.mxu0 %v4536
    %4745 = vmatprep.subr.bf16.mxu0 0
    %4746 = vmatpush1.bf16.msra.mxu0 %v4535
    %4747 = vmatprep.subr.bf16.mxu0 0
    %4748 = vmatpush1.bf16.msra.mxu0 %v4534
    %4749 = vmatprep.subr.bf16.mxu0 0
    %4750 = vmatpush1.bf16.msra.mxu0 %v4533
    %4751 = vmatprep.subr.bf16.mxu0 0
    %4752 = vmatpush1.bf16.msra.mxu0 %v4532
    %4753 = vmatprep.subr.bf16.mxu0 0
    %4754 = vmatpush2.bf16.msra.mxu0 0
    %4755 = vmatprep.subr.bf16.mxu0 0
    %4756 = vmatpush2.bf16.msra.mxu0 0
    %4757 = vmatprep.subr.bf16.mxu0 0
    %4758 = vmatpush2.bf16.msra.mxu0 0
    %4759 = vmatprep.subr.bf16.mxu0 0
    %4760 = vmatpush2.bf16.msra.mxu0 0
    %4761 = vmatprep.subr.bf16.mxu0 0
    %4762 = vmatpush2.bf16.msra.mxu0 0
    %4763 = vmatprep.subr.bf16.mxu0 0
    %4764 = vmatpush2.bf16.msra.mxu0 0
    %4765 = vmatprep.subr.bf16.mxu0 0
    %4766 = vmatpush2.bf16.msra.mxu0 0
    %4767 = vmatprep.subr.bf16.mxu0 0
    %4768 = vmatpush2.bf16.msra.mxu0 0
    %4769 = vmatprep.mubr.bf16.mxu0 0
    %4770 = vmatmul.mubr.bf16.gmra.mxu0 %v4546
    %v4771 = vpop.f32.mrf.mxu0
    %v4772 = vadd.f32 %v4506, %v4771
    %v4773 = vpop.f32.mrf.mxu0
    %v4774 = vpop.f32.mrf.mxu0
    %v4775 = vadd.f32 %v4506, %v4774
    %v4776 = vpop.f32.mrf.mxu0
    %4777 = vmatprep.mubr.bf16.mxu0 0
    %4778 = vmatmul.mubr.bf16.gmra.mxu0 %v4549
    %v4779 = vpop.f32.mrf.mxu0
    %v4780 = vadd.f32 %v4506, %v4779
    %v4781 = vpop.f32.mrf.mxu0
    %v4782 = vpop.f32.mrf.mxu0
    %v4783 = vadd.f32 %v4506, %v4782
    %v4784 = vpop.f32.mrf.mxu0
    %4785 = vmatprep.mubr.bf16.mxu0 0
    %4786 = vmatmul.mubr.bf16.gmra.mxu0 %v4552
    %v4787 = vpop.f32.mrf.mxu0
    %v4788 = vadd.f32 %v4506, %v4787
    %v4789 = vpop.f32.mrf.mxu0
    %v4790 = vpop.f32.mrf.mxu0
    %v4791 = vadd.f32 %v4506, %v4790
    %v4792 = vpop.f32.mrf.mxu0
    %4793 = vmatprep.mubr.bf16.mxu0 0
    %4794 = vmatmul.mubr.bf16.gmra.mxu0 %v4555
    %v4795 = vpop.f32.mrf.mxu0
    %v4796 = vadd.f32 %v4506, %v4795
    %v4797 = vpop.f32.mrf.mxu0
    %v4798 = vpop.f32.mrf.mxu0
    %v4799 = vadd.f32 %v4506, %v4798
    %v4800 = vpop.f32.mrf.mxu0
    %4801 = vmatprep.mubr.bf16.mxu0 0
    %4802 = vmatmul.mubr.bf16.gmra.mxu0 %v4558
    %v4803 = vpop.f32.mrf.mxu0
    %v4804 = vadd.f32 %v4506, %v4803
    %v4805 = vpop.f32.mrf.mxu0
    %v4806 = vpop.f32.mrf.mxu0
    %v4807 = vadd.f32 %v4506, %v4806
    %v4808 = vpop.f32.mrf.mxu0
    %4809 = vmatprep.mubr.bf16.mxu0 0
    %4810 = vmatmul.mubr.bf16.gmra.mxu0 %v4561
    %v4811 = vpop.f32.mrf.mxu0
    %v4812 = vadd.f32 %v4506, %v4811
    %v4813 = vpop.f32.mrf.mxu0
    %v4814 = vpop.f32.mrf.mxu0
    %v4815 = vadd.f32 %v4506, %v4814
    %v4816 = vpop.f32.mrf.mxu0
    %4817 = vmatprep.mubr.bf16.mxu0 0
    %4818 = vmatmul.mubr.bf16.gmra.mxu0 %v4564
    %v4819 = vpop.f32.mrf.mxu0
    %v4820 = vadd.f32 %v4506, %v4819
    %v4821 = vpop.f32.mrf.mxu0
    %v4822 = vpop.f32.mrf.mxu0
    %v4823 = vadd.f32 %v4506, %v4822
    %v4824 = vpop.f32.mrf.mxu0
    %4825 = vmatprep.mubr.bf16.mxu0 0
    %4826 = vmatmul.mubr.bf16.gmra.mxu0 %v4567
    %v4827 = vpop.f32.mrf.mxu0
    %v4828 = vadd.f32 %v4506, %v4827
    %v4829 = vpop.f32.mrf.mxu0
    %v4830 = vpop.f32.mrf.mxu0
    %v4831 = vadd.f32 %v4506, %v4830
    %v4832 = vpop.f32.mrf.mxu0
    %4833 = vmatprep.mubr.bf16.mxu0 0
    %4834 = vmatmul.mubr.bf16.gmra.mxu0 %v4570
    %v4835 = vpop.f32.mrf.mxu0
    %v4836 = vadd.f32 %v4506, %v4835
    %v4837 = vpop.f32.mrf.mxu0
    %v4838 = vpop.f32.mrf.mxu0
    %v4839 = vadd.f32 %v4506, %v4838
    %v4840 = vpop.f32.mrf.mxu0
    %4841 = vmatprep.mubr.bf16.mxu0 0
    %4842 = vmatmul.mubr.bf16.gmra.mxu0 %v4573
    %v4843 = vpop.f32.mrf.mxu0
    %v4844 = vadd.f32 %v4506, %v4843
    %v4845 = vpop.f32.mrf.mxu0
    %v4846 = vpop.f32.mrf.mxu0
    %v4847 = vadd.f32 %v4506, %v4846
    %v4848 = vpop.f32.mrf.mxu0
    %4849 = vmatprep.mubr.bf16.mxu0 0
    %4850 = vmatmul.mubr.bf16.gmra.mxu0 %v4576
    %v4851 = vpop.f32.mrf.mxu0
    %v4852 = vadd.f32 %v4506, %v4851
    %v4853 = vpop.f32.mrf.mxu0
    %v4854 = vpop.f32.mrf.mxu0
    %v4855 = vadd.f32 %v4506, %v4854
    %v4856 = vpop.f32.mrf.mxu0
    %4857 = vmatprep.mubr.bf16.mxu0 0
    %4858 = vmatmul.mubr.bf16.gmra.mxu0 %v4579
    %v4859 = vpop.f32.mrf.mxu0
    %v4860 = vadd.f32 %v4506, %v4859
    %v4861 = vpop.f32.mrf.mxu0
    %v4862 = vpop.f32.mrf.mxu0
    %v4863 = vadd.f32 %v4506, %v4862
    %v4864 = vpop.f32.mrf.mxu0
    %4865 = vmatprep.mubr.bf16.mxu0 0
    %4866 = vmatmul.mubr.bf16.gmra.mxu0 %v4582
    %v4867 = vpop.f32.mrf.mxu0
    %v4868 = vadd.f32 %v4506, %v4867
    %v4869 = vpop.f32.mrf.mxu0
    %v4870 = vpop.f32.mrf.mxu0
    %v4871 = vadd.f32 %v4506, %v4870
    %v4872 = vpop.f32.mrf.mxu0
    %4873 = vmatprep.mubr.bf16.mxu0 0
    %4874 = vmatmul.mubr.bf16.gmra.mxu0 %v4585
    %v4875 = vpop.f32.mrf.mxu0
    %v4876 = vadd.f32 %v4506, %v4875
    %v4877 = vpop.f32.mrf.mxu0
    %v4878 = vpop.f32.mrf.mxu0
    %v4879 = vadd.f32 %v4506, %v4878
    %v4880 = vpop.f32.mrf.mxu0
    %4881 = vmatprep.mubr.bf16.mxu0 0
    %4882 = vmatmul.mubr.bf16.gmra.mxu0 %v4588
    %v4883 = vpop.f32.mrf.mxu0
    %v4884 = vadd.f32 %v4506, %v4883
    %v4885 = vpop.f32.mrf.mxu0
    %v4886 = vpop.f32.mrf.mxu0
    %v4887 = vadd.f32 %v4506, %v4886
    %v4888 = vpop.f32.mrf.mxu0
    %4889 = vmatprep.mubr.bf16.mxu0 0
    %4890 = vmatmul.mubr.bf16.gmra.mxu0 %v4591
    %v4891 = vpop.f32.mrf.mxu0
    %v4892 = vadd.f32 %v4506, %v4891
    %v4893 = vpop.f32.mrf.mxu0
    %v4894 = vpop.f32.mrf.mxu0
    %v4895 = vadd.f32 %v4506, %v4894
    %v4896 = vpop.f32.mrf.mxu0
    %4897 = vmatprep.mubr.bf16.mxu0 0
    %4898 = vmatmul.mubr.bf16.gmra.mxu0 %v4594
    %v4899 = vpop.f32.mrf.mxu0
    %v4900 = vadd.f32 %v4506, %v4899
    %v4901 = vpop.f32.mrf.mxu0
    %v4902 = vpop.f32.mrf.mxu0
    %v4903 = vadd.f32 %v4506, %v4902
    %v4904 = vpop.f32.mrf.mxu0
    %4905 = vmatprep.mubr.bf16.mxu0 0
    %4906 = vmatmul.mubr.bf16.gmra.mxu0 %v4597
    %v4907 = vpop.f32.mrf.mxu0
    %v4908 = vadd.f32 %v4506, %v4907
    %v4909 = vpop.f32.mrf.mxu0
    %v4910 = vpop.f32.mrf.mxu0
    %v4911 = vadd.f32 %v4506, %v4910
    %v4912 = vpop.f32.mrf.mxu0
    %4913 = vmatprep.mubr.bf16.mxu0 0
    %4914 = vmatmul.mubr.bf16.gmra.mxu0 %v4600
    %v4915 = vpop.f32.mrf.mxu0
    %v4916 = vadd.f32 %v4506, %v4915
    %v4917 = vpop.f32.mrf.mxu0
    %v4918 = vpop.f32.mrf.mxu0
    %v4919 = vadd.f32 %v4506, %v4918
    %v4920 = vpop.f32.mrf.mxu0
    %4921 = vmatprep.mubr.bf16.mxu0 0
    %4922 = vmatmul.mubr.bf16.gmra.mxu0 %v4603
    %v4923 = vpop.f32.mrf.mxu0
    %v4924 = vadd.f32 %v4506, %v4923
    %v4925 = vpop.f32.mrf.mxu0
    %v4926 = vpop.f32.mrf.mxu0
    %v4927 = vadd.f32 %v4506, %v4926
    %v4928 = vpop.f32.mrf.mxu0
    %4929 = vmatprep.mubr.bf16.mxu0 0
    %4930 = vmatmul.mubr.bf16.gmra.mxu0 %v4606
    %v4931 = vpop.f32.mrf.mxu0
    %v4932 = vadd.f32 %v4506, %v4931
    %v4933 = vpop.f32.mrf.mxu0
    %v4934 = vpop.f32.mrf.mxu0
    %v4935 = vadd.f32 %v4506, %v4934
    %v4936 = vpop.f32.mrf.mxu0
    %4937 = vmatprep.mubr.bf16.mxu0 0
    %4938 = vmatmul.mubr.bf16.gmra.mxu0 %v4609
    %v4939 = vpop.f32.mrf.mxu0
    %v4940 = vadd.f32 %v4506, %v4939
    %v4941 = vpop.f32.mrf.mxu0
    %v4942 = vpop.f32.mrf.mxu0
    %v4943 = vadd.f32 %v4506, %v4942
    %v4944 = vpop.f32.mrf.mxu0
    %4945 = vmatprep.mubr.bf16.mxu0 0
    %4946 = vmatmul.mubr.bf16.gmra.mxu0 %v4612
    %v4947 = vpop.f32.mrf.mxu0
    %v4948 = vadd.f32 %v4506, %v4947
    %v4949 = vpop.f32.mrf.mxu0
    %v4950 = vpop.f32.mrf.mxu0
    %v4951 = vadd.f32 %v4506, %v4950
    %v4952 = vpop.f32.mrf.mxu0
    %4953 = vmatprep.mubr.bf16.mxu0 0
    %4954 = vmatmul.mubr.bf16.gmra.mxu0 %v4615
    %v4955 = vpop.f32.mrf.mxu0
    %v4956 = vadd.f32 %v4506, %v4955
    %v4957 = vpop.f32.mrf.mxu0
    %v4958 = vpop.f32.mrf.mxu0
    %v4959 = vadd.f32 %v4506, %v4958
    %v4960 = vpop.f32.mrf.mxu0
    %4961 = vmatprep.mubr.bf16.mxu0 0
    %4962 = vmatmul.mubr.bf16.gmra.mxu0 %v4618
    %v4963 = vpop.f32.mrf.mxu0
    %v4964 = vadd.f32 %v4506, %v4963
    %v4965 = vpop.f32.mrf.mxu0
    %v4966 = vpop.f32.mrf.mxu0
    %v4967 = vadd.f32 %v4506, %v4966
    %v4968 = vpop.f32.mrf.mxu0
    %4969 = vmatprep.mubr.bf16.mxu0 0
    %4970 = vmatmul.mubr.bf16.gmra.mxu0 %v4621
    %v4971 = vpop.f32.mrf.mxu0
    %v4972 = vadd.f32 %v4506, %v4971
    %v4973 = vpop.f32.mrf.mxu0
    %v4974 = vpop.f32.mrf.mxu0
    %v4975 = vadd.f32 %v4506, %v4974
    %v4976 = vpop.f32.mrf.mxu0
    %4977 = vmatprep.mubr.bf16.mxu0 0
    %4978 = vmatmul.mubr.bf16.gmra.mxu0 %v4624
    %v4979 = vpop.f32.mrf.mxu0
    %v4980 = vadd.f32 %v4506, %v4979
    %v4981 = vpop.f32.mrf.mxu0
    %v4982 = vpop.f32.mrf.mxu0
    %v4983 = vadd.f32 %v4506, %v4982
    %v4984 = vpop.f32.mrf.mxu0
    %4985 = vmatprep.mubr.bf16.mxu0 0
    %4986 = vmatmul.mubr.bf16.gmra.mxu0 %v4627
    %v4987 = vpop.f32.mrf.mxu0
    %v4988 = vadd.f32 %v4506, %v4987
    %v4989 = vpop.f32.mrf.mxu0
    %v4990 = vpop.f32.mrf.mxu0
    %v4991 = vadd.f32 %v4506, %v4990
    %v4992 = vpop.f32.mrf.mxu0
    %4993 = vmatprep.mubr.bf16.mxu0 0
    %4994 = vmatmul.mubr.bf16.gmra.mxu0 %v4630
    %v4995 = vpop.f32.mrf.mxu0
    %v4996 = vadd.f32 %v4506, %v4995
    %v4997 = vpop.f32.mrf.mxu0
    %v4998 = vpop.f32.mrf.mxu0
    %v4999 = vadd.f32 %v4506, %v4998
    %v5000 = vpop.f32.mrf.mxu0
    %5001 = vmatprep.mubr.bf16.mxu0 0
    %5002 = vmatmul.mubr.bf16.gmra.mxu0 %v4633
    %v5003 = vpop.f32.mrf.mxu0
    %v5004 = vadd.f32 %v4506, %v5003
    %v5005 = vpop.f32.mrf.mxu0
    %v5006 = vpop.f32.mrf.mxu0
    %v5007 = vadd.f32 %v4506, %v5006
    %v5008 = vpop.f32.mrf.mxu0
    %5009 = vmatprep.mubr.bf16.mxu0 0
    %5010 = vmatmul.mubr.bf16.gmra.mxu0 %v4636
    %v5011 = vpop.f32.mrf.mxu0
    %v5012 = vadd.f32 %v4506, %v5011
    %v5013 = vpop.f32.mrf.mxu0
    %v5014 = vpop.f32.mrf.mxu0
    %v5015 = vadd.f32 %v4506, %v5014
    %v5016 = vpop.f32.mrf.mxu0
    %5017 = vmatprep.mubr.bf16.mxu0 0
    %5018 = vmatmul.mubr.bf16.gmra.mxu0 %v4639
    %v5019 = vpop.f32.mrf.mxu0
    %v5020 = vadd.f32 %v4506, %v5019
    %v5021 = vpop.f32.mrf.mxu0
    %v5022 = vpop.f32.mrf.mxu0
    %v5023 = vadd.f32 %v4506, %v5022
    %v5024 = vpop.f32.mrf.mxu0
    %5025 = vmatprep.mubr.bf16.mxu0 0
    %5026 = vmatmul.mubr.bf16.gmra.mxu0 %v4642
    %v5027 = vpop.f32.mrf.mxu0
    %v5028 = vadd.f32 %v4506, %v5027
    %v5029 = vpop.f32.mrf.mxu0
    %v5030 = vpop.f32.mrf.mxu0
    %v5031 = vadd.f32 %v4506, %v5030
    %v5032 = vpop.f32.mrf.mxu0
    %5033 = vmatprep.mubr.bf16.mxu0 0
    %5034 = vmatmul.mubr.bf16.gmra.mxu0 %v4645
    %v5035 = vpop.f32.mrf.mxu0
    %v5036 = vadd.f32 %v4506, %v5035
    %v5037 = vpop.f32.mrf.mxu0
    %v5038 = vpop.f32.mrf.mxu0
    %v5039 = vadd.f32 %v4506, %v5038
    %v5040 = vpop.f32.mrf.mxu0
    %5041 = vmatprep.mubr.bf16.mxu0 0
    %5042 = vmatmul.mubr.bf16.gmra.mxu0 %v4648
    %v5043 = vpop.f32.mrf.mxu0
    %v5044 = vadd.f32 %v4506, %v5043
    %v5045 = vpop.f32.mrf.mxu0
    %v5046 = vpop.f32.mrf.mxu0
    %v5047 = vadd.f32 %v4506, %v5046
    %v5048 = vpop.f32.mrf.mxu0
    %5049 = vmatprep.mubr.bf16.mxu0 0
    %5050 = vmatmul.mubr.bf16.gmra.mxu0 %v4651
    %v5051 = vpop.f32.mrf.mxu0
    %v5052 = vadd.f32 %v4506, %v5051
    %v5053 = vpop.f32.mrf.mxu0
    %v5054 = vpop.f32.mrf.mxu0
    %v5055 = vadd.f32 %v4506, %v5054
    %v5056 = vpop.f32.mrf.mxu0
    %5057 = vmatprep.mubr.bf16.mxu0 0
    %5058 = vmatmul.mubr.bf16.gmra.mxu0 %v4654
    %v5059 = vpop.f32.mrf.mxu0
    %v5060 = vadd.f32 %v4506, %v5059
    %v5061 = vpop.f32.mrf.mxu0
    %v5062 = vpop.f32.mrf.mxu0
    %v5063 = vadd.f32 %v4506, %v5062
    %v5064 = vpop.f32.mrf.mxu0
    %5065 = vmatprep.mubr.bf16.mxu0 0
    %5066 = vmatmul.mubr.bf16.gmra.mxu0 %v4657
    %v5067 = vpop.f32.mrf.mxu0
    %v5068 = vadd.f32 %v4506, %v5067
    %v5069 = vpop.f32.mrf.mxu0
    %v5070 = vpop.f32.mrf.mxu0
    %v5071 = vadd.f32 %v4506, %v5070
    %v5072 = vpop.f32.mrf.mxu0
    %5073 = vmatprep.mubr.bf16.mxu0 0
    %5074 = vmatmul.mubr.bf16.gmra.mxu0 %v4660
    %v5075 = vpop.f32.mrf.mxu0
    %v5076 = vadd.f32 %v4506, %v5075
    %v5077 = vpop.f32.mrf.mxu0
    %v5078 = vpop.f32.mrf.mxu0
    %v5079 = vadd.f32 %v4506, %v5078
    %v5080 = vpop.f32.mrf.mxu0
    %5081 = vmatprep.mubr.bf16.mxu0 0
    %5082 = vmatmul.mubr.bf16.gmra.mxu0 %v4663
    %v5083 = vpop.f32.mrf.mxu0
    %v5084 = vadd.f32 %v4506, %v5083
    %v5085 = vpop.f32.mrf.mxu0
    %v5086 = vpop.f32.mrf.mxu0
    %v5087 = vadd.f32 %v4506, %v5086
    %v5088 = vpop.f32.mrf.mxu0
    %5089 = vmatprep.mubr.bf16.mxu0 0
    %5090 = vmatmul.mubr.bf16.gmra.mxu0 %v4666
    %v5091 = vpop.f32.mrf.mxu0
    %v5092 = vadd.f32 %v4506, %v5091
    %v5093 = vpop.f32.mrf.mxu0
    %v5094 = vpop.f32.mrf.mxu0
    %v5095 = vadd.f32 %v4506, %v5094
    %v5096 = vpop.f32.mrf.mxu0
    %5097 = vmatprep.mubr.bf16.mxu0 0
    %5098 = vmatmul.mubr.bf16.gmra.mxu0 %v4669
    %v5099 = vpop.f32.mrf.mxu0
    %v5100 = vadd.f32 %v4506, %v5099
    %v5101 = vpop.f32.mrf.mxu0
    %v5102 = vpop.f32.mrf.mxu0
    %v5103 = vadd.f32 %v4506, %v5102
    %v5104 = vpop.f32.mrf.mxu0
    %5105 = vmatprep.mubr.bf16.mxu0 0
    %5106 = vmatmul.mubr.bf16.gmra.mxu0 %v4672
    %v5107 = vpop.f32.mrf.mxu0
    %v5108 = vadd.f32 %v4506, %v5107
    %v5109 = vpop.f32.mrf.mxu0
    %v5110 = vpop.f32.mrf.mxu0
    %v5111 = vadd.f32 %v4506, %v5110
    %v5112 = vpop.f32.mrf.mxu0
    %5113 = vmatprep.mubr.bf16.mxu0 0
    %5114 = vmatmul.mubr.bf16.gmra.mxu0 %v4675
    %v5115 = vpop.f32.mrf.mxu0
    %v5116 = vadd.f32 %v4506, %v5115
    %v5117 = vpop.f32.mrf.mxu0
    %v5118 = vpop.f32.mrf.mxu0
    %v5119 = vadd.f32 %v4506, %v5118
    %v5120 = vpop.f32.mrf.mxu0
    %5121 = vmatprep.mubr.bf16.mxu0 0
    %5122 = vmatmul.mubr.bf16.gmra.mxu0 %v4678
    %v5123 = vpop.f32.mrf.mxu0
    %v5124 = vadd.f32 %v4506, %v5123
    %v5125 = vpop.f32.mrf.mxu0
    %v5126 = vpop.f32.mrf.mxu0
    %v5127 = vadd.f32 %v4506, %v5126
    %v5128 = vpop.f32.mrf.mxu0
    %5129 = vmatprep.mubr.bf16.mxu0 0
    %5130 = vmatmul.mubr.bf16.gmra.mxu0 %v4681
    %v5131 = vpop.f32.mrf.mxu0
    %v5132 = vadd.f32 %v4506, %v5131
    %v5133 = vpop.f32.mrf.mxu0
    %v5134 = vpop.f32.mrf.mxu0
    %v5135 = vadd.f32 %v4506, %v5134
    %v5136 = vpop.f32.mrf.mxu0
    %5137 = vmatprep.mubr.bf16.mxu0 0
    %5138 = vmatmul.mubr.bf16.gmra.mxu0 %v4684
    %v5139 = vpop.f32.mrf.mxu0
    %v5140 = vadd.f32 %v4506, %v5139
    %v5141 = vpop.f32.mrf.mxu0
    %v5142 = vpop.f32.mrf.mxu0
    %v5143 = vadd.f32 %v4506, %v5142
    %v5144 = vpop.f32.mrf.mxu0
    %5145 = vmatprep.mubr.bf16.mxu0 0
    %5146 = vmatmul.mubr.bf16.gmra.mxu0 %v4687
    %v5147 = vpop.f32.mrf.mxu0
    %v5148 = vadd.f32 %v4506, %v5147
    %v5149 = vpop.f32.mrf.mxu0
    %v5150 = vpop.f32.mrf.mxu0
    %v5151 = vadd.f32 %v4506, %v5150
    %v5152 = vpop.f32.mrf.mxu0
    %5153 = vmatprep.mubr.bf16.mxu0 0
    %5154 = vmatmul.mubr.bf16.gmra.mxu0 %v4690
    %v5155 = vpop.f32.mrf.mxu0
    %v5156 = vadd.f32 %v4506, %v5155
    %v5157 = vpop.f32.mrf.mxu0
    %v5158 = vpop.f32.mrf.mxu0
    %v5159 = vadd.f32 %v4506, %v5158
    %v5160 = vpop.f32.mrf.mxu0
    %5161 = vmatprep.mubr.bf16.mxu0 0
    %5162 = vmatmul.mubr.bf16.gmra.mxu0 %v4693
    %v5163 = vpop.f32.mrf.mxu0
    %v5164 = vadd.f32 %v4506, %v5163
    %v5165 = vpop.f32.mrf.mxu0
    %v5166 = vpop.f32.mrf.mxu0
    %v5167 = vadd.f32 %v4506, %v5166
    %v5168 = vpop.f32.mrf.mxu0
    %5169 = vmatprep.mubr.bf16.mxu0 0
    %5170 = vmatmul.mubr.bf16.gmra.mxu0 %v4696
    %v5171 = vpop.f32.mrf.mxu0
    %v5172 = vadd.f32 %v4506, %v5171
    %v5173 = vpop.f32.mrf.mxu0
    %v5174 = vpop.f32.mrf.mxu0
    %v5175 = vadd.f32 %v4506, %v5174
    %v5176 = vpop.f32.mrf.mxu0
    %5177 = vmatprep.mubr.bf16.mxu0 0
    %5178 = vmatmul.mubr.bf16.gmra.mxu0 %v4699
    %v5179 = vpop.f32.mrf.mxu0
    %v5180 = vadd.f32 %v4506, %v5179
    %v5181 = vpop.f32.mrf.mxu0
    %v5182 = vpop.f32.mrf.mxu0
    %v5183 = vadd.f32 %v4506, %v5182
    %v5184 = vpop.f32.mrf.mxu0
    %5185 = vmatprep.mubr.bf16.mxu0 0
    %5186 = vmatmul.mubr.bf16.gmra.mxu0 %v4702
    %v5187 = vpop.f32.mrf.mxu0
    %v5188 = vadd.f32 %v4506, %v5187
    %v5189 = vpop.f32.mrf.mxu0
    %v5190 = vpop.f32.mrf.mxu0
    %v5191 = vadd.f32 %v4506, %v5190
    %v5192 = vpop.f32.mrf.mxu0
    %5193 = vmatprep.mubr.bf16.mxu0 0
    %5194 = vmatmul.mubr.bf16.gmra.mxu0 %v4705
    %v5195 = vpop.f32.mrf.mxu0
    %v5196 = vadd.f32 %v4506, %v5195
    %v5197 = vpop.f32.mrf.mxu0
    %v5198 = vpop.f32.mrf.mxu0
    %v5199 = vadd.f32 %v4506, %v5198
    %v5200 = vpop.f32.mrf.mxu0
    %5201 = vmatprep.mubr.bf16.mxu0 0
    %5202 = vmatmul.mubr.bf16.gmra.mxu0 %v4708
    %v5203 = vpop.f32.mrf.mxu0
    %v5204 = vadd.f32 %v4506, %v5203
    %v5205 = vpop.f32.mrf.mxu0
    %v5206 = vpop.f32.mrf.mxu0
    %v5207 = vadd.f32 %v4506, %v5206
    %v5208 = vpop.f32.mrf.mxu0
    %5209 = vmatprep.mubr.bf16.mxu0 0
    %5210 = vmatmul.mubr.bf16.gmra.mxu0 %v4711
    %v5211 = vpop.f32.mrf.mxu0
    %v5212 = vadd.f32 %v4506, %v5211
    %v5213 = vpop.f32.mrf.mxu0
    %v5214 = vpop.f32.mrf.mxu0
    %v5215 = vadd.f32 %v4506, %v5214
    %v5216 = vpop.f32.mrf.mxu0
    %5217 = vmatprep.mubr.bf16.mxu0 0
    %5218 = vmatmul.mubr.bf16.gmra.mxu0 %v4714
    %v5219 = vpop.f32.mrf.mxu0
    %v5220 = vadd.f32 %v4506, %v5219
    %v5221 = vpop.f32.mrf.mxu0
    %v5222 = vpop.f32.mrf.mxu0
    %v5223 = vadd.f32 %v4506, %v5222
    %v5224 = vpop.f32.mrf.mxu0
    %5225 = vmatprep.mubr.bf16.mxu0 0
    %5226 = vmatmul.mubr.bf16.gmra.mxu0 %v4717
    %v5227 = vpop.f32.mrf.mxu0
    %v5228 = vadd.f32 %v4506, %v5227
    %v5229 = vpop.f32.mrf.mxu0
    %v5230 = vpop.f32.mrf.mxu0
    %v5231 = vadd.f32 %v4506, %v5230
    %v5232 = vpop.f32.mrf.mxu0
    %5233 = vmatprep.mubr.bf16.mxu0 0
    %5234 = vmatmul.mubr.bf16.gmra.mxu0 %v4720
    %v5235 = vpop.f32.mrf.mxu0
    %v5236 = vadd.f32 %v4506, %v5235
    %v5237 = vpop.f32.mrf.mxu0
    %v5238 = vpop.f32.mrf.mxu0
    %v5239 = vadd.f32 %v4506, %v5238
    %v5240 = vpop.f32.mrf.mxu0
    %5241 = vmatprep.mubr.bf16.mxu0 0
    %5242 = vmatmul.mubr.bf16.gmra.mxu0 %v4723
    %v5243 = vpop.f32.mrf.mxu0
    %v5244 = vadd.f32 %v4506, %v5243
    %v5245 = vpop.f32.mrf.mxu0
    %v5246 = vpop.f32.mrf.mxu0
    %v5247 = vadd.f32 %v4506, %v5246
    %v5248 = vpop.f32.mrf.mxu0
    %5249 = vmatprep.mubr.bf16.mxu0 0
    %5250 = vmatmul.mubr.bf16.gmra.mxu0 %v4726
    %v5251 = vpop.f32.mrf.mxu0
    %v5252 = vadd.f32 %v4506, %v5251
    %v5253 = vpop.f32.mrf.mxu0
    %v5254 = vpop.f32.mrf.mxu0
    %v5255 = vadd.f32 %v4506, %v5254
    %v5256 = vpop.f32.mrf.mxu0
    %5257 = vmatprep.mubr.bf16.mxu0 0
    %5258 = vmatmul.mubr.bf16.gmra.mxu0 %v4729
    %v5259 = vpop.f32.mrf.mxu0
    %v5260 = vadd.f32 %v4506, %v5259
    %v5261 = vpop.f32.mrf.mxu0
    %v5262 = vpop.f32.mrf.mxu0
    %v5263 = vadd.f32 %v4506, %v5262
    %v5264 = vpop.f32.mrf.mxu0
    %5265 = vmatprep.mubr.bf16.mxu0 0
    %5266 = vmatmul.mubr.bf16.gmra.mxu0 %v4732
    %v5267 = vpop.f32.mrf.mxu0
    %v5268 = vadd.f32 %v4506, %v5267
    %v5269 = vpop.f32.mrf.mxu0
    %v5270 = vpop.f32.mrf.mxu0
    %v5271 = vadd.f32 %v4506, %v5270
    %v5272 = vpop.f32.mrf.mxu0
    %5273 = vmatprep.mubr.bf16.mxu0 0
    %5274 = vmatmul.mubr.bf16.gmra.mxu0 %v4735
    %v5275 = vpop.f32.mrf.mxu0
    %v5276 = vadd.f32 %v4506, %v5275
    %v5277 = vpop.f32.mrf.mxu0
    %v5278 = vpop.f32.mrf.mxu0
    %v5279 = vadd.f32 %v4506, %v5278
    %v5280 = vpop.f32.mrf.mxu0
    %5281 = vdwg.mxu0
    %v5282 = vmax.f32 %v4772, 0.0
    %v5283 = vmax.f32 %v4775, 0.0
    %v5284 = vmax.f32 %v4780, 0.0
    %v5285 = vmax.f32 %v4783, 0.0
    %v5286 = vmax.f32 %v4788, 0.0
    %v5287 = vmax.f32 %v4791, 0.0
    %v5288 = vmax.f32 %v4796, 0.0
    %v5289 = vmax.f32 %v4799, 0.0
    %v5290 = vmax.f32 %v4804, 0.0
    %v5291 = vmax.f32 %v4807, 0.0
    %v5292 = vmax.f32 %v4812, 0.0
    %v5293 = vmax.f32 %v4815, 0.0
    %v5294 = vmax.f32 %v4820, 0.0
    %v5295 = vmax.f32 %v4823, 0.0
    %v5296 = vmax.f32 %v4828, 0.0
    %v5297 = vmax.f32 %v4831, 0.0
    %v5298 = vmax.f32 %v4836, 0.0
    %v5299 = vmax.f32 %v4839, 0.0
    %v5300 = vmax.f32 %v4844, 0.0
    %v5301 = vmax.f32 %v4847, 0.0
    %v5302 = vmax.f32 %v4852, 0.0
    %v5303 = vmax.f32 %v4855, 0.0
    %v5304 = vmax.f32 %v4860, 0.0
    %v5305 = vmax.f32 %v4863, 0.0
    %v5306 = vmax.f32 %v4868, 0.0
    %v5307 = vmax.f32 %v4871, 0.0
    %v5308 = vmax.f32 %v4876, 0.0
    %v5309 = vmax.f32 %v4879, 0.0
    %v5310 = vmax.f32 %v4884, 0.0
    %v5311 = vmax.f32 %v4887, 0.0
    %v5312 = vmax.f32 %v4892, 0.0
    %v5313 = vmax.f32 %v4895, 0.0
    %v5314 = vmax.f32 %v4900, 0.0
    %v5315 = vmax.f32 %v4903, 0.0
    %v5316 = vmax.f32 %v4908, 0.0
    %v5317 = vmax.f32 %v4911, 0.0
    %v5318 = vmax.f32 %v4916, 0.0
    %v5319 = vmax.f32 %v4919, 0.0
    %v5320 = vmax.f32 %v4924, 0.0
    %v5321 = vmax.f32 %v4927, 0.0
    %v5322 = vmax.f32 %v4932, 0.0
    %v5323 = vmax.f32 %v4935, 0.0
    %v5324 = vmax.f32 %v4940, 0.0
    %v5325 = vmax.f32 %v4943, 0.0
    %v5326 = vmax.f32 %v4948, 0.0
    %v5327 = vmax.f32 %v4951, 0.0
    %v5328 = vmax.f32 %v4956, 0.0
    %v5329 = vmax.f32 %v4959, 0.0
    %v5330 = vmax.f32 %v4964, 0.0
    %v5331 = vmax.f32 %v4967, 0.0
    %v5332 = vmax.f32 %v4972, 0.0
    %v5333 = vmax.f32 %v4975, 0.0
    %v5334 = vmax.f32 %v4980, 0.0
    %v5335 = vmax.f32 %v4983, 0.0
    %v5336 = vmax.f32 %v4988, 0.0
    %v5337 = vmax.f32 %v4991, 0.0
    %v5338 = vmax.f32 %v4996, 0.0
    %v5339 = vmax.f32 %v4999, 0.0
    %v5340 = vmax.f32 %v5004, 0.0
    %v5341 = vmax.f32 %v5007, 0.0
    %v5342 = vmax.f32 %v5012, 0.0
    %v5343 = vmax.f32 %v5015, 0.0
    %v5344 = vmax.f32 %v5020, 0.0
    %v5345 = vmax.f32 %v5023, 0.0
    %v5346 = vmax.f32 %v5028, 0.0
    %v5347 = vmax.f32 %v5031, 0.0
    %v5348 = vmax.f32 %v5036, 0.0
    %v5349 = vmax.f32 %v5039, 0.0
    %v5350 = vmax.f32 %v5044, 0.0
    %v5351 = vmax.f32 %v5047, 0.0
    %v5352 = vmax.f32 %v5052, 0.0
    %v5353 = vmax.f32 %v5055, 0.0
    %v5354 = vmax.f32 %v5060, 0.0
    %v5355 = vmax.f32 %v5063, 0.0
    %v5356 = vmax.f32 %v5068, 0.0
    %v5357 = vmax.f32 %v5071, 0.0
    %v5358 = vmax.f32 %v5076, 0.0
    %v5359 = vmax.f32 %v5079, 0.0
    %v5360 = vmax.f32 %v5084, 0.0
    %v5361 = vmax.f32 %v5087, 0.0
    %v5362 = vmax.f32 %v5092, 0.0
    %v5363 = vmax.f32 %v5095, 0.0
    %v5364 = vmax.f32 %v5100, 0.0
    %v5365 = vmax.f32 %v5103, 0.0
    %v5366 = vmax.f32 %v5108, 0.0
    %v5367 = vmax.f32 %v5111, 0.0
    %v5368 = vmax.f32 %v5116, 0.0
    %v5369 = vmax.f32 %v5119, 0.0
    %v5370 = vmax.f32 %v5124, 0.0
    %v5371 = vmax.f32 %v5127, 0.0
    %v5372 = vmax.f32 %v5132, 0.0
    %v5373 = vmax.f32 %v5135, 0.0
    %v5374 = vmax.f32 %v5140, 0.0
    %v5375 = vmax.f32 %v5143, 0.0
    %v5376 = vmax.f32 %v5148, 0.0
    %v5377 = vmax.f32 %v5151, 0.0
    %v5378 = vmax.f32 %v5156, 0.0
    %v5379 = vmax.f32 %v5159, 0.0
    %v5380 = vmax.f32 %v5164, 0.0
    %v5381 = vmax.f32 %v5167, 0.0
    %v5382 = vmax.f32 %v5172, 0.0
    %v5383 = vmax.f32 %v5175, 0.0
    %v5384 = vmax.f32 %v5180, 0.0
    %v5385 = vmax.f32 %v5183, 0.0
    %v5386 = vmax.f32 %v5188, 0.0
    %v5387 = vmax.f32 %v5191, 0.0
    %v5388 = vmax.f32 %v5196, 0.0
    %v5389 = vmax.f32 %v5199, 0.0
    %v5390 = vmax.f32 %v5204, 0.0
    %v5391 = vmax.f32 %v5207, 0.0
    %v5392 = vmax.f32 %v5212, 0.0
    %v5393 = vmax.f32 %v5215, 0.0
    %v5394 = vmax.f32 %v5220, 0.0
    %v5395 = vmax.f32 %v5223, 0.0
    %v5396 = vmax.f32 %v5228, 0.0
    %v5397 = vmax.f32 %v5231, 0.0
    %v5398 = vmax.f32 %v5236, 0.0
    %v5399 = vmax.f32 %v5239, 0.0
    %v5400 = vmax.f32 %v5244, 0.0
    %v5401 = vmax.f32 %v5247, 0.0
    %v5402 = vmax.f32 %v5252, 0.0
    %v5403 = vmax.f32 %v5255, 0.0
    %v5404 = vmax.f32 %v5260, 0.0
    %v5405 = vmax.f32 %v5263, 0.0
    %v5406 = vmax.f32 %v5268, 0.0
    %v5407 = vmax.f32 %v5271, 0.0
    %v5408 = vmax.f32 %v5276, 0.0
    %v5409 = vmax.f32 %v5279, 0.0
    %5538 = vrot.lane.b32.xlu0 %v5282, 64
    %v5539 = vpop.permute.xlu0 %5538
    %5540 = vrot.lane.b32.xlu0 %v5283, 64
    %v5541 = vpop.permute.xlu0 %5540
    %5542 = vrot.lane.b32.xlu0 %v5284, 64
    %v5543 = vpop.permute.xlu0 %5542
    %5544 = vrot.lane.b32.xlu0 %v5285, 64
    %v5545 = vpop.permute.xlu0 %5544
    %5546 = vrot.lane.b32.xlu0 %v5286, 64
    %v5547 = vpop.permute.xlu0 %5546
    %5548 = vrot.lane.b32.xlu0 %v5287, 64
    %v5549 = vpop.permute.xlu0 %5548
    %5550 = vrot.lane.b32.xlu0 %v5288, 64
    %v5551 = vpop.permute.xlu0 %5550
    %5552 = vrot.lane.b32.xlu0 %v5289, 64
    %v5553 = vpop.permute.xlu0 %5552
    %5554 = vrot.lane.b32.xlu0 %v5290, 64
    %v5555 = vpop.permute.xlu0 %5554
    %5556 = vrot.lane.b32.xlu0 %v5291, 64
    %v5557 = vpop.permute.xlu0 %5556
    %5558 = vrot.lane.b32.xlu0 %v5292, 64
    %v5559 = vpop.permute.xlu0 %5558
    %5560 = vrot.lane.b32.xlu0 %v5293, 64
    %v5561 = vpop.permute.xlu0 %5560
    %5562 = vrot.lane.b32.xlu0 %v5294, 64
    %v5563 = vpop.permute.xlu0 %5562
    %5564 = vrot.lane.b32.xlu0 %v5295, 64
    %v5565 = vpop.permute.xlu0 %5564
    %5566 = vrot.lane.b32.xlu0 %v5296, 64
    %v5567 = vpop.permute.xlu0 %5566
    %5568 = vrot.lane.b32.xlu0 %v5297, 64
    %v5569 = vpop.permute.xlu0 %5568
    %5570 = vrot.lane.b32.xlu0 %v5298, 64
    %v5571 = vpop.permute.xlu0 %5570
    %5572 = vrot.lane.b32.xlu0 %v5299, 64
    %v5573 = vpop.permute.xlu0 %5572
    %5574 = vrot.lane.b32.xlu0 %v5300, 64
    %v5575 = vpop.permute.xlu0 %5574
    %5576 = vrot.lane.b32.xlu0 %v5301, 64
    %v5577 = vpop.permute.xlu0 %5576
    %5578 = vrot.lane.b32.xlu0 %v5302, 64
    %v5579 = vpop.permute.xlu0 %5578
    %5580 = vrot.lane.b32.xlu0 %v5303, 64
    %v5581 = vpop.permute.xlu0 %5580
    %5582 = vrot.lane.b32.xlu0 %v5304, 64
    %v5583 = vpop.permute.xlu0 %5582
    %5584 = vrot.lane.b32.xlu0 %v5305, 64
    %v5585 = vpop.permute.xlu0 %5584
    %5586 = vrot.lane.b32.xlu0 %v5306, 64
    %v5587 = vpop.permute.xlu0 %5586
    %5588 = vrot.lane.b32.xlu0 %v5307, 64
    %v5589 = vpop.permute.xlu0 %5588
    %5590 = vrot.lane.b32.xlu0 %v5308, 64
    %v5591 = vpop.permute.xlu0 %5590
    %5592 = vrot.lane.b32.xlu0 %v5309, 64
    %v5593 = vpop.permute.xlu0 %5592
    %5594 = vrot.lane.b32.xlu0 %v5310, 64
    %v5595 = vpop.permute.xlu0 %5594
    %5596 = vrot.lane.b32.xlu0 %v5311, 64
    %v5597 = vpop.permute.xlu0 %5596
    %5598 = vrot.lane.b32.xlu0 %v5312, 64
    %v5599 = vpop.permute.xlu0 %5598
    %5600 = vrot.lane.b32.xlu0 %v5313, 64
    %v5601 = vpop.permute.xlu0 %5600
    %5602 = vrot.lane.b32.xlu0 %v5314, 64
    %v5603 = vpop.permute.xlu0 %5602
    %5604 = vrot.lane.b32.xlu0 %v5315, 64
    %v5605 = vpop.permute.xlu0 %5604
    %5606 = vrot.lane.b32.xlu0 %v5316, 64
    %v5607 = vpop.permute.xlu0 %5606
    %5608 = vrot.lane.b32.xlu0 %v5317, 64
    %v5609 = vpop.permute.xlu0 %5608
    %5610 = vrot.lane.b32.xlu0 %v5318, 64
    %v5611 = vpop.permute.xlu0 %5610
    %5612 = vrot.lane.b32.xlu0 %v5319, 64
    %v5613 = vpop.permute.xlu0 %5612
    %5614 = vrot.lane.b32.xlu0 %v5320, 64
    %v5615 = vpop.permute.xlu0 %5614
    %5616 = vrot.lane.b32.xlu0 %v5321, 64
    %v5617 = vpop.permute.xlu0 %5616
    %5618 = vrot.lane.b32.xlu0 %v5322, 64
    %v5619 = vpop.permute.xlu0 %5618
    %5620 = vrot.lane.b32.xlu0 %v5323, 64
    %v5621 = vpop.permute.xlu0 %5620
    %5622 = vrot.lane.b32.xlu0 %v5324, 64
    %v5623 = vpop.permute.xlu0 %5622
    %5624 = vrot.lane.b32.xlu0 %v5325, 64
    %v5625 = vpop.permute.xlu0 %5624
    %5626 = vrot.lane.b32.xlu0 %v5326, 64
    %v5627 = vpop.permute.xlu0 %5626
    %5628 = vrot.lane.b32.xlu0 %v5327, 64
    %v5629 = vpop.permute.xlu0 %5628
    %5630 = vrot.lane.b32.xlu0 %v5328, 64
    %v5631 = vpop.permute.xlu0 %5630
    %5632 = vrot.lane.b32.xlu0 %v5329, 64
    %v5633 = vpop.permute.xlu0 %5632
    %5634 = vrot.lane.b32.xlu0 %v5330, 64
    %v5635 = vpop.permute.xlu0 %5634
    %5636 = vrot.lane.b32.xlu0 %v5331, 64
    %v5637 = vpop.permute.xlu0 %5636
    %5638 = vrot.lane.b32.xlu0 %v5332, 64
    %v5639 = vpop.permute.xlu0 %5638
    %5640 = vrot.lane.b32.xlu0 %v5333, 64
    %v5641 = vpop.permute.xlu0 %5640
    %5642 = vrot.lane.b32.xlu0 %v5334, 64
    %v5643 = vpop.permute.xlu0 %5642
    %5644 = vrot.lane.b32.xlu0 %v5335, 64
    %v5645 = vpop.permute.xlu0 %5644
    %5646 = vrot.lane.b32.xlu0 %v5336, 64
    %v5647 = vpop.permute.xlu0 %5646
    %5648 = vrot.lane.b32.xlu0 %v5337, 64
    %v5649 = vpop.permute.xlu0 %5648
    %5650 = vrot.lane.b32.xlu0 %v5338, 64
    %v5651 = vpop.permute.xlu0 %5650
    %5652 = vrot.lane.b32.xlu0 %v5339, 64
    %v5653 = vpop.permute.xlu0 %5652
    %5654 = vrot.lane.b32.xlu0 %v5340, 64
    %v5655 = vpop.permute.xlu0 %5654
    %5656 = vrot.lane.b32.xlu0 %v5341, 64
    %v5657 = vpop.permute.xlu0 %5656
    %5658 = vrot.lane.b32.xlu0 %v5342, 64
    %v5659 = vpop.permute.xlu0 %5658
    %5660 = vrot.lane.b32.xlu0 %v5343, 64
    %v5661 = vpop.permute.xlu0 %5660
    %5662 = vrot.lane.b32.xlu0 %v5344, 64
    %v5663 = vpop.permute.xlu0 %5662
    %5664 = vrot.lane.b32.xlu0 %v5345, 64
    %v5665 = vpop.permute.xlu0 %5664
    %5666 = vrot.lane.b32.xlu0 %v5346, 64
    %v5667 = vpop.permute.xlu0 %5666
    %5668 = vrot.lane.b32.xlu0 %v5347, 64
    %v5669 = vpop.permute.xlu0 %5668
    %5670 = vrot.lane.b32.xlu0 %v5348, 64
    %v5671 = vpop.permute.xlu0 %5670
    %5672 = vrot.lane.b32.xlu0 %v5349, 64
    %v5673 = vpop.permute.xlu0 %5672
    %5674 = vrot.lane.b32.xlu0 %v5350, 64
    %v5675 = vpop.permute.xlu0 %5674
    %5676 = vrot.lane.b32.xlu0 %v5351, 64
    %v5677 = vpop.permute.xlu0 %5676
    %5678 = vrot.lane.b32.xlu0 %v5352, 64
    %v5679 = vpop.permute.xlu0 %5678
    %5680 = vrot.lane.b32.xlu0 %v5353, 64
    %v5681 = vpop.permute.xlu0 %5680
    %5682 = vrot.lane.b32.xlu0 %v5354, 64
    %v5683 = vpop.permute.xlu0 %5682
    %5684 = vrot.lane.b32.xlu0 %v5355, 64
    %v5685 = vpop.permute.xlu0 %5684
    %5686 = vrot.lane.b32.xlu0 %v5356, 64
    %v5687 = vpop.permute.xlu0 %5686
    %5688 = vrot.lane.b32.xlu0 %v5357, 64
    %v5689 = vpop.permute.xlu0 %5688
    %5690 = vrot.lane.b32.xlu0 %v5358, 64
    %v5691 = vpop.permute.xlu0 %5690
    %5692 = vrot.lane.b32.xlu0 %v5359, 64
    %v5693 = vpop.permute.xlu0 %5692
    %5694 = vrot.lane.b32.xlu0 %v5360, 64
    %v5695 = vpop.permute.xlu0 %5694
    %5696 = vrot.lane.b32.xlu0 %v5361, 64
    %v5697 = vpop.permute.xlu0 %5696
    %5698 = vrot.lane.b32.xlu0 %v5362, 64
    %v5699 = vpop.permute.xlu0 %5698
    %5700 = vrot.lane.b32.xlu0 %v5363, 64
    %v5701 = vpop.permute.xlu0 %5700
    %5702 = vrot.lane.b32.xlu0 %v5364, 64
    %v5703 = vpop.permute.xlu0 %5702
    %5704 = vrot.lane.b32.xlu0 %v5365, 64
    %v5705 = vpop.permute.xlu0 %5704
    %5706 = vrot.lane.b32.xlu0 %v5366, 64
    %v5707 = vpop.permute.xlu0 %5706
    %5708 = vrot.lane.b32.xlu0 %v5367, 64
    %v5709 = vpop.permute.xlu0 %5708
    %5710 = vrot.lane.b32.xlu0 %v5368, 64
    %v5711 = vpop.permute.xlu0 %5710
    %5712 = vrot.lane.b32.xlu0 %v5369, 64
    %v5713 = vpop.permute.xlu0 %5712
    %5714 = vrot.lane.b32.xlu0 %v5370, 64
    %v5715 = vpop.permute.xlu0 %5714
    %5716 = vrot.lane.b32.xlu0 %v5371, 64
    %v5717 = vpop.permute.xlu0 %5716
    %5718 = vrot.lane.b32.xlu0 %v5372, 64
    %v5719 = vpop.permute.xlu0 %5718
    %5720 = vrot.lane.b32.xlu0 %v5373, 64
    %v5721 = vpop.permute.xlu0 %5720
    %5722 = vrot.lane.b32.xlu0 %v5374, 64
    %v5723 = vpop.permute.xlu0 %5722
    %5724 = vrot.lane.b32.xlu0 %v5375, 64
    %v5725 = vpop.permute.xlu0 %5724
    %5726 = vrot.lane.b32.xlu0 %v5376, 64
    %v5727 = vpop.permute.xlu0 %5726
    %5728 = vrot.lane.b32.xlu0 %v5377, 64
    %v5729 = vpop.permute.xlu0 %5728
    %5730 = vrot.lane.b32.xlu0 %v5378, 64
    %v5731 = vpop.permute.xlu0 %5730
    %5732 = vrot.lane.b32.xlu0 %v5379, 64
    %v5733 = vpop.permute.xlu0 %5732
    %5734 = vrot.lane.b32.xlu0 %v5380, 64
    %v5735 = vpop.permute.xlu0 %5734
    %5736 = vrot.lane.b32.xlu0 %v5381, 64
    %v5737 = vpop.permute.xlu0 %5736
    %5738 = vrot.lane.b32.xlu0 %v5382, 64
    %v5739 = vpop.permute.xlu0 %5738
    %5740 = vrot.lane.b32.xlu0 %v5383, 64
    %v5741 = vpop.permute.xlu0 %5740
    %5742 = vrot.lane.b32.xlu0 %v5384, 64
    %v5743 = vpop.permute.xlu0 %5742
    %5744 = vrot.lane.b32.xlu0 %v5385, 64
    %v5745 = vpop.permute.xlu0 %5744
    %5746 = vrot.lane.b32.xlu0 %v5386, 64
    %v5747 = vpop.permute.xlu0 %5746
    %5748 = vrot.lane.b32.xlu0 %v5387, 64
    %v5749 = vpop.permute.xlu0 %5748
    %5750 = vrot.lane.b32.xlu0 %v5388, 64
    %v5751 = vpop.permute.xlu0 %5750
    %5752 = vrot.lane.b32.xlu0 %v5389, 64
    %v5753 = vpop.permute.xlu0 %5752
    %5754 = vrot.lane.b32.xlu0 %v5390, 64
    %v5755 = vpop.permute.xlu0 %5754
    %5756 = vrot.lane.b32.xlu0 %v5391, 64
    %v5757 = vpop.permute.xlu0 %5756
    %5758 = vrot.lane.b32.xlu0 %v5392, 64
    %v5759 = vpop.permute.xlu0 %5758
    %5760 = vrot.lane.b32.xlu0 %v5393, 64
    %v5761 = vpop.permute.xlu0 %5760
    %5762 = vrot.lane.b32.xlu0 %v5394, 64
    %v5763 = vpop.permute.xlu0 %5762
    %5764 = vrot.lane.b32.xlu0 %v5395, 64
    %v5765 = vpop.permute.xlu0 %5764
    %5766 = vrot.lane.b32.xlu0 %v5396, 64
    %v5767 = vpop.permute.xlu0 %5766
    %5768 = vrot.lane.b32.xlu0 %v5397, 64
    %v5769 = vpop.permute.xlu0 %5768
    %5770 = vrot.lane.b32.xlu0 %v5398, 64
    %v5771 = vpop.permute.xlu0 %5770
    %5772 = vrot.lane.b32.xlu0 %v5399, 64
    %v5773 = vpop.permute.xlu0 %5772
    %5774 = vrot.lane.b32.xlu0 %v5400, 64
    %v5775 = vpop.permute.xlu0 %5774
    %5776 = vrot.lane.b32.xlu0 %v5401, 64
    %v5777 = vpop.permute.xlu0 %5776
    %5778 = vrot.lane.b32.xlu0 %v5402, 64
    %v5779 = vpop.permute.xlu0 %5778
    %5780 = vrot.lane.b32.xlu0 %v5403, 64
    %v5781 = vpop.permute.xlu0 %5780
    %5782 = vrot.lane.b32.xlu0 %v5404, 64
    %v5783 = vpop.permute.xlu0 %5782
    %5784 = vrot.lane.b32.xlu0 %v5405, 64
    %v5785 = vpop.permute.xlu0 %5784
    %5786 = vrot.lane.b32.xlu0 %v5406, 64
    %v5787 = vpop.permute.xlu0 %5786
    %5788 = vrot.lane.b32.xlu0 %v5407, 64
    %v5789 = vpop.permute.xlu0 %5788
    %5790 = vrot.lane.b32.xlu0 %v5408, 64
    %v5791 = vpop.permute.xlu0 %5790
    %5792 = vrot.lane.b32.xlu0 %v5409, 64
    %v5793 = vpop.permute.xlu0 %5792
    %v5922 = vmax.f32 %v5282, %v5539
    %v5923 = vmax.f32 %v5283, %v5541
    %v5924 = vmax.f32 %v5284, %v5543
    %v5925 = vmax.f32 %v5285, %v5545
    %v5926 = vmax.f32 %v5286, %v5547
    %v5927 = vmax.f32 %v5287, %v5549
    %v5928 = vmax.f32 %v5288, %v5551
    %v5929 = vmax.f32 %v5289, %v5553
    %v5930 = vmax.f32 %v5290, %v5555
    %v5931 = vmax.f32 %v5291, %v5557
    %v5932 = vmax.f32 %v5292, %v5559
    %v5933 = vmax.f32 %v5293, %v5561
    %v5934 = vmax.f32 %v5294, %v5563
    %v5935 = vmax.f32 %v5295, %v5565
    %v5936 = vmax.f32 %v5296, %v5567
    %v5937 = vmax.f32 %v5297, %v5569
    %v5938 = vmax.f32 %v5298, %v5571
    %v5939 = vmax.f32 %v5299, %v5573
    %v5940 = vmax.f32 %v5300, %v5575
    %v5941 = vmax.f32 %v5301, %v5577
    %v5942 = vmax.f32 %v5302, %v5579
    %v5943 = vmax.f32 %v5303, %v5581
    %v5944 = vmax.f32 %v5304, %v5583
    %v5945 = vmax.f32 %v5305, %v5585
    %v5946 = vmax.f32 %v5306, %v5587
    %v5947 = vmax.f32 %v5307, %v5589
    %v5948 = vmax.f32 %v5308, %v5591
    %v5949 = vmax.f32 %v5309, %v5593
    %v5950 = vmax.f32 %v5310, %v5595
    %v5951 = vmax.f32 %v5311, %v5597
    %v5952 = vmax.f32 %v5312, %v5599
    %v5953 = vmax.f32 %v5313, %v5601
    %v5954 = vmax.f32 %v5314, %v5603
    %v5955 = vmax.f32 %v5315, %v5605
    %v5956 = vmax.f32 %v5316, %v5607
    %v5957 = vmax.f32 %v5317, %v5609
    %v5958 = vmax.f32 %v5318, %v5611
    %v5959 = vmax.f32 %v5319, %v5613
    %v5960 = vmax.f32 %v5320, %v5615
    %v5961 = vmax.f32 %v5321, %v5617
    %v5962 = vmax.f32 %v5322, %v5619
    %v5963 = vmax.f32 %v5323, %v5621
    %v5964 = vmax.f32 %v5324, %v5623
    %v5965 = vmax.f32 %v5325, %v5625
    %v5966 = vmax.f32 %v5326, %v5627
    %v5967 = vmax.f32 %v5327, %v5629
    %v5968 = vmax.f32 %v5328, %v5631
    %v5969 = vmax.f32 %v5329, %v5633
    %v5970 = vmax.f32 %v5330, %v5635
    %v5971 = vmax.f32 %v5331, %v5637
    %v5972 = vmax.f32 %v5332, %v5639
    %v5973 = vmax.f32 %v5333, %v5641
    %v5974 = vmax.f32 %v5334, %v5643
    %v5975 = vmax.f32 %v5335, %v5645
    %v5976 = vmax.f32 %v5336, %v5647
    %v5977 = vmax.f32 %v5337, %v5649
    %v5978 = vmax.f32 %v5338, %v5651
    %v5979 = vmax.f32 %v5339, %v5653
    %v5980 = vmax.f32 %v5340, %v5655
    %v5981 = vmax.f32 %v5341, %v5657
    %v5982 = vmax.f32 %v5342, %v5659
    %v5983 = vmax.f32 %v5343, %v5661
    %v5984 = vmax.f32 %v5344, %v5663
    %v5985 = vmax.f32 %v5345, %v5665
    %v5986 = vmax.f32 %v5346, %v5667
    %v5987 = vmax.f32 %v5347, %v5669
    %v5988 = vmax.f32 %v5348, %v5671
    %v5989 = vmax.f32 %v5349, %v5673
    %v5990 = vmax.f32 %v5350, %v5675
    %v5991 = vmax.f32 %v5351, %v5677
    %v5992 = vmax.f32 %v5352, %v5679
    %v5993 = vmax.f32 %v5353, %v5681
    %v5994 = vmax.f32 %v5354, %v5683
    %v5995 = vmax.f32 %v5355, %v5685
    %v5996 = vmax.f32 %v5356, %v5687
    %v5997 = vmax.f32 %v5357, %v5689
    %v5998 = vmax.f32 %v5358, %v5691
    %v5999 = vmax.f32 %v5359, %v5693
    %v6000 = vmax.f32 %v5360, %v5695
    %v6001 = vmax.f32 %v5361, %v5697
    %v6002 = vmax.f32 %v5362, %v5699
    %v6003 = vmax.f32 %v5363, %v5701
    %v6004 = vmax.f32 %v5364, %v5703
    %v6005 = vmax.f32 %v5365, %v5705
    %v6006 = vmax.f32 %v5366, %v5707
    %v6007 = vmax.f32 %v5367, %v5709
    %v6008 = vmax.f32 %v5368, %v5711
    %v6009 = vmax.f32 %v5369, %v5713
    %v6010 = vmax.f32 %v5370, %v5715
    %v6011 = vmax.f32 %v5371, %v5717
    %v6012 = vmax.f32 %v5372, %v5719
    %v6013 = vmax.f32 %v5373, %v5721
    %v6014 = vmax.f32 %v5374, %v5723
    %v6015 = vmax.f32 %v5375, %v5725
    %v6016 = vmax.f32 %v5376, %v5727
    %v6017 = vmax.f32 %v5377, %v5729
    %v6018 = vmax.f32 %v5378, %v5731
    %v6019 = vmax.f32 %v5379, %v5733
    %v6020 = vmax.f32 %v5380, %v5735
    %v6021 = vmax.f32 %v5381, %v5737
    %v6022 = vmax.f32 %v5382, %v5739
    %v6023 = vmax.f32 %v5383, %v5741
    %v6024 = vmax.f32 %v5384, %v5743
    %v6025 = vmax.f32 %v5385, %v5745
    %v6026 = vmax.f32 %v5386, %v5747
    %v6027 = vmax.f32 %v5387, %v5749
    %v6028 = vmax.f32 %v5388, %v5751
    %v6029 = vmax.f32 %v5389, %v5753
    %v6030 = vmax.f32 %v5390, %v5755
    %v6031 = vmax.f32 %v5391, %v5757
    %v6032 = vmax.f32 %v5392, %v5759
    %v6033 = vmax.f32 %v5393, %v5761
    %v6034 = vmax.f32 %v5394, %v5763
    %v6035 = vmax.f32 %v5395, %v5765
    %v6036 = vmax.f32 %v5396, %v5767
    %v6037 = vmax.f32 %v5397, %v5769
    %v6038 = vmax.f32 %v5398, %v5771
    %v6039 = vmax.f32 %v5399, %v5773
    %v6040 = vmax.f32 %v5400, %v5775
    %v6041 = vmax.f32 %v5401, %v5777
    %v6042 = vmax.f32 %v5402, %v5779
    %v6043 = vmax.f32 %v5403, %v5781
    %v6044 = vmax.f32 %v5404, %v5783
    %v6045 = vmax.f32 %v5405, %v5785
    %v6046 = vmax.f32 %v5406, %v5787
    %v6047 = vmax.f32 %v5407, %v5789
    %v6048 = vmax.f32 %v5408, %v5791
    %v6049 = vmax.f32 %v5409, %v5793
    %v6050 = vpack.c.bf16 %v5923, %v5922
    %v6051 = vpack.c.bf16 %v5925, %v5924
    %v6052 = vld [vmem:[%s5] sm:$0xf]
    %v6053 = vld [vmem:[%s5 + $0x4] sm:$0xf]
    %v6054 = vld [vmem:[%s5 + $0x8] sm:$0xf]
    %v6055 = vld [vmem:[%s5 + $0xc] sm:$0xf]
    %v6056 = vld [vmem:[%s5 + $0x10] sm:$0xf]
    %v6057 = vld [vmem:[%s5 + $0x14] sm:$0xf]
    %v6058 = vld [vmem:[%s5 + $0x18] sm:$0xf]
    %v6059 = vld [vmem:[%s5 + $0x1c] sm:$0xf]
    %v6060 = vpack.c.bf16 %v5927, %v5926
    %v6061 = vpack.c.bf16 %v5929, %v5928
    %s6062 = scalar_lea.vmem %s5, 32
    %v6063 = vld [vmem:[%s6062] sm:$0xf]
    %v6064 = vld [vmem:[%s6062 + $0x4] sm:$0xf]
    %v6065 = vld [vmem:[%s6062 + $0x8] sm:$0xf]
    %v6066 = vld [vmem:[%s6062 + $0xc] sm:$0xf]
    %v6067 = vld [vmem:[%s6062 + $0x10] sm:$0xf]
    %v6068 = vld [vmem:[%s6062 + $0x14] sm:$0xf]
    %v6069 = vld [vmem:[%s6062 + $0x18] sm:$0xf]
    %v6070 = vld [vmem:[%s6062 + $0x1c] sm:$0xf]
    %v6079 = vunpack.c.l.b16 %v6063
    %v6080 = vunpack.c.l.b16 %v6064
    %v6081 = vunpack.c.l.b16 %v6065
    %v6082 = vunpack.c.l.b16 %v6066
    %v6083 = vunpack.c.l.b16 %v6067
    %v6084 = vunpack.c.l.b16 %v6068
    %v6085 = vunpack.c.l.b16 %v6069
    %v6086 = vunpack.c.l.b16 %v6070
    %v6087 = vpack.c.b16 %v6080, %v6079
    %v6088 = vpack.c.b16 %v6082, %v6081
    %v6089 = vpack.c.b16 %v6084, %v6083
    %v6090 = vpack.c.b16 %v6086, %v6085
    %vm6095 = vcmask 523264
    %v6097 = vsel %vm6095, %v6060, 0
    %v6100 = vsel %vm6095, %v6061, 0
    %6102 = vmatprep.subr.bf16.mxu0 0
    %6103 = vmatpush1.bf16.msra.mxu0 0
    %6104 = vmatprep.subr.bf16.mxu0 0
    %6105 = vmatpush1.bf16.msra.mxu0 0
    %6106 = vmatprep.subr.bf16.mxu0 0
    %6107 = vmatpush1.bf16.msra.mxu0 0
    %6108 = vmatprep.subr.bf16.mxu0 0
    %6109 = vmatpush1.bf16.msra.mxu0 0
    %6110 = vmatprep.subr.bf16.mxu0 0
    %6111 = vmatpush1.bf16.msra.mxu0 %v6090
    %6112 = vmatprep.subr.bf16.mxu0 0
    %6113 = vmatpush1.bf16.msra.mxu0 %v6089
    %6114 = vmatprep.subr.bf16.mxu0 0
    %6115 = vmatpush1.bf16.msra.mxu0 %v6088
    %6116 = vmatprep.subr.bf16.mxu0 0
    %6117 = vmatpush1.bf16.msra.mxu0 %v6087
    %6118 = vmatprep.subr.bf16.mxu0 0
    %6119 = vmatpush2.bf16.msra.mxu0 0
    %6120 = vmatprep.subr.bf16.mxu0 0
    %6121 = vmatpush2.bf16.msra.mxu0 0
    %6122 = vmatprep.subr.bf16.mxu0 0
    %6123 = vmatpush2.bf16.msra.mxu0 0
    %6124 = vmatprep.subr.bf16.mxu0 0
    %6125 = vmatpush2.bf16.msra.mxu0 0
    %6126 = vmatprep.subr.bf16.mxu0 0
    %6127 = vmatpush2.bf16.msra.mxu0 0
    %6128 = vmatprep.subr.bf16.mxu0 0
    %6129 = vmatpush2.bf16.msra.mxu0 0
    %6130 = vmatprep.subr.bf16.mxu0 0
    %6131 = vmatpush2.bf16.msra.mxu0 0
    %6132 = vmatprep.subr.bf16.mxu0 0
    %6133 = vmatpush2.bf16.msra.mxu0 0
    %6134 = vmatprep.mubr.bf16.mxu0 0
    %6135 = vmatmul.mubr.bf16.gmra.mxu0 %v6097
    %v6136 = vpop.f32.mrf.mxu0
    %v6137 = vadd.f32 0.0, %v6136
    %v6138 = vpop.f32.mrf.mxu0
    %v6139 = vpop.f32.mrf.mxu0
    %v6140 = vadd.f32 0.0, %v6139
    %v6141 = vpop.f32.mrf.mxu0
    %6142 = vmatprep.mubr.bf16.mxu0 0
    %6143 = vmatmul.mubr.bf16.gmra.mxu0 %v6100
    %v6144 = vpop.f32.mrf.mxu0
    %v6145 = vadd.f32 0.0, %v6144
    %v6146 = vpop.f32.mrf.mxu0
    %v6147 = vpop.f32.mrf.mxu0
    %v6148 = vadd.f32 0.0, %v6147
    %v6149 = vpop.f32.mrf.mxu0
    %6150 = vdwg.mxu0
    %v6159 = vunpack.c.l.b16 %v6052
    %v6160 = vunpack.c.l.b16 %v6053
    %v6161 = vunpack.c.l.b16 %v6054
    %v6162 = vunpack.c.l.b16 %v6055
    %v6163 = vunpack.c.l.b16 %v6056
    %v6164 = vunpack.c.l.b16 %v6057
    %v6165 = vunpack.c.l.b16 %v6058
    %v6166 = vunpack.c.l.b16 %v6059
    %v6167 = vpack.c.b16 %v6160, %v6159
    %v6168 = vpack.c.b16 %v6162, %v6161
    %v6169 = vpack.c.b16 %v6164, %v6163
    %v6170 = vpack.c.b16 %v6166, %v6165
    %v6176 = vsel %vm6095, %v6050, 0
    %v6179 = vsel %vm6095, %v6051, 0
    %6181 = vmatprep.subr.bf16.mxu0 0
    %6182 = vmatpush1.bf16.msra.mxu0 0
    %6183 = vmatprep.subr.bf16.mxu0 0
    %6184 = vmatpush1.bf16.msra.mxu0 0
    %6185 = vmatprep.subr.bf16.mxu0 0
    %6186 = vmatpush1.bf16.msra.mxu0 0
    %6187 = vmatprep.subr.bf16.mxu0 0
    %6188 = vmatpush1.bf16.msra.mxu0 0
    %6189 = vmatprep.subr.bf16.mxu0 0
    %6190 = vmatpush1.bf16.msra.mxu0 %v6170
    %6191 = vmatprep.subr.bf16.mxu0 0
    %6192 = vmatpush1.bf16.msra.mxu0 %v6169
    %6193 = vmatprep.subr.bf16.mxu0 0
    %6194 = vmatpush1.bf16.msra.mxu0 %v6168
    %6195 = vmatprep.subr.bf16.mxu0 0
    %6196 = vmatpush1.bf16.msra.mxu0 %v6167
    %6197 = vmatprep.subr.bf16.mxu0 0
    %6198 = vmatpush2.bf16.msra.mxu0 0
    %6199 = vmatprep.subr.bf16.mxu0 0
    %6200 = vmatpush2.bf16.msra.mxu0 0
    %6201 = vmatprep.subr.bf16.mxu0 0
    %6202 = vmatpush2.bf16.msra.mxu0 0
    %6203 = vmatprep.subr.bf16.mxu0 0
    %6204 = vmatpush2.bf16.msra.mxu0 0
    %6205 = vmatprep.subr.bf16.mxu0 0
    %6206 = vmatpush2.bf16.msra.mxu0 0
    %6207 = vmatprep.subr.bf16.mxu0 0
    %6208 = vmatpush2.bf16.msra.mxu0 0
    %6209 = vmatprep.subr.bf16.mxu0 0
    %6210 = vmatpush2.bf16.msra.mxu0 0
    %6211 = vmatprep.subr.bf16.mxu0 0
    %6212 = vmatpush2.bf16.msra.mxu0 0
    %6213 = vmatprep.mubr.bf16.mxu0 0
    %6214 = vmatmul.mubr.bf16.gmra.mxu0 %v6176
    %v6215 = vpop.f32.mrf.mxu0
    %v6216 = vadd.f32 %v6137, %v6215
    %v6217 = vpop.f32.mrf.mxu0
    %v6218 = vpop.f32.mrf.mxu0
    %v6219 = vadd.f32 %v6140, %v6218
    %v6220 = vpop.f32.mrf.mxu0
    %6221 = vmatprep.mubr.bf16.mxu0 0
    %6222 = vmatmul.mubr.bf16.gmra.mxu0 %v6179
    %v6223 = vpop.f32.mrf.mxu0
    %v6224 = vadd.f32 %v6145, %v6223
    %v6225 = vpop.f32.mrf.mxu0
    %v6226 = vpop.f32.mrf.mxu0
    %v6227 = vadd.f32 %v6148, %v6226
    %v6228 = vpop.f32.mrf.mxu0
    %6229 = vdwg.mxu0
    %v6230 = vpack.c.bf16 %v5931, %v5930
    %v6231 = vpack.c.bf16 %v5933, %v5932
    %s6232 = scalar_lea.vmem %s5, 64
    %v6233 = vld [vmem:[%s6232] sm:$0xf]
    %v6234 = vld [vmem:[%s6232 + $0x4] sm:$0xf]
    %v6235 = vld [vmem:[%s6232 + $0x8] sm:$0xf]
    %v6236 = vld [vmem:[%s6232 + $0xc] sm:$0xf]
    %v6237 = vld [vmem:[%s6232 + $0x10] sm:$0xf]
    %v6238 = vld [vmem:[%s6232 + $0x14] sm:$0xf]
    %v6239 = vld [vmem:[%s6232 + $0x18] sm:$0xf]
    %v6240 = vld [vmem:[%s6232 + $0x1c] sm:$0xf]
    %v6249 = vunpack.c.l.b16 %v6233
    %v6250 = vunpack.c.l.b16 %v6234
    %v6251 = vunpack.c.l.b16 %v6235
    %v6252 = vunpack.c.l.b16 %v6236
    %v6253 = vunpack.c.l.b16 %v6237
    %v6254 = vunpack.c.l.b16 %v6238
    %v6255 = vunpack.c.l.b16 %v6239
    %v6256 = vunpack.c.l.b16 %v6240
    %v6257 = vpack.c.b16 %v6250, %v6249
    %v6258 = vpack.c.b16 %v6252, %v6251
    %v6259 = vpack.c.b16 %v6254, %v6253
    %v6260 = vpack.c.b16 %v6256, %v6255
    %v6266 = vsel %vm6095, %v6230, 0
    %v6269 = vsel %vm6095, %v6231, 0
    %6271 = vmatprep.subr.bf16.mxu0 0
    %6272 = vmatpush1.bf16.msra.mxu0 0
    %6273 = vmatprep.subr.bf16.mxu0 0
    %6274 = vmatpush1.bf16.msra.mxu0 0
    %6275 = vmatprep.subr.bf16.mxu0 0
    %6276 = vmatpush1.bf16.msra.mxu0 0
    %6277 = vmatprep.subr.bf16.mxu0 0
    %6278 = vmatpush1.bf16.msra.mxu0 0
    %6279 = vmatprep.subr.bf16.mxu0 0
    %6280 = vmatpush1.bf16.msra.mxu0 %v6260
    %6281 = vmatprep.subr.bf16.mxu0 0
    %6282 = vmatpush1.bf16.msra.mxu0 %v6259
    %6283 = vmatprep.subr.bf16.mxu0 0
    %6284 = vmatpush1.bf16.msra.mxu0 %v6258
    %6285 = vmatprep.subr.bf16.mxu0 0
    %6286 = vmatpush1.bf16.msra.mxu0 %v6257
    %6287 = vmatprep.subr.bf16.mxu0 0
    %6288 = vmatpush2.bf16.msra.mxu0 0
    %6289 = vmatprep.subr.bf16.mxu0 0
    %6290 = vmatpush2.bf16.msra.mxu0 0
    %6291 = vmatprep.subr.bf16.mxu0 0
    %6292 = vmatpush2.bf16.msra.mxu0 0
    %6293 = vmatprep.subr.bf16.mxu0 0
    %6294 = vmatpush2.bf16.msra.mxu0 0
    %6295 = vmatprep.subr.bf16.mxu0 0
    %6296 = vmatpush2.bf16.msra.mxu0 0
    %6297 = vmatprep.subr.bf16.mxu0 0
    %6298 = vmatpush2.bf16.msra.mxu0 0
    %6299 = vmatprep.subr.bf16.mxu0 0
    %6300 = vmatpush2.bf16.msra.mxu0 0
    %6301 = vmatprep.subr.bf16.mxu0 0
    %6302 = vmatpush2.bf16.msra.mxu0 0
    %6303 = vmatprep.mubr.bf16.mxu0 0
    %6304 = vmatmul.mubr.bf16.gmra.mxu0 %v6266
    %v6305 = vpop.f32.mrf.mxu0
    %v6306 = vadd.f32 0.0, %v6305
    %v6307 = vpop.f32.mrf.mxu0
    %v6308 = vpop.f32.mrf.mxu0
    %v6309 = vadd.f32 0.0, %v6308
    %v6310 = vpop.f32.mrf.mxu0
    %6311 = vmatprep.mubr.bf16.mxu0 0
    %6312 = vmatmul.mubr.bf16.gmra.mxu0 %v6269
    %v6313 = vpop.f32.mrf.mxu0
    %v6314 = vadd.f32 0.0, %v6313
    %v6315 = vpop.f32.mrf.mxu0
    %v6316 = vpop.f32.mrf.mxu0
    %v6317 = vadd.f32 0.0, %v6316
    %v6318 = vpop.f32.mrf.mxu0
    %6319 = vdwg.mxu0
    %v6320 = vadd.f32 %v6216, %v6306
    %v6321 = vadd.f32 %v6219, %v6309
    %v6322 = vadd.f32 %v6224, %v6314
    %v6323 = vadd.f32 %v6227, %v6317
    %v6324 = vpack.c.bf16 %v5935, %v5934
    %v6325 = vpack.c.bf16 %v5937, %v5936
    %s6326 = scalar_lea.vmem %s5, 96
    %v6327 = vld [vmem:[%s6326] sm:$0xf]
    %v6328 = vld [vmem:[%s6326 + $0x4] sm:$0xf]
    %v6329 = vld [vmem:[%s6326 + $0x8] sm:$0xf]
    %v6330 = vld [vmem:[%s6326 + $0xc] sm:$0xf]
    %v6331 = vld [vmem:[%s6326 + $0x10] sm:$0xf]
    %v6332 = vld [vmem:[%s6326 + $0x14] sm:$0xf]
    %v6333 = vld [vmem:[%s6326 + $0x18] sm:$0xf]
    %v6334 = vld [vmem:[%s6326 + $0x1c] sm:$0xf]
    %v6343 = vunpack.c.l.b16 %v6327
    %v6344 = vunpack.c.l.b16 %v6328
    %v6345 = vunpack.c.l.b16 %v6329
    %v6346 = vunpack.c.l.b16 %v6330
    %v6347 = vunpack.c.l.b16 %v6331
    %v6348 = vunpack.c.l.b16 %v6332
    %v6349 = vunpack.c.l.b16 %v6333
    %v6350 = vunpack.c.l.b16 %v6334
    %v6351 = vpack.c.b16 %v6344, %v6343
    %v6352 = vpack.c.b16 %v6346, %v6345
    %v6353 = vpack.c.b16 %v6348, %v6347
    %v6354 = vpack.c.b16 %v6350, %v6349
    %v6360 = vsel %vm6095, %v6324, 0
    %v6363 = vsel %vm6095, %v6325, 0
    %6365 = vmatprep.subr.bf16.mxu0 0
    %6366 = vmatpush1.bf16.msra.mxu0 0
    %6367 = vmatprep.subr.bf16.mxu0 0
    %6368 = vmatpush1.bf16.msra.mxu0 0
    %6369 = vmatprep.subr.bf16.mxu0 0
    %6370 = vmatpush1.bf16.msra.mxu0 0
    %6371 = vmatprep.subr.bf16.mxu0 0
    %6372 = vmatpush1.bf16.msra.mxu0 0
    %6373 = vmatprep.subr.bf16.mxu0 0
    %6374 = vmatpush1.bf16.msra.mxu0 %v6354
    %6375 = vmatprep.subr.bf16.mxu0 0
    %6376 = vmatpush1.bf16.msra.mxu0 %v6353
    %6377 = vmatprep.subr.bf16.mxu0 0
    %6378 = vmatpush1.bf16.msra.mxu0 %v6352
    %6379 = vmatprep.subr.bf16.mxu0 0
    %6380 = vmatpush1.bf16.msra.mxu0 %v6351
    %6381 = vmatprep.subr.bf16.mxu0 0
    %6382 = vmatpush2.bf16.msra.mxu0 0
    %6383 = vmatprep.subr.bf16.mxu0 0
    %6384 = vmatpush2.bf16.msra.mxu0 0
    %6385 = vmatprep.subr.bf16.mxu0 0
    %6386 = vmatpush2.bf16.msra.mxu0 0
    %6387 = vmatprep.subr.bf16.mxu0 0
    %6388 = vmatpush2.bf16.msra.mxu0 0
    %6389 = vmatprep.subr.bf16.mxu0 0
    %6390 = vmatpush2.bf16.msra.mxu0 0
    %6391 = vmatprep.subr.bf16.mxu0 0
    %6392 = vmatpush2.bf16.msra.mxu0 0
    %6393 = vmatprep.subr.bf16.mxu0 0
    %6394 = vmatpush2.bf16.msra.mxu0 0
    %6395 = vmatprep.subr.bf16.mxu0 0
    %6396 = vmatpush2.bf16.msra.mxu0 0
    %6397 = vmatprep.mubr.bf16.mxu0 0
    %6398 = vmatmul.mubr.bf16.gmra.mxu0 %v6360
    %v6399 = vpop.f32.mrf.mxu0
    %v6400 = vadd.f32 0.0, %v6399
    %v6401 = vpop.f32.mrf.mxu0
    %v6402 = vpop.f32.mrf.mxu0
    %v6403 = vadd.f32 0.0, %v6402
    %v6404 = vpop.f32.mrf.mxu0
    %6405 = vmatprep.mubr.bf16.mxu0 0
    %6406 = vmatmul.mubr.bf16.gmra.mxu0 %v6363
    %v6407 = vpop.f32.mrf.mxu0
    %v6408 = vadd.f32 0.0, %v6407
    %v6409 = vpop.f32.mrf.mxu0
    %v6410 = vpop.f32.mrf.mxu0
    %v6411 = vadd.f32 0.0, %v6410
    %v6412 = vpop.f32.mrf.mxu0
    %6413 = vdwg.mxu0
    %v6414 = vadd.f32 %v6320, %v6400
    %v6415 = vadd.f32 %v6321, %v6403
    %v6416 = vadd.f32 %v6322, %v6408
    %v6417 = vadd.f32 %v6323, %v6411
    %v6418 = vpack.c.bf16 %v5939, %v5938
    %v6419 = vpack.c.bf16 %v5941, %v5940
    %s6420 = scalar_lea.vmem %s5, 128
    %v6421 = vld [vmem:[%s6420] sm:$0xf]
    %v6422 = vld [vmem:[%s6420 + $0x4] sm:$0xf]
    %v6423 = vld [vmem:[%s6420 + $0x8] sm:$0xf]
    %v6424 = vld [vmem:[%s6420 + $0xc] sm:$0xf]
    %v6425 = vld [vmem:[%s6420 + $0x10] sm:$0xf]
    %v6426 = vld [vmem:[%s6420 + $0x14] sm:$0xf]
    %v6427 = vld [vmem:[%s6420 + $0x18] sm:$0xf]
    %v6428 = vld [vmem:[%s6420 + $0x1c] sm:$0xf]
    %v6437 = vunpack.c.l.b16 %v6421
    %v6438 = vunpack.c.l.b16 %v6422
    %v6439 = vunpack.c.l.b16 %v6423
    %v6440 = vunpack.c.l.b16 %v6424
    %v6441 = vunpack.c.l.b16 %v6425
    %v6442 = vunpack.c.l.b16 %v6426
    %v6443 = vunpack.c.l.b16 %v6427
    %v6444 = vunpack.c.l.b16 %v6428
    %v6445 = vpack.c.b16 %v6438, %v6437
    %v6446 = vpack.c.b16 %v6440, %v6439
    %v6447 = vpack.c.b16 %v6442, %v6441
    %v6448 = vpack.c.b16 %v6444, %v6443
    %v6454 = vsel %vm6095, %v6418, 0
    %v6457 = vsel %vm6095, %v6419, 0
    %6459 = vmatprep.subr.bf16.mxu0 0
    %6460 = vmatpush1.bf16.msra.mxu0 0
    %6461 = vmatprep.subr.bf16.mxu0 0
    %6462 = vmatpush1.bf16.msra.mxu0 0
    %6463 = vmatprep.subr.bf16.mxu0 0
    %6464 = vmatpush1.bf16.msra.mxu0 0
    %6465 = vmatprep.subr.bf16.mxu0 0
    %6466 = vmatpush1.bf16.msra.mxu0 0
    %6467 = vmatprep.subr.bf16.mxu0 0
    %6468 = vmatpush1.bf16.msra.mxu0 %v6448
    %6469 = vmatprep.subr.bf16.mxu0 0
    %6470 = vmatpush1.bf16.msra.mxu0 %v6447
    %6471 = vmatprep.subr.bf16.mxu0 0
    %6472 = vmatpush1.bf16.msra.mxu0 %v6446
    %6473 = vmatprep.subr.bf16.mxu0 0
    %6474 = vmatpush1.bf16.msra.mxu0 %v6445
    %6475 = vmatprep.subr.bf16.mxu0 0
    %6476 = vmatpush2.bf16.msra.mxu0 0
    %6477 = vmatprep.subr.bf16.mxu0 0
    %6478 = vmatpush2.bf16.msra.mxu0 0
    %6479 = vmatprep.subr.bf16.mxu0 0
    %6480 = vmatpush2.bf16.msra.mxu0 0
    %6481 = vmatprep.subr.bf16.mxu0 0
    %6482 = vmatpush2.bf16.msra.mxu0 0
    %6483 = vmatprep.subr.bf16.mxu0 0
    %6484 = vmatpush2.bf16.msra.mxu0 0
    %6485 = vmatprep.subr.bf16.mxu0 0
    %6486 = vmatpush2.bf16.msra.mxu0 0
    %6487 = vmatprep.subr.bf16.mxu0 0
    %6488 = vmatpush2.bf16.msra.mxu0 0
    %6489 = vmatprep.subr.bf16.mxu0 0
    %6490 = vmatpush2.bf16.msra.mxu0 0
    %6491 = vmatprep.mubr.bf16.mxu0 0
    %6492 = vmatmul.mubr.bf16.gmra.mxu0 %v6454
    %v6493 = vpop.f32.mrf.mxu0
    %v6494 = vadd.f32 0.0, %v6493
    %v6495 = vpop.f32.mrf.mxu0
    %v6496 = vpop.f32.mrf.mxu0
    %v6497 = vadd.f32 0.0, %v6496
    %v6498 = vpop.f32.mrf.mxu0
    %6499 = vmatprep.mubr.bf16.mxu0 0
    %6500 = vmatmul.mubr.bf16.gmra.mxu0 %v6457
    %v6501 = vpop.f32.mrf.mxu0
    %v6502 = vadd.f32 0.0, %v6501
    %v6503 = vpop.f32.mrf.mxu0
    %v6504 = vpop.f32.mrf.mxu0
    %v6505 = vadd.f32 0.0, %v6504
    %v6506 = vpop.f32.mrf.mxu0
    %6507 = vdwg.mxu0
    %v6508 = vadd.f32 %v6414, %v6494
    %v6509 = vadd.f32 %v6415, %v6497
    %v6510 = vadd.f32 %v6416, %v6502
    %v6511 = vadd.f32 %v6417, %v6505
    %v6512 = vpack.c.bf16 %v5943, %v5942
    %v6513 = vpack.c.bf16 %v5945, %v5944
    %s6514 = scalar_lea.vmem %s5, 160
    %v6515 = vld [vmem:[%s6514] sm:$0xf]
    %v6516 = vld [vmem:[%s6514 + $0x4] sm:$0xf]
    %v6517 = vld [vmem:[%s6514 + $0x8] sm:$0xf]
    %v6518 = vld [vmem:[%s6514 + $0xc] sm:$0xf]
    %v6519 = vld [vmem:[%s6514 + $0x10] sm:$0xf]
    %v6520 = vld [vmem:[%s6514 + $0x14] sm:$0xf]
    %v6521 = vld [vmem:[%s6514 + $0x18] sm:$0xf]
    %v6522 = vld [vmem:[%s6514 + $0x1c] sm:$0xf]
    %v6531 = vunpack.c.l.b16 %v6515
    %v6532 = vunpack.c.l.b16 %v6516
    %v6533 = vunpack.c.l.b16 %v6517
    %v6534 = vunpack.c.l.b16 %v6518
    %v6535 = vunpack.c.l.b16 %v6519
    %v6536 = vunpack.c.l.b16 %v6520
    %v6537 = vunpack.c.l.b16 %v6521
    %v6538 = vunpack.c.l.b16 %v6522
    %v6539 = vpack.c.b16 %v6532, %v6531
    %v6540 = vpack.c.b16 %v6534, %v6533
    %v6541 = vpack.c.b16 %v6536, %v6535
    %v6542 = vpack.c.b16 %v6538, %v6537
    %v6548 = vsel %vm6095, %v6512, 0
    %v6551 = vsel %vm6095, %v6513, 0
    %6553 = vmatprep.subr.bf16.mxu0 0
    %6554 = vmatpush1.bf16.msra.mxu0 0
    %6555 = vmatprep.subr.bf16.mxu0 0
    %6556 = vmatpush1.bf16.msra.mxu0 0
    %6557 = vmatprep.subr.bf16.mxu0 0
    %6558 = vmatpush1.bf16.msra.mxu0 0
    %6559 = vmatprep.subr.bf16.mxu0 0
    %6560 = vmatpush1.bf16.msra.mxu0 0
    %6561 = vmatprep.subr.bf16.mxu0 0
    %6562 = vmatpush1.bf16.msra.mxu0 %v6542
    %6563 = vmatprep.subr.bf16.mxu0 0
    %6564 = vmatpush1.bf16.msra.mxu0 %v6541
    %6565 = vmatprep.subr.bf16.mxu0 0
    %6566 = vmatpush1.bf16.msra.mxu0 %v6540
    %6567 = vmatprep.subr.bf16.mxu0 0
    %6568 = vmatpush1.bf16.msra.mxu0 %v6539
    %6569 = vmatprep.subr.bf16.mxu0 0
    %6570 = vmatpush2.bf16.msra.mxu0 0
    %6571 = vmatprep.subr.bf16.mxu0 0
    %6572 = vmatpush2.bf16.msra.mxu0 0
    %6573 = vmatprep.subr.bf16.mxu0 0
    %6574 = vmatpush2.bf16.msra.mxu0 0
    %6575 = vmatprep.subr.bf16.mxu0 0
    %6576 = vmatpush2.bf16.msra.mxu0 0
    %6577 = vmatprep.subr.bf16.mxu0 0
    %6578 = vmatpush2.bf16.msra.mxu0 0
    %6579 = vmatprep.subr.bf16.mxu0 0
    %6580 = vmatpush2.bf16.msra.mxu0 0
    %6581 = vmatprep.subr.bf16.mxu0 0
    %6582 = vmatpush2.bf16.msra.mxu0 0
    %6583 = vmatprep.subr.bf16.mxu0 0
    %6584 = vmatpush2.bf16.msra.mxu0 0
    %6585 = vmatprep.mubr.bf16.mxu0 0
    %6586 = vmatmul.mubr.bf16.gmra.mxu0 %v6548
    %v6587 = vpop.f32.mrf.mxu0
    %v6588 = vadd.f32 0.0, %v6587
    %v6589 = vpop.f32.mrf.mxu0
    %v6590 = vpop.f32.mrf.mxu0
    %v6591 = vadd.f32 0.0, %v6590
    %v6592 = vpop.f32.mrf.mxu0
    %6593 = vmatprep.mubr.bf16.mxu0 0
    %6594 = vmatmul.mubr.bf16.gmra.mxu0 %v6551
    %v6595 = vpop.f32.mrf.mxu0
    %v6596 = vadd.f32 0.0, %v6595
    %v6597 = vpop.f32.mrf.mxu0
    %v6598 = vpop.f32.mrf.mxu0
    %v6599 = vadd.f32 0.0, %v6598
    %v6600 = vpop.f32.mrf.mxu0
    %6601 = vdwg.mxu0
    %v6602 = vadd.f32 %v6508, %v6588
    %v6603 = vadd.f32 %v6509, %v6591
    %v6604 = vadd.f32 %v6510, %v6596
    %v6605 = vadd.f32 %v6511, %v6599
    %v6606 = vpack.c.bf16 %v5947, %v5946
    %v6607 = vpack.c.bf16 %v5949, %v5948
    %s6608 = scalar_lea.vmem %s5, 192
    %v6609 = vld [vmem:[%s6608] sm:$0xf]
    %v6610 = vld [vmem:[%s6608 + $0x4] sm:$0xf]
    %v6611 = vld [vmem:[%s6608 + $0x8] sm:$0xf]
    %v6612 = vld [vmem:[%s6608 + $0xc] sm:$0xf]
    %v6613 = vld [vmem:[%s6608 + $0x10] sm:$0xf]
    %v6614 = vld [vmem:[%s6608 + $0x14] sm:$0xf]
    %v6615 = vld [vmem:[%s6608 + $0x18] sm:$0xf]
    %v6616 = vld [vmem:[%s6608 + $0x1c] sm:$0xf]
    %v6625 = vunpack.c.l.b16 %v6609
    %v6626 = vunpack.c.l.b16 %v6610
    %v6627 = vunpack.c.l.b16 %v6611
    %v6628 = vunpack.c.l.b16 %v6612
    %v6629 = vunpack.c.l.b16 %v6613
    %v6630 = vunpack.c.l.b16 %v6614
    %v6631 = vunpack.c.l.b16 %v6615
    %v6632 = vunpack.c.l.b16 %v6616
    %v6633 = vpack.c.b16 %v6626, %v6625
    %v6634 = vpack.c.b16 %v6628, %v6627
    %v6635 = vpack.c.b16 %v6630, %v6629
    %v6636 = vpack.c.b16 %v6632, %v6631
    %v6642 = vsel %vm6095, %v6606, 0
    %v6645 = vsel %vm6095, %v6607, 0
    %6647 = vmatprep.subr.bf16.mxu0 0
    %6648 = vmatpush1.bf16.msra.mxu0 0
    %6649 = vmatprep.subr.bf16.mxu0 0
    %6650 = vmatpush1.bf16.msra.mxu0 0
    %6651 = vmatprep.subr.bf16.mxu0 0
    %6652 = vmatpush1.bf16.msra.mxu0 0
    %6653 = vmatprep.subr.bf16.mxu0 0
    %6654 = vmatpush1.bf16.msra.mxu0 0
    %6655 = vmatprep.subr.bf16.mxu0 0
    %6656 = vmatpush1.bf16.msra.mxu0 %v6636
    %6657 = vmatprep.subr.bf16.mxu0 0
    %6658 = vmatpush1.bf16.msra.mxu0 %v6635
    %6659 = vmatprep.subr.bf16.mxu0 0
    %6660 = vmatpush1.bf16.msra.mxu0 %v6634
    %6661 = vmatprep.subr.bf16.mxu0 0
    %6662 = vmatpush1.bf16.msra.mxu0 %v6633
    %6663 = vmatprep.subr.bf16.mxu0 0
    %6664 = vmatpush2.bf16.msra.mxu0 0
    %6665 = vmatprep.subr.bf16.mxu0 0
    %6666 = vmatpush2.bf16.msra.mxu0 0
    %6667 = vmatprep.subr.bf16.mxu0 0
    %6668 = vmatpush2.bf16.msra.mxu0 0
    %6669 = vmatprep.subr.bf16.mxu0 0
    %6670 = vmatpush2.bf16.msra.mxu0 0
    %6671 = vmatprep.subr.bf16.mxu0 0
    %6672 = vmatpush2.bf16.msra.mxu0 0
    %6673 = vmatprep.subr.bf16.mxu0 0
    %6674 = vmatpush2.bf16.msra.mxu0 0
    %6675 = vmatprep.subr.bf16.mxu0 0
    %6676 = vmatpush2.bf16.msra.mxu0 0
    %6677 = vmatprep.subr.bf16.mxu0 0
    %6678 = vmatpush2.bf16.msra.mxu0 0
    %6679 = vmatprep.mubr.bf16.mxu0 0
    %6680 = vmatmul.mubr.bf16.gmra.mxu0 %v6642
    %v6681 = vpop.f32.mrf.mxu0
    %v6682 = vadd.f32 0.0, %v6681
    %v6683 = vpop.f32.mrf.mxu0
    %v6684 = vpop.f32.mrf.mxu0
    %v6685 = vadd.f32 0.0, %v6684
    %v6686 = vpop.f32.mrf.mxu0
    %6687 = vmatprep.mubr.bf16.mxu0 0
    %6688 = vmatmul.mubr.bf16.gmra.mxu0 %v6645
    %v6689 = vpop.f32.mrf.mxu0
    %v6690 = vadd.f32 0.0, %v6689
    %v6691 = vpop.f32.mrf.mxu0
    %v6692 = vpop.f32.mrf.mxu0
    %v6693 = vadd.f32 0.0, %v6692
    %v6694 = vpop.f32.mrf.mxu0
    %6695 = vdwg.mxu0
    %v6696 = vadd.f32 %v6602, %v6682
    %v6697 = vadd.f32 %v6603, %v6685
    %v6698 = vadd.f32 %v6604, %v6690
    %v6699 = vadd.f32 %v6605, %v6693
    %v6700 = vpack.c.bf16 %v5951, %v5950
    %v6701 = vpack.c.bf16 %v5953, %v5952
    %s6702 = scalar_lea.vmem %s5, 224
    %v6703 = vld [vmem:[%s6702] sm:$0xf]
    %v6704 = vld [vmem:[%s6702 + $0x4] sm:$0xf]
    %v6705 = vld [vmem:[%s6702 + $0x8] sm:$0xf]
    %v6706 = vld [vmem:[%s6702 + $0xc] sm:$0xf]
    %v6707 = vld [vmem:[%s6702 + $0x10] sm:$0xf]
    %v6708 = vld [vmem:[%s6702 + $0x14] sm:$0xf]
    %v6709 = vld [vmem:[%s6702 + $0x18] sm:$0xf]
    %v6710 = vld [vmem:[%s6702 + $0x1c] sm:$0xf]
    %v6719 = vunpack.c.l.b16 %v6703
    %v6720 = vunpack.c.l.b16 %v6704
    %v6721 = vunpack.c.l.b16 %v6705
    %v6722 = vunpack.c.l.b16 %v6706
    %v6723 = vunpack.c.l.b16 %v6707
    %v6724 = vunpack.c.l.b16 %v6708
    %v6725 = vunpack.c.l.b16 %v6709
    %v6726 = vunpack.c.l.b16 %v6710
    %v6727 = vpack.c.b16 %v6720, %v6719
    %v6728 = vpack.c.b16 %v6722, %v6721
    %v6729 = vpack.c.b16 %v6724, %v6723
    %v6730 = vpack.c.b16 %v6726, %v6725
    %v6736 = vsel %vm6095, %v6700, 0
    %v6739 = vsel %vm6095, %v6701, 0
    %6741 = vmatprep.subr.bf16.mxu0 0
    %6742 = vmatpush1.bf16.msra.mxu0 0
    %6743 = vmatprep.subr.bf16.mxu0 0
    %6744 = vmatpush1.bf16.msra.mxu0 0
    %6745 = vmatprep.subr.bf16.mxu0 0
    %6746 = vmatpush1.bf16.msra.mxu0 0
    %6747 = vmatprep.subr.bf16.mxu0 0
    %6748 = vmatpush1.bf16.msra.mxu0 0
    %6749 = vmatprep.subr.bf16.mxu0 0
    %6750 = vmatpush1.bf16.msra.mxu0 %v6730
    %6751 = vmatprep.subr.bf16.mxu0 0
    %6752 = vmatpush1.bf16.msra.mxu0 %v6729
    %6753 = vmatprep.subr.bf16.mxu0 0
    %6754 = vmatpush1.bf16.msra.mxu0 %v6728
    %6755 = vmatprep.subr.bf16.mxu0 0
    %6756 = vmatpush1.bf16.msra.mxu0 %v6727
    %6757 = vmatprep.subr.bf16.mxu0 0
    %6758 = vmatpush2.bf16.msra.mxu0 0
    %6759 = vmatprep.subr.bf16.mxu0 0
    %6760 = vmatpush2.bf16.msra.mxu0 0
    %6761 = vmatprep.subr.bf16.mxu0 0
    %6762 = vmatpush2.bf16.msra.mxu0 0
    %6763 = vmatprep.subr.bf16.mxu0 0
    %6764 = vmatpush2.bf16.msra.mxu0 0
    %6765 = vmatprep.subr.bf16.mxu0 0
    %6766 = vmatpush2.bf16.msra.mxu0 0
    %6767 = vmatprep.subr.bf16.mxu0 0
    %6768 = vmatpush2.bf16.msra.mxu0 0
    %6769 = vmatprep.subr.bf16.mxu0 0
    %6770 = vmatpush2.bf16.msra.mxu0 0
    %6771 = vmatprep.subr.bf16.mxu0 0
    %6772 = vmatpush2.bf16.msra.mxu0 0
    %6773 = vmatprep.mubr.bf16.mxu0 0
    %6774 = vmatmul.mubr.bf16.gmra.mxu0 %v6736
    %v6775 = vpop.f32.mrf.mxu0
    %v6776 = vadd.f32 0.0, %v6775
    %v6777 = vpop.f32.mrf.mxu0
    %v6778 = vpop.f32.mrf.mxu0
    %v6779 = vadd.f32 0.0, %v6778
    %v6780 = vpop.f32.mrf.mxu0
    %6781 = vmatprep.mubr.bf16.mxu0 0
    %6782 = vmatmul.mubr.bf16.gmra.mxu0 %v6739
    %v6783 = vpop.f32.mrf.mxu0
    %v6784 = vadd.f32 0.0, %v6783
    %v6785 = vpop.f32.mrf.mxu0
    %v6786 = vpop.f32.mrf.mxu0
    %v6787 = vadd.f32 0.0, %v6786
    %v6788 = vpop.f32.mrf.mxu0
    %6789 = vdwg.mxu0
    %v6790 = vadd.f32 %v6696, %v6776
    %v6791 = vadd.f32 %v6697, %v6779
    %v6792 = vadd.f32 %v6698, %v6784
    %v6793 = vadd.f32 %v6699, %v6787
    %v6794 = vpack.c.bf16 %v5955, %v5954
    %v6795 = vpack.c.bf16 %v5957, %v5956
    %s6796 = scalar_lea.vmem %s5, 256
    %v6797 = vld [vmem:[%s6796] sm:$0xf]
    %v6798 = vld [vmem:[%s6796 + $0x4] sm:$0xf]
    %v6799 = vld [vmem:[%s6796 + $0x8] sm:$0xf]
    %v6800 = vld [vmem:[%s6796 + $0xc] sm:$0xf]
    %v6801 = vld [vmem:[%s6796 + $0x10] sm:$0xf]
    %v6802 = vld [vmem:[%s6796 + $0x14] sm:$0xf]
    %v6803 = vld [vmem:[%s6796 + $0x18] sm:$0xf]
    %v6804 = vld [vmem:[%s6796 + $0x1c] sm:$0xf]
    %v6813 = vunpack.c.l.b16 %v6797
    %v6814 = vunpack.c.l.b16 %v6798
    %v6815 = vunpack.c.l.b16 %v6799
    %v6816 = vunpack.c.l.b16 %v6800
    %v6817 = vunpack.c.l.b16 %v6801
    %v6818 = vunpack.c.l.b16 %v6802
    %v6819 = vunpack.c.l.b16 %v6803
    %v6820 = vunpack.c.l.b16 %v6804
    %v6821 = vpack.c.b16 %v6814, %v6813
    %v6822 = vpack.c.b16 %v6816, %v6815
    %v6823 = vpack.c.b16 %v6818, %v6817
    %v6824 = vpack.c.b16 %v6820, %v6819
    %v6830 = vsel %vm6095, %v6794, 0
    %v6833 = vsel %vm6095, %v6795, 0
    %6835 = vmatprep.subr.bf16.mxu0 0
    %6836 = vmatpush1.bf16.msra.mxu0 0
    %6837 = vmatprep.subr.bf16.mxu0 0
    %6838 = vmatpush1.bf16.msra.mxu0 0
    %6839 = vmatprep.subr.bf16.mxu0 0
    %6840 = vmatpush1.bf16.msra.mxu0 0
    %6841 = vmatprep.subr.bf16.mxu0 0
    %6842 = vmatpush1.bf16.msra.mxu0 0
    %6843 = vmatprep.subr.bf16.mxu0 0
    %6844 = vmatpush1.bf16.msra.mxu0 %v6824
    %6845 = vmatprep.subr.bf16.mxu0 0
    %6846 = vmatpush1.bf16.msra.mxu0 %v6823
    %6847 = vmatprep.subr.bf16.mxu0 0
    %6848 = vmatpush1.bf16.msra.mxu0 %v6822
    %6849 = vmatprep.subr.bf16.mxu0 0
    %6850 = vmatpush1.bf16.msra.mxu0 %v6821
    %6851 = vmatprep.subr.bf16.mxu0 0
    %6852 = vmatpush2.bf16.msra.mxu0 0
    %6853 = vmatprep.subr.bf16.mxu0 0
    %6854 = vmatpush2.bf16.msra.mxu0 0
    %6855 = vmatprep.subr.bf16.mxu0 0
    %6856 = vmatpush2.bf16.msra.mxu0 0
    %6857 = vmatprep.subr.bf16.mxu0 0
    %6858 = vmatpush2.bf16.msra.mxu0 0
    %6859 = vmatprep.subr.bf16.mxu0 0
    %6860 = vmatpush2.bf16.msra.mxu0 0
    %6861 = vmatprep.subr.bf16.mxu0 0
    %6862 = vmatpush2.bf16.msra.mxu0 0
    %6863 = vmatprep.subr.bf16.mxu0 0
    %6864 = vmatpush2.bf16.msra.mxu0 0
    %6865 = vmatprep.subr.bf16.mxu0 0
    %6866 = vmatpush2.bf16.msra.mxu0 0
    %6867 = vmatprep.mubr.bf16.mxu0 0
    %6868 = vmatmul.mubr.bf16.gmra.mxu0 %v6830
    %v6869 = vpop.f32.mrf.mxu0
    %v6870 = vadd.f32 0.0, %v6869
    %v6871 = vpop.f32.mrf.mxu0
    %v6872 = vpop.f32.mrf.mxu0
    %v6873 = vadd.f32 0.0, %v6872
    %v6874 = vpop.f32.mrf.mxu0
    %6875 = vmatprep.mubr.bf16.mxu0 0
    %6876 = vmatmul.mubr.bf16.gmra.mxu0 %v6833
    %v6877 = vpop.f32.mrf.mxu0
    %v6878 = vadd.f32 0.0, %v6877
    %v6879 = vpop.f32.mrf.mxu0
    %v6880 = vpop.f32.mrf.mxu0
    %v6881 = vadd.f32 0.0, %v6880
    %v6882 = vpop.f32.mrf.mxu0
    %6883 = vdwg.mxu0
    %v6884 = vadd.f32 %v6790, %v6870
    %v6885 = vadd.f32 %v6791, %v6873
    %v6886 = vadd.f32 %v6792, %v6878
    %v6887 = vadd.f32 %v6793, %v6881
    %v6888 = vpack.c.bf16 %v5959, %v5958
    %v6889 = vpack.c.bf16 %v5961, %v5960
    %s6890 = scalar_lea.vmem %s5, 288
    %v6891 = vld [vmem:[%s6890] sm:$0xf]
    %v6892 = vld [vmem:[%s6890 + $0x4] sm:$0xf]
    %v6893 = vld [vmem:[%s6890 + $0x8] sm:$0xf]
    %v6894 = vld [vmem:[%s6890 + $0xc] sm:$0xf]
    %v6895 = vld [vmem:[%s6890 + $0x10] sm:$0xf]
    %v6896 = vld [vmem:[%s6890 + $0x14] sm:$0xf]
    %v6897 = vld [vmem:[%s6890 + $0x18] sm:$0xf]
    %v6898 = vld [vmem:[%s6890 + $0x1c] sm:$0xf]
    %v6907 = vunpack.c.l.b16 %v6891
    %v6908 = vunpack.c.l.b16 %v6892
    %v6909 = vunpack.c.l.b16 %v6893
    %v6910 = vunpack.c.l.b16 %v6894
    %v6911 = vunpack.c.l.b16 %v6895
    %v6912 = vunpack.c.l.b16 %v6896
    %v6913 = vunpack.c.l.b16 %v6897
    %v6914 = vunpack.c.l.b16 %v6898
    %v6915 = vpack.c.b16 %v6908, %v6907
    %v6916 = vpack.c.b16 %v6910, %v6909
    %v6917 = vpack.c.b16 %v6912, %v6911
    %v6918 = vpack.c.b16 %v6914, %v6913
    %v6924 = vsel %vm6095, %v6888, 0
    %v6927 = vsel %vm6095, %v6889, 0
    %6929 = vmatprep.subr.bf16.mxu0 0
    %6930 = vmatpush1.bf16.msra.mxu0 0
    %6931 = vmatprep.subr.bf16.mxu0 0
    %6932 = vmatpush1.bf16.msra.mxu0 0
    %6933 = vmatprep.subr.bf16.mxu0 0
    %6934 = vmatpush1.bf16.msra.mxu0 0
    %6935 = vmatprep.subr.bf16.mxu0 0
    %6936 = vmatpush1.bf16.msra.mxu0 0
    %6937 = vmatprep.subr.bf16.mxu0 0
    %6938 = vmatpush1.bf16.msra.mxu0 %v6918
    %6939 = vmatprep.subr.bf16.mxu0 0
    %6940 = vmatpush1.bf16.msra.mxu0 %v6917
    %6941 = vmatprep.subr.bf16.mxu0 0
    %6942 = vmatpush1.bf16.msra.mxu0 %v6916
    %6943 = vmatprep.subr.bf16.mxu0 0
    %6944 = vmatpush1.bf16.msra.mxu0 %v6915
    %6945 = vmatprep.subr.bf16.mxu0 0
    %6946 = vmatpush2.bf16.msra.mxu0 0
    %6947 = vmatprep.subr.bf16.mxu0 0
    %6948 = vmatpush2.bf16.msra.mxu0 0
    %6949 = vmatprep.subr.bf16.mxu0 0
    %6950 = vmatpush2.bf16.msra.mxu0 0
    %6951 = vmatprep.subr.bf16.mxu0 0
    %6952 = vmatpush2.bf16.msra.mxu0 0
    %6953 = vmatprep.subr.bf16.mxu0 0
    %6954 = vmatpush2.bf16.msra.mxu0 0
    %6955 = vmatprep.subr.bf16.mxu0 0
    %6956 = vmatpush2.bf16.msra.mxu0 0
    %6957 = vmatprep.subr.bf16.mxu0 0
    %6958 = vmatpush2.bf16.msra.mxu0 0
    %6959 = vmatprep.subr.bf16.mxu0 0
    %6960 = vmatpush2.bf16.msra.mxu0 0
    %6961 = vmatprep.mubr.bf16.mxu0 0
    %6962 = vmatmul.mubr.bf16.gmra.mxu0 %v6924
    %v6963 = vpop.f32.mrf.mxu0
    %v6964 = vadd.f32 0.0, %v6963
    %v6965 = vpop.f32.mrf.mxu0
    %v6966 = vpop.f32.mrf.mxu0
    %v6967 = vadd.f32 0.0, %v6966
    %v6968 = vpop.f32.mrf.mxu0
    %6969 = vmatprep.mubr.bf16.mxu0 0
    %6970 = vmatmul.mubr.bf16.gmra.mxu0 %v6927
    %v6971 = vpop.f32.mrf.mxu0
    %v6972 = vadd.f32 0.0, %v6971
    %v6973 = vpop.f32.mrf.mxu0
    %v6974 = vpop.f32.mrf.mxu0
    %v6975 = vadd.f32 0.0, %v6974
    %v6976 = vpop.f32.mrf.mxu0
    %6977 = vdwg.mxu0
    %v6978 = vadd.f32 %v6884, %v6964
    %v6979 = vadd.f32 %v6885, %v6967
    %v6980 = vadd.f32 %v6886, %v6972
    %v6981 = vadd.f32 %v6887, %v6975
    %v6982 = vpack.c.bf16 %v5963, %v5962
    %v6983 = vpack.c.bf16 %v5965, %v5964
    %s6984 = scalar_lea.vmem %s5, 320
    %v6985 = vld [vmem:[%s6984] sm:$0xf]
    %v6986 = vld [vmem:[%s6984 + $0x4] sm:$0xf]
    %v6987 = vld [vmem:[%s6984 + $0x8] sm:$0xf]
    %v6988 = vld [vmem:[%s6984 + $0xc] sm:$0xf]
    %v6989 = vld [vmem:[%s6984 + $0x10] sm:$0xf]
    %v6990 = vld [vmem:[%s6984 + $0x14] sm:$0xf]
    %v6991 = vld [vmem:[%s6984 + $0x18] sm:$0xf]
    %v6992 = vld [vmem:[%s6984 + $0x1c] sm:$0xf]
    %v7001 = vunpack.c.l.b16 %v6985
    %v7002 = vunpack.c.l.b16 %v6986
    %v7003 = vunpack.c.l.b16 %v6987
    %v7004 = vunpack.c.l.b16 %v6988
    %v7005 = vunpack.c.l.b16 %v6989
    %v7006 = vunpack.c.l.b16 %v6990
    %v7007 = vunpack.c.l.b16 %v6991
    %v7008 = vunpack.c.l.b16 %v6992
    %v7009 = vpack.c.b16 %v7002, %v7001
    %v7010 = vpack.c.b16 %v7004, %v7003
    %v7011 = vpack.c.b16 %v7006, %v7005
    %v7012 = vpack.c.b16 %v7008, %v7007
    %v7018 = vsel %vm6095, %v6982, 0
    %v7021 = vsel %vm6095, %v6983, 0
    %7023 = vmatprep.subr.bf16.mxu0 0
    %7024 = vmatpush1.bf16.msra.mxu0 0
    %7025 = vmatprep.subr.bf16.mxu0 0
    %7026 = vmatpush1.bf16.msra.mxu0 0
    %7027 = vmatprep.subr.bf16.mxu0 0
    %7028 = vmatpush1.bf16.msra.mxu0 0
    %7029 = vmatprep.subr.bf16.mxu0 0
    %7030 = vmatpush1.bf16.msra.mxu0 0
    %7031 = vmatprep.subr.bf16.mxu0 0
    %7032 = vmatpush1.bf16.msra.mxu0 %v7012
    %7033 = vmatprep.subr.bf16.mxu0 0
    %7034 = vmatpush1.bf16.msra.mxu0 %v7011
    %7035 = vmatprep.subr.bf16.mxu0 0
    %7036 = vmatpush1.bf16.msra.mxu0 %v7010
    %7037 = vmatprep.subr.bf16.mxu0 0
    %7038 = vmatpush1.bf16.msra.mxu0 %v7009
    %7039 = vmatprep.subr.bf16.mxu0 0
    %7040 = vmatpush2.bf16.msra.mxu0 0
    %7041 = vmatprep.subr.bf16.mxu0 0
    %7042 = vmatpush2.bf16.msra.mxu0 0
    %7043 = vmatprep.subr.bf16.mxu0 0
    %7044 = vmatpush2.bf16.msra.mxu0 0
    %7045 = vmatprep.subr.bf16.mxu0 0
    %7046 = vmatpush2.bf16.msra.mxu0 0
    %7047 = vmatprep.subr.bf16.mxu0 0
    %7048 = vmatpush2.bf16.msra.mxu0 0
    %7049 = vmatprep.subr.bf16.mxu0 0
    %7050 = vmatpush2.bf16.msra.mxu0 0
    %7051 = vmatprep.subr.bf16.mxu0 0
    %7052 = vmatpush2.bf16.msra.mxu0 0
    %7053 = vmatprep.subr.bf16.mxu0 0
    %7054 = vmatpush2.bf16.msra.mxu0 0
    %7055 = vmatprep.mubr.bf16.mxu0 0
    %7056 = vmatmul.mubr.bf16.gmra.mxu0 %v7018
    %v7057 = vpop.f32.mrf.mxu0
    %v7058 = vadd.f32 0.0, %v7057
    %v7059 = vpop.f32.mrf.mxu0
    %v7060 = vpop.f32.mrf.mxu0
    %v7061 = vadd.f32 0.0, %v7060
    %v7062 = vpop.f32.mrf.mxu0
    %7063 = vmatprep.mubr.bf16.mxu0 0
    %7064 = vmatmul.mubr.bf16.gmra.mxu0 %v7021
    %v7065 = vpop.f32.mrf.mxu0
    %v7066 = vadd.f32 0.0, %v7065
    %v7067 = vpop.f32.mrf.mxu0
    %v7068 = vpop.f32.mrf.mxu0
    %v7069 = vadd.f32 0.0, %v7068
    %v7070 = vpop.f32.mrf.mxu0
    %7071 = vdwg.mxu0
    %v7072 = vadd.f32 %v6978, %v7058
    %v7073 = vadd.f32 %v6979, %v7061
    %v7074 = vadd.f32 %v6980, %v7066
    %v7075 = vadd.f32 %v6981, %v7069
    %v7076 = vpack.c.bf16 %v5967, %v5966
    %v7077 = vpack.c.bf16 %v5969, %v5968
    %s7078 = scalar_lea.vmem %s5, 352
    %v7079 = vld [vmem:[%s7078] sm:$0xf]
    %v7080 = vld [vmem:[%s7078 + $0x4] sm:$0xf]
    %v7081 = vld [vmem:[%s7078 + $0x8] sm:$0xf]
    %v7082 = vld [vmem:[%s7078 + $0xc] sm:$0xf]
    %v7083 = vld [vmem:[%s7078 + $0x10] sm:$0xf]
    %v7084 = vld [vmem:[%s7078 + $0x14] sm:$0xf]
    %v7085 = vld [vmem:[%s7078 + $0x18] sm:$0xf]
    %v7086 = vld [vmem:[%s7078 + $0x1c] sm:$0xf]
    %v7095 = vunpack.c.l.b16 %v7079
    %v7096 = vunpack.c.l.b16 %v7080
    %v7097 = vunpack.c.l.b16 %v7081
    %v7098 = vunpack.c.l.b16 %v7082
    %v7099 = vunpack.c.l.b16 %v7083
    %v7100 = vunpack.c.l.b16 %v7084
    %v7101 = vunpack.c.l.b16 %v7085
    %v7102 = vunpack.c.l.b16 %v7086
    %v7103 = vpack.c.b16 %v7096, %v7095
    %v7104 = vpack.c.b16 %v7098, %v7097
    %v7105 = vpack.c.b16 %v7100, %v7099
    %v7106 = vpack.c.b16 %v7102, %v7101
    %v7112 = vsel %vm6095, %v7076, 0
    %v7115 = vsel %vm6095, %v7077, 0
    %7117 = vmatprep.subr.bf16.mxu0 0
    %7118 = vmatpush1.bf16.msra.mxu0 0
    %7119 = vmatprep.subr.bf16.mxu0 0
    %7120 = vmatpush1.bf16.msra.mxu0 0
    %7121 = vmatprep.subr.bf16.mxu0 0
    %7122 = vmatpush1.bf16.msra.mxu0 0
    %7123 = vmatprep.subr.bf16.mxu0 0
    %7124 = vmatpush1.bf16.msra.mxu0 0
    %7125 = vmatprep.subr.bf16.mxu0 0
    %7126 = vmatpush1.bf16.msra.mxu0 %v7106
    %7127 = vmatprep.subr.bf16.mxu0 0
    %7128 = vmatpush1.bf16.msra.mxu0 %v7105
    %7129 = vmatprep.subr.bf16.mxu0 0
    %7130 = vmatpush1.bf16.msra.mxu0 %v7104
    %7131 = vmatprep.subr.bf16.mxu0 0
    %7132 = vmatpush1.bf16.msra.mxu0 %v7103
    %7133 = vmatprep.subr.bf16.mxu0 0
    %7134 = vmatpush2.bf16.msra.mxu0 0
    %7135 = vmatprep.subr.bf16.mxu0 0
    %7136 = vmatpush2.bf16.msra.mxu0 0
    %7137 = vmatprep.subr.bf16.mxu0 0
    %7138 = vmatpush2.bf16.msra.mxu0 0
    %7139 = vmatprep.subr.bf16.mxu0 0
    %7140 = vmatpush2.bf16.msra.mxu0 0
    %7141 = vmatprep.subr.bf16.mxu0 0
    %7142 = vmatpush2.bf16.msra.mxu0 0
    %7143 = vmatprep.subr.bf16.mxu0 0
    %7144 = vmatpush2.bf16.msra.mxu0 0
    %7145 = vmatprep.subr.bf16.mxu0 0
    %7146 = vmatpush2.bf16.msra.mxu0 0
    %7147 = vmatprep.subr.bf16.mxu0 0
    %7148 = vmatpush2.bf16.msra.mxu0 0
    %7149 = vmatprep.mubr.bf16.mxu0 0
    %7150 = vmatmul.mubr.bf16.gmra.mxu0 %v7112
    %v7151 = vpop.f32.mrf.mxu0
    %v7152 = vadd.f32 0.0, %v7151
    %v7153 = vpop.f32.mrf.mxu0
    %v7154 = vpop.f32.mrf.mxu0
    %v7155 = vadd.f32 0.0, %v7154
    %v7156 = vpop.f32.mrf.mxu0
    %7157 = vmatprep.mubr.bf16.mxu0 0
    %7158 = vmatmul.mubr.bf16.gmra.mxu0 %v7115
    %v7159 = vpop.f32.mrf.mxu0
    %v7160 = vadd.f32 0.0, %v7159
    %v7161 = vpop.f32.mrf.mxu0
    %v7162 = vpop.f32.mrf.mxu0
    %v7163 = vadd.f32 0.0, %v7162
    %v7164 = vpop.f32.mrf.mxu0
    %7165 = vdwg.mxu0
    %v7166 = vadd.f32 %v7072, %v7152
    %v7167 = vadd.f32 %v7073, %v7155
    %v7168 = vadd.f32 %v7074, %v7160
    %v7169 = vadd.f32 %v7075, %v7163
    %v7170 = vpack.c.bf16 %v5971, %v5970
    %v7171 = vpack.c.bf16 %v5973, %v5972
    %s7172 = scalar_lea.vmem %s5, 384
    %v7173 = vld [vmem:[%s7172] sm:$0xf]
    %v7174 = vld [vmem:[%s7172 + $0x4] sm:$0xf]
    %v7175 = vld [vmem:[%s7172 + $0x8] sm:$0xf]
    %v7176 = vld [vmem:[%s7172 + $0xc] sm:$0xf]
    %v7177 = vld [vmem:[%s7172 + $0x10] sm:$0xf]
    %v7178 = vld [vmem:[%s7172 + $0x14] sm:$0xf]
    %v7179 = vld [vmem:[%s7172 + $0x18] sm:$0xf]
    %v7180 = vld [vmem:[%s7172 + $0x1c] sm:$0xf]
    %v7189 = vunpack.c.l.b16 %v7173
    %v7190 = vunpack.c.l.b16 %v7174
    %v7191 = vunpack.c.l.b16 %v7175
    %v7192 = vunpack.c.l.b16 %v7176
    %v7193 = vunpack.c.l.b16 %v7177
    %v7194 = vunpack.c.l.b16 %v7178
    %v7195 = vunpack.c.l.b16 %v7179
    %v7196 = vunpack.c.l.b16 %v7180
    %v7197 = vpack.c.b16 %v7190, %v7189
    %v7198 = vpack.c.b16 %v7192, %v7191
    %v7199 = vpack.c.b16 %v7194, %v7193
    %v7200 = vpack.c.b16 %v7196, %v7195
    %v7206 = vsel %vm6095, %v7170, 0
    %v7209 = vsel %vm6095, %v7171, 0
    %7211 = vmatprep.subr.bf16.mxu0 0
    %7212 = vmatpush1.bf16.msra.mxu0 0
    %7213 = vmatprep.subr.bf16.mxu0 0
    %7214 = vmatpush1.bf16.msra.mxu0 0
    %7215 = vmatprep.subr.bf16.mxu0 0
    %7216 = vmatpush1.bf16.msra.mxu0 0
    %7217 = vmatprep.subr.bf16.mxu0 0
    %7218 = vmatpush1.bf16.msra.mxu0 0
    %7219 = vmatprep.subr.bf16.mxu0 0
    %7220 = vmatpush1.bf16.msra.mxu0 %v7200
    %7221 = vmatprep.subr.bf16.mxu0 0
    %7222 = vmatpush1.bf16.msra.mxu0 %v7199
    %7223 = vmatprep.subr.bf16.mxu0 0
    %7224 = vmatpush1.bf16.msra.mxu0 %v7198
    %7225 = vmatprep.subr.bf16.mxu0 0
    %7226 = vmatpush1.bf16.msra.mxu0 %v7197
    %7227 = vmatprep.subr.bf16.mxu0 0
    %7228 = vmatpush2.bf16.msra.mxu0 0
    %7229 = vmatprep.subr.bf16.mxu0 0
    %7230 = vmatpush2.bf16.msra.mxu0 0
    %7231 = vmatprep.subr.bf16.mxu0 0
    %7232 = vmatpush2.bf16.msra.mxu0 0
    %7233 = vmatprep.subr.bf16.mxu0 0
    %7234 = vmatpush2.bf16.msra.mxu0 0
    %7235 = vmatprep.subr.bf16.mxu0 0
    %7236 = vmatpush2.bf16.msra.mxu0 0
    %7237 = vmatprep.subr.bf16.mxu0 0
    %7238 = vmatpush2.bf16.msra.mxu0 0
    %7239 = vmatprep.subr.bf16.mxu0 0
    %7240 = vmatpush2.bf16.msra.mxu0 0
    %7241 = vmatprep.subr.bf16.mxu0 0
    %7242 = vmatpush2.bf16.msra.mxu0 0
    %7243 = vmatprep.mubr.bf16.mxu0 0
    %7244 = vmatmul.mubr.bf16.gmra.mxu0 %v7206
    %v7245 = vpop.f32.mrf.mxu0
    %v7246 = vadd.f32 0.0, %v7245
    %v7247 = vpop.f32.mrf.mxu0
    %v7248 = vpop.f32.mrf.mxu0
    %v7249 = vadd.f32 0.0, %v7248
    %v7250 = vpop.f32.mrf.mxu0
    %7251 = vmatprep.mubr.bf16.mxu0 0
    %7252 = vmatmul.mubr.bf16.gmra.mxu0 %v7209
    %v7253 = vpop.f32.mrf.mxu0
    %v7254 = vadd.f32 0.0, %v7253
    %v7255 = vpop.f32.mrf.mxu0
    %v7256 = vpop.f32.mrf.mxu0
    %v7257 = vadd.f32 0.0, %v7256
    %v7258 = vpop.f32.mrf.mxu0
    %7259 = vdwg.mxu0
    %v7260 = vadd.f32 %v7166, %v7246
    %v7261 = vadd.f32 %v7167, %v7249
    %v7262 = vadd.f32 %v7168, %v7254
    %v7263 = vadd.f32 %v7169, %v7257
    %v7264 = vpack.c.bf16 %v5975, %v5974
    %v7265 = vpack.c.bf16 %v5977, %v5976
    %s7266 = scalar_lea.vmem %s5, 416
    %v7267 = vld [vmem:[%s7266] sm:$0xf]
    %v7268 = vld [vmem:[%s7266 + $0x4] sm:$0xf]
    %v7269 = vld [vmem:[%s7266 + $0x8] sm:$0xf]
    %v7270 = vld [vmem:[%s7266 + $0xc] sm:$0xf]
    %v7271 = vld [vmem:[%s7266 + $0x10] sm:$0xf]
    %v7272 = vld [vmem:[%s7266 + $0x14] sm:$0xf]
    %v7273 = vld [vmem:[%s7266 + $0x18] sm:$0xf]
    %v7274 = vld [vmem:[%s7266 + $0x1c] sm:$0xf]
    %v7283 = vunpack.c.l.b16 %v7267
    %v7284 = vunpack.c.l.b16 %v7268
    %v7285 = vunpack.c.l.b16 %v7269
    %v7286 = vunpack.c.l.b16 %v7270
    %v7287 = vunpack.c.l.b16 %v7271
    %v7288 = vunpack.c.l.b16 %v7272
    %v7289 = vunpack.c.l.b16 %v7273
    %v7290 = vunpack.c.l.b16 %v7274
    %v7291 = vpack.c.b16 %v7284, %v7283
    %v7292 = vpack.c.b16 %v7286, %v7285
    %v7293 = vpack.c.b16 %v7288, %v7287
    %v7294 = vpack.c.b16 %v7290, %v7289
    %v7300 = vsel %vm6095, %v7264, 0
    %v7303 = vsel %vm6095, %v7265, 0
    %7305 = vmatprep.subr.bf16.mxu0 0
    %7306 = vmatpush1.bf16.msra.mxu0 0
    %7307 = vmatprep.subr.bf16.mxu0 0
    %7308 = vmatpush1.bf16.msra.mxu0 0
    %7309 = vmatprep.subr.bf16.mxu0 0
    %7310 = vmatpush1.bf16.msra.mxu0 0
    %7311 = vmatprep.subr.bf16.mxu0 0
    %7312 = vmatpush1.bf16.msra.mxu0 0
    %7313 = vmatprep.subr.bf16.mxu0 0
    %7314 = vmatpush1.bf16.msra.mxu0 %v7294
    %7315 = vmatprep.subr.bf16.mxu0 0
    %7316 = vmatpush1.bf16.msra.mxu0 %v7293
    %7317 = vmatprep.subr.bf16.mxu0 0
    %7318 = vmatpush1.bf16.msra.mxu0 %v7292
    %7319 = vmatprep.subr.bf16.mxu0 0
    %7320 = vmatpush1.bf16.msra.mxu0 %v7291
    %7321 = vmatprep.subr.bf16.mxu0 0
    %7322 = vmatpush2.bf16.msra.mxu0 0
    %7323 = vmatprep.subr.bf16.mxu0 0
    %7324 = vmatpush2.bf16.msra.mxu0 0
    %7325 = vmatprep.subr.bf16.mxu0 0
    %7326 = vmatpush2.bf16.msra.mxu0 0
    %7327 = vmatprep.subr.bf16.mxu0 0
    %7328 = vmatpush2.bf16.msra.mxu0 0
    %7329 = vmatprep.subr.bf16.mxu0 0
    %7330 = vmatpush2.bf16.msra.mxu0 0
    %7331 = vmatprep.subr.bf16.mxu0 0
    %7332 = vmatpush2.bf16.msra.mxu0 0
    %7333 = vmatprep.subr.bf16.mxu0 0
    %7334 = vmatpush2.bf16.msra.mxu0 0
    %7335 = vmatprep.subr.bf16.mxu0 0
    %7336 = vmatpush2.bf16.msra.mxu0 0
    %7337 = vmatprep.mubr.bf16.mxu0 0
    %7338 = vmatmul.mubr.bf16.gmra.mxu0 %v7300
    %v7339 = vpop.f32.mrf.mxu0
    %v7340 = vadd.f32 0.0, %v7339
    %v7341 = vpop.f32.mrf.mxu0
    %v7342 = vpop.f32.mrf.mxu0
    %v7343 = vadd.f32 0.0, %v7342
    %v7344 = vpop.f32.mrf.mxu0
    %7345 = vmatprep.mubr.bf16.mxu0 0
    %7346 = vmatmul.mubr.bf16.gmra.mxu0 %v7303
    %v7347 = vpop.f32.mrf.mxu0
    %v7348 = vadd.f32 0.0, %v7347
    %v7349 = vpop.f32.mrf.mxu0
    %v7350 = vpop.f32.mrf.mxu0
    %v7351 = vadd.f32 0.0, %v7350
    %v7352 = vpop.f32.mrf.mxu0
    %7353 = vdwg.mxu0
    %v7354 = vadd.f32 %v7260, %v7340
    %v7355 = vadd.f32 %v7261, %v7343
    %v7356 = vadd.f32 %v7262, %v7348
    %v7357 = vadd.f32 %v7263, %v7351
    %v7358 = vpack.c.bf16 %v5979, %v5978
    %v7359 = vpack.c.bf16 %v5981, %v5980
    %s7360 = scalar_lea.vmem %s5, 448
    %v7361 = vld [vmem:[%s7360] sm:$0xf]
    %v7362 = vld [vmem:[%s7360 + $0x4] sm:$0xf]
    %v7363 = vld [vmem:[%s7360 + $0x8] sm:$0xf]
    %v7364 = vld [vmem:[%s7360 + $0xc] sm:$0xf]
    %v7365 = vld [vmem:[%s7360 + $0x10] sm:$0xf]
    %v7366 = vld [vmem:[%s7360 + $0x14] sm:$0xf]
    %v7367 = vld [vmem:[%s7360 + $0x18] sm:$0xf]
    %v7368 = vld [vmem:[%s7360 + $0x1c] sm:$0xf]
    %v7377 = vunpack.c.l.b16 %v7361
    %v7378 = vunpack.c.l.b16 %v7362
    %v7379 = vunpack.c.l.b16 %v7363
    %v7380 = vunpack.c.l.b16 %v7364
    %v7381 = vunpack.c.l.b16 %v7365
    %v7382 = vunpack.c.l.b16 %v7366
    %v7383 = vunpack.c.l.b16 %v7367
    %v7384 = vunpack.c.l.b16 %v7368
    %v7385 = vpack.c.b16 %v7378, %v7377
    %v7386 = vpack.c.b16 %v7380, %v7379
    %v7387 = vpack.c.b16 %v7382, %v7381
    %v7388 = vpack.c.b16 %v7384, %v7383
    %v7394 = vsel %vm6095, %v7358, 0
    %v7397 = vsel %vm6095, %v7359, 0
    %7399 = vmatprep.subr.bf16.mxu0 0
    %7400 = vmatpush1.bf16.msra.mxu0 0
    %7401 = vmatprep.subr.bf16.mxu0 0
    %7402 = vmatpush1.bf16.msra.mxu0 0
    %7403 = vmatprep.subr.bf16.mxu0 0
    %7404 = vmatpush1.bf16.msra.mxu0 0
    %7405 = vmatprep.subr.bf16.mxu0 0
    %7406 = vmatpush1.bf16.msra.mxu0 0
    %7407 = vmatprep.subr.bf16.mxu0 0
    %7408 = vmatpush1.bf16.msra.mxu0 %v7388
    %7409 = vmatprep.subr.bf16.mxu0 0
    %7410 = vmatpush1.bf16.msra.mxu0 %v7387
    %7411 = vmatprep.subr.bf16.mxu0 0
    %7412 = vmatpush1.bf16.msra.mxu0 %v7386
    %7413 = vmatprep.subr.bf16.mxu0 0
    %7414 = vmatpush1.bf16.msra.mxu0 %v7385
    %7415 = vmatprep.subr.bf16.mxu0 0
    %7416 = vmatpush2.bf16.msra.mxu0 0
    %7417 = vmatprep.subr.bf16.mxu0 0
    %7418 = vmatpush2.bf16.msra.mxu0 0
    %7419 = vmatprep.subr.bf16.mxu0 0
    %7420 = vmatpush2.bf16.msra.mxu0 0
    %7421 = vmatprep.subr.bf16.mxu0 0
    %7422 = vmatpush2.bf16.msra.mxu0 0
    %7423 = vmatprep.subr.bf16.mxu0 0
    %7424 = vmatpush2.bf16.msra.mxu0 0
    %7425 = vmatprep.subr.bf16.mxu0 0
    %7426 = vmatpush2.bf16.msra.mxu0 0
    %7427 = vmatprep.subr.bf16.mxu0 0
    %7428 = vmatpush2.bf16.msra.mxu0 0
    %7429 = vmatprep.subr.bf16.mxu0 0
    %7430 = vmatpush2.bf16.msra.mxu0 0
    %7431 = vmatprep.mubr.bf16.mxu0 0
    %7432 = vmatmul.mubr.bf16.gmra.mxu0 %v7394
    %v7433 = vpop.f32.mrf.mxu0
    %v7434 = vadd.f32 0.0, %v7433
    %v7435 = vpop.f32.mrf.mxu0
    %v7436 = vpop.f32.mrf.mxu0
    %v7437 = vadd.f32 0.0, %v7436
    %v7438 = vpop.f32.mrf.mxu0
    %7439 = vmatprep.mubr.bf16.mxu0 0
    %7440 = vmatmul.mubr.bf16.gmra.mxu0 %v7397
    %v7441 = vpop.f32.mrf.mxu0
    %v7442 = vadd.f32 0.0, %v7441
    %v7443 = vpop.f32.mrf.mxu0
    %v7444 = vpop.f32.mrf.mxu0
    %v7445 = vadd.f32 0.0, %v7444
    %v7446 = vpop.f32.mrf.mxu0
    %7447 = vdwg.mxu0
    %v7448 = vadd.f32 %v7354, %v7434
    %v7449 = vadd.f32 %v7355, %v7437
    %v7450 = vadd.f32 %v7356, %v7442
    %v7451 = vadd.f32 %v7357, %v7445
    %v7452 = vpack.c.bf16 %v5983, %v5982
    %v7453 = vpack.c.bf16 %v5985, %v5984
    %s7454 = scalar_lea.vmem %s5, 480
    %v7455 = vld [vmem:[%s7454] sm:$0xf]
    %v7456 = vld [vmem:[%s7454 + $0x4] sm:$0xf]
    %v7457 = vld [vmem:[%s7454 + $0x8] sm:$0xf]
    %v7458 = vld [vmem:[%s7454 + $0xc] sm:$0xf]
    %v7459 = vld [vmem:[%s7454 + $0x10] sm:$0xf]
    %v7460 = vld [vmem:[%s7454 + $0x14] sm:$0xf]
    %v7461 = vld [vmem:[%s7454 + $0x18] sm:$0xf]
    %v7462 = vld [vmem:[%s7454 + $0x1c] sm:$0xf]
    %v7471 = vunpack.c.l.b16 %v7455
    %v7472 = vunpack.c.l.b16 %v7456
    %v7473 = vunpack.c.l.b16 %v7457
    %v7474 = vunpack.c.l.b16 %v7458
    %v7475 = vunpack.c.l.b16 %v7459
    %v7476 = vunpack.c.l.b16 %v7460
    %v7477 = vunpack.c.l.b16 %v7461
    %v7478 = vunpack.c.l.b16 %v7462
    %v7479 = vpack.c.b16 %v7472, %v7471
    %v7480 = vpack.c.b16 %v7474, %v7473
    %v7481 = vpack.c.b16 %v7476, %v7475
    %v7482 = vpack.c.b16 %v7478, %v7477
    %v7488 = vsel %vm6095, %v7452, 0
    %v7491 = vsel %vm6095, %v7453, 0
    %7493 = vmatprep.subr.bf16.mxu0 0
    %7494 = vmatpush1.bf16.msra.mxu0 0
    %7495 = vmatprep.subr.bf16.mxu0 0
    %7496 = vmatpush1.bf16.msra.mxu0 0
    %7497 = vmatprep.subr.bf16.mxu0 0
    %7498 = vmatpush1.bf16.msra.mxu0 0
    %7499 = vmatprep.subr.bf16.mxu0 0
    %7500 = vmatpush1.bf16.msra.mxu0 0
    %7501 = vmatprep.subr.bf16.mxu0 0
    %7502 = vmatpush1.bf16.msra.mxu0 %v7482
    %7503 = vmatprep.subr.bf16.mxu0 0
    %7504 = vmatpush1.bf16.msra.mxu0 %v7481
    %7505 = vmatprep.subr.bf16.mxu0 0
    %7506 = vmatpush1.bf16.msra.mxu0 %v7480
    %7507 = vmatprep.subr.bf16.mxu0 0
    %7508 = vmatpush1.bf16.msra.mxu0 %v7479
    %7509 = vmatprep.subr.bf16.mxu0 0
    %7510 = vmatpush2.bf16.msra.mxu0 0
    %7511 = vmatprep.subr.bf16.mxu0 0
    %7512 = vmatpush2.bf16.msra.mxu0 0
    %7513 = vmatprep.subr.bf16.mxu0 0
    %7514 = vmatpush2.bf16.msra.mxu0 0
    %7515 = vmatprep.subr.bf16.mxu0 0
    %7516 = vmatpush2.bf16.msra.mxu0 0
    %7517 = vmatprep.subr.bf16.mxu0 0
    %7518 = vmatpush2.bf16.msra.mxu0 0
    %7519 = vmatprep.subr.bf16.mxu0 0
    %7520 = vmatpush2.bf16.msra.mxu0 0
    %7521 = vmatprep.subr.bf16.mxu0 0
    %7522 = vmatpush2.bf16.msra.mxu0 0
    %7523 = vmatprep.subr.bf16.mxu0 0
    %7524 = vmatpush2.bf16.msra.mxu0 0
    %7525 = vmatprep.mubr.bf16.mxu0 0
    %7526 = vmatmul.mubr.bf16.gmra.mxu0 %v7488
    %v7527 = vpop.f32.mrf.mxu0
    %v7528 = vadd.f32 0.0, %v7527
    %v7529 = vpop.f32.mrf.mxu0
    %v7530 = vpop.f32.mrf.mxu0
    %v7531 = vadd.f32 0.0, %v7530
    %v7532 = vpop.f32.mrf.mxu0
    %7533 = vmatprep.mubr.bf16.mxu0 0
    %7534 = vmatmul.mubr.bf16.gmra.mxu0 %v7491
    %v7535 = vpop.f32.mrf.mxu0
    %v7536 = vadd.f32 0.0, %v7535
    %v7537 = vpop.f32.mrf.mxu0
    %v7538 = vpop.f32.mrf.mxu0
    %v7539 = vadd.f32 0.0, %v7538
    %v7540 = vpop.f32.mrf.mxu0
    %7541 = vdwg.mxu0
    %v7542 = vadd.f32 %v7448, %v7528
    %v7543 = vadd.f32 %v7449, %v7531
    %v7544 = vadd.f32 %v7450, %v7536
    %v7545 = vadd.f32 %v7451, %v7539
    %v7546 = vpack.c.bf16 %v5987, %v5986
    %v7547 = vpack.c.bf16 %v5989, %v5988
    %s7548 = scalar_lea.vmem %s5, 512
    %v7549 = vld [vmem:[%s7548] sm:$0xf]
    %v7550 = vld [vmem:[%s7548 + $0x4] sm:$0xf]
    %v7551 = vld [vmem:[%s7548 + $0x8] sm:$0xf]
    %v7552 = vld [vmem:[%s7548 + $0xc] sm:$0xf]
    %v7553 = vld [vmem:[%s7548 + $0x10] sm:$0xf]
    %v7554 = vld [vmem:[%s7548 + $0x14] sm:$0xf]
    %v7555 = vld [vmem:[%s7548 + $0x18] sm:$0xf]
    %v7556 = vld [vmem:[%s7548 + $0x1c] sm:$0xf]
    %v7565 = vunpack.c.l.b16 %v7549
    %v7566 = vunpack.c.l.b16 %v7550
    %v7567 = vunpack.c.l.b16 %v7551
    %v7568 = vunpack.c.l.b16 %v7552
    %v7569 = vunpack.c.l.b16 %v7553
    %v7570 = vunpack.c.l.b16 %v7554
    %v7571 = vunpack.c.l.b16 %v7555
    %v7572 = vunpack.c.l.b16 %v7556
    %v7573 = vpack.c.b16 %v7566, %v7565
    %v7574 = vpack.c.b16 %v7568, %v7567
    %v7575 = vpack.c.b16 %v7570, %v7569
    %v7576 = vpack.c.b16 %v7572, %v7571
    %v7582 = vsel %vm6095, %v7546, 0
    %v7585 = vsel %vm6095, %v7547, 0
    %7587 = vmatprep.subr.bf16.mxu0 0
    %7588 = vmatpush1.bf16.msra.mxu0 0
    %7589 = vmatprep.subr.bf16.mxu0 0
    %7590 = vmatpush1.bf16.msra.mxu0 0
    %7591 = vmatprep.subr.bf16.mxu0 0
    %7592 = vmatpush1.bf16.msra.mxu0 0
    %7593 = vmatprep.subr.bf16.mxu0 0
    %7594 = vmatpush1.bf16.msra.mxu0 0
    %7595 = vmatprep.subr.bf16.mxu0 0
    %7596 = vmatpush1.bf16.msra.mxu0 %v7576
    %7597 = vmatprep.subr.bf16.mxu0 0
    %7598 = vmatpush1.bf16.msra.mxu0 %v7575
    %7599 = vmatprep.subr.bf16.mxu0 0
    %7600 = vmatpush1.bf16.msra.mxu0 %v7574
    %7601 = vmatprep.subr.bf16.mxu0 0
    %7602 = vmatpush1.bf16.msra.mxu0 %v7573
    %7603 = vmatprep.subr.bf16.mxu0 0
    %7604 = vmatpush2.bf16.msra.mxu0 0
    %7605 = vmatprep.subr.bf16.mxu0 0
    %7606 = vmatpush2.bf16.msra.mxu0 0
    %7607 = vmatprep.subr.bf16.mxu0 0
    %7608 = vmatpush2.bf16.msra.mxu0 0
    %7609 = vmatprep.subr.bf16.mxu0 0
    %7610 = vmatpush2.bf16.msra.mxu0 0
    %7611 = vmatprep.subr.bf16.mxu0 0
    %7612 = vmatpush2.bf16.msra.mxu0 0
    %7613 = vmatprep.subr.bf16.mxu0 0
    %7614 = vmatpush2.bf16.msra.mxu0 0
    %7615 = vmatprep.subr.bf16.mxu0 0
    %7616 = vmatpush2.bf16.msra.mxu0 0
    %7617 = vmatprep.subr.bf16.mxu0 0
    %7618 = vmatpush2.bf16.msra.mxu0 0
    %7619 = vmatprep.mubr.bf16.mxu0 0
    %7620 = vmatmul.mubr.bf16.gmra.mxu0 %v7582
    %v7621 = vpop.f32.mrf.mxu0
    %v7622 = vadd.f32 0.0, %v7621
    %v7623 = vpop.f32.mrf.mxu0
    %v7624 = vpop.f32.mrf.mxu0
    %v7625 = vadd.f32 0.0, %v7624
    %v7626 = vpop.f32.mrf.mxu0
    %7627 = vmatprep.mubr.bf16.mxu0 0
    %7628 = vmatmul.mubr.bf16.gmra.mxu0 %v7585
    %v7629 = vpop.f32.mrf.mxu0
    %v7630 = vadd.f32 0.0, %v7629
    %v7631 = vpop.f32.mrf.mxu0
    %v7632 = vpop.f32.mrf.mxu0
    %v7633 = vadd.f32 0.0, %v7632
    %v7634 = vpop.f32.mrf.mxu0
    %7635 = vdwg.mxu0
    %v7636 = vadd.f32 %v7542, %v7622
    %v7637 = vadd.f32 %v7543, %v7625
    %v7638 = vadd.f32 %v7544, %v7630
    %v7639 = vadd.f32 %v7545, %v7633
    %v7640 = vpack.c.bf16 %v5991, %v5990
    %v7641 = vpack.c.bf16 %v5993, %v5992
    %s7642 = scalar_lea.vmem %s5, 544
    %v7643 = vld [vmem:[%s7642] sm:$0xf]
    %v7644 = vld [vmem:[%s7642 + $0x4] sm:$0xf]
    %v7645 = vld [vmem:[%s7642 + $0x8] sm:$0xf]
    %v7646 = vld [vmem:[%s7642 + $0xc] sm:$0xf]
    %v7647 = vld [vmem:[%s7642 + $0x10] sm:$0xf]
    %v7648 = vld [vmem:[%s7642 + $0x14] sm:$0xf]
    %v7649 = vld [vmem:[%s7642 + $0x18] sm:$0xf]
    %v7650 = vld [vmem:[%s7642 + $0x1c] sm:$0xf]
    %v7659 = vunpack.c.l.b16 %v7643
    %v7660 = vunpack.c.l.b16 %v7644
    %v7661 = vunpack.c.l.b16 %v7645
    %v7662 = vunpack.c.l.b16 %v7646
    %v7663 = vunpack.c.l.b16 %v7647
    %v7664 = vunpack.c.l.b16 %v7648
    %v7665 = vunpack.c.l.b16 %v7649
    %v7666 = vunpack.c.l.b16 %v7650
    %v7667 = vpack.c.b16 %v7660, %v7659
    %v7668 = vpack.c.b16 %v7662, %v7661
    %v7669 = vpack.c.b16 %v7664, %v7663
    %v7670 = vpack.c.b16 %v7666, %v7665
    %v7676 = vsel %vm6095, %v7640, 0
    %v7679 = vsel %vm6095, %v7641, 0
    %7681 = vmatprep.subr.bf16.mxu0 0
    %7682 = vmatpush1.bf16.msra.mxu0 0
    %7683 = vmatprep.subr.bf16.mxu0 0
    %7684 = vmatpush1.bf16.msra.mxu0 0
    %7685 = vmatprep.subr.bf16.mxu0 0
    %7686 = vmatpush1.bf16.msra.mxu0 0
    %7687 = vmatprep.subr.bf16.mxu0 0
    %7688 = vmatpush1.bf16.msra.mxu0 0
    %7689 = vmatprep.subr.bf16.mxu0 0
    %7690 = vmatpush1.bf16.msra.mxu0 %v7670
    %7691 = vmatprep.subr.bf16.mxu0 0
    %7692 = vmatpush1.bf16.msra.mxu0 %v7669
    %7693 = vmatprep.subr.bf16.mxu0 0
    %7694 = vmatpush1.bf16.msra.mxu0 %v7668
    %7695 = vmatprep.subr.bf16.mxu0 0
    %7696 = vmatpush1.bf16.msra.mxu0 %v7667
    %7697 = vmatprep.subr.bf16.mxu0 0
    %7698 = vmatpush2.bf16.msra.mxu0 0
    %7699 = vmatprep.subr.bf16.mxu0 0
    %7700 = vmatpush2.bf16.msra.mxu0 0
    %7701 = vmatprep.subr.bf16.mxu0 0
    %7702 = vmatpush2.bf16.msra.mxu0 0
    %7703 = vmatprep.subr.bf16.mxu0 0
    %7704 = vmatpush2.bf16.msra.mxu0 0
    %7705 = vmatprep.subr.bf16.mxu0 0
    %7706 = vmatpush2.bf16.msra.mxu0 0
    %7707 = vmatprep.subr.bf16.mxu0 0
    %7708 = vmatpush2.bf16.msra.mxu0 0
    %7709 = vmatprep.subr.bf16.mxu0 0
    %7710 = vmatpush2.bf16.msra.mxu0 0
    %7711 = vmatprep.subr.bf16.mxu0 0
    %7712 = vmatpush2.bf16.msra.mxu0 0
    %7713 = vmatprep.mubr.bf16.mxu0 0
    %7714 = vmatmul.mubr.bf16.gmra.mxu0 %v7676
    %v7715 = vpop.f32.mrf.mxu0
    %v7716 = vadd.f32 0.0, %v7715
    %v7717 = vpop.f32.mrf.mxu0
    %v7718 = vpop.f32.mrf.mxu0
    %v7719 = vadd.f32 0.0, %v7718
    %v7720 = vpop.f32.mrf.mxu0
    %7721 = vmatprep.mubr.bf16.mxu0 0
    %7722 = vmatmul.mubr.bf16.gmra.mxu0 %v7679
    %v7723 = vpop.f32.mrf.mxu0
    %v7724 = vadd.f32 0.0, %v7723
    %v7725 = vpop.f32.mrf.mxu0
    %v7726 = vpop.f32.mrf.mxu0
    %v7727 = vadd.f32 0.0, %v7726
    %v7728 = vpop.f32.mrf.mxu0
    %7729 = vdwg.mxu0
    %v7730 = vadd.f32 %v7636, %v7716
    %v7731 = vadd.f32 %v7637, %v7719
    %v7732 = vadd.f32 %v7638, %v7724
    %v7733 = vadd.f32 %v7639, %v7727
    %v7734 = vpack.c.bf16 %v5995, %v5994
    %v7735 = vpack.c.bf16 %v5997, %v5996
    %s7736 = scalar_lea.vmem %s5, 576
    %v7737 = vld [vmem:[%s7736] sm:$0xf]
    %v7738 = vld [vmem:[%s7736 + $0x4] sm:$0xf]
    %v7739 = vld [vmem:[%s7736 + $0x8] sm:$0xf]
    %v7740 = vld [vmem:[%s7736 + $0xc] sm:$0xf]
    %v7741 = vld [vmem:[%s7736 + $0x10] sm:$0xf]
    %v7742 = vld [vmem:[%s7736 + $0x14] sm:$0xf]
    %v7743 = vld [vmem:[%s7736 + $0x18] sm:$0xf]
    %v7744 = vld [vmem:[%s7736 + $0x1c] sm:$0xf]
    %v7753 = vunpack.c.l.b16 %v7737
    %v7754 = vunpack.c.l.b16 %v7738
    %v7755 = vunpack.c.l.b16 %v7739
    %v7756 = vunpack.c.l.b16 %v7740
    %v7757 = vunpack.c.l.b16 %v7741
    %v7758 = vunpack.c.l.b16 %v7742
    %v7759 = vunpack.c.l.b16 %v7743
    %v7760 = vunpack.c.l.b16 %v7744
    %v7761 = vpack.c.b16 %v7754, %v7753
    %v7762 = vpack.c.b16 %v7756, %v7755
    %v7763 = vpack.c.b16 %v7758, %v7757
    %v7764 = vpack.c.b16 %v7760, %v7759
    %v7770 = vsel %vm6095, %v7734, 0
    %v7773 = vsel %vm6095, %v7735, 0
    %7775 = vmatprep.subr.bf16.mxu0 0
    %7776 = vmatpush1.bf16.msra.mxu0 0
    %7777 = vmatprep.subr.bf16.mxu0 0
    %7778 = vmatpush1.bf16.msra.mxu0 0
    %7779 = vmatprep.subr.bf16.mxu0 0
    %7780 = vmatpush1.bf16.msra.mxu0 0
    %7781 = vmatprep.subr.bf16.mxu0 0
    %7782 = vmatpush1.bf16.msra.mxu0 0
    %7783 = vmatprep.subr.bf16.mxu0 0
    %7784 = vmatpush1.bf16.msra.mxu0 %v7764
    %7785 = vmatprep.subr.bf16.mxu0 0
    %7786 = vmatpush1.bf16.msra.mxu0 %v7763
    %7787 = vmatprep.subr.bf16.mxu0 0
    %7788 = vmatpush1.bf16.msra.mxu0 %v7762
    %7789 = vmatprep.subr.bf16.mxu0 0
    %7790 = vmatpush1.bf16.msra.mxu0 %v7761
    %7791 = vmatprep.subr.bf16.mxu0 0
    %7792 = vmatpush2.bf16.msra.mxu0 0
    %7793 = vmatprep.subr.bf16.mxu0 0
    %7794 = vmatpush2.bf16.msra.mxu0 0
    %7795 = vmatprep.subr.bf16.mxu0 0
    %7796 = vmatpush2.bf16.msra.mxu0 0
    %7797 = vmatprep.subr.bf16.mxu0 0
    %7798 = vmatpush2.bf16.msra.mxu0 0
    %7799 = vmatprep.subr.bf16.mxu0 0
    %7800 = vmatpush2.bf16.msra.mxu0 0
    %7801 = vmatprep.subr.bf16.mxu0 0
    %7802 = vmatpush2.bf16.msra.mxu0 0
    %7803 = vmatprep.subr.bf16.mxu0 0
    %7804 = vmatpush2.bf16.msra.mxu0 0
    %7805 = vmatprep.subr.bf16.mxu0 0
    %7806 = vmatpush2.bf16.msra.mxu0 0
    %7807 = vmatprep.mubr.bf16.mxu0 0
    %7808 = vmatmul.mubr.bf16.gmra.mxu0 %v7770
    %v7809 = vpop.f32.mrf.mxu0
    %v7810 = vadd.f32 0.0, %v7809
    %v7811 = vpop.f32.mrf.mxu0
    %v7812 = vpop.f32.mrf.mxu0
    %v7813 = vadd.f32 0.0, %v7812
    %v7814 = vpop.f32.mrf.mxu0
    %7815 = vmatprep.mubr.bf16.mxu0 0
    %7816 = vmatmul.mubr.bf16.gmra.mxu0 %v7773
    %v7817 = vpop.f32.mrf.mxu0
    %v7818 = vadd.f32 0.0, %v7817
    %v7819 = vpop.f32.mrf.mxu0
    %v7820 = vpop.f32.mrf.mxu0
    %v7821 = vadd.f32 0.0, %v7820
    %v7822 = vpop.f32.mrf.mxu0
    %7823 = vdwg.mxu0
    %v7824 = vadd.f32 %v7730, %v7810
    %v7825 = vadd.f32 %v7731, %v7813
    %v7826 = vadd.f32 %v7732, %v7818
    %v7827 = vadd.f32 %v7733, %v7821
    %v7828 = vpack.c.bf16 %v5999, %v5998
    %v7829 = vpack.c.bf16 %v6001, %v6000
    %s7830 = scalar_lea.vmem %s5, 608
    %v7831 = vld [vmem:[%s7830] sm:$0xf]
    %v7832 = vld [vmem:[%s7830 + $0x4] sm:$0xf]
    %v7833 = vld [vmem:[%s7830 + $0x8] sm:$0xf]
    %v7834 = vld [vmem:[%s7830 + $0xc] sm:$0xf]
    %v7835 = vld [vmem:[%s7830 + $0x10] sm:$0xf]
    %v7836 = vld [vmem:[%s7830 + $0x14] sm:$0xf]
    %v7837 = vld [vmem:[%s7830 + $0x18] sm:$0xf]
    %v7838 = vld [vmem:[%s7830 + $0x1c] sm:$0xf]
    %v7847 = vunpack.c.l.b16 %v7831
    %v7848 = vunpack.c.l.b16 %v7832
    %v7849 = vunpack.c.l.b16 %v7833
    %v7850 = vunpack.c.l.b16 %v7834
    %v7851 = vunpack.c.l.b16 %v7835
    %v7852 = vunpack.c.l.b16 %v7836
    %v7853 = vunpack.c.l.b16 %v7837
    %v7854 = vunpack.c.l.b16 %v7838
    %v7855 = vpack.c.b16 %v7848, %v7847
    %v7856 = vpack.c.b16 %v7850, %v7849
    %v7857 = vpack.c.b16 %v7852, %v7851
    %v7858 = vpack.c.b16 %v7854, %v7853
    %v7864 = vsel %vm6095, %v7828, 0
    %v7867 = vsel %vm6095, %v7829, 0
    %7869 = vmatprep.subr.bf16.mxu0 0
    %7870 = vmatpush1.bf16.msra.mxu0 0
    %7871 = vmatprep.subr.bf16.mxu0 0
    %7872 = vmatpush1.bf16.msra.mxu0 0
    %7873 = vmatprep.subr.bf16.mxu0 0
    %7874 = vmatpush1.bf16.msra.mxu0 0
    %7875 = vmatprep.subr.bf16.mxu0 0
    %7876 = vmatpush1.bf16.msra.mxu0 0
    %7877 = vmatprep.subr.bf16.mxu0 0
    %7878 = vmatpush1.bf16.msra.mxu0 %v7858
    %7879 = vmatprep.subr.bf16.mxu0 0
    %7880 = vmatpush1.bf16.msra.mxu0 %v7857
    %7881 = vmatprep.subr.bf16.mxu0 0
    %7882 = vmatpush1.bf16.msra.mxu0 %v7856
    %7883 = vmatprep.subr.bf16.mxu0 0
    %7884 = vmatpush1.bf16.msra.mxu0 %v7855
    %7885 = vmatprep.subr.bf16.mxu0 0
    %7886 = vmatpush2.bf16.msra.mxu0 0
    %7887 = vmatprep.subr.bf16.mxu0 0
    %7888 = vmatpush2.bf16.msra.mxu0 0
    %7889 = vmatprep.subr.bf16.mxu0 0
    %7890 = vmatpush2.bf16.msra.mxu0 0
    %7891 = vmatprep.subr.bf16.mxu0 0
    %7892 = vmatpush2.bf16.msra.mxu0 0
    %7893 = vmatprep.subr.bf16.mxu0 0
    %7894 = vmatpush2.bf16.msra.mxu0 0
    %7895 = vmatprep.subr.bf16.mxu0 0
    %7896 = vmatpush2.bf16.msra.mxu0 0
    %7897 = vmatprep.subr.bf16.mxu0 0
    %7898 = vmatpush2.bf16.msra.mxu0 0
    %7899 = vmatprep.subr.bf16.mxu0 0
    %7900 = vmatpush2.bf16.msra.mxu0 0
    %7901 = vmatprep.mubr.bf16.mxu0 0
    %7902 = vmatmul.mubr.bf16.gmra.mxu0 %v7864
    %v7903 = vpop.f32.mrf.mxu0
    %v7904 = vadd.f32 0.0, %v7903
    %v7905 = vpop.f32.mrf.mxu0
    %v7906 = vpop.f32.mrf.mxu0
    %v7907 = vadd.f32 0.0, %v7906
    %v7908 = vpop.f32.mrf.mxu0
    %7909 = vmatprep.mubr.bf16.mxu0 0
    %7910 = vmatmul.mubr.bf16.gmra.mxu0 %v7867
    %v7911 = vpop.f32.mrf.mxu0
    %v7912 = vadd.f32 0.0, %v7911
    %v7913 = vpop.f32.mrf.mxu0
    %v7914 = vpop.f32.mrf.mxu0
    %v7915 = vadd.f32 0.0, %v7914
    %v7916 = vpop.f32.mrf.mxu0
    %7917 = vdwg.mxu0
    %v7918 = vadd.f32 %v7824, %v7904
    %v7919 = vadd.f32 %v7825, %v7907
    %v7920 = vadd.f32 %v7826, %v7912
    %v7921 = vadd.f32 %v7827, %v7915
    %v7922 = vpack.c.bf16 %v6003, %v6002
    %v7923 = vpack.c.bf16 %v6005, %v6004
    %s7924 = scalar_lea.vmem %s5, 640
    %v7925 = vld [vmem:[%s7924] sm:$0xf]
    %v7926 = vld [vmem:[%s7924 + $0x4] sm:$0xf]
    %v7927 = vld [vmem:[%s7924 + $0x8] sm:$0xf]
    %v7928 = vld [vmem:[%s7924 + $0xc] sm:$0xf]
    %v7929 = vld [vmem:[%s7924 + $0x10] sm:$0xf]
    %v7930 = vld [vmem:[%s7924 + $0x14] sm:$0xf]
    %v7931 = vld [vmem:[%s7924 + $0x18] sm:$0xf]
    %v7932 = vld [vmem:[%s7924 + $0x1c] sm:$0xf]
    %v7941 = vunpack.c.l.b16 %v7925
    %v7942 = vunpack.c.l.b16 %v7926
    %v7943 = vunpack.c.l.b16 %v7927
    %v7944 = vunpack.c.l.b16 %v7928
    %v7945 = vunpack.c.l.b16 %v7929
    %v7946 = vunpack.c.l.b16 %v7930
    %v7947 = vunpack.c.l.b16 %v7931
    %v7948 = vunpack.c.l.b16 %v7932
    %v7949 = vpack.c.b16 %v7942, %v7941
    %v7950 = vpack.c.b16 %v7944, %v7943
    %v7951 = vpack.c.b16 %v7946, %v7945
    %v7952 = vpack.c.b16 %v7948, %v7947
    %v7958 = vsel %vm6095, %v7922, 0
    %v7961 = vsel %vm6095, %v7923, 0
    %7963 = vmatprep.subr.bf16.mxu0 0
    %7964 = vmatpush1.bf16.msra.mxu0 0
    %7965 = vmatprep.subr.bf16.mxu0 0
    %7966 = vmatpush1.bf16.msra.mxu0 0
    %7967 = vmatprep.subr.bf16.mxu0 0
    %7968 = vmatpush1.bf16.msra.mxu0 0
    %7969 = vmatprep.subr.bf16.mxu0 0
    %7970 = vmatpush1.bf16.msra.mxu0 0
    %7971 = vmatprep.subr.bf16.mxu0 0
    %7972 = vmatpush1.bf16.msra.mxu0 %v7952
    %7973 = vmatprep.subr.bf16.mxu0 0
    %7974 = vmatpush1.bf16.msra.mxu0 %v7951
    %7975 = vmatprep.subr.bf16.mxu0 0
    %7976 = vmatpush1.bf16.msra.mxu0 %v7950
    %7977 = vmatprep.subr.bf16.mxu0 0
    %7978 = vmatpush1.bf16.msra.mxu0 %v7949
    %7979 = vmatprep.subr.bf16.mxu0 0
    %7980 = vmatpush2.bf16.msra.mxu0 0
    %7981 = vmatprep.subr.bf16.mxu0 0
    %7982 = vmatpush2.bf16.msra.mxu0 0
    %7983 = vmatprep.subr.bf16.mxu0 0
    %7984 = vmatpush2.bf16.msra.mxu0 0
    %7985 = vmatprep.subr.bf16.mxu0 0
    %7986 = vmatpush2.bf16.msra.mxu0 0
    %7987 = vmatprep.subr.bf16.mxu0 0
    %7988 = vmatpush2.bf16.msra.mxu0 0
    %7989 = vmatprep.subr.bf16.mxu0 0
    %7990 = vmatpush2.bf16.msra.mxu0 0
    %7991 = vmatprep.subr.bf16.mxu0 0
    %7992 = vmatpush2.bf16.msra.mxu0 0
    %7993 = vmatprep.subr.bf16.mxu0 0
    %7994 = vmatpush2.bf16.msra.mxu0 0
    %7995 = vmatprep.mubr.bf16.mxu0 0
    %7996 = vmatmul.mubr.bf16.gmra.mxu0 %v7958
    %v7997 = vpop.f32.mrf.mxu0
    %v7998 = vadd.f32 0.0, %v7997
    %v7999 = vpop.f32.mrf.mxu0
    %v8000 = vpop.f32.mrf.mxu0
    %v8001 = vadd.f32 0.0, %v8000
    %v8002 = vpop.f32.mrf.mxu0
    %8003 = vmatprep.mubr.bf16.mxu0 0
    %8004 = vmatmul.mubr.bf16.gmra.mxu0 %v7961
    %v8005 = vpop.f32.mrf.mxu0
    %v8006 = vadd.f32 0.0, %v8005
    %v8007 = vpop.f32.mrf.mxu0
    %v8008 = vpop.f32.mrf.mxu0
    %v8009 = vadd.f32 0.0, %v8008
    %v8010 = vpop.f32.mrf.mxu0
    %8011 = vdwg.mxu0
    %v8012 = vadd.f32 %v7918, %v7998
    %v8013 = vadd.f32 %v7919, %v8001
    %v8014 = vadd.f32 %v7920, %v8006
    %v8015 = vadd.f32 %v7921, %v8009
    %v8016 = vpack.c.bf16 %v6007, %v6006
    %v8017 = vpack.c.bf16 %v6009, %v6008
    %s8018 = scalar_lea.vmem %s5, 672
    %v8019 = vld [vmem:[%s8018] sm:$0xf]
    %v8020 = vld [vmem:[%s8018 + $0x4] sm:$0xf]
    %v8021 = vld [vmem:[%s8018 + $0x8] sm:$0xf]
    %v8022 = vld [vmem:[%s8018 + $0xc] sm:$0xf]
    %v8023 = vld [vmem:[%s8018 + $0x10] sm:$0xf]
    %v8024 = vld [vmem:[%s8018 + $0x14] sm:$0xf]
    %v8025 = vld [vmem:[%s8018 + $0x18] sm:$0xf]
    %v8026 = vld [vmem:[%s8018 + $0x1c] sm:$0xf]
    %v8035 = vunpack.c.l.b16 %v8019
    %v8036 = vunpack.c.l.b16 %v8020
    %v8037 = vunpack.c.l.b16 %v8021
    %v8038 = vunpack.c.l.b16 %v8022
    %v8039 = vunpack.c.l.b16 %v8023
    %v8040 = vunpack.c.l.b16 %v8024
    %v8041 = vunpack.c.l.b16 %v8025
    %v8042 = vunpack.c.l.b16 %v8026
    %v8043 = vpack.c.b16 %v8036, %v8035
    %v8044 = vpack.c.b16 %v8038, %v8037
    %v8045 = vpack.c.b16 %v8040, %v8039
    %v8046 = vpack.c.b16 %v8042, %v8041
    %v8052 = vsel %vm6095, %v8016, 0
    %v8055 = vsel %vm6095, %v8017, 0
    %8057 = vmatprep.subr.bf16.mxu0 0
    %8058 = vmatpush1.bf16.msra.mxu0 0
    %8059 = vmatprep.subr.bf16.mxu0 0
    %8060 = vmatpush1.bf16.msra.mxu0 0
    %8061 = vmatprep.subr.bf16.mxu0 0
    %8062 = vmatpush1.bf16.msra.mxu0 0
    %8063 = vmatprep.subr.bf16.mxu0 0
    %8064 = vmatpush1.bf16.msra.mxu0 0
    %8065 = vmatprep.subr.bf16.mxu0 0
    %8066 = vmatpush1.bf16.msra.mxu0 %v8046
    %8067 = vmatprep.subr.bf16.mxu0 0
    %8068 = vmatpush1.bf16.msra.mxu0 %v8045
    %8069 = vmatprep.subr.bf16.mxu0 0
    %8070 = vmatpush1.bf16.msra.mxu0 %v8044
    %8071 = vmatprep.subr.bf16.mxu0 0
    %8072 = vmatpush1.bf16.msra.mxu0 %v8043
    %8073 = vmatprep.subr.bf16.mxu0 0
    %8074 = vmatpush2.bf16.msra.mxu0 0
    %8075 = vmatprep.subr.bf16.mxu0 0
    %8076 = vmatpush2.bf16.msra.mxu0 0
    %8077 = vmatprep.subr.bf16.mxu0 0
    %8078 = vmatpush2.bf16.msra.mxu0 0
    %8079 = vmatprep.subr.bf16.mxu0 0
    %8080 = vmatpush2.bf16.msra.mxu0 0
    %8081 = vmatprep.subr.bf16.mxu0 0
    %8082 = vmatpush2.bf16.msra.mxu0 0
    %8083 = vmatprep.subr.bf16.mxu0 0
    %8084 = vmatpush2.bf16.msra.mxu0 0
    %8085 = vmatprep.subr.bf16.mxu0 0
    %8086 = vmatpush2.bf16.msra.mxu0 0
    %8087 = vmatprep.subr.bf16.mxu0 0
    %8088 = vmatpush2.bf16.msra.mxu0 0
    %8089 = vmatprep.mubr.bf16.mxu0 0
    %8090 = vmatmul.mubr.bf16.gmra.mxu0 %v8052
    %v8091 = vpop.f32.mrf.mxu0
    %v8092 = vadd.f32 0.0, %v8091
    %v8093 = vpop.f32.mrf.mxu0
    %v8094 = vpop.f32.mrf.mxu0
    %v8095 = vadd.f32 0.0, %v8094
    %v8096 = vpop.f32.mrf.mxu0
    %8097 = vmatprep.mubr.bf16.mxu0 0
    %8098 = vmatmul.mubr.bf16.gmra.mxu0 %v8055
    %v8099 = vpop.f32.mrf.mxu0
    %v8100 = vadd.f32 0.0, %v8099
    %v8101 = vpop.f32.mrf.mxu0
    %v8102 = vpop.f32.mrf.mxu0
    %v8103 = vadd.f32 0.0, %v8102
    %v8104 = vpop.f32.mrf.mxu0
    %8105 = vdwg.mxu0
    %v8106 = vadd.f32 %v8012, %v8092
    %v8107 = vadd.f32 %v8013, %v8095
    %v8108 = vadd.f32 %v8014, %v8100
    %v8109 = vadd.f32 %v8015, %v8103
    %v8110 = vpack.c.bf16 %v6011, %v6010
    %v8111 = vpack.c.bf16 %v6013, %v6012
    %s8112 = scalar_lea.vmem %s5, 704
    %v8113 = vld [vmem:[%s8112] sm:$0xf]
    %v8114 = vld [vmem:[%s8112 + $0x4] sm:$0xf]
    %v8115 = vld [vmem:[%s8112 + $0x8] sm:$0xf]
    %v8116 = vld [vmem:[%s8112 + $0xc] sm:$0xf]
    %v8117 = vld [vmem:[%s8112 + $0x10] sm:$0xf]
    %v8118 = vld [vmem:[%s8112 + $0x14] sm:$0xf]
    %v8119 = vld [vmem:[%s8112 + $0x18] sm:$0xf]
    %v8120 = vld [vmem:[%s8112 + $0x1c] sm:$0xf]
    %v8129 = vunpack.c.l.b16 %v8113
    %v8130 = vunpack.c.l.b16 %v8114
    %v8131 = vunpack.c.l.b16 %v8115
    %v8132 = vunpack.c.l.b16 %v8116
    %v8133 = vunpack.c.l.b16 %v8117
    %v8134 = vunpack.c.l.b16 %v8118
    %v8135 = vunpack.c.l.b16 %v8119
    %v8136 = vunpack.c.l.b16 %v8120
    %v8137 = vpack.c.b16 %v8130, %v8129
    %v8138 = vpack.c.b16 %v8132, %v8131
    %v8139 = vpack.c.b16 %v8134, %v8133
    %v8140 = vpack.c.b16 %v8136, %v8135
    %v8146 = vsel %vm6095, %v8110, 0
    %v8149 = vsel %vm6095, %v8111, 0
    %8151 = vmatprep.subr.bf16.mxu0 0
    %8152 = vmatpush1.bf16.msra.mxu0 0
    %8153 = vmatprep.subr.bf16.mxu0 0
    %8154 = vmatpush1.bf16.msra.mxu0 0
    %8155 = vmatprep.subr.bf16.mxu0 0
    %8156 = vmatpush1.bf16.msra.mxu0 0
    %8157 = vmatprep.subr.bf16.mxu0 0
    %8158 = vmatpush1.bf16.msra.mxu0 0
    %8159 = vmatprep.subr.bf16.mxu0 0
    %8160 = vmatpush1.bf16.msra.mxu0 %v8140
    %8161 = vmatprep.subr.bf16.mxu0 0
    %8162 = vmatpush1.bf16.msra.mxu0 %v8139
    %8163 = vmatprep.subr.bf16.mxu0 0
    %8164 = vmatpush1.bf16.msra.mxu0 %v8138
    %8165 = vmatprep.subr.bf16.mxu0 0
    %8166 = vmatpush1.bf16.msra.mxu0 %v8137
    %8167 = vmatprep.subr.bf16.mxu0 0
    %8168 = vmatpush2.bf16.msra.mxu0 0
    %8169 = vmatprep.subr.bf16.mxu0 0
    %8170 = vmatpush2.bf16.msra.mxu0 0
    %8171 = vmatprep.subr.bf16.mxu0 0
    %8172 = vmatpush2.bf16.msra.mxu0 0
    %8173 = vmatprep.subr.bf16.mxu0 0
    %8174 = vmatpush2.bf16.msra.mxu0 0
    %8175 = vmatprep.subr.bf16.mxu0 0
    %8176 = vmatpush2.bf16.msra.mxu0 0
    %8177 = vmatprep.subr.bf16.mxu0 0
    %8178 = vmatpush2.bf16.msra.mxu0 0
    %8179 = vmatprep.subr.bf16.mxu0 0
    %8180 = vmatpush2.bf16.msra.mxu0 0
    %8181 = vmatprep.subr.bf16.mxu0 0
    %8182 = vmatpush2.bf16.msra.mxu0 0
    %8183 = vmatprep.mubr.bf16.mxu0 0
    %8184 = vmatmul.mubr.bf16.gmra.mxu0 %v8146
    %v8185 = vpop.f32.mrf.mxu0
    %v8186 = vadd.f32 0.0, %v8185
    %v8187 = vpop.f32.mrf.mxu0
    %v8188 = vpop.f32.mrf.mxu0
    %v8189 = vadd.f32 0.0, %v8188
    %v8190 = vpop.f32.mrf.mxu0
    %8191 = vmatprep.mubr.bf16.mxu0 0
    %8192 = vmatmul.mubr.bf16.gmra.mxu0 %v8149
    %v8193 = vpop.f32.mrf.mxu0
    %v8194 = vadd.f32 0.0, %v8193
    %v8195 = vpop.f32.mrf.mxu0
    %v8196 = vpop.f32.mrf.mxu0
    %v8197 = vadd.f32 0.0, %v8196
    %v8198 = vpop.f32.mrf.mxu0
    %8199 = vdwg.mxu0
    %v8200 = vadd.f32 %v8106, %v8186
    %v8201 = vadd.f32 %v8107, %v8189
    %v8202 = vadd.f32 %v8108, %v8194
    %v8203 = vadd.f32 %v8109, %v8197
    %v8204 = vpack.c.bf16 %v6015, %v6014
    %v8205 = vpack.c.bf16 %v6017, %v6016
    %s8206 = scalar_lea.vmem %s5, 736
    %v8207 = vld [vmem:[%s8206] sm:$0xf]
    %v8208 = vld [vmem:[%s8206 + $0x4] sm:$0xf]
    %v8209 = vld [vmem:[%s8206 + $0x8] sm:$0xf]
    %v8210 = vld [vmem:[%s8206 + $0xc] sm:$0xf]
    %v8211 = vld [vmem:[%s8206 + $0x10] sm:$0xf]
    %v8212 = vld [vmem:[%s8206 + $0x14] sm:$0xf]
    %v8213 = vld [vmem:[%s8206 + $0x18] sm:$0xf]
    %v8214 = vld [vmem:[%s8206 + $0x1c] sm:$0xf]
    %v8223 = vunpack.c.l.b16 %v8207
    %v8224 = vunpack.c.l.b16 %v8208
    %v8225 = vunpack.c.l.b16 %v8209
    %v8226 = vunpack.c.l.b16 %v8210
    %v8227 = vunpack.c.l.b16 %v8211
    %v8228 = vunpack.c.l.b16 %v8212
    %v8229 = vunpack.c.l.b16 %v8213
    %v8230 = vunpack.c.l.b16 %v8214
    %v8231 = vpack.c.b16 %v8224, %v8223
    %v8232 = vpack.c.b16 %v8226, %v8225
    %v8233 = vpack.c.b16 %v8228, %v8227
    %v8234 = vpack.c.b16 %v8230, %v8229
    %v8240 = vsel %vm6095, %v8204, 0
    %v8243 = vsel %vm6095, %v8205, 0
    %8245 = vmatprep.subr.bf16.mxu0 0
    %8246 = vmatpush1.bf16.msra.mxu0 0
    %8247 = vmatprep.subr.bf16.mxu0 0
    %8248 = vmatpush1.bf16.msra.mxu0 0
    %8249 = vmatprep.subr.bf16.mxu0 0
    %8250 = vmatpush1.bf16.msra.mxu0 0
    %8251 = vmatprep.subr.bf16.mxu0 0
    %8252 = vmatpush1.bf16.msra.mxu0 0
    %8253 = vmatprep.subr.bf16.mxu0 0
    %8254 = vmatpush1.bf16.msra.mxu0 %v8234
    %8255 = vmatprep.subr.bf16.mxu0 0
    %8256 = vmatpush1.bf16.msra.mxu0 %v8233
    %8257 = vmatprep.subr.bf16.mxu0 0
    %8258 = vmatpush1.bf16.msra.mxu0 %v8232
    %8259 = vmatprep.subr.bf16.mxu0 0
    %8260 = vmatpush1.bf16.msra.mxu0 %v8231
    %8261 = vmatprep.subr.bf16.mxu0 0
    %8262 = vmatpush2.bf16.msra.mxu0 0
    %8263 = vmatprep.subr.bf16.mxu0 0
    %8264 = vmatpush2.bf16.msra.mxu0 0
    %8265 = vmatprep.subr.bf16.mxu0 0
    %8266 = vmatpush2.bf16.msra.mxu0 0
    %8267 = vmatprep.subr.bf16.mxu0 0
    %8268 = vmatpush2.bf16.msra.mxu0 0
    %8269 = vmatprep.subr.bf16.mxu0 0
    %8270 = vmatpush2.bf16.msra.mxu0 0
    %8271 = vmatprep.subr.bf16.mxu0 0
    %8272 = vmatpush2.bf16.msra.mxu0 0
    %8273 = vmatprep.subr.bf16.mxu0 0
    %8274 = vmatpush2.bf16.msra.mxu0 0
    %8275 = vmatprep.subr.bf16.mxu0 0
    %8276 = vmatpush2.bf16.msra.mxu0 0
    %8277 = vmatprep.mubr.bf16.mxu0 0
    %8278 = vmatmul.mubr.bf16.gmra.mxu0 %v8240
    %v8279 = vpop.f32.mrf.mxu0
    %v8280 = vadd.f32 0.0, %v8279
    %v8281 = vpop.f32.mrf.mxu0
    %v8282 = vpop.f32.mrf.mxu0
    %v8283 = vadd.f32 0.0, %v8282
    %v8284 = vpop.f32.mrf.mxu0
    %8285 = vmatprep.mubr.bf16.mxu0 0
    %8286 = vmatmul.mubr.bf16.gmra.mxu0 %v8243
    %v8287 = vpop.f32.mrf.mxu0
    %v8288 = vadd.f32 0.0, %v8287
    %v8289 = vpop.f32.mrf.mxu0
    %v8290 = vpop.f32.mrf.mxu0
    %v8291 = vadd.f32 0.0, %v8290
    %v8292 = vpop.f32.mrf.mxu0
    %8293 = vdwg.mxu0
    %v8294 = vadd.f32 %v8200, %v8280
    %v8295 = vadd.f32 %v8201, %v8283
    %v8296 = vadd.f32 %v8202, %v8288
    %v8297 = vadd.f32 %v8203, %v8291
    %v8298 = vpack.c.bf16 %v6019, %v6018
    %v8299 = vpack.c.bf16 %v6021, %v6020
    %s8300 = scalar_lea.vmem %s5, 768
    %v8301 = vld [vmem:[%s8300] sm:$0xf]
    %v8302 = vld [vmem:[%s8300 + $0x4] sm:$0xf]
    %v8303 = vld [vmem:[%s8300 + $0x8] sm:$0xf]
    %v8304 = vld [vmem:[%s8300 + $0xc] sm:$0xf]
    %v8305 = vld [vmem:[%s8300 + $0x10] sm:$0xf]
    %v8306 = vld [vmem:[%s8300 + $0x14] sm:$0xf]
    %v8307 = vld [vmem:[%s8300 + $0x18] sm:$0xf]
    %v8308 = vld [vmem:[%s8300 + $0x1c] sm:$0xf]
    %v8317 = vunpack.c.l.b16 %v8301
    %v8318 = vunpack.c.l.b16 %v8302
    %v8319 = vunpack.c.l.b16 %v8303
    %v8320 = vunpack.c.l.b16 %v8304
    %v8321 = vunpack.c.l.b16 %v8305
    %v8322 = vunpack.c.l.b16 %v8306
    %v8323 = vunpack.c.l.b16 %v8307
    %v8324 = vunpack.c.l.b16 %v8308
    %v8325 = vpack.c.b16 %v8318, %v8317
    %v8326 = vpack.c.b16 %v8320, %v8319
    %v8327 = vpack.c.b16 %v8322, %v8321
    %v8328 = vpack.c.b16 %v8324, %v8323
    %v8334 = vsel %vm6095, %v8298, 0
    %v8337 = vsel %vm6095, %v8299, 0
    %8339 = vmatprep.subr.bf16.mxu0 0
    %8340 = vmatpush1.bf16.msra.mxu0 0
    %8341 = vmatprep.subr.bf16.mxu0 0
    %8342 = vmatpush1.bf16.msra.mxu0 0
    %8343 = vmatprep.subr.bf16.mxu0 0
    %8344 = vmatpush1.bf16.msra.mxu0 0
    %8345 = vmatprep.subr.bf16.mxu0 0
    %8346 = vmatpush1.bf16.msra.mxu0 0
    %8347 = vmatprep.subr.bf16.mxu0 0
    %8348 = vmatpush1.bf16.msra.mxu0 %v8328
    %8349 = vmatprep.subr.bf16.mxu0 0
    %8350 = vmatpush1.bf16.msra.mxu0 %v8327
    %8351 = vmatprep.subr.bf16.mxu0 0
    %8352 = vmatpush1.bf16.msra.mxu0 %v8326
    %8353 = vmatprep.subr.bf16.mxu0 0
    %8354 = vmatpush1.bf16.msra.mxu0 %v8325
    %8355 = vmatprep.subr.bf16.mxu0 0
    %8356 = vmatpush2.bf16.msra.mxu0 0
    %8357 = vmatprep.subr.bf16.mxu0 0
    %8358 = vmatpush2.bf16.msra.mxu0 0
    %8359 = vmatprep.subr.bf16.mxu0 0
    %8360 = vmatpush2.bf16.msra.mxu0 0
    %8361 = vmatprep.subr.bf16.mxu0 0
    %8362 = vmatpush2.bf16.msra.mxu0 0
    %8363 = vmatprep.subr.bf16.mxu0 0
    %8364 = vmatpush2.bf16.msra.mxu0 0
    %8365 = vmatprep.subr.bf16.mxu0 0
    %8366 = vmatpush2.bf16.msra.mxu0 0
    %8367 = vmatprep.subr.bf16.mxu0 0
    %8368 = vmatpush2.bf16.msra.mxu0 0
    %8369 = vmatprep.subr.bf16.mxu0 0
    %8370 = vmatpush2.bf16.msra.mxu0 0
    %8371 = vmatprep.mubr.bf16.mxu0 0
    %8372 = vmatmul.mubr.bf16.gmra.mxu0 %v8334
    %v8373 = vpop.f32.mrf.mxu0
    %v8374 = vadd.f32 0.0, %v8373
    %v8375 = vpop.f32.mrf.mxu0
    %v8376 = vpop.f32.mrf.mxu0
    %v8377 = vadd.f32 0.0, %v8376
    %v8378 = vpop.f32.mrf.mxu0
    %8379 = vmatprep.mubr.bf16.mxu0 0
    %8380 = vmatmul.mubr.bf16.gmra.mxu0 %v8337
    %v8381 = vpop.f32.mrf.mxu0
    %v8382 = vadd.f32 0.0, %v8381
    %v8383 = vpop.f32.mrf.mxu0
    %v8384 = vpop.f32.mrf.mxu0
    %v8385 = vadd.f32 0.0, %v8384
    %v8386 = vpop.f32.mrf.mxu0
    %8387 = vdwg.mxu0
    %v8388 = vadd.f32 %v8294, %v8374
    %v8389 = vadd.f32 %v8295, %v8377
    %v8390 = vadd.f32 %v8296, %v8382
    %v8391 = vadd.f32 %v8297, %v8385
    %v8392 = vpack.c.bf16 %v6023, %v6022
    %v8393 = vpack.c.bf16 %v6025, %v6024
    %s8394 = scalar_lea.vmem %s5, 800
    %v8395 = vld [vmem:[%s8394] sm:$0xf]
    %v8396 = vld [vmem:[%s8394 + $0x4] sm:$0xf]
    %v8397 = vld [vmem:[%s8394 + $0x8] sm:$0xf]
    %v8398 = vld [vmem:[%s8394 + $0xc] sm:$0xf]
    %v8399 = vld [vmem:[%s8394 + $0x10] sm:$0xf]
    %v8400 = vld [vmem:[%s8394 + $0x14] sm:$0xf]
    %v8401 = vld [vmem:[%s8394 + $0x18] sm:$0xf]
    %v8402 = vld [vmem:[%s8394 + $0x1c] sm:$0xf]
    %v8411 = vunpack.c.l.b16 %v8395
    %v8412 = vunpack.c.l.b16 %v8396
    %v8413 = vunpack.c.l.b16 %v8397
    %v8414 = vunpack.c.l.b16 %v8398
    %v8415 = vunpack.c.l.b16 %v8399
    %v8416 = vunpack.c.l.b16 %v8400
    %v8417 = vunpack.c.l.b16 %v8401
    %v8418 = vunpack.c.l.b16 %v8402
    %v8419 = vpack.c.b16 %v8412, %v8411
    %v8420 = vpack.c.b16 %v8414, %v8413
    %v8421 = vpack.c.b16 %v8416, %v8415
    %v8422 = vpack.c.b16 %v8418, %v8417
    %v8428 = vsel %vm6095, %v8392, 0
    %v8431 = vsel %vm6095, %v8393, 0
    %8433 = vmatprep.subr.bf16.mxu0 0
    %8434 = vmatpush1.bf16.msra.mxu0 0
    %8435 = vmatprep.subr.bf16.mxu0 0
    %8436 = vmatpush1.bf16.msra.mxu0 0
    %8437 = vmatprep.subr.bf16.mxu0 0
    %8438 = vmatpush1.bf16.msra.mxu0 0
    %8439 = vmatprep.subr.bf16.mxu0 0
    %8440 = vmatpush1.bf16.msra.mxu0 0
    %8441 = vmatprep.subr.bf16.mxu0 0
    %8442 = vmatpush1.bf16.msra.mxu0 %v8422
    %8443 = vmatprep.subr.bf16.mxu0 0
    %8444 = vmatpush1.bf16.msra.mxu0 %v8421
    %8445 = vmatprep.subr.bf16.mxu0 0
    %8446 = vmatpush1.bf16.msra.mxu0 %v8420
    %8447 = vmatprep.subr.bf16.mxu0 0
    %8448 = vmatpush1.bf16.msra.mxu0 %v8419
    %8449 = vmatprep.subr.bf16.mxu0 0
    %8450 = vmatpush2.bf16.msra.mxu0 0
    %8451 = vmatprep.subr.bf16.mxu0 0
    %8452 = vmatpush2.bf16.msra.mxu0 0
    %8453 = vmatprep.subr.bf16.mxu0 0
    %8454 = vmatpush2.bf16.msra.mxu0 0
    %8455 = vmatprep.subr.bf16.mxu0 0
    %8456 = vmatpush2.bf16.msra.mxu0 0
    %8457 = vmatprep.subr.bf16.mxu0 0
    %8458 = vmatpush2.bf16.msra.mxu0 0
    %8459 = vmatprep.subr.bf16.mxu0 0
    %8460 = vmatpush2.bf16.msra.mxu0 0
    %8461 = vmatprep.subr.bf16.mxu0 0
    %8462 = vmatpush2.bf16.msra.mxu0 0
    %8463 = vmatprep.subr.bf16.mxu0 0
    %8464 = vmatpush2.bf16.msra.mxu0 0
    %8465 = vmatprep.mubr.bf16.mxu0 0
    %8466 = vmatmul.mubr.bf16.gmra.mxu0 %v8428
    %v8467 = vpop.f32.mrf.mxu0
    %v8468 = vadd.f32 0.0, %v8467
    %v8469 = vpop.f32.mrf.mxu0
    %v8470 = vpop.f32.mrf.mxu0
    %v8471 = vadd.f32 0.0, %v8470
    %v8472 = vpop.f32.mrf.mxu0
    %8473 = vmatprep.mubr.bf16.mxu0 0
    %8474 = vmatmul.mubr.bf16.gmra.mxu0 %v8431
    %v8475 = vpop.f32.mrf.mxu0
    %v8476 = vadd.f32 0.0, %v8475
    %v8477 = vpop.f32.mrf.mxu0
    %v8478 = vpop.f32.mrf.mxu0
    %v8479 = vadd.f32 0.0, %v8478
    %v8480 = vpop.f32.mrf.mxu0
    %8481 = vdwg.mxu0
    %v8482 = vadd.f32 %v8388, %v8468
    %v8483 = vadd.f32 %v8389, %v8471
    %v8484 = vadd.f32 %v8390, %v8476
    %v8485 = vadd.f32 %v8391, %v8479
    %v8486 = vpack.c.bf16 %v6027, %v6026
    %v8487 = vpack.c.bf16 %v6029, %v6028
    %s8488 = scalar_lea.vmem %s5, 832
    %v8489 = vld [vmem:[%s8488] sm:$0xf]
    %v8490 = vld [vmem:[%s8488 + $0x4] sm:$0xf]
    %v8491 = vld [vmem:[%s8488 + $0x8] sm:$0xf]
    %v8492 = vld [vmem:[%s8488 + $0xc] sm:$0xf]
    %v8493 = vld [vmem:[%s8488 + $0x10] sm:$0xf]
    %v8494 = vld [vmem:[%s8488 + $0x14] sm:$0xf]
    %v8495 = vld [vmem:[%s8488 + $0x18] sm:$0xf]
    %v8496 = vld [vmem:[%s8488 + $0x1c] sm:$0xf]
    %v8505 = vunpack.c.l.b16 %v8489
    %v8506 = vunpack.c.l.b16 %v8490
    %v8507 = vunpack.c.l.b16 %v8491
    %v8508 = vunpack.c.l.b16 %v8492
    %v8509 = vunpack.c.l.b16 %v8493
    %v8510 = vunpack.c.l.b16 %v8494
    %v8511 = vunpack.c.l.b16 %v8495
    %v8512 = vunpack.c.l.b16 %v8496
    %v8513 = vpack.c.b16 %v8506, %v8505
    %v8514 = vpack.c.b16 %v8508, %v8507
    %v8515 = vpack.c.b16 %v8510, %v8509
    %v8516 = vpack.c.b16 %v8512, %v8511
    %v8522 = vsel %vm6095, %v8486, 0
    %v8525 = vsel %vm6095, %v8487, 0
    %8527 = vmatprep.subr.bf16.mxu0 0
    %8528 = vmatpush1.bf16.msra.mxu0 0
    %8529 = vmatprep.subr.bf16.mxu0 0
    %8530 = vmatpush1.bf16.msra.mxu0 0
    %8531 = vmatprep.subr.bf16.mxu0 0
    %8532 = vmatpush1.bf16.msra.mxu0 0
    %8533 = vmatprep.subr.bf16.mxu0 0
    %8534 = vmatpush1.bf16.msra.mxu0 0
    %8535 = vmatprep.subr.bf16.mxu0 0
    %8536 = vmatpush1.bf16.msra.mxu0 %v8516
    %8537 = vmatprep.subr.bf16.mxu0 0
    %8538 = vmatpush1.bf16.msra.mxu0 %v8515
    %8539 = vmatprep.subr.bf16.mxu0 0
    %8540 = vmatpush1.bf16.msra.mxu0 %v8514
    %8541 = vmatprep.subr.bf16.mxu0 0
    %8542 = vmatpush1.bf16.msra.mxu0 %v8513
    %8543 = vmatprep.subr.bf16.mxu0 0
    %8544 = vmatpush2.bf16.msra.mxu0 0
    %8545 = vmatprep.subr.bf16.mxu0 0
    %8546 = vmatpush2.bf16.msra.mxu0 0
    %8547 = vmatprep.subr.bf16.mxu0 0
    %8548 = vmatpush2.bf16.msra.mxu0 0
    %8549 = vmatprep.subr.bf16.mxu0 0
    %8550 = vmatpush2.bf16.msra.mxu0 0
    %8551 = vmatprep.subr.bf16.mxu0 0
    %8552 = vmatpush2.bf16.msra.mxu0 0
    %8553 = vmatprep.subr.bf16.mxu0 0
    %8554 = vmatpush2.bf16.msra.mxu0 0
    %8555 = vmatprep.subr.bf16.mxu0 0
    %8556 = vmatpush2.bf16.msra.mxu0 0
    %8557 = vmatprep.subr.bf16.mxu0 0
    %8558 = vmatpush2.bf16.msra.mxu0 0
    %8559 = vmatprep.mubr.bf16.mxu0 0
    %8560 = vmatmul.mubr.bf16.gmra.mxu0 %v8522
    %v8561 = vpop.f32.mrf.mxu0
    %v8562 = vadd.f32 0.0, %v8561
    %v8563 = vpop.f32.mrf.mxu0
    %v8564 = vpop.f32.mrf.mxu0
    %v8565 = vadd.f32 0.0, %v8564
    %v8566 = vpop.f32.mrf.mxu0
    %8567 = vmatprep.mubr.bf16.mxu0 0
    %8568 = vmatmul.mubr.bf16.gmra.mxu0 %v8525
    %v8569 = vpop.f32.mrf.mxu0
    %v8570 = vadd.f32 0.0, %v8569
    %v8571 = vpop.f32.mrf.mxu0
    %v8572 = vpop.f32.mrf.mxu0
    %v8573 = vadd.f32 0.0, %v8572
    %v8574 = vpop.f32.mrf.mxu0
    %8575 = vdwg.mxu0
    %v8576 = vadd.f32 %v8482, %v8562
    %v8577 = vadd.f32 %v8483, %v8565
    %v8578 = vadd.f32 %v8484, %v8570
    %v8579 = vadd.f32 %v8485, %v8573
    %v8580 = vpack.c.bf16 %v6031, %v6030
    %v8581 = vpack.c.bf16 %v6033, %v6032
    %s8582 = scalar_lea.vmem %s5, 864
    %v8583 = vld [vmem:[%s8582] sm:$0xf]
    %v8584 = vld [vmem:[%s8582 + $0x4] sm:$0xf]
    %v8585 = vld [vmem:[%s8582 + $0x8] sm:$0xf]
    %v8586 = vld [vmem:[%s8582 + $0xc] sm:$0xf]
    %v8587 = vld [vmem:[%s8582 + $0x10] sm:$0xf]
    %v8588 = vld [vmem:[%s8582 + $0x14] sm:$0xf]
    %v8589 = vld [vmem:[%s8582 + $0x18] sm:$0xf]
    %v8590 = vld [vmem:[%s8582 + $0x1c] sm:$0xf]
    %v8599 = vunpack.c.l.b16 %v8583
    %v8600 = vunpack.c.l.b16 %v8584
    %v8601 = vunpack.c.l.b16 %v8585
    %v8602 = vunpack.c.l.b16 %v8586
    %v8603 = vunpack.c.l.b16 %v8587
    %v8604 = vunpack.c.l.b16 %v8588
    %v8605 = vunpack.c.l.b16 %v8589
    %v8606 = vunpack.c.l.b16 %v8590
    %v8607 = vpack.c.b16 %v8600, %v8599
    %v8608 = vpack.c.b16 %v8602, %v8601
    %v8609 = vpack.c.b16 %v8604, %v8603
    %v8610 = vpack.c.b16 %v8606, %v8605
    %v8616 = vsel %vm6095, %v8580, 0
    %v8619 = vsel %vm6095, %v8581, 0
    %8621 = vmatprep.subr.bf16.mxu0 0
    %8622 = vmatpush1.bf16.msra.mxu0 0
    %8623 = vmatprep.subr.bf16.mxu0 0
    %8624 = vmatpush1.bf16.msra.mxu0 0
    %8625 = vmatprep.subr.bf16.mxu0 0
    %8626 = vmatpush1.bf16.msra.mxu0 0
    %8627 = vmatprep.subr.bf16.mxu0 0
    %8628 = vmatpush1.bf16.msra.mxu0 0
    %8629 = vmatprep.subr.bf16.mxu0 0
    %8630 = vmatpush1.bf16.msra.mxu0 %v8610
    %8631 = vmatprep.subr.bf16.mxu0 0
    %8632 = vmatpush1.bf16.msra.mxu0 %v8609
    %8633 = vmatprep.subr.bf16.mxu0 0
    %8634 = vmatpush1.bf16.msra.mxu0 %v8608
    %8635 = vmatprep.subr.bf16.mxu0 0
    %8636 = vmatpush1.bf16.msra.mxu0 %v8607
    %8637 = vmatprep.subr.bf16.mxu0 0
    %8638 = vmatpush2.bf16.msra.mxu0 0
    %8639 = vmatprep.subr.bf16.mxu0 0
    %8640 = vmatpush2.bf16.msra.mxu0 0
    %8641 = vmatprep.subr.bf16.mxu0 0
    %8642 = vmatpush2.bf16.msra.mxu0 0
    %8643 = vmatprep.subr.bf16.mxu0 0
    %8644 = vmatpush2.bf16.msra.mxu0 0
    %8645 = vmatprep.subr.bf16.mxu0 0
    %8646 = vmatpush2.bf16.msra.mxu0 0
    %8647 = vmatprep.subr.bf16.mxu0 0
    %8648 = vmatpush2.bf16.msra.mxu0 0
    %8649 = vmatprep.subr.bf16.mxu0 0
    %8650 = vmatpush2.bf16.msra.mxu0 0
    %8651 = vmatprep.subr.bf16.mxu0 0
    %8652 = vmatpush2.bf16.msra.mxu0 0
    %8653 = vmatprep.mubr.bf16.mxu0 0
    %8654 = vmatmul.mubr.bf16.gmra.mxu0 %v8616
    %v8655 = vpop.f32.mrf.mxu0
    %v8656 = vadd.f32 0.0, %v8655
    %v8657 = vpop.f32.mrf.mxu0
    %v8658 = vpop.f32.mrf.mxu0
    %v8659 = vadd.f32 0.0, %v8658
    %v8660 = vpop.f32.mrf.mxu0
    %8661 = vmatprep.mubr.bf16.mxu0 0
    %8662 = vmatmul.mubr.bf16.gmra.mxu0 %v8619
    %v8663 = vpop.f32.mrf.mxu0
    %v8664 = vadd.f32 0.0, %v8663
    %v8665 = vpop.f32.mrf.mxu0
    %v8666 = vpop.f32.mrf.mxu0
    %v8667 = vadd.f32 0.0, %v8666
    %v8668 = vpop.f32.mrf.mxu0
    %8669 = vdwg.mxu0
    %v8670 = vadd.f32 %v8576, %v8656
    %v8671 = vadd.f32 %v8577, %v8659
    %v8672 = vadd.f32 %v8578, %v8664
    %v8673 = vadd.f32 %v8579, %v8667
    %v8674 = vpack.c.bf16 %v6035, %v6034
    %v8675 = vpack.c.bf16 %v6037, %v6036
    %s8676 = scalar_lea.vmem %s5, 896
    %v8677 = vld [vmem:[%s8676] sm:$0xf]
    %v8678 = vld [vmem:[%s8676 + $0x4] sm:$0xf]
    %v8679 = vld [vmem:[%s8676 + $0x8] sm:$0xf]
    %v8680 = vld [vmem:[%s8676 + $0xc] sm:$0xf]
    %v8681 = vld [vmem:[%s8676 + $0x10] sm:$0xf]
    %v8682 = vld [vmem:[%s8676 + $0x14] sm:$0xf]
    %v8683 = vld [vmem:[%s8676 + $0x18] sm:$0xf]
    %v8684 = vld [vmem:[%s8676 + $0x1c] sm:$0xf]
    %v8693 = vunpack.c.l.b16 %v8677
    %v8694 = vunpack.c.l.b16 %v8678
    %v8695 = vunpack.c.l.b16 %v8679
    %v8696 = vunpack.c.l.b16 %v8680
    %v8697 = vunpack.c.l.b16 %v8681
    %v8698 = vunpack.c.l.b16 %v8682
    %v8699 = vunpack.c.l.b16 %v8683
    %v8700 = vunpack.c.l.b16 %v8684
    %v8701 = vpack.c.b16 %v8694, %v8693
    %v8702 = vpack.c.b16 %v8696, %v8695
    %v8703 = vpack.c.b16 %v8698, %v8697
    %v8704 = vpack.c.b16 %v8700, %v8699
    %v8710 = vsel %vm6095, %v8674, 0
    %v8713 = vsel %vm6095, %v8675, 0
    %8715 = vmatprep.subr.bf16.mxu0 0
    %8716 = vmatpush1.bf16.msra.mxu0 0
    %8717 = vmatprep.subr.bf16.mxu0 0
    %8718 = vmatpush1.bf16.msra.mxu0 0
    %8719 = vmatprep.subr.bf16.mxu0 0
    %8720 = vmatpush1.bf16.msra.mxu0 0
    %8721 = vmatprep.subr.bf16.mxu0 0
    %8722 = vmatpush1.bf16.msra.mxu0 0
    %8723 = vmatprep.subr.bf16.mxu0 0
    %8724 = vmatpush1.bf16.msra.mxu0 %v8704
    %8725 = vmatprep.subr.bf16.mxu0 0
    %8726 = vmatpush1.bf16.msra.mxu0 %v8703
    %8727 = vmatprep.subr.bf16.mxu0 0
    %8728 = vmatpush1.bf16.msra.mxu0 %v8702
    %8729 = vmatprep.subr.bf16.mxu0 0
    %8730 = vmatpush1.bf16.msra.mxu0 %v8701
    %8731 = vmatprep.subr.bf16.mxu0 0
    %8732 = vmatpush2.bf16.msra.mxu0 0
    %8733 = vmatprep.subr.bf16.mxu0 0
    %8734 = vmatpush2.bf16.msra.mxu0 0
    %8735 = vmatprep.subr.bf16.mxu0 0
    %8736 = vmatpush2.bf16.msra.mxu0 0
    %8737 = vmatprep.subr.bf16.mxu0 0
    %8738 = vmatpush2.bf16.msra.mxu0 0
    %8739 = vmatprep.subr.bf16.mxu0 0
    %8740 = vmatpush2.bf16.msra.mxu0 0
    %8741 = vmatprep.subr.bf16.mxu0 0
    %8742 = vmatpush2.bf16.msra.mxu0 0
    %8743 = vmatprep.subr.bf16.mxu0 0
    %8744 = vmatpush2.bf16.msra.mxu0 0
    %8745 = vmatprep.subr.bf16.mxu0 0
    %8746 = vmatpush2.bf16.msra.mxu0 0
    %8747 = vmatprep.mubr.bf16.mxu0 0
    %8748 = vmatmul.mubr.bf16.gmra.mxu0 %v8710
    %v8749 = vpop.f32.mrf.mxu0
    %v8750 = vadd.f32 0.0, %v8749
    %v8751 = vpop.f32.mrf.mxu0
    %v8752 = vpop.f32.mrf.mxu0
    %v8753 = vadd.f32 0.0, %v8752
    %v8754 = vpop.f32.mrf.mxu0
    %8755 = vmatprep.mubr.bf16.mxu0 0
    %8756 = vmatmul.mubr.bf16.gmra.mxu0 %v8713
    %v8757 = vpop.f32.mrf.mxu0
    %v8758 = vadd.f32 0.0, %v8757
    %v8759 = vpop.f32.mrf.mxu0
    %v8760 = vpop.f32.mrf.mxu0
    %v8761 = vadd.f32 0.0, %v8760
    %v8762 = vpop.f32.mrf.mxu0
    %8763 = vdwg.mxu0
    %v8764 = vadd.f32 %v8670, %v8750
    %v8765 = vadd.f32 %v8671, %v8753
    %v8766 = vadd.f32 %v8672, %v8758
    %v8767 = vadd.f32 %v8673, %v8761
    %v8768 = vpack.c.bf16 %v6039, %v6038
    %v8769 = vpack.c.bf16 %v6041, %v6040
    %s8770 = scalar_lea.vmem %s5, 928
    %v8771 = vld [vmem:[%s8770] sm:$0xf]
    %v8772 = vld [vmem:[%s8770 + $0x4] sm:$0xf]
    %v8773 = vld [vmem:[%s8770 + $0x8] sm:$0xf]
    %v8774 = vld [vmem:[%s8770 + $0xc] sm:$0xf]
    %v8775 = vld [vmem:[%s8770 + $0x10] sm:$0xf]
    %v8776 = vld [vmem:[%s8770 + $0x14] sm:$0xf]
    %v8777 = vld [vmem:[%s8770 + $0x18] sm:$0xf]
    %v8778 = vld [vmem:[%s8770 + $0x1c] sm:$0xf]
    %v8787 = vunpack.c.l.b16 %v8771
    %v8788 = vunpack.c.l.b16 %v8772
    %v8789 = vunpack.c.l.b16 %v8773
    %v8790 = vunpack.c.l.b16 %v8774
    %v8791 = vunpack.c.l.b16 %v8775
    %v8792 = vunpack.c.l.b16 %v8776
    %v8793 = vunpack.c.l.b16 %v8777
    %v8794 = vunpack.c.l.b16 %v8778
    %v8795 = vpack.c.b16 %v8788, %v8787
    %v8796 = vpack.c.b16 %v8790, %v8789
    %v8797 = vpack.c.b16 %v8792, %v8791
    %v8798 = vpack.c.b16 %v8794, %v8793
    %v8804 = vsel %vm6095, %v8768, 0
    %v8807 = vsel %vm6095, %v8769, 0
    %8809 = vmatprep.subr.bf16.mxu0 0
    %8810 = vmatpush1.bf16.msra.mxu0 0
    %8811 = vmatprep.subr.bf16.mxu0 0
    %8812 = vmatpush1.bf16.msra.mxu0 0
    %8813 = vmatprep.subr.bf16.mxu0 0
    %8814 = vmatpush1.bf16.msra.mxu0 0
    %8815 = vmatprep.subr.bf16.mxu0 0
    %8816 = vmatpush1.bf16.msra.mxu0 0
    %8817 = vmatprep.subr.bf16.mxu0 0
    %8818 = vmatpush1.bf16.msra.mxu0 %v8798
    %8819 = vmatprep.subr.bf16.mxu0 0
    %8820 = vmatpush1.bf16.msra.mxu0 %v8797
    %8821 = vmatprep.subr.bf16.mxu0 0
    %8822 = vmatpush1.bf16.msra.mxu0 %v8796
    %8823 = vmatprep.subr.bf16.mxu0 0
    %8824 = vmatpush1.bf16.msra.mxu0 %v8795
    %8825 = vmatprep.subr.bf16.mxu0 0
    %8826 = vmatpush2.bf16.msra.mxu0 0
    %8827 = vmatprep.subr.bf16.mxu0 0
    %8828 = vmatpush2.bf16.msra.mxu0 0
    %8829 = vmatprep.subr.bf16.mxu0 0
    %8830 = vmatpush2.bf16.msra.mxu0 0
    %8831 = vmatprep.subr.bf16.mxu0 0
    %8832 = vmatpush2.bf16.msra.mxu0 0
    %8833 = vmatprep.subr.bf16.mxu0 0
    %8834 = vmatpush2.bf16.msra.mxu0 0
    %8835 = vmatprep.subr.bf16.mxu0 0
    %8836 = vmatpush2.bf16.msra.mxu0 0
    %8837 = vmatprep.subr.bf16.mxu0 0
    %8838 = vmatpush2.bf16.msra.mxu0 0
    %8839 = vmatprep.subr.bf16.mxu0 0
    %8840 = vmatpush2.bf16.msra.mxu0 0
    %8841 = vmatprep.mubr.bf16.mxu0 0
    %8842 = vmatmul.mubr.bf16.gmra.mxu0 %v8804
    %v8843 = vpop.f32.mrf.mxu0
    %v8844 = vadd.f32 0.0, %v8843
    %v8845 = vpop.f32.mrf.mxu0
    %v8846 = vpop.f32.mrf.mxu0
    %v8847 = vadd.f32 0.0, %v8846
    %v8848 = vpop.f32.mrf.mxu0
    %8849 = vmatprep.mubr.bf16.mxu0 0
    %8850 = vmatmul.mubr.bf16.gmra.mxu0 %v8807
    %v8851 = vpop.f32.mrf.mxu0
    %v8852 = vadd.f32 0.0, %v8851
    %v8853 = vpop.f32.mrf.mxu0
    %v8854 = vpop.f32.mrf.mxu0
    %v8855 = vadd.f32 0.0, %v8854
    %v8856 = vpop.f32.mrf.mxu0
    %8857 = vdwg.mxu0
    %v8858 = vadd.f32 %v8764, %v8844
    %v8859 = vadd.f32 %v8765, %v8847
    %v8860 = vadd.f32 %v8766, %v8852
    %v8861 = vadd.f32 %v8767, %v8855
    %v8862 = vpack.c.bf16 %v6043, %v6042
    %v8863 = vpack.c.bf16 %v6045, %v6044
    %s8864 = scalar_lea.vmem %s5, 960
    %v8865 = vld [vmem:[%s8864] sm:$0xf]
    %v8866 = vld [vmem:[%s8864 + $0x4] sm:$0xf]
    %v8867 = vld [vmem:[%s8864 + $0x8] sm:$0xf]
    %v8868 = vld [vmem:[%s8864 + $0xc] sm:$0xf]
    %v8869 = vld [vmem:[%s8864 + $0x10] sm:$0xf]
    %v8870 = vld [vmem:[%s8864 + $0x14] sm:$0xf]
    %v8871 = vld [vmem:[%s8864 + $0x18] sm:$0xf]
    %v8872 = vld [vmem:[%s8864 + $0x1c] sm:$0xf]
    %v8881 = vunpack.c.l.b16 %v8865
    %v8882 = vunpack.c.l.b16 %v8866
    %v8883 = vunpack.c.l.b16 %v8867
    %v8884 = vunpack.c.l.b16 %v8868
    %v8885 = vunpack.c.l.b16 %v8869
    %v8886 = vunpack.c.l.b16 %v8870
    %v8887 = vunpack.c.l.b16 %v8871
    %v8888 = vunpack.c.l.b16 %v8872
    %v8889 = vpack.c.b16 %v8882, %v8881
    %v8890 = vpack.c.b16 %v8884, %v8883
    %v8891 = vpack.c.b16 %v8886, %v8885
    %v8892 = vpack.c.b16 %v8888, %v8887
    %v8898 = vsel %vm6095, %v8862, 0
    %v8901 = vsel %vm6095, %v8863, 0
    %8903 = vmatprep.subr.bf16.mxu0 0
    %8904 = vmatpush1.bf16.msra.mxu0 0
    %8905 = vmatprep.subr.bf16.mxu0 0
    %8906 = vmatpush1.bf16.msra.mxu0 0
    %8907 = vmatprep.subr.bf16.mxu0 0
    %8908 = vmatpush1.bf16.msra.mxu0 0
    %8909 = vmatprep.subr.bf16.mxu0 0
    %8910 = vmatpush1.bf16.msra.mxu0 0
    %8911 = vmatprep.subr.bf16.mxu0 0
    %8912 = vmatpush1.bf16.msra.mxu0 %v8892
    %8913 = vmatprep.subr.bf16.mxu0 0
    %8914 = vmatpush1.bf16.msra.mxu0 %v8891
    %8915 = vmatprep.subr.bf16.mxu0 0
    %8916 = vmatpush1.bf16.msra.mxu0 %v8890
    %8917 = vmatprep.subr.bf16.mxu0 0
    %8918 = vmatpush1.bf16.msra.mxu0 %v8889
    %8919 = vmatprep.subr.bf16.mxu0 0
    %8920 = vmatpush2.bf16.msra.mxu0 0
    %8921 = vmatprep.subr.bf16.mxu0 0
    %8922 = vmatpush2.bf16.msra.mxu0 0
    %8923 = vmatprep.subr.bf16.mxu0 0
    %8924 = vmatpush2.bf16.msra.mxu0 0
    %8925 = vmatprep.subr.bf16.mxu0 0
    %8926 = vmatpush2.bf16.msra.mxu0 0
    %8927 = vmatprep.subr.bf16.mxu0 0
    %8928 = vmatpush2.bf16.msra.mxu0 0
    %8929 = vmatprep.subr.bf16.mxu0 0
    %8930 = vmatpush2.bf16.msra.mxu0 0
    %8931 = vmatprep.subr.bf16.mxu0 0
    %8932 = vmatpush2.bf16.msra.mxu0 0
    %8933 = vmatprep.subr.bf16.mxu0 0
    %8934 = vmatpush2.bf16.msra.mxu0 0
    %8935 = vmatprep.mubr.bf16.mxu0 0
    %8936 = vmatmul.mubr.bf16.gmra.mxu0 %v8898
    %v8937 = vpop.f32.mrf.mxu0
    %v8938 = vadd.f32 0.0, %v8937
    %v8939 = vpop.f32.mrf.mxu0
    %v8940 = vpop.f32.mrf.mxu0
    %v8941 = vadd.f32 0.0, %v8940
    %v8942 = vpop.f32.mrf.mxu0
    %8943 = vmatprep.mubr.bf16.mxu0 0
    %8944 = vmatmul.mubr.bf16.gmra.mxu0 %v8901
    %v8945 = vpop.f32.mrf.mxu0
    %v8946 = vadd.f32 0.0, %v8945
    %v8947 = vpop.f32.mrf.mxu0
    %v8948 = vpop.f32.mrf.mxu0
    %v8949 = vadd.f32 0.0, %v8948
    %v8950 = vpop.f32.mrf.mxu0
    %8951 = vdwg.mxu0
    %v8952 = vadd.f32 %v8858, %v8938
    %v8953 = vadd.f32 %v8859, %v8941
    %v8954 = vadd.f32 %v8860, %v8946
    %v8955 = vadd.f32 %v8861, %v8949
    %v8956 = vpack.c.bf16 %v6047, %v6046
    %v8957 = vpack.c.bf16 %v6049, %v6048
    %s8958 = scalar_lea.vmem %s5, 992
    %v8959 = vld [vmem:[%s8958] sm:$0xf]
    %v8960 = vld [vmem:[%s8958 + $0x4] sm:$0xf]
    %v8961 = vld [vmem:[%s8958 + $0x8] sm:$0xf]
    %v8962 = vld [vmem:[%s8958 + $0xc] sm:$0xf]
    %v8963 = vld [vmem:[%s8958 + $0x10] sm:$0xf]
    %v8964 = vld [vmem:[%s8958 + $0x14] sm:$0xf]
    %v8965 = vld [vmem:[%s8958 + $0x18] sm:$0xf]
    %v8966 = vld [vmem:[%s8958 + $0x1c] sm:$0xf]
    %v8975 = vunpack.c.l.b16 %v8959
    %v8976 = vunpack.c.l.b16 %v8960
    %v8977 = vunpack.c.l.b16 %v8961
    %v8978 = vunpack.c.l.b16 %v8962
    %v8979 = vunpack.c.l.b16 %v8963
    %v8980 = vunpack.c.l.b16 %v8964
    %v8981 = vunpack.c.l.b16 %v8965
    %v8982 = vunpack.c.l.b16 %v8966
    %v8983 = vpack.c.b16 %v8976, %v8975
    %v8984 = vpack.c.b16 %v8978, %v8977
    %v8985 = vpack.c.b16 %v8980, %v8979
    %v8986 = vpack.c.b16 %v8982, %v8981
    %v8992 = vsel %vm6095, %v8956, 0
    %v8995 = vsel %vm6095, %v8957, 0
    %8997 = vmatprep.subr.bf16.mxu0 0
    %8998 = vmatpush1.bf16.msra.mxu0 0
    %8999 = vmatprep.subr.bf16.mxu0 0
    %9000 = vmatpush1.bf16.msra.mxu0 0
    %9001 = vmatprep.subr.bf16.mxu0 0
    %9002 = vmatpush1.bf16.msra.mxu0 0
    %9003 = vmatprep.subr.bf16.mxu0 0
    %9004 = vmatpush1.bf16.msra.mxu0 0
    %9005 = vmatprep.subr.bf16.mxu0 0
    %9006 = vmatpush1.bf16.msra.mxu0 %v8986
    %9007 = vmatprep.subr.bf16.mxu0 0
    %9008 = vmatpush1.bf16.msra.mxu0 %v8985
    %9009 = vmatprep.subr.bf16.mxu0 0
    %9010 = vmatpush1.bf16.msra.mxu0 %v8984
    %9011 = vmatprep.subr.bf16.mxu0 0
    %9012 = vmatpush1.bf16.msra.mxu0 %v8983
    %9013 = vmatprep.subr.bf16.mxu0 0
    %9014 = vmatpush2.bf16.msra.mxu0 0
    %9015 = vmatprep.subr.bf16.mxu0 0
    %9016 = vmatpush2.bf16.msra.mxu0 0
    %9017 = vmatprep.subr.bf16.mxu0 0
    %9018 = vmatpush2.bf16.msra.mxu0 0
    %9019 = vmatprep.subr.bf16.mxu0 0
    %9020 = vmatpush2.bf16.msra.mxu0 0
    %9021 = vmatprep.subr.bf16.mxu0 0
    %9022 = vmatpush2.bf16.msra.mxu0 0
    %9023 = vmatprep.subr.bf16.mxu0 0
    %9024 = vmatpush2.bf16.msra.mxu0 0
    %9025 = vmatprep.subr.bf16.mxu0 0
    %9026 = vmatpush2.bf16.msra.mxu0 0
    %9027 = vmatprep.subr.bf16.mxu0 0
    %9028 = vmatpush2.bf16.msra.mxu0 0
    %9029 = vmatprep.mubr.bf16.mxu0 0
    %9030 = vmatmul.mubr.bf16.gmra.mxu0 %v8992
    %v9031 = vpop.f32.mrf.mxu0
    %v9032 = vadd.f32 0.0, %v9031
    %v9033 = vpop.f32.mrf.mxu0
    %v9034 = vpop.f32.mrf.mxu0
    %v9035 = vadd.f32 0.0, %v9034
    %v9036 = vpop.f32.mrf.mxu0
    %9037 = vmatprep.mubr.bf16.mxu0 0
    %9038 = vmatmul.mubr.bf16.gmra.mxu0 %v8995
    %v9039 = vpop.f32.mrf.mxu0
    %v9040 = vadd.f32 0.0, %v9039
    %v9041 = vpop.f32.mrf.mxu0
    %v9042 = vpop.f32.mrf.mxu0
    %v9043 = vadd.f32 0.0, %v9042
    %v9044 = vpop.f32.mrf.mxu0
    %9045 = vdwg.mxu0
    %v9046 = vadd.f32 %v8952, %v9032
    %v9047 = vadd.f32 %v8953, %v9035
    %v9048 = vadd.f32 %v8954, %v9040
    %v9049 = vadd.f32 %v8955, %v9043
    %v9050 = vld [vmem:[%s6] sm:$0x1]
    %v9052 = vlaneseq
    %v9053 = vshrl.u32 %v9052, 7
    %v9054 = vsub.s32 0, %v9053
    %v9055 = vrot.slane %v9050, %v9054
    %v9057 = vadd.f32 %v9046, %v9055
    %v9058 = vadd.f32 %v9047, %v9055
    %v9059 = vadd.f32 %v9048, %v9055
    %v9060 = vadd.f32 %v9049, %v9055
    %v9061 = vmax.f32 %v9057, 0.0
    %v9062 = vmax.f32 %v9058, 0.0
    %v9063 = vmax.f32 %v9059, 0.0
    %v9064 = vmax.f32 %v9060, 0.0
    %v9065 = vpack.c.bf16 %v9062, %v9061
    %v9066 = vpack.c.bf16 %v9064, %v9063
    %v9067 = vld [vmem:[%s7] sm:$0xf]
    %v9068 = vld [vmem:[%s7 + $0x4] sm:$0xf]
    %v9069 = vld [vmem:[%s7 + $0x8] sm:$0xf]
    %v9070 = vld [vmem:[%s7 + $0xc] sm:$0xf]
    %v9071 = vld [vmem:[%s7 + $0x10] sm:$0xf]
    %v9072 = vld [vmem:[%s7 + $0x14] sm:$0xf]
    %v9073 = vld [vmem:[%s7 + $0x18] sm:$0xf]
    %v9074 = vld [vmem:[%s7 + $0x1c] sm:$0xf]
    %v9075 = vld [vmem:[%s7 + $0x20] sm:$0xf]
    %v9076 = vld [vmem:[%s7 + $0x24] sm:$0xf]
    %v9077 = vld [vmem:[%s7 + $0x28] sm:$0xf]
    %v9078 = vld [vmem:[%s7 + $0x2c] sm:$0xf]
    %v9079 = vld [vmem:[%s7 + $0x30] sm:$0xf]
    %v9080 = vld [vmem:[%s7 + $0x34] sm:$0xf]
    %v9081 = vld [vmem:[%s7 + $0x38] sm:$0xf]
    %v9082 = vld [vmem:[%s7 + $0x3c] sm:$0xf]
    %v9083 = vld [vmem:[%s8] sm:$0x1]
    %v9085 = vlaneseq
    %v9086 = vshrl.u32 %v9085, 7
    %v9087 = vsub.s32 0, %v9086
    %v9088 = vrot.slane %v9083, %v9087
    %v9106 = vunpack.c.l.b16 %v9067
    %v9107 = vunpack.c.l.b16 %v9068
    %v9108 = vunpack.c.l.b16 %v9069
    %v9109 = vunpack.c.l.b16 %v9070
    %v9110 = vunpack.c.l.b16 %v9071
    %v9111 = vunpack.c.l.b16 %v9072
    %v9112 = vunpack.c.l.b16 %v9073
    %v9113 = vunpack.c.l.b16 %v9074
    %v9114 = vunpack.c.l.b16 %v9075
    %v9115 = vunpack.c.l.b16 %v9076
    %v9116 = vunpack.c.l.b16 %v9077
    %v9117 = vunpack.c.l.b16 %v9078
    %v9118 = vunpack.c.l.b16 %v9079
    %v9119 = vunpack.c.l.b16 %v9080
    %v9120 = vunpack.c.l.b16 %v9081
    %v9121 = vunpack.c.l.b16 %v9082
    %v9122 = vpack.c.b16 %v9107, %v9106
    %v9123 = vpack.c.b16 %v9109, %v9108
    %v9124 = vpack.c.b16 %v9111, %v9110
    %v9125 = vpack.c.b16 %v9113, %v9112
    %v9126 = vpack.c.b16 %v9115, %v9114
    %v9127 = vpack.c.b16 %v9117, %v9116
    %v9128 = vpack.c.b16 %v9119, %v9118
    %v9129 = vpack.c.b16 %v9121, %v9120
    %9138 = vmatprep.subr.bf16.mxu0 0
    %9139 = vmatpush1.bf16.msra.mxu0 %v9129
    %9140 = vmatprep.subr.bf16.mxu0 0
    %9141 = vmatpush1.bf16.msra.mxu0 %v9128
    %9142 = vmatprep.subr.bf16.mxu0 0
    %9143 = vmatpush1.bf16.msra.mxu0 %v9127
    %9144 = vmatprep.subr.bf16.mxu0 0
    %9145 = vmatpush1.bf16.msra.mxu0 %v9126
    %9146 = vmatprep.subr.bf16.mxu0 0
    %9147 = vmatpush1.bf16.msra.mxu0 %v9125
    %9148 = vmatprep.subr.bf16.mxu0 0
    %9149 = vmatpush1.bf16.msra.mxu0 %v9124
    %9150 = vmatprep.subr.bf16.mxu0 0
    %9151 = vmatpush1.bf16.msra.mxu0 %v9123
    %9152 = vmatprep.subr.bf16.mxu0 0
    %9153 = vmatpush1.bf16.msra.mxu0 %v9122
    %9154 = vmatprep.subr.bf16.mxu0 0
    %9155 = vmatpush2.bf16.msra.mxu0 0
    %9156 = vmatprep.subr.bf16.mxu0 0
    %9157 = vmatpush2.bf16.msra.mxu0 0
    %9158 = vmatprep.subr.bf16.mxu0 0
    %9159 = vmatpush2.bf16.msra.mxu0 0
    %9160 = vmatprep.subr.bf16.mxu0 0
    %9161 = vmatpush2.bf16.msra.mxu0 0
    %9162 = vmatprep.subr.bf16.mxu0 0
    %9163 = vmatpush2.bf16.msra.mxu0 0
    %9164 = vmatprep.subr.bf16.mxu0 0
    %9165 = vmatpush2.bf16.msra.mxu0 0
    %9166 = vmatprep.subr.bf16.mxu0 0
    %9167 = vmatpush2.bf16.msra.mxu0 0
    %9168 = vmatprep.subr.bf16.mxu0 0
    %9169 = vmatpush2.bf16.msra.mxu0 0
    %9170 = vmatprep.mubr.bf16.mxu0 0
    %9171 = vmatmul.mubr.bf16.gmra.mxu0 %v9065
    %v9172 = vpop.f32.mrf.mxu0
    %v9173 = vadd.f32 %v9088, %v9172
    %v9174 = vpop.f32.mrf.mxu0
    %v9175 = vpop.f32.mrf.mxu0
    %v9176 = vadd.f32 %v9088, %v9175
    %v9177 = vpop.f32.mrf.mxu0
    %9178 = vmatprep.mubr.bf16.mxu0 0
    %9179 = vmatmul.mubr.bf16.gmra.mxu0 %v9066
    %v9180 = vpop.f32.mrf.mxu0
    %v9181 = vadd.f32 %v9088, %v9180
    %v9182 = vpop.f32.mrf.mxu0
    %v9183 = vpop.f32.mrf.mxu0
    %v9184 = vadd.f32 %v9088, %v9183
    %v9185 = vpop.f32.mrf.mxu0
    %9186 = vdwg.mxu0
    %9187 = vmax.xlane.f32.xlu0 %v9173
    %v9188 = vpop.xlane.xlu0 %9187
    %9189 = vmax.xlane.f32.xlu0 %v9176
    %v9190 = vpop.xlane.xlu0 %9189
    %9191 = vmax.xlane.f32.xlu0 %v9181
    %v9192 = vpop.xlane.xlu0 %9191
    %9193 = vmax.xlane.f32.xlu0 %v9184
    %v9194 = vpop.xlane.xlu0 %9193
    %v9195 = vsub.f32 %v9173, %v9188
    %v9196 = vsub.f32 %v9176, %v9190
    %v9197 = vsub.f32 %v9181, %v9192
    %v9198 = vsub.f32 %v9184, %v9194
    %v9199 = vmul.f32 %v9195, 1.442695
    %v9200 = vpow.pop %v9199
    %v9201 = vmul.f32 %v9196, 1.442695
    %v9202 = vpow.pop %v9201
    %v9203 = vmul.f32 %v9197, 1.442695
    %v9204 = vpow.pop %v9203
    %v9205 = vmul.f32 %v9198, 1.442695
    %v9206 = vpow.pop %v9205
    %9207 = vadd.xlane.f32.xlu0 %v9200
    %v9208 = vpop.xlane.xlu0 %9207
    %9209 = vadd.xlane.f32.xlu0 %v9202
    %v9210 = vpop.xlane.xlu0 %9209
    %9211 = vadd.xlane.f32.xlu0 %v9204
    %v9212 = vpop.xlane.xlu0 %9211
    %9213 = vadd.xlane.f32.xlu0 %v9206
    %v9214 = vpop.xlane.xlu0 %9213
    %v9215 = vlog2.pop %v9208
    %v9216 = vmul.f32 %v9215, 0.6931472
    %v9217 = vlog2.pop %v9210
    %v9218 = vmul.f32 %v9217, 0.6931472
    %v9219 = vlog2.pop %v9212
    %v9220 = vmul.f32 %v9219, 0.6931472
    %v9221 = vlog2.pop %v9214
    %v9222 = vmul.f32 %v9221, 0.6931472
    %v9223 = vsub.f32 %v9195, %v9216
    %v9224 = vsub.f32 %v9196, %v9218
    %v9225 = vsub.f32 %v9197, %v9220
    %v9226 = vsub.f32 %v9198, %v9222
    %9227 = vst [vmem:[#allocation2] sm:$0xff] %v9223
    %9228 = vst [vmem:[#allocation2 + $0x8] sm:$0xff] %v9224
    %9229 = vst [vmem:[#allocation2 + $0x10] sm:$0xff] %v9225
    %9230 = vst [vmem:[#allocation2 + $0x18] sm:$0xff] %v9226
    // Predicated region
    $region38: #{tpu_custom_call.1} parent=1 // pred_check
      _
    $region39: #{tpu_custom_call.1} parent=1 // pred_check_branch
      %9232 = sbr.rel (0) target = $region41
    $region40: #{tpu_custom_call.1} parent=1 // pred_region
      %s9234 = ssub.s32 512, 512
      %9235 = vsyncadd [#allocation3], %s9234
      %s9236 = sshll.u32 [#allocation2], 4
      %s9237 = int_to_ptr.vmem [resolvable:$true] %s9236
      %9242 = dma.vmem_to_hbm [thread:$0]  %s9237, 512, %s9, [#allocation3], 128, 128, 8
    $region41: #{tpu_custom_call.1} parent=1 // pred_fallthru
      _
    // Predicated region
    $region42: #{tpu_custom_call.1} parent=1 // pred_check
      _
    $region43: #{tpu_custom_call.1} parent=1 // pred_check_branch
      %9244 = sbr.rel (0) target = $region45
    $region44: #{tpu_custom_call.1} parent=1 // pred_region
      %9245 = dma.done [#allocation3], 512
    $region45: #{tpu_custom_call.1} parent=1 // pred_fallthru
      _
    %9246 = vsyncpa [#allocation3], 1

</llo_original>
